<compile_context>
chip_gen: v5e
topology: v5e:2x2
jax: 0.10.0
libtpu: 0.0.40
codegen_flags: <defaults>
</compile_context>

<pallas_src>
import jax
import jax.numpy as jnp
from jax.experimental import pallas as pl
from jax.experimental.pallas import tpu as pltpu


# ----------------------------------------------------------------------------
# Static geometry (MNIST-style 28x28, valid 3x3 convs, 2x2 maxpool)
# ----------------------------------------------------------------------------
_H = 28                          # input height/width == flat row stride
_K = 3                           # conv kernel size
_C1, _C2 = 8, 16                 # conv1 / conv2 output channels
_TB = 8                          # batch tile: images per grid step
_IMG = 896                       # per-image padded flat width (784 + 112, = 7*128)
_W1 = 768                        # per-image conv1 flat width (>= 725 + 58)
_W2 = 672                        # per-image conv2 flat width (24 rows * 28)
_L1 = (_TB - 1) * _IMG + _W1     # 7040: conv1 width over the concatenated tile
_L2 = (_TB - 1) * _IMG + _W2     # 6944: conv2 width over the concatenated tile
_LP = _L2 - 1 - _H               # 6915: width after the two shifted maxima
_WSEL = _W2 - 1 - _H             # 643:  per-image K of the pooling selection matmul
_POOL = 12                       # pooled spatial size
_NPOOL = _POOL * _POOL           # 144
_NFC1 = 128
_OFFS = tuple(dh * _H + dw for dh in range(_K) for dw in range(_K))  # 9 flat tap offsets


# ----------------------------------------------------------------------------
# Fused Pallas kernel: whole forward pass for TB images per grid step
# ----------------------------------------------------------------------------
def _fused_cnn_kernel(x_ref, w1_ref, b1_ref, w2_ref, b2_ref, sel_ref, perm_ref,
                      wf1_ref, bf1_ref, wf2_ref, bf2_ref, wf3_ref, bf3_ref,
                      o_ref):
    x = x_ref[...]                                        # (1, TB*896)
    w1 = w1_ref[...]                                      # (8, 9)

    # conv1 (1 -> 8) + ReLU over the lane-concatenated batch tile.  Cin == 1,
    # so each of the 9 taps is a lane-dense broadcast MAC; columns past the
    # valid 26-per-row (and the inter-image pad region) hold garbage that is
    # never read downstream (max tap offset 58 < 112-lane per-image pad).
    h1 = jnp.zeros((_C1, _L1), jnp.float32)
    for t, s in enumerate(_OFFS):
        h1 = h1 + w1[:, t:t + 1] * x[:, s:s + _L1]
    h1 = jnp.maximum(h1 + b1_ref[...], 0.0)               # (8, 7040)

    # conv2 (8 -> 16) + ReLU: ONE K=72 MXU matmul on an in-kernel im2col stack
    # (9 shifted 8-row slices; tap order matches the repacked w2 layout).
    hs = jnp.concatenate([h1[:, s:s + _L2] for s in _OFFS], axis=0)   # (72, 6944)
    h2 = jnp.dot(w2_ref[...], hs, preferred_element_type=jnp.float32)
    h2 = jnp.maximum(h2 + b2_ref[...], 0.0)               # (16, 6944)

    # 2x2 maxpool, stage 1: two shifted element-wise maxima leave every
    # window's max at its origin flat position (56*oh + 2*ow within an image).
    m = jnp.maximum(h2[:, :_L2 - 1], h2[:, 1:])           # max over (w, w+1)
    m = jnp.maximum(m[:, :_LP], m[:, _H:_H + _LP])        # max over (h, h+1) -> (16, 6915)

    # 2x2 maxpool, stage 2 + batch relayout: per image, a 0/1 selection matmul
    # gathers the 144 stride-2 window origins into a dense (16, 144) tile
    # (per-image slices are vreg-aligned: 896 = 7*128).  The tiles are stacked
    # image-major on sublanes, then ONE 0/1 permutation matmul regroups rows
    # channel-major (row c*TB + i) so fc1 can run with M = TB.
    sel = sel_ref[...]                                    # (643, 144)
    pooled = jnp.concatenate(
        [jnp.dot(m[:, i * _IMG:i * _IMG + _WSEL], sel,
                 preferred_element_type=jnp.float32) for i in range(_TB)],
        axis=0)                                           # (128, 144), row i*16+c
    pooled = jnp.dot(perm_ref[...], pooled,
                     preferred_element_type=jnp.float32)  # (128, 144), row c*8+i

    # fc1 + ReLU: 16 accumulated (TB,144)x(144,128) dots — exactly PyTorch's
    # NCHW flatten order (c*144 + h*12 + w) via the pre-sliced wf1 slabs.
    acc = jnp.zeros((_TB, _NFC1), jnp.float32)
    for c in range(_C2):
        acc = acc + jnp.dot(pooled[c * _TB:(c + 1) * _TB, :], wf1_ref[c],
                            preferred_element_type=jnp.float32)
    h3 = jnp.maximum(acc + bf1_ref[...], 0.0)             # (TB, 128)

    # fc2 + ReLU, fc3 (logits, zero-padded to 128 lanes for a dense store).
    h4 = jnp.maximum(
        jnp.dot(h3, wf2_ref[...], preferred_element_type=jnp.float32)
        + bf2_ref[...], 0.0)                              # (TB, 64)
    out = (jnp.dot(h4, wf3_ref[...], preferred_element_type=jnp.float32)
           + bf3_ref[...])                                # (TB, 128); lanes 10..127 are 0
    o_ref[...] = out.astype(o_ref.dtype)


# ----------------------------------------------------------------------------
# One-time weight repack (PyTorch layouts -> kernel-ready layouts)
# ----------------------------------------------------------------------------
def prepare_params(p):
    # Pooling selection: column q = oh*12 + ow picks flat position 56*oh + 2*ow.
    q = jnp.arange(_NPOOL)
    src = 2 * (q // _POOL) * _H + 2 * (q % _POOL)                          # max 638 < 643
    sel = jnp.zeros((_WSEL, _NPOOL), jnp.float32).at[src, q].set(1.0)

    # Row permutation: stacked row i*16 + c  ->  grouped row c*TB + i.
    r = jnp.arange(_TB * _C2)
    perm = jnp.zeros((_TB * _C2, _TB * _C2), jnp.float32).at[
        (r % _C2) * _TB + r // _C2, r].set(1.0)

    # fc3 padded to 128 output lanes (exact: extra lanes are all-zero).
    wf3 = jnp.zeros((64, 128), jnp.float32).at[:, :10].set(
        jnp.transpose(p["fc3_w"]).astype(jnp.float32))
    bf3 = jnp.zeros((1, 128), jnp.float32).at[0, :10].set(
        p["fc3_b"].astype(jnp.float32))

    return {
        "w1": p["conv1_w"].reshape(_C1, _K * _K).astype(jnp.float32),              # (8, 9)
        "b1": p["conv1_b"].reshape(_C1, 1).astype(jnp.float32),
        "w2": jnp.transpose(p["conv2_w"], (0, 2, 3, 1))
                 .reshape(_C2, _K * _K * _C1).astype(jnp.float32),                 # (16, 72)
        "b2": p["conv2_b"].reshape(_C2, 1).astype(jnp.float32),
        "pool_sel": sel,                                                            # (643, 144)
        "perm": perm,                                                               # (128, 128)
        "wf1": jnp.transpose(p["fc1_w"]).reshape(_C2, _NPOOL, _NFC1)
                  .astype(jnp.float32),                                             # (16, 144, 128)
        "bf1": p["fc1_b"].reshape(1, _NFC1).astype(jnp.float32),
        "wf2": jnp.transpose(p["fc2_w"]).astype(jnp.float32),                       # (128, 64)
        "bf2": p["fc2_b"].reshape(1, 64).astype(jnp.float32),
        "wf3": wf3,                                                                 # (64, 128)
        "bf3": bf3,                                                                 # (1, 128)
    }


# ----------------------------------------------------------------------------
# Forward pass wrappers
# ----------------------------------------------------------------------------
def cnn_forward_prepared(kp, x_nchw):
    B = x_nchw.shape[0]
    n_tiles = -(-B // _TB)                 # ceil(B / TB); keep >= 2 tiles on v7x
    b_pad = n_tiles * _TB

    # Glue (pure layout, free in XLA): flatten each image row-major (stride 28),
    # zero-pad to 896 lanes per image, pad the batch to a multiple of TB, and
    # view each group of TB images as one lane-concatenated row.
    x_flat = x_nchw.astype(jnp.float32).reshape(B, _H * _H)
    x_flat = jnp.pad(x_flat, ((0, b_pad - B), (0, _IMG - _H * _H)))
    x_tiles = x_flat.reshape(n_tiles, 1, _TB * _IMG)

    const2 = lambda i: (0, 0)
    out = pl.pallas_call(
        _fused_cnn_kernel,
        grid=(n_tiles,),
        in_specs=[
            pl.BlockSpec((None, 1, _TB * _IMG), lambda i: (i, 0, 0)),
            pl.BlockSpec((_C1, _K * _K), const2),
            pl.BlockSpec((_C1, 1), const2),
            pl.BlockSpec((_C2, _K * _K * _C1), const2),
            pl.BlockSpec((_C2, 1), const2),
            pl.BlockSpec((_WSEL, _NPOOL), const2),
            pl.BlockSpec((_TB * _C2, _TB * _C2), const2),
            pl.BlockSpec((_C2, _NPOOL, _NFC1), lambda i: (0, 0, 0)),
            pl.BlockSpec((1, _NFC1), const2),
            pl.BlockSpec((_NFC1, 64), const2),
            pl.BlockSpec((1, 64), const2),
            pl.BlockSpec((64, 128), const2),
            pl.BlockSpec((1, 128), const2),
        ],
        out_specs=pl.BlockSpec((None, _TB, 128), lambda i: (i, 0, 0)),
        out_shape=jax.ShapeDtypeStruct((n_tiles, _TB, 128), jnp.float32),
        compiler_params=pltpu.CompilerParams(dimension_semantics=("parallel",)),
    )(x_tiles, kp["w1"], kp["b1"], kp["w2"], kp["b2"], kp["pool_sel"],
      kp["perm"], kp["wf1"], kp["bf1"], kp["wf2"], kp["bf2"], kp["wf3"], kp["bf3"])

    return out.reshape(b_pad, 128)[:B, :10]


def cnn_forward(params, x_nchw):
    """Compatibility entry point taking PyTorch-layout params."""
    return cnn_forward_prepared(prepare_params(params), x_nchw)


# ----------------------------------------------------------------------------
# PyTorch-equivalent parameter init (Conv2d / Linear default uniform init)
# ----------------------------------------------------------------------------
def init_params(key):
    ks = jax.random.split(key, 10)

    def u(k, shape, fan_in):
        bound = 1.0 / (fan_in ** 0.5)
        return jax.random.uniform(k, shape, jnp.float32, -bound, bound)

    return {
        "conv1_w": u(ks[0], (8, 1, 3, 3), 1 * 3 * 3),
        "conv1_b": u(ks[1], (8,), 1 * 3 * 3),
        "conv2_w": u(ks[2], (16, 8, 3, 3), 8 * 3 * 3),
        "conv2_b": u(ks[3], (16,), 8 * 3 * 3),
        "fc1_w": u(ks[4], (128, 12 * 12 * 16), 12 * 12 * 16),
        "fc1_b": u(ks[5], (128,), 12 * 12 * 16),
        "fc2_w": u(ks[6], (64, 128), 128),
        "fc2_b": u(ks[7], (64,), 128),
        "fc3_w": u(ks[8], (10, 64), 64),
        "fc3_b": u(ks[9], (10,), 64),
    }


if __name__ == "__main__":
    key = jax.random.PRNGKey(0)
    pkey, xkey = jax.random.split(key)
    params = init_params(pkey)                 # PyTorch-layout parameters
    kparams = prepare_params(params)           # one-time repack (hot path has no transposes)
    x = jax.random.normal(xkey, (2, 1, 28, 28), jnp.float32)   # MNIST-shaped input

    out = jax.jit(cnn_forward_prepared)(kparams, x)
    out = jax.block_until_ready(out)
    assert out.shape == (2, 10) and out.dtype == jnp.float32
    assert bool(jnp.isfinite(out).all())
    print("KERNEL_OK")
</pallas_src>

<mosaic_0001>
module attributes {stable_mosaic.version = 11 : i64} {
  func.func @_fused_cnn_kernel(%arg0: i32, %arg1: memref<1x1x7168xf32, #tpu.memory_space<vmem>>, %arg2: memref<8x9xf32, #tpu.memory_space<vmem>>, %arg3: memref<8x1xf32, #tpu.memory_space<vmem>>, %arg4: memref<16x72xf32, #tpu.memory_space<vmem>>, %arg5: memref<16x1xf32, #tpu.memory_space<vmem>>, %arg6: memref<643x144xf32, #tpu.memory_space<vmem>>, %arg7: memref<128x128xf32, #tpu.memory_space<vmem>>, %arg8: memref<16x144x128xf32, #tpu.memory_space<vmem>>, %arg9: memref<1x128xf32, #tpu.memory_space<vmem>>, %arg10: memref<128x64xf32, #tpu.memory_space<vmem>>, %arg11: memref<1x64xf32, #tpu.memory_space<vmem>>, %arg12: memref<64x128xf32, #tpu.memory_space<vmem>>, %arg13: memref<1x128xf32, #tpu.memory_space<vmem>>, %arg14: memref<1x8x128xf32, #tpu.memory_space<vmem>>) attributes {dimension_semantics = [#tpu.dimension_semantics<parallel>], iteration_bounds = array<i64: 1>, scalar_prefetch = 0 : i64, scratch_operands = 0 : i64, tpu.core_type = #tpu.core_type<tc>, window_params = [{transform_indices = @transform_0, window_bounds = array<i64: 1, 1, 7168>}, {pipeline_mode = #tpu.pipeline_mode<synchronous>, transform_indices = @transform_1, window_bounds = array<i64: 8, 9>}, {pipeline_mode = #tpu.pipeline_mode<synchronous>, transform_indices = @transform_2, window_bounds = array<i64: 8, 1>}, {pipeline_mode = #tpu.pipeline_mode<synchronous>, transform_indices = @transform_3, window_bounds = array<i64: 16, 72>}, {pipeline_mode = #tpu.pipeline_mode<synchronous>, transform_indices = @transform_4, window_bounds = array<i64: 16, 1>}, {pipeline_mode = #tpu.pipeline_mode<synchronous>, transform_indices = @transform_5, window_bounds = array<i64: 643, 144>}, {pipeline_mode = #tpu.pipeline_mode<synchronous>, transform_indices = @transform_6, window_bounds = array<i64: 128, 128>}, {pipeline_mode = #tpu.pipeline_mode<synchronous>, transform_indices = @transform_7, window_bounds = array<i64: 16, 144, 128>}, {pipeline_mode = #tpu.pipeline_mode<synchronous>, transform_indices = @transform_8, window_bounds = array<i64: 1, 128>}, {pipeline_mode = #tpu.pipeline_mode<synchronous>, transform_indices = @transform_9, window_bounds = array<i64: 128, 64>}, {pipeline_mode = #tpu.pipeline_mode<synchronous>, transform_indices = @transform_10, window_bounds = array<i64: 1, 64>}, {pipeline_mode = #tpu.pipeline_mode<synchronous>, transform_indices = @transform_11, window_bounds = array<i64: 64, 128>}, {pipeline_mode = #tpu.pipeline_mode<synchronous>, transform_indices = @transform_12, window_bounds = array<i64: 1, 128>}, {transform_indices = @transform_13, window_bounds = array<i64: 1, 8, 128>}]} {
    %c0 = arith.constant 0 : index
    %c0_0 = arith.constant 0 : index
    %c0_1 = arith.constant 0 : index
    %0 = vector.load %arg1[%c0, %c0_0, %c0_1] : memref<1x1x7168xf32, #tpu.memory_space<vmem>>, vector<1x1x7168xf32>
    %1 = vector.shape_cast %0 : vector<1x1x7168xf32> to vector<1x7168xf32>
    %c0_2 = arith.constant 0 : index
    %c0_3 = arith.constant 0 : index
    %2 = vector.load %arg2[%c0_2, %c0_3] : memref<8x9xf32, #tpu.memory_space<vmem>>, vector<8x9xf32>
    %cst = arith.constant 0.000000e+00 : f32
    %3 = vector.broadcast %cst : f32 to vector<8x7040xf32>
    %4 = vector.extract_strided_slice %2 {offsets = [0, 0], sizes = [8, 1], strides = [1, 1]} : vector<8x9xf32> to vector<8x1xf32>
    %5 = vector.extract_strided_slice %1 {offsets = [0, 0], sizes = [1, 7040], strides = [1, 1]} : vector<1x7168xf32> to vector<1x7040xf32>
    %6 = vector.broadcast %4 : vector<8x1xf32> to vector<8x7040xf32>
    %7 = vector.broadcast %5 : vector<1x7040xf32> to vector<8x7040xf32>
    %8 = arith.mulf %6, %7 : vector<8x7040xf32>
    %9 = arith.addf %3, %8 : vector<8x7040xf32>
    %10 = vector.extract_strided_slice %2 {offsets = [0, 1], sizes = [8, 1], strides = [1, 1]} : vector<8x9xf32> to vector<8x1xf32>
    %11 = vector.extract_strided_slice %1 {offsets = [0, 1], sizes = [1, 7040], strides = [1, 1]} : vector<1x7168xf32> to vector<1x7040xf32>
    %12 = vector.broadcast %10 : vector<8x1xf32> to vector<8x7040xf32>
    %13 = vector.broadcast %11 : vector<1x7040xf32> to vector<8x7040xf32>
    %14 = arith.mulf %12, %13 : vector<8x7040xf32>
    %15 = arith.addf %9, %14 : vector<8x7040xf32>
    %16 = vector.extract_strided_slice %2 {offsets = [0, 2], sizes = [8, 1], strides = [1, 1]} : vector<8x9xf32> to vector<8x1xf32>
    %17 = vector.extract_strided_slice %1 {offsets = [0, 2], sizes = [1, 7040], strides = [1, 1]} : vector<1x7168xf32> to vector<1x7040xf32>
    %18 = vector.broadcast %16 : vector<8x1xf32> to vector<8x7040xf32>
    %19 = vector.broadcast %17 : vector<1x7040xf32> to vector<8x7040xf32>
    %20 = arith.mulf %18, %19 : vector<8x7040xf32>
    %21 = arith.addf %15, %20 : vector<8x7040xf32>
    %22 = vector.extract_strided_slice %2 {offsets = [0, 3], sizes = [8, 1], strides = [1, 1]} : vector<8x9xf32> to vector<8x1xf32>
    %23 = vector.extract_strided_slice %1 {offsets = [0, 28], sizes = [1, 7040], strides = [1, 1]} : vector<1x7168xf32> to vector<1x7040xf32>
    %24 = vector.broadcast %22 : vector<8x1xf32> to vector<8x7040xf32>
    %25 = vector.broadcast %23 : vector<1x7040xf32> to vector<8x7040xf32>
    %26 = arith.mulf %24, %25 : vector<8x7040xf32>
    %27 = arith.addf %21, %26 : vector<8x7040xf32>
    %28 = vector.extract_strided_slice %2 {offsets = [0, 4], sizes = [8, 1], strides = [1, 1]} : vector<8x9xf32> to vector<8x1xf32>
    %29 = vector.extract_strided_slice %1 {offsets = [0, 29], sizes = [1, 7040], strides = [1, 1]} : vector<1x7168xf32> to vector<1x7040xf32>
    %30 = vector.broadcast %28 : vector<8x1xf32> to vector<8x7040xf32>
    %31 = vector.broadcast %29 : vector<1x7040xf32> to vector<8x7040xf32>
    %32 = arith.mulf %30, %31 : vector<8x7040xf32>
    %33 = arith.addf %27, %32 : vector<8x7040xf32>
    %34 = vector.extract_strided_slice %2 {offsets = [0, 5], sizes = [8, 1], strides = [1, 1]} : vector<8x9xf32> to vector<8x1xf32>
    %35 = vector.extract_strided_slice %1 {offsets = [0, 30], sizes = [1, 7040], strides = [1, 1]} : vector<1x7168xf32> to vector<1x7040xf32>
    %36 = vector.broadcast %34 : vector<8x1xf32> to vector<8x7040xf32>
    %37 = vector.broadcast %35 : vector<1x7040xf32> to vector<8x7040xf32>
    %38 = arith.mulf %36, %37 : vector<8x7040xf32>
    %39 = arith.addf %33, %38 : vector<8x7040xf32>
    %40 = vector.extract_strided_slice %2 {offsets = [0, 6], sizes = [8, 1], strides = [1, 1]} : vector<8x9xf32> to vector<8x1xf32>
    %41 = vector.extract_strided_slice %1 {offsets = [0, 56], sizes = [1, 7040], strides = [1, 1]} : vector<1x7168xf32> to vector<1x7040xf32>
    %42 = vector.broadcast %40 : vector<8x1xf32> to vector<8x7040xf32>
    %43 = vector.broadcast %41 : vector<1x7040xf32> to vector<8x7040xf32>
    %44 = arith.mulf %42, %43 : vector<8x7040xf32>
    %45 = arith.addf %39, %44 : vector<8x7040xf32>
    %46 = vector.extract_strided_slice %2 {offsets = [0, 7], sizes = [8, 1], strides = [1, 1]} : vector<8x9xf32> to vector<8x1xf32>
    %47 = vector.extract_strided_slice %1 {offsets = [0, 57], sizes = [1, 7040], strides = [1, 1]} : vector<1x7168xf32> to vector<1x7040xf32>
    %48 = vector.broadcast %46 : vector<8x1xf32> to vector<8x7040xf32>
    %49 = vector.broadcast %47 : vector<1x7040xf32> to vector<8x7040xf32>
    %50 = arith.mulf %48, %49 : vector<8x7040xf32>
    %51 = arith.addf %45, %50 : vector<8x7040xf32>
    %52 = vector.extract_strided_slice %2 {offsets = [0, 8], sizes = [8, 1], strides = [1, 1]} : vector<8x9xf32> to vector<8x1xf32>
    %53 = vector.extract_strided_slice %1 {offsets = [0, 58], sizes = [1, 7040], strides = [1, 1]} : vector<1x7168xf32> to vector<1x7040xf32>
    %54 = vector.broadcast %52 : vector<8x1xf32> to vector<8x7040xf32>
    %55 = vector.broadcast %53 : vector<1x7040xf32> to vector<8x7040xf32>
    %56 = arith.mulf %54, %55 : vector<8x7040xf32>
    %57 = arith.addf %51, %56 : vector<8x7040xf32>
    %c0_4 = arith.constant 0 : index
    %c0_5 = arith.constant 0 : index
    %58 = vector.load %arg3[%c0_4, %c0_5] : memref<8x1xf32, #tpu.memory_space<vmem>>, vector<8x1xf32>
    %59 = vector.broadcast %58 : vector<8x1xf32> to vector<8x7040xf32>
    %60 = arith.addf %57, %59 : vector<8x7040xf32>
    %cst_6 = arith.constant 0.000000e+00 : f32
    %61 = vector.broadcast %cst_6 : f32 to vector<8x7040xf32>
    %62 = arith.maximumf %60, %61 : vector<8x7040xf32>
    %63 = vector.extract_strided_slice %62 {offsets = [0, 0], sizes = [8, 6944], strides = [1, 1]} : vector<8x7040xf32> to vector<8x6944xf32>
    %64 = vector.extract_strided_slice %62 {offsets = [0, 1], sizes = [8, 6944], strides = [1, 1]} : vector<8x7040xf32> to vector<8x6944xf32>
    %65 = vector.extract_strided_slice %62 {offsets = [0, 2], sizes = [8, 6944], strides = [1, 1]} : vector<8x7040xf32> to vector<8x6944xf32>
    %66 = vector.extract_strided_slice %62 {offsets = [0, 28], sizes = [8, 6944], strides = [1, 1]} : vector<8x7040xf32> to vector<8x6944xf32>
    %67 = vector.extract_strided_slice %62 {offsets = [0, 29], sizes = [8, 6944], strides = [1, 1]} : vector<8x7040xf32> to vector<8x6944xf32>
    %68 = vector.extract_strided_slice %62 {offsets = [0, 30], sizes = [8, 6944], strides = [1, 1]} : vector<8x7040xf32> to vector<8x6944xf32>
    %69 = vector.extract_strided_slice %62 {offsets = [0, 56], sizes = [8, 6944], strides = [1, 1]} : vector<8x7040xf32> to vector<8x6944xf32>
    %70 = vector.extract_strided_slice %62 {offsets = [0, 57], sizes = [8, 6944], strides = [1, 1]} : vector<8x7040xf32> to vector<8x6944xf32>
    %71 = vector.extract_strided_slice %62 {offsets = [0, 58], sizes = [8, 6944], strides = [1, 1]} : vector<8x7040xf32> to vector<8x6944xf32>
    %72 = tpu.concatenate %63, %64, %65, %66, %67, %68, %69, %70, %71 in 0 : vector<8x6944xf32>, vector<8x6944xf32>, vector<8x6944xf32>, vector<8x6944xf32>, vector<8x6944xf32>, vector<8x6944xf32>, vector<8x6944xf32>, vector<8x6944xf32>, vector<8x6944xf32> -> vector<72x6944xf32>
    %c0_7 = arith.constant 0 : index
    %c0_8 = arith.constant 0 : index
    %73 = vector.load %arg4[%c0_7, %c0_8] : memref<16x72xf32, #tpu.memory_space<vmem>>, vector<16x72xf32>
    %cst_9 = arith.constant dense<0.000000e+00> : vector<16x6944xf32>
    %74 = tpu.matmul %73, %72, %cst_9 {dimension_numbers = #tpu.dot_dimension_numbers<[1], [0], [0], [1], [0, 0, 1, 1], [], []>} : vector<16x72xf32>, vector<72x6944xf32>, vector<16x6944xf32> -> vector<16x6944xf32>
    %c0_10 = arith.constant 0 : index
    %c0_11 = arith.constant 0 : index
    %75 = vector.load %arg5[%c0_10, %c0_11] : memref<16x1xf32, #tpu.memory_space<vmem>>, vector<16x1xf32>
    %76 = vector.broadcast %75 : vector<16x1xf32> to vector<16x6944xf32>
    %77 = arith.addf %74, %76 : vector<16x6944xf32>
    %cst_12 = arith.constant 0.000000e+00 : f32
    %78 = vector.broadcast %cst_12 : f32 to vector<16x6944xf32>
    %79 = arith.maximumf %77, %78 : vector<16x6944xf32>
    %80 = vector.extract_strided_slice %79 {offsets = [0, 0], sizes = [16, 6943], strides = [1, 1]} : vector<16x6944xf32> to vector<16x6943xf32>
    %81 = vector.extract_strided_slice %79 {offsets = [0, 1], sizes = [16, 6943], strides = [1, 1]} : vector<16x6944xf32> to vector<16x6943xf32>
    %82 = arith.maximumf %80, %81 : vector<16x6943xf32>
    %83 = vector.extract_strided_slice %82 {offsets = [0, 0], sizes = [16, 6915], strides = [1, 1]} : vector<16x6943xf32> to vector<16x6915xf32>
    %84 = vector.extract_strided_slice %82 {offsets = [0, 28], sizes = [16, 6915], strides = [1, 1]} : vector<16x6943xf32> to vector<16x6915xf32>
    %85 = arith.maximumf %83, %84 : vector<16x6915xf32>
    %c0_13 = arith.constant 0 : index
    %c0_14 = arith.constant 0 : index
    %86 = vector.load %arg6[%c0_13, %c0_14] : memref<643x144xf32, #tpu.memory_space<vmem>>, vector<643x144xf32>
    %87 = vector.extract_strided_slice %85 {offsets = [0, 0], sizes = [16, 643], strides = [1, 1]} : vector<16x6915xf32> to vector<16x643xf32>
    %cst_15 = arith.constant dense<0.000000e+00> : vector<16x144xf32>
    %88 = tpu.matmul %87, %86, %cst_15 {dimension_numbers = #tpu.dot_dimension_numbers<[1], [0], [0], [1], [0, 0, 1, 1], [], []>} : vector<16x643xf32>, vector<643x144xf32>, vector<16x144xf32> -> vector<16x144xf32>
    %89 = vector.extract_strided_slice %85 {offsets = [0, 896], sizes = [16, 643], strides = [1, 1]} : vector<16x6915xf32> to vector<16x643xf32>
    %cst_16 = arith.constant dense<0.000000e+00> : vector<16x144xf32>
    %90 = tpu.matmul %89, %86, %cst_16 {dimension_numbers = #tpu.dot_dimension_numbers<[1], [0], [0], [1], [0, 0, 1, 1], [], []>} : vector<16x643xf32>, vector<643x144xf32>, vector<16x144xf32> -> vector<16x144xf32>
    %91 = vector.extract_strided_slice %85 {offsets = [0, 1792], sizes = [16, 643], strides = [1, 1]} : vector<16x6915xf32> to vector<16x643xf32>
    %cst_17 = arith.constant dense<0.000000e+00> : vector<16x144xf32>
    %92 = tpu.matmul %91, %86, %cst_17 {dimension_numbers = #tpu.dot_dimension_numbers<[1], [0], [0], [1], [0, 0, 1, 1], [], []>} : vector<16x643xf32>, vector<643x144xf32>, vector<16x144xf32> -> vector<16x144xf32>
    %93 = vector.extract_strided_slice %85 {offsets = [0, 2688], sizes = [16, 643], strides = [1, 1]} : vector<16x6915xf32> to vector<16x643xf32>
    %cst_18 = arith.constant dense<0.000000e+00> : vector<16x144xf32>
    %94 = tpu.matmul %93, %86, %cst_18 {dimension_numbers = #tpu.dot_dimension_numbers<[1], [0], [0], [1], [0, 0, 1, 1], [], []>} : vector<16x643xf32>, vector<643x144xf32>, vector<16x144xf32> -> vector<16x144xf32>
    %95 = vector.extract_strided_slice %85 {offsets = [0, 3584], sizes = [16, 643], strides = [1, 1]} : vector<16x6915xf32> to vector<16x643xf32>
    %cst_19 = arith.constant dense<0.000000e+00> : vector<16x144xf32>
    %96 = tpu.matmul %95, %86, %cst_19 {dimension_numbers = #tpu.dot_dimension_numbers<[1], [0], [0], [1], [0, 0, 1, 1], [], []>} : vector<16x643xf32>, vector<643x144xf32>, vector<16x144xf32> -> vector<16x144xf32>
    %97 = vector.extract_strided_slice %85 {offsets = [0, 4480], sizes = [16, 643], strides = [1, 1]} : vector<16x6915xf32> to vector<16x643xf32>
    %cst_20 = arith.constant dense<0.000000e+00> : vector<16x144xf32>
    %98 = tpu.matmul %97, %86, %cst_20 {dimension_numbers = #tpu.dot_dimension_numbers<[1], [0], [0], [1], [0, 0, 1, 1], [], []>} : vector<16x643xf32>, vector<643x144xf32>, vector<16x144xf32> -> vector<16x144xf32>
    %99 = vector.extract_strided_slice %85 {offsets = [0, 5376], sizes = [16, 643], strides = [1, 1]} : vector<16x6915xf32> to vector<16x643xf32>
    %cst_21 = arith.constant dense<0.000000e+00> : vector<16x144xf32>
    %100 = tpu.matmul %99, %86, %cst_21 {dimension_numbers = #tpu.dot_dimension_numbers<[1], [0], [0], [1], [0, 0, 1, 1], [], []>} : vector<16x643xf32>, vector<643x144xf32>, vector<16x144xf32> -> vector<16x144xf32>
    %101 = vector.extract_strided_slice %85 {offsets = [0, 6272], sizes = [16, 643], strides = [1, 1]} : vector<16x6915xf32> to vector<16x643xf32>
    %cst_22 = arith.constant dense<0.000000e+00> : vector<16x144xf32>
    %102 = tpu.matmul %101, %86, %cst_22 {dimension_numbers = #tpu.dot_dimension_numbers<[1], [0], [0], [1], [0, 0, 1, 1], [], []>} : vector<16x643xf32>, vector<643x144xf32>, vector<16x144xf32> -> vector<16x144xf32>
    %103 = tpu.concatenate %88, %90, %92, %94, %96, %98, %100, %102 in 0 : vector<16x144xf32>, vector<16x144xf32>, vector<16x144xf32>, vector<16x144xf32>, vector<16x144xf32>, vector<16x144xf32>, vector<16x144xf32>, vector<16x144xf32> -> vector<128x144xf32>
    %c0_23 = arith.constant 0 : index
    %c0_24 = arith.constant 0 : index
    %104 = vector.load %arg7[%c0_23, %c0_24] : memref<128x128xf32, #tpu.memory_space<vmem>>, vector<128x128xf32>
    %cst_25 = arith.constant dense<0.000000e+00> : vector<128x144xf32>
    %105 = tpu.matmul %104, %103, %cst_25 {dimension_numbers = #tpu.dot_dimension_numbers<[1], [0], [0], [1], [0, 0, 1, 1], [], []>} : vector<128x128xf32>, vector<128x144xf32>, vector<128x144xf32> -> vector<128x144xf32>
    %cst_26 = arith.constant 0.000000e+00 : f32
    %106 = vector.broadcast %cst_26 : f32 to vector<8x128xf32>
    %107 = vector.extract_strided_slice %105 {offsets = [0, 0], sizes = [8, 144], strides = [1, 1]} : vector<128x144xf32> to vector<8x144xf32>
    %c0_27 = arith.constant 0 : index
    %c0_28 = arith.constant 0 : index
    %c0_29 = arith.constant 0 : index
    %108 = vector.load %arg8[%c0_27, %c0_28, %c0_29] : memref<16x144x128xf32, #tpu.memory_space<vmem>>, vector<1x144x128xf32>
    %109 = vector.shape_cast %108 : vector<1x144x128xf32> to vector<144x128xf32>
    %cst_30 = arith.constant dense<0.000000e+00> : vector<8x128xf32>
    %110 = tpu.matmul %107, %109, %cst_30 {dimension_numbers = #tpu.dot_dimension_numbers<[1], [0], [0], [1], [0, 0, 1, 1], [], []>} : vector<8x144xf32>, vector<144x128xf32>, vector<8x128xf32> -> vector<8x128xf32>
    %111 = arith.addf %106, %110 : vector<8x128xf32>
    %112 = vector.extract_strided_slice %105 {offsets = [8, 0], sizes = [8, 144], strides = [1, 1]} : vector<128x144xf32> to vector<8x144xf32>
    %c1 = arith.constant 1 : index
    %c0_31 = arith.constant 0 : index
    %c0_32 = arith.constant 0 : index
    %113 = vector.load %arg8[%c1, %c0_31, %c0_32] : memref<16x144x128xf32, #tpu.memory_space<vmem>>, vector<1x144x128xf32>
    %114 = vector.shape_cast %113 : vector<1x144x128xf32> to vector<144x128xf32>
    %cst_33 = arith.constant dense<0.000000e+00> : vector<8x128xf32>
    %115 = tpu.matmul %112, %114, %cst_33 {dimension_numbers = #tpu.dot_dimension_numbers<[1], [0], [0], [1], [0, 0, 1, 1], [], []>} : vector<8x144xf32>, vector<144x128xf32>, vector<8x128xf32> -> vector<8x128xf32>
    %116 = arith.addf %111, %115 : vector<8x128xf32>
    %117 = vector.extract_strided_slice %105 {offsets = [16, 0], sizes = [8, 144], strides = [1, 1]} : vector<128x144xf32> to vector<8x144xf32>
    %c2 = arith.constant 2 : index
    %c0_34 = arith.constant 0 : index
    %c0_35 = arith.constant 0 : index
    %118 = vector.load %arg8[%c2, %c0_34, %c0_35] : memref<16x144x128xf32, #tpu.memory_space<vmem>>, vector<1x144x128xf32>
    %119 = vector.shape_cast %118 : vector<1x144x128xf32> to vector<144x128xf32>
    %cst_36 = arith.constant dense<0.000000e+00> : vector<8x128xf32>
    %120 = tpu.matmul %117, %119, %cst_36 {dimension_numbers = #tpu.dot_dimension_numbers<[1], [0], [0], [1], [0, 0, 1, 1], [], []>} : vector<8x144xf32>, vector<144x128xf32>, vector<8x128xf32> -> vector<8x128xf32>
    %121 = arith.addf %116, %120 : vector<8x128xf32>
    %122 = vector.extract_strided_slice %105 {offsets = [24, 0], sizes = [8, 144], strides = [1, 1]} : vector<128x144xf32> to vector<8x144xf32>
    %c3 = arith.constant 3 : index
    %c0_37 = arith.constant 0 : index
    %c0_38 = arith.constant 0 : index
    %123 = vector.load %arg8[%c3, %c0_37, %c0_38] : memref<16x144x128xf32, #tpu.memory_space<vmem>>, vector<1x144x128xf32>
    %124 = vector.shape_cast %123 : vector<1x144x128xf32> to vector<144x128xf32>
    %cst_39 = arith.constant dense<0.000000e+00> : vector<8x128xf32>
    %125 = tpu.matmul %122, %124, %cst_39 {dimension_numbers = #tpu.dot_dimension_numbers<[1], [0], [0], [1], [0, 0, 1, 1], [], []>} : vector<8x144xf32>, vector<144x128xf32>, vector<8x128xf32> -> vector<8x128xf32>
    %126 = arith.addf %121, %125 : vector<8x128xf32>
    %127 = vector.extract_strided_slice %105 {offsets = [32, 0], sizes = [8, 144], strides = [1, 1]} : vector<128x144xf32> to vector<8x144xf32>
    %c4 = arith.constant 4 : index
    %c0_40 = arith.constant 0 : index
    %c0_41 = arith.constant 0 : index
    %128 = vector.load %arg8[%c4, %c0_40, %c0_41] : memref<16x144x128xf32, #tpu.memory_space<vmem>>, vector<1x144x128xf32>
    %129 = vector.shape_cast %128 : vector<1x144x128xf32> to vector<144x128xf32>
    %cst_42 = arith.constant dense<0.000000e+00> : vector<8x128xf32>
    %130 = tpu.matmul %127, %129, %cst_42 {dimension_numbers = #tpu.dot_dimension_numbers<[1], [0], [0], [1], [0, 0, 1, 1], [], []>} : vector<8x144xf32>, vector<144x128xf32>, vector<8x128xf32> -> vector<8x128xf32>
    %131 = arith.addf %126, %130 : vector<8x128xf32>
    %132 = vector.extract_strided_slice %105 {offsets = [40, 0], sizes = [8, 144], strides = [1, 1]} : vector<128x144xf32> to vector<8x144xf32>
    %c5 = arith.constant 5 : index
    %c0_43 = arith.constant 0 : index
    %c0_44 = arith.constant 0 : index
    %133 = vector.load %arg8[%c5, %c0_43, %c0_44] : memref<16x144x128xf32, #tpu.memory_space<vmem>>, vector<1x144x128xf32>
    %134 = vector.shape_cast %133 : vector<1x144x128xf32> to vector<144x128xf32>
    %cst_45 = arith.constant dense<0.000000e+00> : vector<8x128xf32>
    %135 = tpu.matmul %132, %134, %cst_45 {dimension_numbers = #tpu.dot_dimension_numbers<[1], [0], [0], [1], [0, 0, 1, 1], [], []>} : vector<8x144xf32>, vector<144x128xf32>, vector<8x128xf32> -> vector<8x128xf32>
    %136 = arith.addf %131, %135 : vector<8x128xf32>
    %137 = vector.extract_strided_slice %105 {offsets = [48, 0], sizes = [8, 144], strides = [1, 1]} : vector<128x144xf32> to vector<8x144xf32>
    %c6 = arith.constant 6 : index
    %c0_46 = arith.constant 0 : index
    %c0_47 = arith.constant 0 : index
    %138 = vector.load %arg8[%c6, %c0_46, %c0_47] : memref<16x144x128xf32, #tpu.memory_space<vmem>>, vector<1x144x128xf32>
    %139 = vector.shape_cast %138 : vector<1x144x128xf32> to vector<144x128xf32>
    %cst_48 = arith.constant dense<0.000000e+00> : vector<8x128xf32>
    %140 = tpu.matmul %137, %139, %cst_48 {dimension_numbers = #tpu.dot_dimension_numbers<[1], [0], [0], [1], [0, 0, 1, 1], [], []>} : vector<8x144xf32>, vector<144x128xf32>, vector<8x128xf32> -> vector<8x128xf32>
    %141 = arith.addf %136, %140 : vector<8x128xf32>
    %142 = vector.extract_strided_slice %105 {offsets = [56, 0], sizes = [8, 144], strides = [1, 1]} : vector<128x144xf32> to vector<8x144xf32>
    %c7 = arith.constant 7 : index
    %c0_49 = arith.constant 0 : index
    %c0_50 = arith.constant 0 : index
    %143 = vector.load %arg8[%c7, %c0_49, %c0_50] : memref<16x144x128xf32, #tpu.memory_space<vmem>>, vector<1x144x128xf32>
    %144 = vector.shape_cast %143 : vector<1x144x128xf32> to vector<144x128xf32>
    %cst_51 = arith.constant dense<0.000000e+00> : vector<8x128xf32>
    %145 = tpu.matmul %142, %144, %cst_51 {dimension_numbers = #tpu.dot_dimension_numbers<[1], [0], [0], [1], [0, 0, 1, 1], [], []>} : vector<8x144xf32>, vector<144x128xf32>, vector<8x128xf32> -> vector<8x128xf32>
    %146 = arith.addf %141, %145 : vector<8x128xf32>
    %147 = vector.extract_strided_slice %105 {offsets = [64, 0], sizes = [8, 144], strides = [1, 1]} : vector<128x144xf32> to vector<8x144xf32>
    %c8 = arith.constant 8 : index
    %c0_52 = arith.constant 0 : index
    %c0_53 = arith.constant 0 : index
    %148 = vector.load %arg8[%c8, %c0_52, %c0_53] : memref<16x144x128xf32, #tpu.memory_space<vmem>>, vector<1x144x128xf32>
    %149 = vector.shape_cast %148 : vector<1x144x128xf32> to vector<144x128xf32>
    %cst_54 = arith.constant dense<0.000000e+00> : vector<8x128xf32>
    %150 = tpu.matmul %147, %149, %cst_54 {dimension_numbers = #tpu.dot_dimension_numbers<[1], [0], [0], [1], [0, 0, 1, 1], [], []>} : vector<8x144xf32>, vector<144x128xf32>, vector<8x128xf32> -> vector<8x128xf32>
    %151 = arith.addf %146, %150 : vector<8x128xf32>
    %152 = vector.extract_strided_slice %105 {offsets = [72, 0], sizes = [8, 144], strides = [1, 1]} : vector<128x144xf32> to vector<8x144xf32>
    %c9 = arith.constant 9 : index
    %c0_55 = arith.constant 0 : index
    %c0_56 = arith.constant 0 : index
    %153 = vector.load %arg8[%c9, %c0_55, %c0_56] : memref<16x144x128xf32, #tpu.memory_space<vmem>>, vector<1x144x128xf32>
    %154 = vector.shape_cast %153 : vector<1x144x128xf32> to vector<144x128xf32>
    %cst_57 = arith.constant dense<0.000000e+00> : vector<8x128xf32>
    %155 = tpu.matmul %152, %154, %cst_57 {dimension_numbers = #tpu.dot_dimension_numbers<[1], [0], [0], [1], [0, 0, 1, 1], [], []>} : vector<8x144xf32>, vector<144x128xf32>, vector<8x128xf32> -> vector<8x128xf32>
    %156 = arith.addf %151, %155 : vector<8x128xf32>
    %157 = vector.extract_strided_slice %105 {offsets = [80, 0], sizes = [8, 144], strides = [1, 1]} : vector<128x144xf32> to vector<8x144xf32>
    %c10 = arith.constant 10 : index
    %c0_58 = arith.constant 0 : index
    %c0_59 = arith.constant 0 : index
    %158 = vector.load %arg8[%c10, %c0_58, %c0_59] : memref<16x144x128xf32, #tpu.memory_space<vmem>>, vector<1x144x128xf32>
    %159 = vector.shape_cast %158 : vector<1x144x128xf32> to vector<144x128xf32>
    %cst_60 = arith.constant dense<0.000000e+00> : vector<8x128xf32>
    %160 = tpu.matmul %157, %159, %cst_60 {dimension_numbers = #tpu.dot_dimension_numbers<[1], [0], [0], [1], [0, 0, 1, 1], [], []>} : vector<8x144xf32>, vector<144x128xf32>, vector<8x128xf32> -> vector<8x128xf32>
    %161 = arith.addf %156, %160 : vector<8x128xf32>
    %162 = vector.extract_strided_slice %105 {offsets = [88, 0], sizes = [8, 144], strides = [1, 1]} : vector<128x144xf32> to vector<8x144xf32>
    %c11 = arith.constant 11 : index
    %c0_61 = arith.constant 0 : index
    %c0_62 = arith.constant 0 : index
    %163 = vector.load %arg8[%c11, %c0_61, %c0_62] : memref<16x144x128xf32, #tpu.memory_space<vmem>>, vector<1x144x128xf32>
    %164 = vector.shape_cast %163 : vector<1x144x128xf32> to vector<144x128xf32>
    %cst_63 = arith.constant dense<0.000000e+00> : vector<8x128xf32>
    %165 = tpu.matmul %162, %164, %cst_63 {dimension_numbers = #tpu.dot_dimension_numbers<[1], [0], [0], [1], [0, 0, 1, 1], [], []>} : vector<8x144xf32>, vector<144x128xf32>, vector<8x128xf32> -> vector<8x128xf32>
    %166 = arith.addf %161, %165 : vector<8x128xf32>
    %167 = vector.extract_strided_slice %105 {offsets = [96, 0], sizes = [8, 144], strides = [1, 1]} : vector<128x144xf32> to vector<8x144xf32>
    %c12 = arith.constant 12 : index
    %c0_64 = arith.constant 0 : index
    %c0_65 = arith.constant 0 : index
    %168 = vector.load %arg8[%c12, %c0_64, %c0_65] : memref<16x144x128xf32, #tpu.memory_space<vmem>>, vector<1x144x128xf32>
    %169 = vector.shape_cast %168 : vector<1x144x128xf32> to vector<144x128xf32>
    %cst_66 = arith.constant dense<0.000000e+00> : vector<8x128xf32>
    %170 = tpu.matmul %167, %169, %cst_66 {dimension_numbers = #tpu.dot_dimension_numbers<[1], [0], [0], [1], [0, 0, 1, 1], [], []>} : vector<8x144xf32>, vector<144x128xf32>, vector<8x128xf32> -> vector<8x128xf32>
    %171 = arith.addf %166, %170 : vector<8x128xf32>
    %172 = vector.extract_strided_slice %105 {offsets = [104, 0], sizes = [8, 144], strides = [1, 1]} : vector<128x144xf32> to vector<8x144xf32>
    %c13 = arith.constant 13 : index
    %c0_67 = arith.constant 0 : index
    %c0_68 = arith.constant 0 : index
    %173 = vector.load %arg8[%c13, %c0_67, %c0_68] : memref<16x144x128xf32, #tpu.memory_space<vmem>>, vector<1x144x128xf32>
    %174 = vector.shape_cast %173 : vector<1x144x128xf32> to vector<144x128xf32>
    %cst_69 = arith.constant dense<0.000000e+00> : vector<8x128xf32>
    %175 = tpu.matmul %172, %174, %cst_69 {dimension_numbers = #tpu.dot_dimension_numbers<[1], [0], [0], [1], [0, 0, 1, 1], [], []>} : vector<8x144xf32>, vector<144x128xf32>, vector<8x128xf32> -> vector<8x128xf32>
    %176 = arith.addf %171, %175 : vector<8x128xf32>
    %177 = vector.extract_strided_slice %105 {offsets = [112, 0], sizes = [8, 144], strides = [1, 1]} : vector<128x144xf32> to vector<8x144xf32>
    %c14 = arith.constant 14 : index
    %c0_70 = arith.constant 0 : index
    %c0_71 = arith.constant 0 : index
    %178 = vector.load %arg8[%c14, %c0_70, %c0_71] : memref<16x144x128xf32, #tpu.memory_space<vmem>>, vector<1x144x128xf32>
    %179 = vector.shape_cast %178 : vector<1x144x128xf32> to vector<144x128xf32>
    %cst_72 = arith.constant dense<0.000000e+00> : vector<8x128xf32>
    %180 = tpu.matmul %177, %179, %cst_72 {dimension_numbers = #tpu.dot_dimension_numbers<[1], [0], [0], [1], [0, 0, 1, 1], [], []>} : vector<8x144xf32>, vector<144x128xf32>, vector<8x128xf32> -> vector<8x128xf32>
    %181 = arith.addf %176, %180 : vector<8x128xf32>
    %182 = vector.extract_strided_slice %105 {offsets = [120, 0], sizes = [8, 144], strides = [1, 1]} : vector<128x144xf32> to vector<8x144xf32>
    %c15 = arith.constant 15 : index
    %c0_73 = arith.constant 0 : index
    %c0_74 = arith.constant 0 : index
    %183 = vector.load %arg8[%c15, %c0_73, %c0_74] : memref<16x144x128xf32, #tpu.memory_space<vmem>>, vector<1x144x128xf32>
    %184 = vector.shape_cast %183 : vector<1x144x128xf32> to vector<144x128xf32>
    %cst_75 = arith.constant dense<0.000000e+00> : vector<8x128xf32>
    %185 = tpu.matmul %182, %184, %cst_75 {dimension_numbers = #tpu.dot_dimension_numbers<[1], [0], [0], [1], [0, 0, 1, 1], [], []>} : vector<8x144xf32>, vector<144x128xf32>, vector<8x128xf32> -> vector<8x128xf32>
    %186 = arith.addf %181, %185 : vector<8x128xf32>
    %c0_76 = arith.constant 0 : index
    %c0_77 = arith.constant 0 : index
    %187 = vector.load %arg9[%c0_76, %c0_77] : memref<1x128xf32, #tpu.memory_space<vmem>>, vector<1x128xf32>
    %188 = vector.broadcast %187 : vector<1x128xf32> to vector<8x128xf32>
    %189 = arith.addf %186, %188 : vector<8x128xf32>
    %cst_78 = arith.constant 0.000000e+00 : f32
    %190 = vector.broadcast %cst_78 : f32 to vector<8x128xf32>
    %191 = arith.maximumf %189, %190 : vector<8x128xf32>
    %c0_79 = arith.constant 0 : index
    %c0_80 = arith.constant 0 : index
    %192 = vector.load %arg10[%c0_79, %c0_80] : memref<128x64xf32, #tpu.memory_space<vmem>>, vector<128x64xf32>
    %cst_81 = arith.constant dense<0.000000e+00> : vector<8x64xf32>
    %193 = tpu.matmul %191, %192, %cst_81 {dimension_numbers = #tpu.dot_dimension_numbers<[1], [0], [0], [1], [0, 0, 1, 1], [], []>} : vector<8x128xf32>, vector<128x64xf32>, vector<8x64xf32> -> vector<8x64xf32>
    %c0_82 = arith.constant 0 : index
    %c0_83 = arith.constant 0 : index
    %194 = vector.load %arg11[%c0_82, %c0_83] : memref<1x64xf32, #tpu.memory_space<vmem>>, vector<1x64xf32>
    %195 = vector.broadcast %194 : vector<1x64xf32> to vector<8x64xf32>
    %196 = arith.addf %193, %195 : vector<8x64xf32>
    %cst_84 = arith.constant 0.000000e+00 : f32
    %197 = vector.broadcast %cst_84 : f32 to vector<8x64xf32>
    %198 = arith.maximumf %196, %197 : vector<8x64xf32>
    %c0_85 = arith.constant 0 : index
    %c0_86 = arith.constant 0 : index
    %199 = vector.load %arg12[%c0_85, %c0_86] : memref<64x128xf32, #tpu.memory_space<vmem>>, vector<64x128xf32>
    %cst_87 = arith.constant dense<0.000000e+00> : vector<8x128xf32>
    %200 = tpu.matmul %198, %199, %cst_87 {dimension_numbers = #tpu.dot_dimension_numbers<[1], [0], [0], [1], [0, 0, 1, 1], [], []>} : vector<8x64xf32>, vector<64x128xf32>, vector<8x128xf32> -> vector<8x128xf32>
    %c0_88 = arith.constant 0 : index
    %c0_89 = arith.constant 0 : index
    %201 = vector.load %arg13[%c0_88, %c0_89] : memref<1x128xf32, #tpu.memory_space<vmem>>, vector<1x128xf32>
    %202 = vector.broadcast %201 : vector<1x128xf32> to vector<8x128xf32>
    %203 = arith.addf %200, %202 : vector<8x128xf32>
    %c0_90 = arith.constant 0 : index
    %c0_91 = arith.constant 0 : index
    %c0_92 = arith.constant 0 : index
    %204 = vector.load %arg14[%c0_90, %c0_91, %c0_92] : memref<1x8x128xf32, #tpu.memory_space<vmem>>, vector<1x8x128xf32>
    %205 = vector.shape_cast %204 : vector<1x8x128xf32> to vector<8x128xf32>
    %206 = vector.shape_cast %203 : vector<8x128xf32> to vector<1x8x128xf32>
    tpu.vector_store %arg14[%c0_90, %c0_91, %c0_92], %206 {strides = array<i32>} : memref<1x8x128xf32, #tpu.memory_space<vmem>>, vector<1x8x128xf32>,
    return
  }
  func.func @transform_0(%arg0: i32) -> (i32, i32, i32) {
    %c0_i32 = arith.constant 0 : i32
    %c0_i32_0 = arith.constant 0 : i32
    %c0_i32_1 = arith.constant 0 : i32
    return %arg0, %c0_i32, %c0_i32_0 : i32, i32, i32
  }
  func.func @transform_1(%arg0: i32) -> (i32, i32) {
    %c0_i32 = arith.constant 0 : i32
    %c0_i32_0 = arith.constant 0 : i32
    %c0_i32_1 = arith.constant 0 : i32
    return %c0_i32, %c0_i32_0 : i32, i32
  }
  func.func @transform_2(%arg0: i32) -> (i32, i32) {
    %c0_i32 = arith.constant 0 : i32
    %c0_i32_0 = arith.constant 0 : i32
    %c0_i32_1 = arith.constant 0 : i32
    return %c0_i32, %c0_i32_0 : i32, i32
  }
  func.func @transform_3(%arg0: i32) -> (i32, i32) {
    %c0_i32 = arith.constant 0 : i32
    %c0_i32_0 = arith.constant 0 : i32
    %c0_i32_1 = arith.constant 0 : i32
    return %c0_i32, %c0_i32_0 : i32, i32
  }
  func.func @transform_4(%arg0: i32) -> (i32, i32) {
    %c0_i32 = arith.constant 0 : i32
    %c0_i32_0 = arith.constant 0 : i32
    %c0_i32_1 = arith.constant 0 : i32
    return %c0_i32, %c0_i32_0 : i32, i32
  }
  func.func @transform_5(%arg0: i32) -> (i32, i32) {
    %c0_i32 = arith.constant 0 : i32
    %c0_i32_0 = arith.constant 0 : i32
    %c0_i32_1 = arith.constant 0 : i32
    return %c0_i32, %c0_i32_0 : i32, i32
  }
  func.func @transform_6(%arg0: i32) -> (i32, i32) {
    %c0_i32 = arith.constant 0 : i32
    %c0_i32_0 = arith.constant 0 : i32
    %c0_i32_1 = arith.constant 0 : i32
    return %c0_i32, %c0_i32_0 : i32, i32
  }
  func.func @transform_7(%arg0: i32) -> (i32, i32, i32) {
    %c0_i32 = arith.constant 0 : i32
    %c0_i32_0 = arith.constant 0 : i32
    %c0_i32_1 = arith.constant 0 : i32
    %c0_i32_2 = arith.constant 0 : i32
    return %c0_i32, %c0_i32_0, %c0_i32_1 : i32, i32, i32
  }
  func.func @transform_8(%arg0: i32) -> (i32, i32) {
    %c0_i32 = arith.constant 0 : i32
    %c0_i32_0 = arith.constant 0 : i32
    %c0_i32_1 = arith.constant 0 : i32
    return %c0_i32, %c0_i32_0 : i32, i32
  }
  func.func @transform_9(%arg0: i32) -> (i32, i32) {
    %c0_i32 = arith.constant 0 : i32
    %c0_i32_0 = arith.constant 0 : i32
    %c0_i32_1 = arith.constant 0 : i32
    return %c0_i32, %c0_i32_0 : i32, i32
  }
  func.func @transform_10(%arg0: i32) -> (i32, i32) {
    %c0_i32 = arith.constant 0 : i32
    %c0_i32_0 = arith.constant 0 : i32
    %c0_i32_1 = arith.constant 0 : i32
    return %c0_i32, %c0_i32_0 : i32, i32
  }
  func.func @transform_11(%arg0: i32) -> (i32, i32) {
    %c0_i32 = arith.constant 0 : i32
    %c0_i32_0 = arith.constant 0 : i32
    %c0_i32_1 = arith.constant 0 : i32
    return %c0_i32, %c0_i32_0 : i32, i32
  }
  func.func @transform_12(%arg0: i32) -> (i32, i32) {
    %c0_i32 = arith.constant 0 : i32
    %c0_i32_0 = arith.constant 0 : i32
    %c0_i32_1 = arith.constant 0 : i32
    return %c0_i32, %c0_i32_0 : i32, i32
  }
  func.func @transform_13(%arg0: i32) -> (i32, i32, i32) {
    %c0_i32 = arith.constant 0 : i32
    %c0_i32_0 = arith.constant 0 : i32
    %c0_i32_1 = arith.constant 0 : i32
    return %arg0, %c0_i32, %c0_i32_0 : i32, i32, i32
  }
}

</mosaic_0001>

<llo_original>
// kernel: cnn_forward_prepared.1
$region0: #{cnn_forward_prepared.1}
  #allocation0 [shape = 'u32[]', space=smem, size = 0x4, offset = 0x4, fixed_abs, tag = 'smem constant byte address 0x4 - core index']
  #allocation1 [shape = 'u32[72,128]{1,0:T(1,128)}', space=vmem, size = 0x9000, scoped, tag = 'internal scratch']
  %s0 = inlined_call_operand.vmem [shape: f32[1,1,7168], index: 0, kind: input, shape index: {}]
  %s1 = inlined_call_operand.vmem [shape: f32[8,9], index: 1, kind: input, shape index: {}]
  %s2 = inlined_call_operand.vmem [shape: f32[8,1], index: 2, kind: input, shape index: {}]
  %s3 = inlined_call_operand.vmem [shape: f32[16,72], index: 3, kind: input, shape index: {}]
  %s4 = inlined_call_operand.vmem [shape: f32[16,1], index: 4, kind: input, shape index: {}]
  %s5 = inlined_call_operand.vmem [shape: f32[643,144], index: 5, kind: input, shape index: {}]
  %s6 = inlined_call_operand.vmem [shape: f32[128,128], index: 6, kind: input, shape index: {}]
  %s7 = inlined_call_operand.vmem [shape: f32[16,144,128], index: 7, kind: input, shape index: {}]
  %s8 = inlined_call_operand.vmem [shape: f32[1,128], index: 8, kind: input, shape index: {}]
  %s9 = inlined_call_operand.vmem [shape: f32[128,64], index: 9, kind: input, shape index: {}]
  %s10 = inlined_call_operand.vmem [shape: f32[1,64], index: 10, kind: input, shape index: {}]
  %s11 = inlined_call_operand.vmem [shape: f32[64,128], index: 11, kind: input, shape index: {}]
  %s12 = inlined_call_operand.vmem [shape: f32[1,128], index: 12, kind: input, shape index: {}]
  %s13 = inlined_call_operand.vmem [shape: f32[1,8,128], index: 13, kind: output, shape index: {}]
  %s14 = sld [smem:[#allocation0]]
  $region62: #{cnn_forward_prepared.1} parent=0
    _
  %s16 = ssub.s32 1, %s14
  %s17 = scalar_select 0, %s16, %s14
  // Predicated region
  $region2: #{cnn_forward_prepared.1} parent=0 // pred_check
    _
  $region3: #{cnn_forward_prepared.1} parent=0 // pred_check_branch
    %19 = sbr.rel (0) target = $region5
  $region4: #{cnn_forward_prepared.1} parent=0 // pred_region
    _
  $region5: #{cnn_forward_prepared.1} parent=0 // pred_fallthru
    _
  // Predicated region
  $region6: #{cnn_forward_prepared.1} parent=0 // pred_check
    _
  $region7: #{cnn_forward_prepared.1} parent=0 // pred_check_branch
    %21 = sbr.rel (0) target = $region9
  $region8: #{cnn_forward_prepared.1} parent=0 // pred_region
    _
  $region9: #{cnn_forward_prepared.1} parent=0 // pred_fallthru
    _
  // Predicated region
  $region10: #{cnn_forward_prepared.1} parent=0 // pred_check
    _
  $region11: #{cnn_forward_prepared.1} parent=0 // pred_check_branch
    %23 = sbr.rel (0) target = $region13
  $region12: #{cnn_forward_prepared.1} parent=0 // pred_region
    _
  $region13: #{cnn_forward_prepared.1} parent=0 // pred_fallthru
    _
  // Predicated region
  $region14: #{cnn_forward_prepared.1} parent=0 // pred_check
    _
  $region15: #{cnn_forward_prepared.1} parent=0 // pred_check_branch
    %25 = sbr.rel (0) target = $region17
  $region16: #{cnn_forward_prepared.1} parent=0 // pred_region
    _
  $region17: #{cnn_forward_prepared.1} parent=0 // pred_fallthru
    _
  // Predicated region
  $region18: #{cnn_forward_prepared.1} parent=0 // pred_check
    _
  $region19: #{cnn_forward_prepared.1} parent=0 // pred_check_branch
    %27 = sbr.rel (0) target = $region21
  $region20: #{cnn_forward_prepared.1} parent=0 // pred_region
    _
  $region21: #{cnn_forward_prepared.1} parent=0 // pred_fallthru
    _
  // Predicated region
  $region22: #{cnn_forward_prepared.1} parent=0 // pred_check
    _
  $region23: #{cnn_forward_prepared.1} parent=0 // pred_check_branch
    %29 = sbr.rel (0) target = $region25
  $region24: #{cnn_forward_prepared.1} parent=0 // pred_region
    _
  $region25: #{cnn_forward_prepared.1} parent=0 // pred_fallthru
    _
  // Predicated region
  $region26: #{cnn_forward_prepared.1} parent=0 // pred_check
    _
  $region27: #{cnn_forward_prepared.1} parent=0 // pred_check_branch
    %31 = sbr.rel (0) target = $region29
  $region28: #{cnn_forward_prepared.1} parent=0 // pred_region
    _
  $region29: #{cnn_forward_prepared.1} parent=0 // pred_fallthru
    _
  // Predicated region
  $region30: #{cnn_forward_prepared.1} parent=0 // pred_check
    _
  $region31: #{cnn_forward_prepared.1} parent=0 // pred_check_branch
    %33 = sbr.rel (0) target = $region33
  $region32: #{cnn_forward_prepared.1} parent=0 // pred_region
    _
  $region33: #{cnn_forward_prepared.1} parent=0 // pred_fallthru
    _
  // Predicated region
  $region34: #{cnn_forward_prepared.1} parent=0 // pred_check
    _
  $region35: #{cnn_forward_prepared.1} parent=0 // pred_check_branch
    %35 = sbr.rel (0) target = $region37
  $region36: #{cnn_forward_prepared.1} parent=0 // pred_region
    _
  $region37: #{cnn_forward_prepared.1} parent=0 // pred_fallthru
    _
  // Predicated region
  $region38: #{cnn_forward_prepared.1} parent=0 // pred_check
    _
  $region39: #{cnn_forward_prepared.1} parent=0 // pred_check_branch
    %37 = sbr.rel (0) target = $region41
  $region40: #{cnn_forward_prepared.1} parent=0 // pred_region
    _
  $region41: #{cnn_forward_prepared.1} parent=0 // pred_fallthru
    _
  // Predicated region
  $region42: #{cnn_forward_prepared.1} parent=0 // pred_check
    _
  $region43: #{cnn_forward_prepared.1} parent=0 // pred_check_branch
    %39 = sbr.rel (0) target = $region45
  $region44: #{cnn_forward_prepared.1} parent=0 // pred_region
    _
  $region45: #{cnn_forward_prepared.1} parent=0 // pred_fallthru
    _
  // Predicated region
  $region46: #{cnn_forward_prepared.1} parent=0 // pred_check
    _
  $region47: #{cnn_forward_prepared.1} parent=0 // pred_check_branch
    %41 = sbr.rel (0) target = $region49
  $region48: #{cnn_forward_prepared.1} parent=0 // pred_region
    _
  $region49: #{cnn_forward_prepared.1} parent=0 // pred_fallthru
    _
  // Predicated region
  $region50: #{cnn_forward_prepared.1} parent=0 // pred_check
    _
  $region51: #{cnn_forward_prepared.1} parent=0 // pred_check_branch
    %43 = sbr.rel (0) target = $region53
  $region52: #{cnn_forward_prepared.1} parent=0 // pred_region
    _
  $region53: #{cnn_forward_prepared.1} parent=0 // pred_fallthru
    _
  %v44 = vld [vmem:[%s0] sm:$0xff]
  %v45 = vld [vmem:[%s0 + $0x8] sm:$0xff]
  %v46 = vld [vmem:[%s0 + $0x10] sm:$0xff]
  %v47 = vld [vmem:[%s0 + $0x18] sm:$0xff]
  %v48 = vld [vmem:[%s0 + $0x20] sm:$0xff]
  %v49 = vld [vmem:[%s0 + $0x28] sm:$0xff]
  %v50 = vld [vmem:[%s0 + $0x30] sm:$0xff]
  %v51 = vld [vmem:[%s1] sm:$0xff]
  %53 = vset.pattern.permute.xlu0 0
  %54 = vperm.xlu0 %53, %v51
  %v55 = vpop.permute.xlu0 %54
  %v64 = vperm.slane %v44, 0
  %v65 = vperm.slane %v44, 1
  %v66 = vperm.slane %v44, 2
  %v67 = vperm.slane %v44, 3
  %v68 = vperm.slane %v44, 4
  %v69 = vperm.slane %v44, 5
  %v70 = vperm.slane %v44, 6
  %v71 = vperm.slane %v44, 7
  %v72 = vperm.slane %v45, 0
  %v73 = vperm.slane %v45, 1
  %v74 = vperm.slane %v45, 2
  %v75 = vperm.slane %v45, 3
  %v76 = vperm.slane %v45, 4
  %v77 = vperm.slane %v45, 5
  %v78 = vperm.slane %v45, 6
  %v79 = vperm.slane %v45, 7
  %v80 = vperm.slane %v46, 0
  %v81 = vperm.slane %v46, 1
  %v82 = vperm.slane %v46, 2
  %v83 = vperm.slane %v46, 3
  %v84 = vperm.slane %v46, 4
  %v85 = vperm.slane %v46, 5
  %v86 = vperm.slane %v46, 6
  %v87 = vperm.slane %v46, 7
  %v88 = vperm.slane %v47, 0
  %v89 = vperm.slane %v47, 1
  %v90 = vperm.slane %v47, 2
  %v91 = vperm.slane %v47, 3
  %v92 = vperm.slane %v47, 4
  %v93 = vperm.slane %v47, 5
  %v94 = vperm.slane %v47, 6
  %v95 = vperm.slane %v47, 7
  %v96 = vperm.slane %v48, 0
  %v97 = vperm.slane %v48, 1
  %v98 = vperm.slane %v48, 2
  %v99 = vperm.slane %v48, 3
  %v100 = vperm.slane %v48, 4
  %v101 = vperm.slane %v48, 5
  %v102 = vperm.slane %v48, 6
  %v103 = vperm.slane %v48, 7
  %v104 = vperm.slane %v49, 0
  %v105 = vperm.slane %v49, 1
  %v106 = vperm.slane %v49, 2
  %v107 = vperm.slane %v49, 3
  %v108 = vperm.slane %v49, 4
  %v109 = vperm.slane %v49, 5
  %v110 = vperm.slane %v49, 6
  %v111 = vperm.slane %v49, 7
  %v112 = vperm.slane %v50, 0
  %v113 = vperm.slane %v50, 1
  %v114 = vperm.slane %v50, 2
  %v115 = vperm.slane %v50, 3
  %v116 = vperm.slane %v50, 4
  %v117 = vperm.slane %v50, 5
  %v118 = vperm.slane %v50, 6
  %v174 = vmul.f32 %v55, %v64
  %v175 = vmul.f32 %v55, %v65
  %v176 = vmul.f32 %v55, %v66
  %v177 = vmul.f32 %v55, %v67
  %v178 = vmul.f32 %v55, %v68
  %v179 = vmul.f32 %v55, %v69
  %v180 = vmul.f32 %v55, %v70
  %v181 = vmul.f32 %v55, %v71
  %v182 = vmul.f32 %v55, %v72
  %v183 = vmul.f32 %v55, %v73
  %v184 = vmul.f32 %v55, %v74
  %v185 = vmul.f32 %v55, %v75
  %v186 = vmul.f32 %v55, %v76
  %v187 = vmul.f32 %v55, %v77
  %v188 = vmul.f32 %v55, %v78
  %v189 = vmul.f32 %v55, %v79
  %v190 = vmul.f32 %v55, %v80
  %v191 = vmul.f32 %v55, %v81
  %v192 = vmul.f32 %v55, %v82
  %v193 = vmul.f32 %v55, %v83
  %v194 = vmul.f32 %v55, %v84
  %v195 = vmul.f32 %v55, %v85
  %v196 = vmul.f32 %v55, %v86
  %v197 = vmul.f32 %v55, %v87
  %v198 = vmul.f32 %v55, %v88
  %v199 = vmul.f32 %v55, %v89
  %v200 = vmul.f32 %v55, %v90
  %v201 = vmul.f32 %v55, %v91
  %v202 = vmul.f32 %v55, %v92
  %v203 = vmul.f32 %v55, %v93
  %v204 = vmul.f32 %v55, %v94
  %v205 = vmul.f32 %v55, %v95
  %v206 = vmul.f32 %v55, %v96
  %v207 = vmul.f32 %v55, %v97
  %v208 = vmul.f32 %v55, %v98
  %v209 = vmul.f32 %v55, %v99
  %v210 = vmul.f32 %v55, %v100
  %v211 = vmul.f32 %v55, %v101
  %v212 = vmul.f32 %v55, %v102
  %v213 = vmul.f32 %v55, %v103
  %v214 = vmul.f32 %v55, %v104
  %v215 = vmul.f32 %v55, %v105
  %v216 = vmul.f32 %v55, %v106
  %v217 = vmul.f32 %v55, %v107
  %v218 = vmul.f32 %v55, %v108
  %v219 = vmul.f32 %v55, %v109
  %v220 = vmul.f32 %v55, %v110
  %v221 = vmul.f32 %v55, %v111
  %v222 = vmul.f32 %v55, %v112
  %v223 = vmul.f32 %v55, %v113
  %v224 = vmul.f32 %v55, %v114
  %v225 = vmul.f32 %v55, %v115
  %v226 = vmul.f32 %v55, %v116
  %v227 = vmul.f32 %v55, %v117
  %v228 = vmul.f32 %v55, %v118
  %v229 = vadd.f32 %v174, 0.0
  %v230 = vadd.f32 %v175, 0.0
  %v231 = vadd.f32 %v176, 0.0
  %v232 = vadd.f32 %v177, 0.0
  %v233 = vadd.f32 %v178, 0.0
  %v234 = vadd.f32 %v179, 0.0
  %v235 = vadd.f32 %v180, 0.0
  %v236 = vadd.f32 %v181, 0.0
  %v237 = vadd.f32 %v182, 0.0
  %v238 = vadd.f32 %v183, 0.0
  %v239 = vadd.f32 %v184, 0.0
  %v240 = vadd.f32 %v185, 0.0
  %v241 = vadd.f32 %v186, 0.0
  %v242 = vadd.f32 %v187, 0.0
  %v243 = vadd.f32 %v188, 0.0
  %v244 = vadd.f32 %v189, 0.0
  %v245 = vadd.f32 %v190, 0.0
  %v246 = vadd.f32 %v191, 0.0
  %v247 = vadd.f32 %v192, 0.0
  %v248 = vadd.f32 %v193, 0.0
  %v249 = vadd.f32 %v194, 0.0
  %v250 = vadd.f32 %v195, 0.0
  %v251 = vadd.f32 %v196, 0.0
  %v252 = vadd.f32 %v197, 0.0
  %v253 = vadd.f32 %v198, 0.0
  %v254 = vadd.f32 %v199, 0.0
  %v255 = vadd.f32 %v200, 0.0
  %v256 = vadd.f32 %v201, 0.0
  %v257 = vadd.f32 %v202, 0.0
  %v258 = vadd.f32 %v203, 0.0
  %v259 = vadd.f32 %v204, 0.0
  %v260 = vadd.f32 %v205, 0.0
  %v261 = vadd.f32 %v206, 0.0
  %v262 = vadd.f32 %v207, 0.0
  %v263 = vadd.f32 %v208, 0.0
  %v264 = vadd.f32 %v209, 0.0
  %v265 = vadd.f32 %v210, 0.0
  %v266 = vadd.f32 %v211, 0.0
  %v267 = vadd.f32 %v212, 0.0
  %v268 = vadd.f32 %v213, 0.0
  %v269 = vadd.f32 %v214, 0.0
  %v270 = vadd.f32 %v215, 0.0
  %v271 = vadd.f32 %v216, 0.0
  %v272 = vadd.f32 %v217, 0.0
  %v273 = vadd.f32 %v218, 0.0
  %v274 = vadd.f32 %v219, 0.0
  %v275 = vadd.f32 %v220, 0.0
  %v276 = vadd.f32 %v221, 0.0
  %v277 = vadd.f32 %v222, 0.0
  %v278 = vadd.f32 %v223, 0.0
  %v279 = vadd.f32 %v224, 0.0
  %v280 = vadd.f32 %v225, 0.0
  %v281 = vadd.f32 %v226, 0.0
  %v282 = vadd.f32 %v227, 0.0
  %v283 = vadd.f32 %v228, 0.0
  %284 = vset.pattern.permute.xlu0 1
  %285 = vperm.xlu0 %284, %v51
  %v286 = vpop.permute.xlu0 %285
  %v288 = vperm.slane %v50, 7
  %v290 = vmul.f32 %v286, %v64
  %v291 = vmul.f32 %v286, %v65
  %v292 = vmul.f32 %v286, %v66
  %v293 = vmul.f32 %v286, %v67
  %v294 = vmul.f32 %v286, %v68
  %v295 = vmul.f32 %v286, %v69
  %v296 = vmul.f32 %v286, %v70
  %v297 = vmul.f32 %v286, %v71
  %v298 = vmul.f32 %v286, %v72
  %v299 = vmul.f32 %v286, %v73
  %v300 = vmul.f32 %v286, %v74
  %v301 = vmul.f32 %v286, %v75
  %v302 = vmul.f32 %v286, %v76
  %v303 = vmul.f32 %v286, %v77
  %v304 = vmul.f32 %v286, %v78
  %v305 = vmul.f32 %v286, %v79
  %v306 = vmul.f32 %v286, %v80
  %v307 = vmul.f32 %v286, %v81
  %v308 = vmul.f32 %v286, %v82
  %v309 = vmul.f32 %v286, %v83
  %v310 = vmul.f32 %v286, %v84
  %v311 = vmul.f32 %v286, %v85
  %v312 = vmul.f32 %v286, %v86
  %v313 = vmul.f32 %v286, %v87
  %v314 = vmul.f32 %v286, %v88
  %v315 = vmul.f32 %v286, %v89
  %v316 = vmul.f32 %v286, %v90
  %v317 = vmul.f32 %v286, %v91
  %v318 = vmul.f32 %v286, %v92
  %v319 = vmul.f32 %v286, %v93
  %v320 = vmul.f32 %v286, %v94
  %v321 = vmul.f32 %v286, %v95
  %v322 = vmul.f32 %v286, %v96
  %v323 = vmul.f32 %v286, %v97
  %v324 = vmul.f32 %v286, %v98
  %v325 = vmul.f32 %v286, %v99
  %v326 = vmul.f32 %v286, %v100
  %v327 = vmul.f32 %v286, %v101
  %v328 = vmul.f32 %v286, %v102
  %v329 = vmul.f32 %v286, %v103
  %v330 = vmul.f32 %v286, %v104
  %v331 = vmul.f32 %v286, %v105
  %v332 = vmul.f32 %v286, %v106
  %v333 = vmul.f32 %v286, %v107
  %v334 = vmul.f32 %v286, %v108
  %v335 = vmul.f32 %v286, %v109
  %v336 = vmul.f32 %v286, %v110
  %v337 = vmul.f32 %v286, %v111
  %v338 = vmul.f32 %v286, %v112
  %v339 = vmul.f32 %v286, %v113
  %v340 = vmul.f32 %v286, %v114
  %v341 = vmul.f32 %v286, %v115
  %v342 = vmul.f32 %v286, %v116
  %v343 = vmul.f32 %v286, %v117
  %v344 = vmul.f32 %v286, %v118
  %v345 = vmul.f32 %v286, %v288
  %402 = vrot.lane.b32.xlu0 %v290, 127
  %v403 = vpop.permute.xlu0 %402
  %404 = vrot.lane.b32.xlu0 %v291, 127
  %v405 = vpop.permute.xlu0 %404
  %406 = vrot.lane.b32.xlu0 %v292, 127
  %v407 = vpop.permute.xlu0 %406
  %408 = vrot.lane.b32.xlu0 %v293, 127
  %v409 = vpop.permute.xlu0 %408
  %410 = vrot.lane.b32.xlu0 %v294, 127
  %v411 = vpop.permute.xlu0 %410
  %412 = vrot.lane.b32.xlu0 %v295, 127
  %v413 = vpop.permute.xlu0 %412
  %414 = vrot.lane.b32.xlu0 %v296, 127
  %v415 = vpop.permute.xlu0 %414
  %416 = vrot.lane.b32.xlu0 %v297, 127
  %v417 = vpop.permute.xlu0 %416
  %418 = vrot.lane.b32.xlu0 %v298, 127
  %v419 = vpop.permute.xlu0 %418
  %420 = vrot.lane.b32.xlu0 %v299, 127
  %v421 = vpop.permute.xlu0 %420
  %422 = vrot.lane.b32.xlu0 %v300, 127
  %v423 = vpop.permute.xlu0 %422
  %424 = vrot.lane.b32.xlu0 %v301, 127
  %v425 = vpop.permute.xlu0 %424
  %426 = vrot.lane.b32.xlu0 %v302, 127
  %v427 = vpop.permute.xlu0 %426
  %428 = vrot.lane.b32.xlu0 %v303, 127
  %v429 = vpop.permute.xlu0 %428
  %430 = vrot.lane.b32.xlu0 %v304, 127
  %v431 = vpop.permute.xlu0 %430
  %432 = vrot.lane.b32.xlu0 %v305, 127
  %v433 = vpop.permute.xlu0 %432
  %434 = vrot.lane.b32.xlu0 %v306, 127
  %v435 = vpop.permute.xlu0 %434
  %436 = vrot.lane.b32.xlu0 %v307, 127
  %v437 = vpop.permute.xlu0 %436
  %438 = vrot.lane.b32.xlu0 %v308, 127
  %v439 = vpop.permute.xlu0 %438
  %440 = vrot.lane.b32.xlu0 %v309, 127
  %v441 = vpop.permute.xlu0 %440
  %442 = vrot.lane.b32.xlu0 %v310, 127
  %v443 = vpop.permute.xlu0 %442
  %444 = vrot.lane.b32.xlu0 %v311, 127
  %v445 = vpop.permute.xlu0 %444
  %446 = vrot.lane.b32.xlu0 %v312, 127
  %v447 = vpop.permute.xlu0 %446
  %448 = vrot.lane.b32.xlu0 %v313, 127
  %v449 = vpop.permute.xlu0 %448
  %450 = vrot.lane.b32.xlu0 %v314, 127
  %v451 = vpop.permute.xlu0 %450
  %452 = vrot.lane.b32.xlu0 %v315, 127
  %v453 = vpop.permute.xlu0 %452
  %454 = vrot.lane.b32.xlu0 %v316, 127
  %v455 = vpop.permute.xlu0 %454
  %456 = vrot.lane.b32.xlu0 %v317, 127
  %v457 = vpop.permute.xlu0 %456
  %458 = vrot.lane.b32.xlu0 %v318, 127
  %v459 = vpop.permute.xlu0 %458
  %460 = vrot.lane.b32.xlu0 %v319, 127
  %v461 = vpop.permute.xlu0 %460
  %462 = vrot.lane.b32.xlu0 %v320, 127
  %v463 = vpop.permute.xlu0 %462
  %464 = vrot.lane.b32.xlu0 %v321, 127
  %v465 = vpop.permute.xlu0 %464
  %466 = vrot.lane.b32.xlu0 %v322, 127
  %v467 = vpop.permute.xlu0 %466
  %468 = vrot.lane.b32.xlu0 %v323, 127
  %v469 = vpop.permute.xlu0 %468
  %470 = vrot.lane.b32.xlu0 %v324, 127
  %v471 = vpop.permute.xlu0 %470
  %472 = vrot.lane.b32.xlu0 %v325, 127
  %v473 = vpop.permute.xlu0 %472
  %474 = vrot.lane.b32.xlu0 %v326, 127
  %v475 = vpop.permute.xlu0 %474
  %476 = vrot.lane.b32.xlu0 %v327, 127
  %v477 = vpop.permute.xlu0 %476
  %478 = vrot.lane.b32.xlu0 %v328, 127
  %v479 = vpop.permute.xlu0 %478
  %480 = vrot.lane.b32.xlu0 %v329, 127
  %v481 = vpop.permute.xlu0 %480
  %482 = vrot.lane.b32.xlu0 %v330, 127
  %v483 = vpop.permute.xlu0 %482
  %484 = vrot.lane.b32.xlu0 %v331, 127
  %v485 = vpop.permute.xlu0 %484
  %486 = vrot.lane.b32.xlu0 %v332, 127
  %v487 = vpop.permute.xlu0 %486
  %488 = vrot.lane.b32.xlu0 %v333, 127
  %v489 = vpop.permute.xlu0 %488
  %490 = vrot.lane.b32.xlu0 %v334, 127
  %v491 = vpop.permute.xlu0 %490
  %492 = vrot.lane.b32.xlu0 %v335, 127
  %v493 = vpop.permute.xlu0 %492
  %494 = vrot.lane.b32.xlu0 %v336, 127
  %v495 = vpop.permute.xlu0 %494
  %496 = vrot.lane.b32.xlu0 %v337, 127
  %v497 = vpop.permute.xlu0 %496
  %498 = vrot.lane.b32.xlu0 %v338, 127
  %v499 = vpop.permute.xlu0 %498
  %500 = vrot.lane.b32.xlu0 %v339, 127
  %v501 = vpop.permute.xlu0 %500
  %502 = vrot.lane.b32.xlu0 %v340, 127
  %v503 = vpop.permute.xlu0 %502
  %504 = vrot.lane.b32.xlu0 %v341, 127
  %v505 = vpop.permute.xlu0 %504
  %506 = vrot.lane.b32.xlu0 %v342, 127
  %v507 = vpop.permute.xlu0 %506
  %508 = vrot.lane.b32.xlu0 %v343, 127
  %v509 = vpop.permute.xlu0 %508
  %510 = vrot.lane.b32.xlu0 %v344, 127
  %v511 = vpop.permute.xlu0 %510
  %512 = vrot.lane.b32.xlu0 %v345, 127
  %v513 = vpop.permute.xlu0 %512
  %vm514 = vcmask 1039360
  %v515 = vsel %vm514, %v403, %v405
  %v516 = vsel %vm514, %v405, %v407
  %v517 = vsel %vm514, %v407, %v409
  %v518 = vsel %vm514, %v409, %v411
  %v519 = vsel %vm514, %v411, %v413
  %v520 = vsel %vm514, %v413, %v415
  %v521 = vsel %vm514, %v415, %v417
  %v522 = vsel %vm514, %v417, %v419
  %v523 = vsel %vm514, %v419, %v421
  %v524 = vsel %vm514, %v421, %v423
  %v525 = vsel %vm514, %v423, %v425
  %v526 = vsel %vm514, %v425, %v427
  %v527 = vsel %vm514, %v427, %v429
  %v528 = vsel %vm514, %v429, %v431
  %v529 = vsel %vm514, %v431, %v433
  %v530 = vsel %vm514, %v433, %v435
  %v531 = vsel %vm514, %v435, %v437
  %v532 = vsel %vm514, %v437, %v439
  %v533 = vsel %vm514, %v439, %v441
  %v534 = vsel %vm514, %v441, %v443
  %v535 = vsel %vm514, %v443, %v445
  %v536 = vsel %vm514, %v445, %v447
  %v537 = vsel %vm514, %v447, %v449
  %v538 = vsel %vm514, %v449, %v451
  %v539 = vsel %vm514, %v451, %v453
  %v540 = vsel %vm514, %v453, %v455
  %v541 = vsel %vm514, %v455, %v457
  %v542 = vsel %vm514, %v457, %v459
  %v543 = vsel %vm514, %v459, %v461
  %v544 = vsel %vm514, %v461, %v463
  %v545 = vsel %vm514, %v463, %v465
  %v546 = vsel %vm514, %v465, %v467
  %v547 = vsel %vm514, %v467, %v469
  %v548 = vsel %vm514, %v469, %v471
  %v549 = vsel %vm514, %v471, %v473
  %v550 = vsel %vm514, %v473, %v475
  %v551 = vsel %vm514, %v475, %v477
  %v552 = vsel %vm514, %v477, %v479
  %v553 = vsel %vm514, %v479, %v481
  %v554 = vsel %vm514, %v481, %v483
  %v555 = vsel %vm514, %v483, %v485
  %v556 = vsel %vm514, %v485, %v487
  %v557 = vsel %vm514, %v487, %v489
  %v558 = vsel %vm514, %v489, %v491
  %v559 = vsel %vm514, %v491, %v493
  %v560 = vsel %vm514, %v493, %v495
  %v561 = vsel %vm514, %v495, %v497
  %v562 = vsel %vm514, %v497, %v499
  %v563 = vsel %vm514, %v499, %v501
  %v564 = vsel %vm514, %v501, %v503
  %v565 = vsel %vm514, %v503, %v505
  %v566 = vsel %vm514, %v505, %v507
  %v567 = vsel %vm514, %v507, %v509
  %v568 = vsel %vm514, %v509, %v511
  %v569 = vsel %vm514, %v511, %v513
  %v625 = vadd.f32 %v229, %v515
  %v626 = vadd.f32 %v230, %v516
  %v627 = vadd.f32 %v231, %v517
  %v628 = vadd.f32 %v232, %v518
  %v629 = vadd.f32 %v233, %v519
  %v630 = vadd.f32 %v234, %v520
  %v631 = vadd.f32 %v235, %v521
  %v632 = vadd.f32 %v236, %v522
  %v633 = vadd.f32 %v237, %v523
  %v634 = vadd.f32 %v238, %v524
  %v635 = vadd.f32 %v239, %v525
  %v636 = vadd.f32 %v240, %v526
  %v637 = vadd.f32 %v241, %v527
  %v638 = vadd.f32 %v242, %v528
  %v639 = vadd.f32 %v243, %v529
  %v640 = vadd.f32 %v244, %v530
  %v641 = vadd.f32 %v245, %v531
  %v642 = vadd.f32 %v246, %v532
  %v643 = vadd.f32 %v247, %v533
  %v644 = vadd.f32 %v248, %v534
  %v645 = vadd.f32 %v249, %v535
  %v646 = vadd.f32 %v250, %v536
  %v647 = vadd.f32 %v251, %v537
  %v648 = vadd.f32 %v252, %v538
  %v649 = vadd.f32 %v253, %v539
  %v650 = vadd.f32 %v254, %v540
  %v651 = vadd.f32 %v255, %v541
  %v652 = vadd.f32 %v256, %v542
  %v653 = vadd.f32 %v257, %v543
  %v654 = vadd.f32 %v258, %v544
  %v655 = vadd.f32 %v259, %v545
  %v656 = vadd.f32 %v260, %v546
  %v657 = vadd.f32 %v261, %v547
  %v658 = vadd.f32 %v262, %v548
  %v659 = vadd.f32 %v263, %v549
  %v660 = vadd.f32 %v264, %v550
  %v661 = vadd.f32 %v265, %v551
  %v662 = vadd.f32 %v266, %v552
  %v663 = vadd.f32 %v267, %v553
  %v664 = vadd.f32 %v268, %v554
  %v665 = vadd.f32 %v269, %v555
  %v666 = vadd.f32 %v270, %v556
  %v667 = vadd.f32 %v271, %v557
  %v668 = vadd.f32 %v272, %v558
  %v669 = vadd.f32 %v273, %v559
  %v670 = vadd.f32 %v274, %v560
  %v671 = vadd.f32 %v275, %v561
  %v672 = vadd.f32 %v276, %v562
  %v673 = vadd.f32 %v277, %v563
  %v674 = vadd.f32 %v278, %v564
  %v675 = vadd.f32 %v279, %v565
  %v676 = vadd.f32 %v280, %v566
  %v677 = vadd.f32 %v281, %v567
  %v678 = vadd.f32 %v282, %v568
  %v679 = vadd.f32 %v283, %v569
  %680 = vset.pattern.permute.xlu0 2
  %681 = vperm.xlu0 %680, %v51
  %v682 = vpop.permute.xlu0 %681
  %v684 = vmul.f32 %v682, %v64
  %v685 = vmul.f32 %v682, %v65
  %v686 = vmul.f32 %v682, %v66
  %v687 = vmul.f32 %v682, %v67
  %v688 = vmul.f32 %v682, %v68
  %v689 = vmul.f32 %v682, %v69
  %v690 = vmul.f32 %v682, %v70
  %v691 = vmul.f32 %v682, %v71
  %v692 = vmul.f32 %v682, %v72
  %v693 = vmul.f32 %v682, %v73
  %v694 = vmul.f32 %v682, %v74
  %v695 = vmul.f32 %v682, %v75
  %v696 = vmul.f32 %v682, %v76
  %v697 = vmul.f32 %v682, %v77
  %v698 = vmul.f32 %v682, %v78
  %v699 = vmul.f32 %v682, %v79
  %v700 = vmul.f32 %v682, %v80
  %v701 = vmul.f32 %v682, %v81
  %v702 = vmul.f32 %v682, %v82
  %v703 = vmul.f32 %v682, %v83
  %v704 = vmul.f32 %v682, %v84
  %v705 = vmul.f32 %v682, %v85
  %v706 = vmul.f32 %v682, %v86
  %v707 = vmul.f32 %v682, %v87
  %v708 = vmul.f32 %v682, %v88
  %v709 = vmul.f32 %v682, %v89
  %v710 = vmul.f32 %v682, %v90
  %v711 = vmul.f32 %v682, %v91
  %v712 = vmul.f32 %v682, %v92
  %v713 = vmul.f32 %v682, %v93
  %v714 = vmul.f32 %v682, %v94
  %v715 = vmul.f32 %v682, %v95
  %v716 = vmul.f32 %v682, %v96
  %v717 = vmul.f32 %v682, %v97
  %v718 = vmul.f32 %v682, %v98
  %v719 = vmul.f32 %v682, %v99
  %v720 = vmul.f32 %v682, %v100
  %v721 = vmul.f32 %v682, %v101
  %v722 = vmul.f32 %v682, %v102
  %v723 = vmul.f32 %v682, %v103
  %v724 = vmul.f32 %v682, %v104
  %v725 = vmul.f32 %v682, %v105
  %v726 = vmul.f32 %v682, %v106
  %v727 = vmul.f32 %v682, %v107
  %v728 = vmul.f32 %v682, %v108
  %v729 = vmul.f32 %v682, %v109
  %v730 = vmul.f32 %v682, %v110
  %v731 = vmul.f32 %v682, %v111
  %v732 = vmul.f32 %v682, %v112
  %v733 = vmul.f32 %v682, %v113
  %v734 = vmul.f32 %v682, %v114
  %v735 = vmul.f32 %v682, %v115
  %v736 = vmul.f32 %v682, %v116
  %v737 = vmul.f32 %v682, %v117
  %v738 = vmul.f32 %v682, %v118
  %v739 = vmul.f32 %v682, %v288
  %796 = vrot.lane.b32.xlu0 %v684, 126
  %v797 = vpop.permute.xlu0 %796
  %798 = vrot.lane.b32.xlu0 %v685, 126
  %v799 = vpop.permute.xlu0 %798
  %800 = vrot.lane.b32.xlu0 %v686, 126
  %v801 = vpop.permute.xlu0 %800
  %802 = vrot.lane.b32.xlu0 %v687, 126
  %v803 = vpop.permute.xlu0 %802
  %804 = vrot.lane.b32.xlu0 %v688, 126
  %v805 = vpop.permute.xlu0 %804
  %806 = vrot.lane.b32.xlu0 %v689, 126
  %v807 = vpop.permute.xlu0 %806
  %808 = vrot.lane.b32.xlu0 %v690, 126
  %v809 = vpop.permute.xlu0 %808
  %810 = vrot.lane.b32.xlu0 %v691, 126
  %v811 = vpop.permute.xlu0 %810
  %812 = vrot.lane.b32.xlu0 %v692, 126
  %v813 = vpop.permute.xlu0 %812
  %814 = vrot.lane.b32.xlu0 %v693, 126
  %v815 = vpop.permute.xlu0 %814
  %816 = vrot.lane.b32.xlu0 %v694, 126
  %v817 = vpop.permute.xlu0 %816
  %818 = vrot.lane.b32.xlu0 %v695, 126
  %v819 = vpop.permute.xlu0 %818
  %820 = vrot.lane.b32.xlu0 %v696, 126
  %v821 = vpop.permute.xlu0 %820
  %822 = vrot.lane.b32.xlu0 %v697, 126
  %v823 = vpop.permute.xlu0 %822
  %824 = vrot.lane.b32.xlu0 %v698, 126
  %v825 = vpop.permute.xlu0 %824
  %826 = vrot.lane.b32.xlu0 %v699, 126
  %v827 = vpop.permute.xlu0 %826
  %828 = vrot.lane.b32.xlu0 %v700, 126
  %v829 = vpop.permute.xlu0 %828
  %830 = vrot.lane.b32.xlu0 %v701, 126
  %v831 = vpop.permute.xlu0 %830
  %832 = vrot.lane.b32.xlu0 %v702, 126
  %v833 = vpop.permute.xlu0 %832
  %834 = vrot.lane.b32.xlu0 %v703, 126
  %v835 = vpop.permute.xlu0 %834
  %836 = vrot.lane.b32.xlu0 %v704, 126
  %v837 = vpop.permute.xlu0 %836
  %838 = vrot.lane.b32.xlu0 %v705, 126
  %v839 = vpop.permute.xlu0 %838
  %840 = vrot.lane.b32.xlu0 %v706, 126
  %v841 = vpop.permute.xlu0 %840
  %842 = vrot.lane.b32.xlu0 %v707, 126
  %v843 = vpop.permute.xlu0 %842
  %844 = vrot.lane.b32.xlu0 %v708, 126
  %v845 = vpop.permute.xlu0 %844
  %846 = vrot.lane.b32.xlu0 %v709, 126
  %v847 = vpop.permute.xlu0 %846
  %848 = vrot.lane.b32.xlu0 %v710, 126
  %v849 = vpop.permute.xlu0 %848
  %850 = vrot.lane.b32.xlu0 %v711, 126
  %v851 = vpop.permute.xlu0 %850
  %852 = vrot.lane.b32.xlu0 %v712, 126
  %v853 = vpop.permute.xlu0 %852
  %854 = vrot.lane.b32.xlu0 %v713, 126
  %v855 = vpop.permute.xlu0 %854
  %856 = vrot.lane.b32.xlu0 %v714, 126
  %v857 = vpop.permute.xlu0 %856
  %858 = vrot.lane.b32.xlu0 %v715, 126
  %v859 = vpop.permute.xlu0 %858
  %860 = vrot.lane.b32.xlu0 %v716, 126
  %v861 = vpop.permute.xlu0 %860
  %862 = vrot.lane.b32.xlu0 %v717, 126
  %v863 = vpop.permute.xlu0 %862
  %864 = vrot.lane.b32.xlu0 %v718, 126
  %v865 = vpop.permute.xlu0 %864
  %866 = vrot.lane.b32.xlu0 %v719, 126
  %v867 = vpop.permute.xlu0 %866
  %868 = vrot.lane.b32.xlu0 %v720, 126
  %v869 = vpop.permute.xlu0 %868
  %870 = vrot.lane.b32.xlu0 %v721, 126
  %v871 = vpop.permute.xlu0 %870
  %872 = vrot.lane.b32.xlu0 %v722, 126
  %v873 = vpop.permute.xlu0 %872
  %874 = vrot.lane.b32.xlu0 %v723, 126
  %v875 = vpop.permute.xlu0 %874
  %876 = vrot.lane.b32.xlu0 %v724, 126
  %v877 = vpop.permute.xlu0 %876
  %878 = vrot.lane.b32.xlu0 %v725, 126
  %v879 = vpop.permute.xlu0 %878
  %880 = vrot.lane.b32.xlu0 %v726, 126
  %v881 = vpop.permute.xlu0 %880
  %882 = vrot.lane.b32.xlu0 %v727, 126
  %v883 = vpop.permute.xlu0 %882
  %884 = vrot.lane.b32.xlu0 %v728, 126
  %v885 = vpop.permute.xlu0 %884
  %886 = vrot.lane.b32.xlu0 %v729, 126
  %v887 = vpop.permute.xlu0 %886
  %888 = vrot.lane.b32.xlu0 %v730, 126
  %v889 = vpop.permute.xlu0 %888
  %890 = vrot.lane.b32.xlu0 %v731, 126
  %v891 = vpop.permute.xlu0 %890
  %892 = vrot.lane.b32.xlu0 %v732, 126
  %v893 = vpop.permute.xlu0 %892
  %894 = vrot.lane.b32.xlu0 %v733, 126
  %v895 = vpop.permute.xlu0 %894
  %896 = vrot.lane.b32.xlu0 %v734, 126
  %v897 = vpop.permute.xlu0 %896
  %898 = vrot.lane.b32.xlu0 %v735, 126
  %v899 = vpop.permute.xlu0 %898
  %900 = vrot.lane.b32.xlu0 %v736, 126
  %v901 = vpop.permute.xlu0 %900
  %902 = vrot.lane.b32.xlu0 %v737, 126
  %v903 = vpop.permute.xlu0 %902
  %904 = vrot.lane.b32.xlu0 %v738, 126
  %v905 = vpop.permute.xlu0 %904
  %906 = vrot.lane.b32.xlu0 %v739, 126
  %v907 = vpop.permute.xlu0 %906
  %vm908 = vcmask 1031168
  %v909 = vsel %vm908, %v797, %v799
  %v910 = vsel %vm908, %v799, %v801
  %v911 = vsel %vm908, %v801, %v803
  %v912 = vsel %vm908, %v803, %v805
  %v913 = vsel %vm908, %v805, %v807
  %v914 = vsel %vm908, %v807, %v809
  %v915 = vsel %vm908, %v809, %v811
  %v916 = vsel %vm908, %v811, %v813
  %v917 = vsel %vm908, %v813, %v815
  %v918 = vsel %vm908, %v815, %v817
  %v919 = vsel %vm908, %v817, %v819
  %v920 = vsel %vm908, %v819, %v821
  %v921 = vsel %vm908, %v821, %v823
  %v922 = vsel %vm908, %v823, %v825
  %v923 = vsel %vm908, %v825, %v827
  %v924 = vsel %vm908, %v827, %v829
  %v925 = vsel %vm908, %v829, %v831
  %v926 = vsel %vm908, %v831, %v833
  %v927 = vsel %vm908, %v833, %v835
  %v928 = vsel %vm908, %v835, %v837
  %v929 = vsel %vm908, %v837, %v839
  %v930 = vsel %vm908, %v839, %v841
  %v931 = vsel %vm908, %v841, %v843
  %v932 = vsel %vm908, %v843, %v845
  %v933 = vsel %vm908, %v845, %v847
  %v934 = vsel %vm908, %v847, %v849
  %v935 = vsel %vm908, %v849, %v851
  %v936 = vsel %vm908, %v851, %v853
  %v937 = vsel %vm908, %v853, %v855
  %v938 = vsel %vm908, %v855, %v857
  %v939 = vsel %vm908, %v857, %v859
  %v940 = vsel %vm908, %v859, %v861
  %v941 = vsel %vm908, %v861, %v863
  %v942 = vsel %vm908, %v863, %v865
  %v943 = vsel %vm908, %v865, %v867
  %v944 = vsel %vm908, %v867, %v869
  %v945 = vsel %vm908, %v869, %v871
  %v946 = vsel %vm908, %v871, %v873
  %v947 = vsel %vm908, %v873, %v875
  %v948 = vsel %vm908, %v875, %v877
  %v949 = vsel %vm908, %v877, %v879
  %v950 = vsel %vm908, %v879, %v881
  %v951 = vsel %vm908, %v881, %v883
  %v952 = vsel %vm908, %v883, %v885
  %v953 = vsel %vm908, %v885, %v887
  %v954 = vsel %vm908, %v887, %v889
  %v955 = vsel %vm908, %v889, %v891
  %v956 = vsel %vm908, %v891, %v893
  %v957 = vsel %vm908, %v893, %v895
  %v958 = vsel %vm908, %v895, %v897
  %v959 = vsel %vm908, %v897, %v899
  %v960 = vsel %vm908, %v899, %v901
  %v961 = vsel %vm908, %v901, %v903
  %v962 = vsel %vm908, %v903, %v905
  %v963 = vsel %vm908, %v905, %v907
  %v1019 = vadd.f32 %v625, %v909
  %v1020 = vadd.f32 %v626, %v910
  %v1021 = vadd.f32 %v627, %v911
  %v1022 = vadd.f32 %v628, %v912
  %v1023 = vadd.f32 %v629, %v913
  %v1024 = vadd.f32 %v630, %v914
  %v1025 = vadd.f32 %v631, %v915
  %v1026 = vadd.f32 %v632, %v916
  %v1027 = vadd.f32 %v633, %v917
  %v1028 = vadd.f32 %v634, %v918
  %v1029 = vadd.f32 %v635, %v919
  %v1030 = vadd.f32 %v636, %v920
  %v1031 = vadd.f32 %v637, %v921
  %v1032 = vadd.f32 %v638, %v922
  %v1033 = vadd.f32 %v639, %v923
  %v1034 = vadd.f32 %v640, %v924
  %v1035 = vadd.f32 %v641, %v925
  %v1036 = vadd.f32 %v642, %v926
  %v1037 = vadd.f32 %v643, %v927
  %v1038 = vadd.f32 %v644, %v928
  %v1039 = vadd.f32 %v645, %v929
  %v1040 = vadd.f32 %v646, %v930
  %v1041 = vadd.f32 %v647, %v931
  %v1042 = vadd.f32 %v648, %v932
  %v1043 = vadd.f32 %v649, %v933
  %v1044 = vadd.f32 %v650, %v934
  %v1045 = vadd.f32 %v651, %v935
  %v1046 = vadd.f32 %v652, %v936
  %v1047 = vadd.f32 %v653, %v937
  %v1048 = vadd.f32 %v654, %v938
  %v1049 = vadd.f32 %v655, %v939
  %v1050 = vadd.f32 %v656, %v940
  %v1051 = vadd.f32 %v657, %v941
  %v1052 = vadd.f32 %v658, %v942
  %v1053 = vadd.f32 %v659, %v943
  %v1054 = vadd.f32 %v660, %v944
  %v1055 = vadd.f32 %v661, %v945
  %v1056 = vadd.f32 %v662, %v946
  %v1057 = vadd.f32 %v663, %v947
  %v1058 = vadd.f32 %v664, %v948
  %v1059 = vadd.f32 %v665, %v949
  %v1060 = vadd.f32 %v666, %v950
  %v1061 = vadd.f32 %v667, %v951
  %v1062 = vadd.f32 %v668, %v952
  %v1063 = vadd.f32 %v669, %v953
  %v1064 = vadd.f32 %v670, %v954
  %v1065 = vadd.f32 %v671, %v955
  %v1066 = vadd.f32 %v672, %v956
  %v1067 = vadd.f32 %v673, %v957
  %v1068 = vadd.f32 %v674, %v958
  %v1069 = vadd.f32 %v675, %v959
  %v1070 = vadd.f32 %v676, %v960
  %v1071 = vadd.f32 %v677, %v961
  %v1072 = vadd.f32 %v678, %v962
  %v1073 = vadd.f32 %v679, %v963
  %1074 = vset.pattern.permute.xlu0 3
  %1075 = vperm.xlu0 %1074, %v51
  %v1076 = vpop.permute.xlu0 %1075
  %v1078 = vmul.f32 %v1076, %v64
  %v1079 = vmul.f32 %v1076, %v65
  %v1080 = vmul.f32 %v1076, %v66
  %v1081 = vmul.f32 %v1076, %v67
  %v1082 = vmul.f32 %v1076, %v68
  %v1083 = vmul.f32 %v1076, %v69
  %v1084 = vmul.f32 %v1076, %v70
  %v1085 = vmul.f32 %v1076, %v71
  %v1086 = vmul.f32 %v1076, %v72
  %v1087 = vmul.f32 %v1076, %v73
  %v1088 = vmul.f32 %v1076, %v74
  %v1089 = vmul.f32 %v1076, %v75
  %v1090 = vmul.f32 %v1076, %v76
  %v1091 = vmul.f32 %v1076, %v77
  %v1092 = vmul.f32 %v1076, %v78
  %v1093 = vmul.f32 %v1076, %v79
  %v1094 = vmul.f32 %v1076, %v80
  %v1095 = vmul.f32 %v1076, %v81
  %v1096 = vmul.f32 %v1076, %v82
  %v1097 = vmul.f32 %v1076, %v83
  %v1098 = vmul.f32 %v1076, %v84
  %v1099 = vmul.f32 %v1076, %v85
  %v1100 = vmul.f32 %v1076, %v86
  %v1101 = vmul.f32 %v1076, %v87
  %v1102 = vmul.f32 %v1076, %v88
  %v1103 = vmul.f32 %v1076, %v89
  %v1104 = vmul.f32 %v1076, %v90
  %v1105 = vmul.f32 %v1076, %v91
  %v1106 = vmul.f32 %v1076, %v92
  %v1107 = vmul.f32 %v1076, %v93
  %v1108 = vmul.f32 %v1076, %v94
  %v1109 = vmul.f32 %v1076, %v95
  %v1110 = vmul.f32 %v1076, %v96
  %v1111 = vmul.f32 %v1076, %v97
  %v1112 = vmul.f32 %v1076, %v98
  %v1113 = vmul.f32 %v1076, %v99
  %v1114 = vmul.f32 %v1076, %v100
  %v1115 = vmul.f32 %v1076, %v101
  %v1116 = vmul.f32 %v1076, %v102
  %v1117 = vmul.f32 %v1076, %v103
  %v1118 = vmul.f32 %v1076, %v104
  %v1119 = vmul.f32 %v1076, %v105
  %v1120 = vmul.f32 %v1076, %v106
  %v1121 = vmul.f32 %v1076, %v107
  %v1122 = vmul.f32 %v1076, %v108
  %v1123 = vmul.f32 %v1076, %v109
  %v1124 = vmul.f32 %v1076, %v110
  %v1125 = vmul.f32 %v1076, %v111
  %v1126 = vmul.f32 %v1076, %v112
  %v1127 = vmul.f32 %v1076, %v113
  %v1128 = vmul.f32 %v1076, %v114
  %v1129 = vmul.f32 %v1076, %v115
  %v1130 = vmul.f32 %v1076, %v116
  %v1131 = vmul.f32 %v1076, %v117
  %v1132 = vmul.f32 %v1076, %v118
  %v1133 = vmul.f32 %v1076, %v288
  %1190 = vrot.lane.b32.xlu0 %v1078, 100
  %v1191 = vpop.permute.xlu0 %1190
  %1192 = vrot.lane.b32.xlu0 %v1079, 100
  %v1193 = vpop.permute.xlu0 %1192
  %1194 = vrot.lane.b32.xlu0 %v1080, 100
  %v1195 = vpop.permute.xlu0 %1194
  %1196 = vrot.lane.b32.xlu0 %v1081, 100
  %v1197 = vpop.permute.xlu0 %1196
  %1198 = vrot.lane.b32.xlu0 %v1082, 100
  %v1199 = vpop.permute.xlu0 %1198
  %1200 = vrot.lane.b32.xlu0 %v1083, 100
  %v1201 = vpop.permute.xlu0 %1200
  %1202 = vrot.lane.b32.xlu0 %v1084, 100
  %v1203 = vpop.permute.xlu0 %1202
  %1204 = vrot.lane.b32.xlu0 %v1085, 100
  %v1205 = vpop.permute.xlu0 %1204
  %1206 = vrot.lane.b32.xlu0 %v1086, 100
  %v1207 = vpop.permute.xlu0 %1206
  %1208 = vrot.lane.b32.xlu0 %v1087, 100
  %v1209 = vpop.permute.xlu0 %1208
  %1210 = vrot.lane.b32.xlu0 %v1088, 100
  %v1211 = vpop.permute.xlu0 %1210
  %1212 = vrot.lane.b32.xlu0 %v1089, 100
  %v1213 = vpop.permute.xlu0 %1212
  %1214 = vrot.lane.b32.xlu0 %v1090, 100
  %v1215 = vpop.permute.xlu0 %1214
  %1216 = vrot.lane.b32.xlu0 %v1091, 100
  %v1217 = vpop.permute.xlu0 %1216
  %1218 = vrot.lane.b32.xlu0 %v1092, 100
  %v1219 = vpop.permute.xlu0 %1218
  %1220 = vrot.lane.b32.xlu0 %v1093, 100
  %v1221 = vpop.permute.xlu0 %1220
  %1222 = vrot.lane.b32.xlu0 %v1094, 100
  %v1223 = vpop.permute.xlu0 %1222
  %1224 = vrot.lane.b32.xlu0 %v1095, 100
  %v1225 = vpop.permute.xlu0 %1224
  %1226 = vrot.lane.b32.xlu0 %v1096, 100
  %v1227 = vpop.permute.xlu0 %1226
  %1228 = vrot.lane.b32.xlu0 %v1097, 100
  %v1229 = vpop.permute.xlu0 %1228
  %1230 = vrot.lane.b32.xlu0 %v1098, 100
  %v1231 = vpop.permute.xlu0 %1230
  %1232 = vrot.lane.b32.xlu0 %v1099, 100
  %v1233 = vpop.permute.xlu0 %1232
  %1234 = vrot.lane.b32.xlu0 %v1100, 100
  %v1235 = vpop.permute.xlu0 %1234
  %1236 = vrot.lane.b32.xlu0 %v1101, 100
  %v1237 = vpop.permute.xlu0 %1236
  %1238 = vrot.lane.b32.xlu0 %v1102, 100
  %v1239 = vpop.permute.xlu0 %1238
  %1240 = vrot.lane.b32.xlu0 %v1103, 100
  %v1241 = vpop.permute.xlu0 %1240
  %1242 = vrot.lane.b32.xlu0 %v1104, 100
  %v1243 = vpop.permute.xlu0 %1242
  %1244 = vrot.lane.b32.xlu0 %v1105, 100
  %v1245 = vpop.permute.xlu0 %1244
  %1246 = vrot.lane.b32.xlu0 %v1106, 100
  %v1247 = vpop.permute.xlu0 %1246
  %1248 = vrot.lane.b32.xlu0 %v1107, 100
  %v1249 = vpop.permute.xlu0 %1248
  %1250 = vrot.lane.b32.xlu0 %v1108, 100
  %v1251 = vpop.permute.xlu0 %1250
  %1252 = vrot.lane.b32.xlu0 %v1109, 100
  %v1253 = vpop.permute.xlu0 %1252
  %1254 = vrot.lane.b32.xlu0 %v1110, 100
  %v1255 = vpop.permute.xlu0 %1254
  %1256 = vrot.lane.b32.xlu0 %v1111, 100
  %v1257 = vpop.permute.xlu0 %1256
  %1258 = vrot.lane.b32.xlu0 %v1112, 100
  %v1259 = vpop.permute.xlu0 %1258
  %1260 = vrot.lane.b32.xlu0 %v1113, 100
  %v1261 = vpop.permute.xlu0 %1260
  %1262 = vrot.lane.b32.xlu0 %v1114, 100
  %v1263 = vpop.permute.xlu0 %1262
  %1264 = vrot.lane.b32.xlu0 %v1115, 100
  %v1265 = vpop.permute.xlu0 %1264
  %1266 = vrot.lane.b32.xlu0 %v1116, 100
  %v1267 = vpop.permute.xlu0 %1266
  %1268 = vrot.lane.b32.xlu0 %v1117, 100
  %v1269 = vpop.permute.xlu0 %1268
  %1270 = vrot.lane.b32.xlu0 %v1118, 100
  %v1271 = vpop.permute.xlu0 %1270
  %1272 = vrot.lane.b32.xlu0 %v1119, 100
  %v1273 = vpop.permute.xlu0 %1272
  %1274 = vrot.lane.b32.xlu0 %v1120, 100
  %v1275 = vpop.permute.xlu0 %1274
  %1276 = vrot.lane.b32.xlu0 %v1121, 100
  %v1277 = vpop.permute.xlu0 %1276
  %1278 = vrot.lane.b32.xlu0 %v1122, 100
  %v1279 = vpop.permute.xlu0 %1278
  %1280 = vrot.lane.b32.xlu0 %v1123, 100
  %v1281 = vpop.permute.xlu0 %1280
  %1282 = vrot.lane.b32.xlu0 %v1124, 100
  %v1283 = vpop.permute.xlu0 %1282
  %1284 = vrot.lane.b32.xlu0 %v1125, 100
  %v1285 = vpop.permute.xlu0 %1284
  %1286 = vrot.lane.b32.xlu0 %v1126, 100
  %v1287 = vpop.permute.xlu0 %1286
  %1288 = vrot.lane.b32.xlu0 %v1127, 100
  %v1289 = vpop.permute.xlu0 %1288
  %1290 = vrot.lane.b32.xlu0 %v1128, 100
  %v1291 = vpop.permute.xlu0 %1290
  %1292 = vrot.lane.b32.xlu0 %v1129, 100
  %v1293 = vpop.permute.xlu0 %1292
  %1294 = vrot.lane.b32.xlu0 %v1130, 100
  %v1295 = vpop.permute.xlu0 %1294
  %1296 = vrot.lane.b32.xlu0 %v1131, 100
  %v1297 = vpop.permute.xlu0 %1296
  %1298 = vrot.lane.b32.xlu0 %v1132, 100
  %v1299 = vpop.permute.xlu0 %1298
  %1300 = vrot.lane.b32.xlu0 %v1133, 100
  %v1301 = vpop.permute.xlu0 %1300
  %vm1302 = vcmask 818176
  %v1303 = vsel %vm1302, %v1191, %v1193
  %v1304 = vsel %vm1302, %v1193, %v1195
  %v1305 = vsel %vm1302, %v1195, %v1197
  %v1306 = vsel %vm1302, %v1197, %v1199
  %v1307 = vsel %vm1302, %v1199, %v1201
  %v1308 = vsel %vm1302, %v1201, %v1203
  %v1309 = vsel %vm1302, %v1203, %v1205
  %v1310 = vsel %vm1302, %v1205, %v1207
  %v1311 = vsel %vm1302, %v1207, %v1209
  %v1312 = vsel %vm1302, %v1209, %v1211
  %v1313 = vsel %vm1302, %v1211, %v1213
  %v1314 = vsel %vm1302, %v1213, %v1215
  %v1315 = vsel %vm1302, %v1215, %v1217
  %v1316 = vsel %vm1302, %v1217, %v1219
  %v1317 = vsel %vm1302, %v1219, %v1221
  %v1318 = vsel %vm1302, %v1221, %v1223
  %v1319 = vsel %vm1302, %v1223, %v1225
  %v1320 = vsel %vm1302, %v1225, %v1227
  %v1321 = vsel %vm1302, %v1227, %v1229
  %v1322 = vsel %vm1302, %v1229, %v1231
  %v1323 = vsel %vm1302, %v1231, %v1233
  %v1324 = vsel %vm1302, %v1233, %v1235
  %v1325 = vsel %vm1302, %v1235, %v1237
  %v1326 = vsel %vm1302, %v1237, %v1239
  %v1327 = vsel %vm1302, %v1239, %v1241
  %v1328 = vsel %vm1302, %v1241, %v1243
  %v1329 = vsel %vm1302, %v1243, %v1245
  %v1330 = vsel %vm1302, %v1245, %v1247
  %v1331 = vsel %vm1302, %v1247, %v1249
  %v1332 = vsel %vm1302, %v1249, %v1251
  %v1333 = vsel %vm1302, %v1251, %v1253
  %v1334 = vsel %vm1302, %v1253, %v1255
  %v1335 = vsel %vm1302, %v1255, %v1257
  %v1336 = vsel %vm1302, %v1257, %v1259
  %v1337 = vsel %vm1302, %v1259, %v1261
  %v1338 = vsel %vm1302, %v1261, %v1263
  %v1339 = vsel %vm1302, %v1263, %v1265
  %v1340 = vsel %vm1302, %v1265, %v1267
  %v1341 = vsel %vm1302, %v1267, %v1269
  %v1342 = vsel %vm1302, %v1269, %v1271
  %v1343 = vsel %vm1302, %v1271, %v1273
  %v1344 = vsel %vm1302, %v1273, %v1275
  %v1345 = vsel %vm1302, %v1275, %v1277
  %v1346 = vsel %vm1302, %v1277, %v1279
  %v1347 = vsel %vm1302, %v1279, %v1281
  %v1348 = vsel %vm1302, %v1281, %v1283
  %v1349 = vsel %vm1302, %v1283, %v1285
  %v1350 = vsel %vm1302, %v1285, %v1287
  %v1351 = vsel %vm1302, %v1287, %v1289
  %v1352 = vsel %vm1302, %v1289, %v1291
  %v1353 = vsel %vm1302, %v1291, %v1293
  %v1354 = vsel %vm1302, %v1293, %v1295
  %v1355 = vsel %vm1302, %v1295, %v1297
  %v1356 = vsel %vm1302, %v1297, %v1299
  %v1357 = vsel %vm1302, %v1299, %v1301
  %v1413 = vadd.f32 %v1019, %v1303
  %v1414 = vadd.f32 %v1020, %v1304
  %v1415 = vadd.f32 %v1021, %v1305
  %v1416 = vadd.f32 %v1022, %v1306
  %v1417 = vadd.f32 %v1023, %v1307
  %v1418 = vadd.f32 %v1024, %v1308
  %v1419 = vadd.f32 %v1025, %v1309
  %v1420 = vadd.f32 %v1026, %v1310
  %v1421 = vadd.f32 %v1027, %v1311
  %v1422 = vadd.f32 %v1028, %v1312
  %v1423 = vadd.f32 %v1029, %v1313
  %v1424 = vadd.f32 %v1030, %v1314
  %v1425 = vadd.f32 %v1031, %v1315
  %v1426 = vadd.f32 %v1032, %v1316
  %v1427 = vadd.f32 %v1033, %v1317
  %v1428 = vadd.f32 %v1034, %v1318
  %v1429 = vadd.f32 %v1035, %v1319
  %v1430 = vadd.f32 %v1036, %v1320
  %v1431 = vadd.f32 %v1037, %v1321
  %v1432 = vadd.f32 %v1038, %v1322
  %v1433 = vadd.f32 %v1039, %v1323
  %v1434 = vadd.f32 %v1040, %v1324
  %v1435 = vadd.f32 %v1041, %v1325
  %v1436 = vadd.f32 %v1042, %v1326
  %v1437 = vadd.f32 %v1043, %v1327
  %v1438 = vadd.f32 %v1044, %v1328
  %v1439 = vadd.f32 %v1045, %v1329
  %v1440 = vadd.f32 %v1046, %v1330
  %v1441 = vadd.f32 %v1047, %v1331
  %v1442 = vadd.f32 %v1048, %v1332
  %v1443 = vadd.f32 %v1049, %v1333
  %v1444 = vadd.f32 %v1050, %v1334
  %v1445 = vadd.f32 %v1051, %v1335
  %v1446 = vadd.f32 %v1052, %v1336
  %v1447 = vadd.f32 %v1053, %v1337
  %v1448 = vadd.f32 %v1054, %v1338
  %v1449 = vadd.f32 %v1055, %v1339
  %v1450 = vadd.f32 %v1056, %v1340
  %v1451 = vadd.f32 %v1057, %v1341
  %v1452 = vadd.f32 %v1058, %v1342
  %v1453 = vadd.f32 %v1059, %v1343
  %v1454 = vadd.f32 %v1060, %v1344
  %v1455 = vadd.f32 %v1061, %v1345
  %v1456 = vadd.f32 %v1062, %v1346
  %v1457 = vadd.f32 %v1063, %v1347
  %v1458 = vadd.f32 %v1064, %v1348
  %v1459 = vadd.f32 %v1065, %v1349
  %v1460 = vadd.f32 %v1066, %v1350
  %v1461 = vadd.f32 %v1067, %v1351
  %v1462 = vadd.f32 %v1068, %v1352
  %v1463 = vadd.f32 %v1069, %v1353
  %v1464 = vadd.f32 %v1070, %v1354
  %v1465 = vadd.f32 %v1071, %v1355
  %v1466 = vadd.f32 %v1072, %v1356
  %v1467 = vadd.f32 %v1073, %v1357
  %1468 = vset.pattern.permute.xlu0 4
  %1469 = vperm.xlu0 %1468, %v51
  %v1470 = vpop.permute.xlu0 %1469
  %v1472 = vmul.f32 %v1470, %v64
  %v1473 = vmul.f32 %v1470, %v65
  %v1474 = vmul.f32 %v1470, %v66
  %v1475 = vmul.f32 %v1470, %v67
  %v1476 = vmul.f32 %v1470, %v68
  %v1477 = vmul.f32 %v1470, %v69
  %v1478 = vmul.f32 %v1470, %v70
  %v1479 = vmul.f32 %v1470, %v71
  %v1480 = vmul.f32 %v1470, %v72
  %v1481 = vmul.f32 %v1470, %v73
  %v1482 = vmul.f32 %v1470, %v74
  %v1483 = vmul.f32 %v1470, %v75
  %v1484 = vmul.f32 %v1470, %v76
  %v1485 = vmul.f32 %v1470, %v77
  %v1486 = vmul.f32 %v1470, %v78
  %v1487 = vmul.f32 %v1470, %v79
  %v1488 = vmul.f32 %v1470, %v80
  %v1489 = vmul.f32 %v1470, %v81
  %v1490 = vmul.f32 %v1470, %v82
  %v1491 = vmul.f32 %v1470, %v83
  %v1492 = vmul.f32 %v1470, %v84
  %v1493 = vmul.f32 %v1470, %v85
  %v1494 = vmul.f32 %v1470, %v86
  %v1495 = vmul.f32 %v1470, %v87
  %v1496 = vmul.f32 %v1470, %v88
  %v1497 = vmul.f32 %v1470, %v89
  %v1498 = vmul.f32 %v1470, %v90
  %v1499 = vmul.f32 %v1470, %v91
  %v1500 = vmul.f32 %v1470, %v92
  %v1501 = vmul.f32 %v1470, %v93
  %v1502 = vmul.f32 %v1470, %v94
  %v1503 = vmul.f32 %v1470, %v95
  %v1504 = vmul.f32 %v1470, %v96
  %v1505 = vmul.f32 %v1470, %v97
  %v1506 = vmul.f32 %v1470, %v98
  %v1507 = vmul.f32 %v1470, %v99
  %v1508 = vmul.f32 %v1470, %v100
  %v1509 = vmul.f32 %v1470, %v101
  %v1510 = vmul.f32 %v1470, %v102
  %v1511 = vmul.f32 %v1470, %v103
  %v1512 = vmul.f32 %v1470, %v104
  %v1513 = vmul.f32 %v1470, %v105
  %v1514 = vmul.f32 %v1470, %v106
  %v1515 = vmul.f32 %v1470, %v107
  %v1516 = vmul.f32 %v1470, %v108
  %v1517 = vmul.f32 %v1470, %v109
  %v1518 = vmul.f32 %v1470, %v110
  %v1519 = vmul.f32 %v1470, %v111
  %v1520 = vmul.f32 %v1470, %v112
  %v1521 = vmul.f32 %v1470, %v113
  %v1522 = vmul.f32 %v1470, %v114
  %v1523 = vmul.f32 %v1470, %v115
  %v1524 = vmul.f32 %v1470, %v116
  %v1525 = vmul.f32 %v1470, %v117
  %v1526 = vmul.f32 %v1470, %v118
  %v1527 = vmul.f32 %v1470, %v288
  %1584 = vrot.lane.b32.xlu0 %v1472, 99
  %v1585 = vpop.permute.xlu0 %1584
  %1586 = vrot.lane.b32.xlu0 %v1473, 99
  %v1587 = vpop.permute.xlu0 %1586
  %1588 = vrot.lane.b32.xlu0 %v1474, 99
  %v1589 = vpop.permute.xlu0 %1588
  %1590 = vrot.lane.b32.xlu0 %v1475, 99
  %v1591 = vpop.permute.xlu0 %1590
  %1592 = vrot.lane.b32.xlu0 %v1476, 99
  %v1593 = vpop.permute.xlu0 %1592
  %1594 = vrot.lane.b32.xlu0 %v1477, 99
  %v1595 = vpop.permute.xlu0 %1594
  %1596 = vrot.lane.b32.xlu0 %v1478, 99
  %v1597 = vpop.permute.xlu0 %1596
  %1598 = vrot.lane.b32.xlu0 %v1479, 99
  %v1599 = vpop.permute.xlu0 %1598
  %1600 = vrot.lane.b32.xlu0 %v1480, 99
  %v1601 = vpop.permute.xlu0 %1600
  %1602 = vrot.lane.b32.xlu0 %v1481, 99
  %v1603 = vpop.permute.xlu0 %1602
  %1604 = vrot.lane.b32.xlu0 %v1482, 99
  %v1605 = vpop.permute.xlu0 %1604
  %1606 = vrot.lane.b32.xlu0 %v1483, 99
  %v1607 = vpop.permute.xlu0 %1606
  %1608 = vrot.lane.b32.xlu0 %v1484, 99
  %v1609 = vpop.permute.xlu0 %1608
  %1610 = vrot.lane.b32.xlu0 %v1485, 99
  %v1611 = vpop.permute.xlu0 %1610
  %1612 = vrot.lane.b32.xlu0 %v1486, 99
  %v1613 = vpop.permute.xlu0 %1612
  %1614 = vrot.lane.b32.xlu0 %v1487, 99
  %v1615 = vpop.permute.xlu0 %1614
  %1616 = vrot.lane.b32.xlu0 %v1488, 99
  %v1617 = vpop.permute.xlu0 %1616
  %1618 = vrot.lane.b32.xlu0 %v1489, 99
  %v1619 = vpop.permute.xlu0 %1618
  %1620 = vrot.lane.b32.xlu0 %v1490, 99
  %v1621 = vpop.permute.xlu0 %1620
  %1622 = vrot.lane.b32.xlu0 %v1491, 99
  %v1623 = vpop.permute.xlu0 %1622
  %1624 = vrot.lane.b32.xlu0 %v1492, 99
  %v1625 = vpop.permute.xlu0 %1624
  %1626 = vrot.lane.b32.xlu0 %v1493, 99
  %v1627 = vpop.permute.xlu0 %1626
  %1628 = vrot.lane.b32.xlu0 %v1494, 99
  %v1629 = vpop.permute.xlu0 %1628
  %1630 = vrot.lane.b32.xlu0 %v1495, 99
  %v1631 = vpop.permute.xlu0 %1630
  %1632 = vrot.lane.b32.xlu0 %v1496, 99
  %v1633 = vpop.permute.xlu0 %1632
  %1634 = vrot.lane.b32.xlu0 %v1497, 99
  %v1635 = vpop.permute.xlu0 %1634
  %1636 = vrot.lane.b32.xlu0 %v1498, 99
  %v1637 = vpop.permute.xlu0 %1636
  %1638 = vrot.lane.b32.xlu0 %v1499, 99
  %v1639 = vpop.permute.xlu0 %1638
  %1640 = vrot.lane.b32.xlu0 %v1500, 99
  %v1641 = vpop.permute.xlu0 %1640
  %1642 = vrot.lane.b32.xlu0 %v1501, 99
  %v1643 = vpop.permute.xlu0 %1642
  %1644 = vrot.lane.b32.xlu0 %v1502, 99
  %v1645 = vpop.permute.xlu0 %1644
  %1646 = vrot.lane.b32.xlu0 %v1503, 99
  %v1647 = vpop.permute.xlu0 %1646
  %1648 = vrot.lane.b32.xlu0 %v1504, 99
  %v1649 = vpop.permute.xlu0 %1648
  %1650 = vrot.lane.b32.xlu0 %v1505, 99
  %v1651 = vpop.permute.xlu0 %1650
  %1652 = vrot.lane.b32.xlu0 %v1506, 99
  %v1653 = vpop.permute.xlu0 %1652
  %1654 = vrot.lane.b32.xlu0 %v1507, 99
  %v1655 = vpop.permute.xlu0 %1654
  %1656 = vrot.lane.b32.xlu0 %v1508, 99
  %v1657 = vpop.permute.xlu0 %1656
  %1658 = vrot.lane.b32.xlu0 %v1509, 99
  %v1659 = vpop.permute.xlu0 %1658
  %1660 = vrot.lane.b32.xlu0 %v1510, 99
  %v1661 = vpop.permute.xlu0 %1660
  %1662 = vrot.lane.b32.xlu0 %v1511, 99
  %v1663 = vpop.permute.xlu0 %1662
  %1664 = vrot.lane.b32.xlu0 %v1512, 99
  %v1665 = vpop.permute.xlu0 %1664
  %1666 = vrot.lane.b32.xlu0 %v1513, 99
  %v1667 = vpop.permute.xlu0 %1666
  %1668 = vrot.lane.b32.xlu0 %v1514, 99
  %v1669 = vpop.permute.xlu0 %1668
  %1670 = vrot.lane.b32.xlu0 %v1515, 99
  %v1671 = vpop.permute.xlu0 %1670
  %1672 = vrot.lane.b32.xlu0 %v1516, 99
  %v1673 = vpop.permute.xlu0 %1672
  %1674 = vrot.lane.b32.xlu0 %v1517, 99
  %v1675 = vpop.permute.xlu0 %1674
  %1676 = vrot.lane.b32.xlu0 %v1518, 99
  %v1677 = vpop.permute.xlu0 %1676
  %1678 = vrot.lane.b32.xlu0 %v1519, 99
  %v1679 = vpop.permute.xlu0 %1678
  %1680 = vrot.lane.b32.xlu0 %v1520, 99
  %v1681 = vpop.permute.xlu0 %1680
  %1682 = vrot.lane.b32.xlu0 %v1521, 99
  %v1683 = vpop.permute.xlu0 %1682
  %1684 = vrot.lane.b32.xlu0 %v1522, 99
  %v1685 = vpop.permute.xlu0 %1684
  %1686 = vrot.lane.b32.xlu0 %v1523, 99
  %v1687 = vpop.permute.xlu0 %1686
  %1688 = vrot.lane.b32.xlu0 %v1524, 99
  %v1689 = vpop.permute.xlu0 %1688
  %1690 = vrot.lane.b32.xlu0 %v1525, 99
  %v1691 = vpop.permute.xlu0 %1690
  %1692 = vrot.lane.b32.xlu0 %v1526, 99
  %v1693 = vpop.permute.xlu0 %1692
  %1694 = vrot.lane.b32.xlu0 %v1527, 99
  %v1695 = vpop.permute.xlu0 %1694
  %vm1696 = vcmask 809984
  %v1697 = vsel %vm1696, %v1585, %v1587
  %v1698 = vsel %vm1696, %v1587, %v1589
  %v1699 = vsel %vm1696, %v1589, %v1591
  %v1700 = vsel %vm1696, %v1591, %v1593
  %v1701 = vsel %vm1696, %v1593, %v1595
  %v1702 = vsel %vm1696, %v1595, %v1597
  %v1703 = vsel %vm1696, %v1597, %v1599
  %v1704 = vsel %vm1696, %v1599, %v1601
  %v1705 = vsel %vm1696, %v1601, %v1603
  %v1706 = vsel %vm1696, %v1603, %v1605
  %v1707 = vsel %vm1696, %v1605, %v1607
  %v1708 = vsel %vm1696, %v1607, %v1609
  %v1709 = vsel %vm1696, %v1609, %v1611
  %v1710 = vsel %vm1696, %v1611, %v1613
  %v1711 = vsel %vm1696, %v1613, %v1615
  %v1712 = vsel %vm1696, %v1615, %v1617
  %v1713 = vsel %vm1696, %v1617, %v1619
  %v1714 = vsel %vm1696, %v1619, %v1621
  %v1715 = vsel %vm1696, %v1621, %v1623
  %v1716 = vsel %vm1696, %v1623, %v1625
  %v1717 = vsel %vm1696, %v1625, %v1627
  %v1718 = vsel %vm1696, %v1627, %v1629
  %v1719 = vsel %vm1696, %v1629, %v1631
  %v1720 = vsel %vm1696, %v1631, %v1633
  %v1721 = vsel %vm1696, %v1633, %v1635
  %v1722 = vsel %vm1696, %v1635, %v1637
  %v1723 = vsel %vm1696, %v1637, %v1639
  %v1724 = vsel %vm1696, %v1639, %v1641
  %v1725 = vsel %vm1696, %v1641, %v1643
  %v1726 = vsel %vm1696, %v1643, %v1645
  %v1727 = vsel %vm1696, %v1645, %v1647
  %v1728 = vsel %vm1696, %v1647, %v1649
  %v1729 = vsel %vm1696, %v1649, %v1651
  %v1730 = vsel %vm1696, %v1651, %v1653
  %v1731 = vsel %vm1696, %v1653, %v1655
  %v1732 = vsel %vm1696, %v1655, %v1657
  %v1733 = vsel %vm1696, %v1657, %v1659
  %v1734 = vsel %vm1696, %v1659, %v1661
  %v1735 = vsel %vm1696, %v1661, %v1663
  %v1736 = vsel %vm1696, %v1663, %v1665
  %v1737 = vsel %vm1696, %v1665, %v1667
  %v1738 = vsel %vm1696, %v1667, %v1669
  %v1739 = vsel %vm1696, %v1669, %v1671
  %v1740 = vsel %vm1696, %v1671, %v1673
  %v1741 = vsel %vm1696, %v1673, %v1675
  %v1742 = vsel %vm1696, %v1675, %v1677
  %v1743 = vsel %vm1696, %v1677, %v1679
  %v1744 = vsel %vm1696, %v1679, %v1681
  %v1745 = vsel %vm1696, %v1681, %v1683
  %v1746 = vsel %vm1696, %v1683, %v1685
  %v1747 = vsel %vm1696, %v1685, %v1687
  %v1748 = vsel %vm1696, %v1687, %v1689
  %v1749 = vsel %vm1696, %v1689, %v1691
  %v1750 = vsel %vm1696, %v1691, %v1693
  %v1751 = vsel %vm1696, %v1693, %v1695
  %v1807 = vadd.f32 %v1413, %v1697
  %v1808 = vadd.f32 %v1414, %v1698
  %v1809 = vadd.f32 %v1415, %v1699
  %v1810 = vadd.f32 %v1416, %v1700
  %v1811 = vadd.f32 %v1417, %v1701
  %v1812 = vadd.f32 %v1418, %v1702
  %v1813 = vadd.f32 %v1419, %v1703
  %v1814 = vadd.f32 %v1420, %v1704
  %v1815 = vadd.f32 %v1421, %v1705
  %v1816 = vadd.f32 %v1422, %v1706
  %v1817 = vadd.f32 %v1423, %v1707
  %v1818 = vadd.f32 %v1424, %v1708
  %v1819 = vadd.f32 %v1425, %v1709
  %v1820 = vadd.f32 %v1426, %v1710
  %v1821 = vadd.f32 %v1427, %v1711
  %v1822 = vadd.f32 %v1428, %v1712
  %v1823 = vadd.f32 %v1429, %v1713
  %v1824 = vadd.f32 %v1430, %v1714
  %v1825 = vadd.f32 %v1431, %v1715
  %v1826 = vadd.f32 %v1432, %v1716
  %v1827 = vadd.f32 %v1433, %v1717
  %v1828 = vadd.f32 %v1434, %v1718
  %v1829 = vadd.f32 %v1435, %v1719
  %v1830 = vadd.f32 %v1436, %v1720
  %v1831 = vadd.f32 %v1437, %v1721
  %v1832 = vadd.f32 %v1438, %v1722
  %v1833 = vadd.f32 %v1439, %v1723
  %v1834 = vadd.f32 %v1440, %v1724
  %v1835 = vadd.f32 %v1441, %v1725
  %v1836 = vadd.f32 %v1442, %v1726
  %v1837 = vadd.f32 %v1443, %v1727
  %v1838 = vadd.f32 %v1444, %v1728
  %v1839 = vadd.f32 %v1445, %v1729
  %v1840 = vadd.f32 %v1446, %v1730
  %v1841 = vadd.f32 %v1447, %v1731
  %v1842 = vadd.f32 %v1448, %v1732
  %v1843 = vadd.f32 %v1449, %v1733
  %v1844 = vadd.f32 %v1450, %v1734
  %v1845 = vadd.f32 %v1451, %v1735
  %v1846 = vadd.f32 %v1452, %v1736
  %v1847 = vadd.f32 %v1453, %v1737
  %v1848 = vadd.f32 %v1454, %v1738
  %v1849 = vadd.f32 %v1455, %v1739
  %v1850 = vadd.f32 %v1456, %v1740
  %v1851 = vadd.f32 %v1457, %v1741
  %v1852 = vadd.f32 %v1458, %v1742
  %v1853 = vadd.f32 %v1459, %v1743
  %v1854 = vadd.f32 %v1460, %v1744
  %v1855 = vadd.f32 %v1461, %v1745
  %v1856 = vadd.f32 %v1462, %v1746
  %v1857 = vadd.f32 %v1463, %v1747
  %v1858 = vadd.f32 %v1464, %v1748
  %v1859 = vadd.f32 %v1465, %v1749
  %v1860 = vadd.f32 %v1466, %v1750
  %v1861 = vadd.f32 %v1467, %v1751
  %1862 = vset.pattern.permute.xlu0 5
  %1863 = vperm.xlu0 %1862, %v51
  %v1864 = vpop.permute.xlu0 %1863
  %v1866 = vmul.f32 %v1864, %v64
  %v1867 = vmul.f32 %v1864, %v65
  %v1868 = vmul.f32 %v1864, %v66
  %v1869 = vmul.f32 %v1864, %v67
  %v1870 = vmul.f32 %v1864, %v68
  %v1871 = vmul.f32 %v1864, %v69
  %v1872 = vmul.f32 %v1864, %v70
  %v1873 = vmul.f32 %v1864, %v71
  %v1874 = vmul.f32 %v1864, %v72
  %v1875 = vmul.f32 %v1864, %v73
  %v1876 = vmul.f32 %v1864, %v74
  %v1877 = vmul.f32 %v1864, %v75
  %v1878 = vmul.f32 %v1864, %v76
  %v1879 = vmul.f32 %v1864, %v77
  %v1880 = vmul.f32 %v1864, %v78
  %v1881 = vmul.f32 %v1864, %v79
  %v1882 = vmul.f32 %v1864, %v80
  %v1883 = vmul.f32 %v1864, %v81
  %v1884 = vmul.f32 %v1864, %v82
  %v1885 = vmul.f32 %v1864, %v83
  %v1886 = vmul.f32 %v1864, %v84
  %v1887 = vmul.f32 %v1864, %v85
  %v1888 = vmul.f32 %v1864, %v86
  %v1889 = vmul.f32 %v1864, %v87
  %v1890 = vmul.f32 %v1864, %v88
  %v1891 = vmul.f32 %v1864, %v89
  %v1892 = vmul.f32 %v1864, %v90
  %v1893 = vmul.f32 %v1864, %v91
  %v1894 = vmul.f32 %v1864, %v92
  %v1895 = vmul.f32 %v1864, %v93
  %v1896 = vmul.f32 %v1864, %v94
  %v1897 = vmul.f32 %v1864, %v95
  %v1898 = vmul.f32 %v1864, %v96
  %v1899 = vmul.f32 %v1864, %v97
  %v1900 = vmul.f32 %v1864, %v98
  %v1901 = vmul.f32 %v1864, %v99
  %v1902 = vmul.f32 %v1864, %v100
  %v1903 = vmul.f32 %v1864, %v101
  %v1904 = vmul.f32 %v1864, %v102
  %v1905 = vmul.f32 %v1864, %v103
  %v1906 = vmul.f32 %v1864, %v104
  %v1907 = vmul.f32 %v1864, %v105
  %v1908 = vmul.f32 %v1864, %v106
  %v1909 = vmul.f32 %v1864, %v107
  %v1910 = vmul.f32 %v1864, %v108
  %v1911 = vmul.f32 %v1864, %v109
  %v1912 = vmul.f32 %v1864, %v110
  %v1913 = vmul.f32 %v1864, %v111
  %v1914 = vmul.f32 %v1864, %v112
  %v1915 = vmul.f32 %v1864, %v113
  %v1916 = vmul.f32 %v1864, %v114
  %v1917 = vmul.f32 %v1864, %v115
  %v1918 = vmul.f32 %v1864, %v116
  %v1919 = vmul.f32 %v1864, %v117
  %v1920 = vmul.f32 %v1864, %v118
  %v1921 = vmul.f32 %v1864, %v288
  %1978 = vrot.lane.b32.xlu0 %v1866, 98
  %v1979 = vpop.permute.xlu0 %1978
  %1980 = vrot.lane.b32.xlu0 %v1867, 98
  %v1981 = vpop.permute.xlu0 %1980
  %1982 = vrot.lane.b32.xlu0 %v1868, 98
  %v1983 = vpop.permute.xlu0 %1982
  %1984 = vrot.lane.b32.xlu0 %v1869, 98
  %v1985 = vpop.permute.xlu0 %1984
  %1986 = vrot.lane.b32.xlu0 %v1870, 98
  %v1987 = vpop.permute.xlu0 %1986
  %1988 = vrot.lane.b32.xlu0 %v1871, 98
  %v1989 = vpop.permute.xlu0 %1988
  %1990 = vrot.lane.b32.xlu0 %v1872, 98
  %v1991 = vpop.permute.xlu0 %1990
  %1992 = vrot.lane.b32.xlu0 %v1873, 98
  %v1993 = vpop.permute.xlu0 %1992
  %1994 = vrot.lane.b32.xlu0 %v1874, 98
  %v1995 = vpop.permute.xlu0 %1994
  %1996 = vrot.lane.b32.xlu0 %v1875, 98
  %v1997 = vpop.permute.xlu0 %1996
  %1998 = vrot.lane.b32.xlu0 %v1876, 98
  %v1999 = vpop.permute.xlu0 %1998
  %2000 = vrot.lane.b32.xlu0 %v1877, 98
  %v2001 = vpop.permute.xlu0 %2000
  %2002 = vrot.lane.b32.xlu0 %v1878, 98
  %v2003 = vpop.permute.xlu0 %2002
  %2004 = vrot.lane.b32.xlu0 %v1879, 98
  %v2005 = vpop.permute.xlu0 %2004
  %2006 = vrot.lane.b32.xlu0 %v1880, 98
  %v2007 = vpop.permute.xlu0 %2006
  %2008 = vrot.lane.b32.xlu0 %v1881, 98
  %v2009 = vpop.permute.xlu0 %2008
  %2010 = vrot.lane.b32.xlu0 %v1882, 98
  %v2011 = vpop.permute.xlu0 %2010
  %2012 = vrot.lane.b32.xlu0 %v1883, 98
  %v2013 = vpop.permute.xlu0 %2012
  %2014 = vrot.lane.b32.xlu0 %v1884, 98
  %v2015 = vpop.permute.xlu0 %2014
  %2016 = vrot.lane.b32.xlu0 %v1885, 98
  %v2017 = vpop.permute.xlu0 %2016
  %2018 = vrot.lane.b32.xlu0 %v1886, 98
  %v2019 = vpop.permute.xlu0 %2018
  %2020 = vrot.lane.b32.xlu0 %v1887, 98
  %v2021 = vpop.permute.xlu0 %2020
  %2022 = vrot.lane.b32.xlu0 %v1888, 98
  %v2023 = vpop.permute.xlu0 %2022
  %2024 = vrot.lane.b32.xlu0 %v1889, 98
  %v2025 = vpop.permute.xlu0 %2024
  %2026 = vrot.lane.b32.xlu0 %v1890, 98
  %v2027 = vpop.permute.xlu0 %2026
  %2028 = vrot.lane.b32.xlu0 %v1891, 98
  %v2029 = vpop.permute.xlu0 %2028
  %2030 = vrot.lane.b32.xlu0 %v1892, 98
  %v2031 = vpop.permute.xlu0 %2030
  %2032 = vrot.lane.b32.xlu0 %v1893, 98
  %v2033 = vpop.permute.xlu0 %2032
  %2034 = vrot.lane.b32.xlu0 %v1894, 98
  %v2035 = vpop.permute.xlu0 %2034
  %2036 = vrot.lane.b32.xlu0 %v1895, 98
  %v2037 = vpop.permute.xlu0 %2036
  %2038 = vrot.lane.b32.xlu0 %v1896, 98
  %v2039 = vpop.permute.xlu0 %2038
  %2040 = vrot.lane.b32.xlu0 %v1897, 98
  %v2041 = vpop.permute.xlu0 %2040
  %2042 = vrot.lane.b32.xlu0 %v1898, 98
  %v2043 = vpop.permute.xlu0 %2042
  %2044 = vrot.lane.b32.xlu0 %v1899, 98
  %v2045 = vpop.permute.xlu0 %2044
  %2046 = vrot.lane.b32.xlu0 %v1900, 98
  %v2047 = vpop.permute.xlu0 %2046
  %2048 = vrot.lane.b32.xlu0 %v1901, 98
  %v2049 = vpop.permute.xlu0 %2048
  %2050 = vrot.lane.b32.xlu0 %v1902, 98
  %v2051 = vpop.permute.xlu0 %2050
  %2052 = vrot.lane.b32.xlu0 %v1903, 98
  %v2053 = vpop.permute.xlu0 %2052
  %2054 = vrot.lane.b32.xlu0 %v1904, 98
  %v2055 = vpop.permute.xlu0 %2054
  %2056 = vrot.lane.b32.xlu0 %v1905, 98
  %v2057 = vpop.permute.xlu0 %2056
  %2058 = vrot.lane.b32.xlu0 %v1906, 98
  %v2059 = vpop.permute.xlu0 %2058
  %2060 = vrot.lane.b32.xlu0 %v1907, 98
  %v2061 = vpop.permute.xlu0 %2060
  %2062 = vrot.lane.b32.xlu0 %v1908, 98
  %v2063 = vpop.permute.xlu0 %2062
  %2064 = vrot.lane.b32.xlu0 %v1909, 98
  %v2065 = vpop.permute.xlu0 %2064
  %2066 = vrot.lane.b32.xlu0 %v1910, 98
  %v2067 = vpop.permute.xlu0 %2066
  %2068 = vrot.lane.b32.xlu0 %v1911, 98
  %v2069 = vpop.permute.xlu0 %2068
  %2070 = vrot.lane.b32.xlu0 %v1912, 98
  %v2071 = vpop.permute.xlu0 %2070
  %2072 = vrot.lane.b32.xlu0 %v1913, 98
  %v2073 = vpop.permute.xlu0 %2072
  %2074 = vrot.lane.b32.xlu0 %v1914, 98
  %v2075 = vpop.permute.xlu0 %2074
  %2076 = vrot.lane.b32.xlu0 %v1915, 98
  %v2077 = vpop.permute.xlu0 %2076
  %2078 = vrot.lane.b32.xlu0 %v1916, 98
  %v2079 = vpop.permute.xlu0 %2078
  %2080 = vrot.lane.b32.xlu0 %v1917, 98
  %v2081 = vpop.permute.xlu0 %2080
  %2082 = vrot.lane.b32.xlu0 %v1918, 98
  %v2083 = vpop.permute.xlu0 %2082
  %2084 = vrot.lane.b32.xlu0 %v1919, 98
  %v2085 = vpop.permute.xlu0 %2084
  %2086 = vrot.lane.b32.xlu0 %v1920, 98
  %v2087 = vpop.permute.xlu0 %2086
  %2088 = vrot.lane.b32.xlu0 %v1921, 98
  %v2089 = vpop.permute.xlu0 %2088
  %vm2090 = vcmask 801792
  %v2091 = vsel %vm2090, %v1979, %v1981
  %v2092 = vsel %vm2090, %v1981, %v1983
  %v2093 = vsel %vm2090, %v1983, %v1985
  %v2094 = vsel %vm2090, %v1985, %v1987
  %v2095 = vsel %vm2090, %v1987, %v1989
  %v2096 = vsel %vm2090, %v1989, %v1991
  %v2097 = vsel %vm2090, %v1991, %v1993
  %v2098 = vsel %vm2090, %v1993, %v1995
  %v2099 = vsel %vm2090, %v1995, %v1997
  %v2100 = vsel %vm2090, %v1997, %v1999
  %v2101 = vsel %vm2090, %v1999, %v2001
  %v2102 = vsel %vm2090, %v2001, %v2003
  %v2103 = vsel %vm2090, %v2003, %v2005
  %v2104 = vsel %vm2090, %v2005, %v2007
  %v2105 = vsel %vm2090, %v2007, %v2009
  %v2106 = vsel %vm2090, %v2009, %v2011
  %v2107 = vsel %vm2090, %v2011, %v2013
  %v2108 = vsel %vm2090, %v2013, %v2015
  %v2109 = vsel %vm2090, %v2015, %v2017
  %v2110 = vsel %vm2090, %v2017, %v2019
  %v2111 = vsel %vm2090, %v2019, %v2021
  %v2112 = vsel %vm2090, %v2021, %v2023
  %v2113 = vsel %vm2090, %v2023, %v2025
  %v2114 = vsel %vm2090, %v2025, %v2027
  %v2115 = vsel %vm2090, %v2027, %v2029
  %v2116 = vsel %vm2090, %v2029, %v2031
  %v2117 = vsel %vm2090, %v2031, %v2033
  %v2118 = vsel %vm2090, %v2033, %v2035
  %v2119 = vsel %vm2090, %v2035, %v2037
  %v2120 = vsel %vm2090, %v2037, %v2039
  %v2121 = vsel %vm2090, %v2039, %v2041
  %v2122 = vsel %vm2090, %v2041, %v2043
  %v2123 = vsel %vm2090, %v2043, %v2045
  %v2124 = vsel %vm2090, %v2045, %v2047
  %v2125 = vsel %vm2090, %v2047, %v2049
  %v2126 = vsel %vm2090, %v2049, %v2051
  %v2127 = vsel %vm2090, %v2051, %v2053
  %v2128 = vsel %vm2090, %v2053, %v2055
  %v2129 = vsel %vm2090, %v2055, %v2057
  %v2130 = vsel %vm2090, %v2057, %v2059
  %v2131 = vsel %vm2090, %v2059, %v2061
  %v2132 = vsel %vm2090, %v2061, %v2063
  %v2133 = vsel %vm2090, %v2063, %v2065
  %v2134 = vsel %vm2090, %v2065, %v2067
  %v2135 = vsel %vm2090, %v2067, %v2069
  %v2136 = vsel %vm2090, %v2069, %v2071
  %v2137 = vsel %vm2090, %v2071, %v2073
  %v2138 = vsel %vm2090, %v2073, %v2075
  %v2139 = vsel %vm2090, %v2075, %v2077
  %v2140 = vsel %vm2090, %v2077, %v2079
  %v2141 = vsel %vm2090, %v2079, %v2081
  %v2142 = vsel %vm2090, %v2081, %v2083
  %v2143 = vsel %vm2090, %v2083, %v2085
  %v2144 = vsel %vm2090, %v2085, %v2087
  %v2145 = vsel %vm2090, %v2087, %v2089
  %v2201 = vadd.f32 %v1807, %v2091
  %v2202 = vadd.f32 %v1808, %v2092
  %v2203 = vadd.f32 %v1809, %v2093
  %v2204 = vadd.f32 %v1810, %v2094
  %v2205 = vadd.f32 %v1811, %v2095
  %v2206 = vadd.f32 %v1812, %v2096
  %v2207 = vadd.f32 %v1813, %v2097
  %v2208 = vadd.f32 %v1814, %v2098
  %v2209 = vadd.f32 %v1815, %v2099
  %v2210 = vadd.f32 %v1816, %v2100
  %v2211 = vadd.f32 %v1817, %v2101
  %v2212 = vadd.f32 %v1818, %v2102
  %v2213 = vadd.f32 %v1819, %v2103
  %v2214 = vadd.f32 %v1820, %v2104
  %v2215 = vadd.f32 %v1821, %v2105
  %v2216 = vadd.f32 %v1822, %v2106
  %v2217 = vadd.f32 %v1823, %v2107
  %v2218 = vadd.f32 %v1824, %v2108
  %v2219 = vadd.f32 %v1825, %v2109
  %v2220 = vadd.f32 %v1826, %v2110
  %v2221 = vadd.f32 %v1827, %v2111
  %v2222 = vadd.f32 %v1828, %v2112
  %v2223 = vadd.f32 %v1829, %v2113
  %v2224 = vadd.f32 %v1830, %v2114
  %v2225 = vadd.f32 %v1831, %v2115
  %v2226 = vadd.f32 %v1832, %v2116
  %v2227 = vadd.f32 %v1833, %v2117
  %v2228 = vadd.f32 %v1834, %v2118
  %v2229 = vadd.f32 %v1835, %v2119
  %v2230 = vadd.f32 %v1836, %v2120
  %v2231 = vadd.f32 %v1837, %v2121
  %v2232 = vadd.f32 %v1838, %v2122
  %v2233 = vadd.f32 %v1839, %v2123
  %v2234 = vadd.f32 %v1840, %v2124
  %v2235 = vadd.f32 %v1841, %v2125
  %v2236 = vadd.f32 %v1842, %v2126
  %v2237 = vadd.f32 %v1843, %v2127
  %v2238 = vadd.f32 %v1844, %v2128
  %v2239 = vadd.f32 %v1845, %v2129
  %v2240 = vadd.f32 %v1846, %v2130
  %v2241 = vadd.f32 %v1847, %v2131
  %v2242 = vadd.f32 %v1848, %v2132
  %v2243 = vadd.f32 %v1849, %v2133
  %v2244 = vadd.f32 %v1850, %v2134
  %v2245 = vadd.f32 %v1851, %v2135
  %v2246 = vadd.f32 %v1852, %v2136
  %v2247 = vadd.f32 %v1853, %v2137
  %v2248 = vadd.f32 %v1854, %v2138
  %v2249 = vadd.f32 %v1855, %v2139
  %v2250 = vadd.f32 %v1856, %v2140
  %v2251 = vadd.f32 %v1857, %v2141
  %v2252 = vadd.f32 %v1858, %v2142
  %v2253 = vadd.f32 %v1859, %v2143
  %v2254 = vadd.f32 %v1860, %v2144
  %v2255 = vadd.f32 %v1861, %v2145
  %2256 = vset.pattern.permute.xlu0 6
  %2257 = vperm.xlu0 %2256, %v51
  %v2258 = vpop.permute.xlu0 %2257
  %v2260 = vmul.f32 %v2258, %v64
  %v2261 = vmul.f32 %v2258, %v65
  %v2262 = vmul.f32 %v2258, %v66
  %v2263 = vmul.f32 %v2258, %v67
  %v2264 = vmul.f32 %v2258, %v68
  %v2265 = vmul.f32 %v2258, %v69
  %v2266 = vmul.f32 %v2258, %v70
  %v2267 = vmul.f32 %v2258, %v71
  %v2268 = vmul.f32 %v2258, %v72
  %v2269 = vmul.f32 %v2258, %v73
  %v2270 = vmul.f32 %v2258, %v74
  %v2271 = vmul.f32 %v2258, %v75
  %v2272 = vmul.f32 %v2258, %v76
  %v2273 = vmul.f32 %v2258, %v77
  %v2274 = vmul.f32 %v2258, %v78
  %v2275 = vmul.f32 %v2258, %v79
  %v2276 = vmul.f32 %v2258, %v80
  %v2277 = vmul.f32 %v2258, %v81
  %v2278 = vmul.f32 %v2258, %v82
  %v2279 = vmul.f32 %v2258, %v83
  %v2280 = vmul.f32 %v2258, %v84
  %v2281 = vmul.f32 %v2258, %v85
  %v2282 = vmul.f32 %v2258, %v86
  %v2283 = vmul.f32 %v2258, %v87
  %v2284 = vmul.f32 %v2258, %v88
  %v2285 = vmul.f32 %v2258, %v89
  %v2286 = vmul.f32 %v2258, %v90
  %v2287 = vmul.f32 %v2258, %v91
  %v2288 = vmul.f32 %v2258, %v92
  %v2289 = vmul.f32 %v2258, %v93
  %v2290 = vmul.f32 %v2258, %v94
  %v2291 = vmul.f32 %v2258, %v95
  %v2292 = vmul.f32 %v2258, %v96
  %v2293 = vmul.f32 %v2258, %v97
  %v2294 = vmul.f32 %v2258, %v98
  %v2295 = vmul.f32 %v2258, %v99
  %v2296 = vmul.f32 %v2258, %v100
  %v2297 = vmul.f32 %v2258, %v101
  %v2298 = vmul.f32 %v2258, %v102
  %v2299 = vmul.f32 %v2258, %v103
  %v2300 = vmul.f32 %v2258, %v104
  %v2301 = vmul.f32 %v2258, %v105
  %v2302 = vmul.f32 %v2258, %v106
  %v2303 = vmul.f32 %v2258, %v107
  %v2304 = vmul.f32 %v2258, %v108
  %v2305 = vmul.f32 %v2258, %v109
  %v2306 = vmul.f32 %v2258, %v110
  %v2307 = vmul.f32 %v2258, %v111
  %v2308 = vmul.f32 %v2258, %v112
  %v2309 = vmul.f32 %v2258, %v113
  %v2310 = vmul.f32 %v2258, %v114
  %v2311 = vmul.f32 %v2258, %v115
  %v2312 = vmul.f32 %v2258, %v116
  %v2313 = vmul.f32 %v2258, %v117
  %v2314 = vmul.f32 %v2258, %v118
  %v2315 = vmul.f32 %v2258, %v288
  %2372 = vrot.lane.b32.xlu0 %v2260, 72
  %v2373 = vpop.permute.xlu0 %2372
  %2374 = vrot.lane.b32.xlu0 %v2261, 72
  %v2375 = vpop.permute.xlu0 %2374
  %2376 = vrot.lane.b32.xlu0 %v2262, 72
  %v2377 = vpop.permute.xlu0 %2376
  %2378 = vrot.lane.b32.xlu0 %v2263, 72
  %v2379 = vpop.permute.xlu0 %2378
  %2380 = vrot.lane.b32.xlu0 %v2264, 72
  %v2381 = vpop.permute.xlu0 %2380
  %2382 = vrot.lane.b32.xlu0 %v2265, 72
  %v2383 = vpop.permute.xlu0 %2382
  %2384 = vrot.lane.b32.xlu0 %v2266, 72
  %v2385 = vpop.permute.xlu0 %2384
  %2386 = vrot.lane.b32.xlu0 %v2267, 72
  %v2387 = vpop.permute.xlu0 %2386
  %2388 = vrot.lane.b32.xlu0 %v2268, 72
  %v2389 = vpop.permute.xlu0 %2388
  %2390 = vrot.lane.b32.xlu0 %v2269, 72
  %v2391 = vpop.permute.xlu0 %2390
  %2392 = vrot.lane.b32.xlu0 %v2270, 72
  %v2393 = vpop.permute.xlu0 %2392
  %2394 = vrot.lane.b32.xlu0 %v2271, 72
  %v2395 = vpop.permute.xlu0 %2394
  %2396 = vrot.lane.b32.xlu0 %v2272, 72
  %v2397 = vpop.permute.xlu0 %2396
  %2398 = vrot.lane.b32.xlu0 %v2273, 72
  %v2399 = vpop.permute.xlu0 %2398
  %2400 = vrot.lane.b32.xlu0 %v2274, 72
  %v2401 = vpop.permute.xlu0 %2400
  %2402 = vrot.lane.b32.xlu0 %v2275, 72
  %v2403 = vpop.permute.xlu0 %2402
  %2404 = vrot.lane.b32.xlu0 %v2276, 72
  %v2405 = vpop.permute.xlu0 %2404
  %2406 = vrot.lane.b32.xlu0 %v2277, 72
  %v2407 = vpop.permute.xlu0 %2406
  %2408 = vrot.lane.b32.xlu0 %v2278, 72
  %v2409 = vpop.permute.xlu0 %2408
  %2410 = vrot.lane.b32.xlu0 %v2279, 72
  %v2411 = vpop.permute.xlu0 %2410
  %2412 = vrot.lane.b32.xlu0 %v2280, 72
  %v2413 = vpop.permute.xlu0 %2412
  %2414 = vrot.lane.b32.xlu0 %v2281, 72
  %v2415 = vpop.permute.xlu0 %2414
  %2416 = vrot.lane.b32.xlu0 %v2282, 72
  %v2417 = vpop.permute.xlu0 %2416
  %2418 = vrot.lane.b32.xlu0 %v2283, 72
  %v2419 = vpop.permute.xlu0 %2418
  %2420 = vrot.lane.b32.xlu0 %v2284, 72
  %v2421 = vpop.permute.xlu0 %2420
  %2422 = vrot.lane.b32.xlu0 %v2285, 72
  %v2423 = vpop.permute.xlu0 %2422
  %2424 = vrot.lane.b32.xlu0 %v2286, 72
  %v2425 = vpop.permute.xlu0 %2424
  %2426 = vrot.lane.b32.xlu0 %v2287, 72
  %v2427 = vpop.permute.xlu0 %2426
  %2428 = vrot.lane.b32.xlu0 %v2288, 72
  %v2429 = vpop.permute.xlu0 %2428
  %2430 = vrot.lane.b32.xlu0 %v2289, 72
  %v2431 = vpop.permute.xlu0 %2430
  %2432 = vrot.lane.b32.xlu0 %v2290, 72
  %v2433 = vpop.permute.xlu0 %2432
  %2434 = vrot.lane.b32.xlu0 %v2291, 72
  %v2435 = vpop.permute.xlu0 %2434
  %2436 = vrot.lane.b32.xlu0 %v2292, 72
  %v2437 = vpop.permute.xlu0 %2436
  %2438 = vrot.lane.b32.xlu0 %v2293, 72
  %v2439 = vpop.permute.xlu0 %2438
  %2440 = vrot.lane.b32.xlu0 %v2294, 72
  %v2441 = vpop.permute.xlu0 %2440
  %2442 = vrot.lane.b32.xlu0 %v2295, 72
  %v2443 = vpop.permute.xlu0 %2442
  %2444 = vrot.lane.b32.xlu0 %v2296, 72
  %v2445 = vpop.permute.xlu0 %2444
  %2446 = vrot.lane.b32.xlu0 %v2297, 72
  %v2447 = vpop.permute.xlu0 %2446
  %2448 = vrot.lane.b32.xlu0 %v2298, 72
  %v2449 = vpop.permute.xlu0 %2448
  %2450 = vrot.lane.b32.xlu0 %v2299, 72
  %v2451 = vpop.permute.xlu0 %2450
  %2452 = vrot.lane.b32.xlu0 %v2300, 72
  %v2453 = vpop.permute.xlu0 %2452
  %2454 = vrot.lane.b32.xlu0 %v2301, 72
  %v2455 = vpop.permute.xlu0 %2454
  %2456 = vrot.lane.b32.xlu0 %v2302, 72
  %v2457 = vpop.permute.xlu0 %2456
  %2458 = vrot.lane.b32.xlu0 %v2303, 72
  %v2459 = vpop.permute.xlu0 %2458
  %2460 = vrot.lane.b32.xlu0 %v2304, 72
  %v2461 = vpop.permute.xlu0 %2460
  %2462 = vrot.lane.b32.xlu0 %v2305, 72
  %v2463 = vpop.permute.xlu0 %2462
  %2464 = vrot.lane.b32.xlu0 %v2306, 72
  %v2465 = vpop.permute.xlu0 %2464
  %2466 = vrot.lane.b32.xlu0 %v2307, 72
  %v2467 = vpop.permute.xlu0 %2466
  %2468 = vrot.lane.b32.xlu0 %v2308, 72
  %v2469 = vpop.permute.xlu0 %2468
  %2470 = vrot.lane.b32.xlu0 %v2309, 72
  %v2471 = vpop.permute.xlu0 %2470
  %2472 = vrot.lane.b32.xlu0 %v2310, 72
  %v2473 = vpop.permute.xlu0 %2472
  %2474 = vrot.lane.b32.xlu0 %v2311, 72
  %v2475 = vpop.permute.xlu0 %2474
  %2476 = vrot.lane.b32.xlu0 %v2312, 72
  %v2477 = vpop.permute.xlu0 %2476
  %2478 = vrot.lane.b32.xlu0 %v2313, 72
  %v2479 = vpop.permute.xlu0 %2478
  %2480 = vrot.lane.b32.xlu0 %v2314, 72
  %v2481 = vpop.permute.xlu0 %2480
  %2482 = vrot.lane.b32.xlu0 %v2315, 72
  %v2483 = vpop.permute.xlu0 %2482
  %vm2484 = vcmask 588800
  %v2485 = vsel %vm2484, %v2373, %v2375
  %v2486 = vsel %vm2484, %v2375, %v2377
  %v2487 = vsel %vm2484, %v2377, %v2379
  %v2488 = vsel %vm2484, %v2379, %v2381
  %v2489 = vsel %vm2484, %v2381, %v2383
  %v2490 = vsel %vm2484, %v2383, %v2385
  %v2491 = vsel %vm2484, %v2385, %v2387
  %v2492 = vsel %vm2484, %v2387, %v2389
  %v2493 = vsel %vm2484, %v2389, %v2391
  %v2494 = vsel %vm2484, %v2391, %v2393
  %v2495 = vsel %vm2484, %v2393, %v2395
  %v2496 = vsel %vm2484, %v2395, %v2397
  %v2497 = vsel %vm2484, %v2397, %v2399
  %v2498 = vsel %vm2484, %v2399, %v2401
  %v2499 = vsel %vm2484, %v2401, %v2403
  %v2500 = vsel %vm2484, %v2403, %v2405
  %v2501 = vsel %vm2484, %v2405, %v2407
  %v2502 = vsel %vm2484, %v2407, %v2409
  %v2503 = vsel %vm2484, %v2409, %v2411
  %v2504 = vsel %vm2484, %v2411, %v2413
  %v2505 = vsel %vm2484, %v2413, %v2415
  %v2506 = vsel %vm2484, %v2415, %v2417
  %v2507 = vsel %vm2484, %v2417, %v2419
  %v2508 = vsel %vm2484, %v2419, %v2421
  %v2509 = vsel %vm2484, %v2421, %v2423
  %v2510 = vsel %vm2484, %v2423, %v2425
  %v2511 = vsel %vm2484, %v2425, %v2427
  %v2512 = vsel %vm2484, %v2427, %v2429
  %v2513 = vsel %vm2484, %v2429, %v2431
  %v2514 = vsel %vm2484, %v2431, %v2433
  %v2515 = vsel %vm2484, %v2433, %v2435
  %v2516 = vsel %vm2484, %v2435, %v2437
  %v2517 = vsel %vm2484, %v2437, %v2439
  %v2518 = vsel %vm2484, %v2439, %v2441
  %v2519 = vsel %vm2484, %v2441, %v2443
  %v2520 = vsel %vm2484, %v2443, %v2445
  %v2521 = vsel %vm2484, %v2445, %v2447
  %v2522 = vsel %vm2484, %v2447, %v2449
  %v2523 = vsel %vm2484, %v2449, %v2451
  %v2524 = vsel %vm2484, %v2451, %v2453
  %v2525 = vsel %vm2484, %v2453, %v2455
  %v2526 = vsel %vm2484, %v2455, %v2457
  %v2527 = vsel %vm2484, %v2457, %v2459
  %v2528 = vsel %vm2484, %v2459, %v2461
  %v2529 = vsel %vm2484, %v2461, %v2463
  %v2530 = vsel %vm2484, %v2463, %v2465
  %v2531 = vsel %vm2484, %v2465, %v2467
  %v2532 = vsel %vm2484, %v2467, %v2469
  %v2533 = vsel %vm2484, %v2469, %v2471
  %v2534 = vsel %vm2484, %v2471, %v2473
  %v2535 = vsel %vm2484, %v2473, %v2475
  %v2536 = vsel %vm2484, %v2475, %v2477
  %v2537 = vsel %vm2484, %v2477, %v2479
  %v2538 = vsel %vm2484, %v2479, %v2481
  %v2539 = vsel %vm2484, %v2481, %v2483
  %v2595 = vadd.f32 %v2201, %v2485
  %v2596 = vadd.f32 %v2202, %v2486
  %v2597 = vadd.f32 %v2203, %v2487
  %v2598 = vadd.f32 %v2204, %v2488
  %v2599 = vadd.f32 %v2205, %v2489
  %v2600 = vadd.f32 %v2206, %v2490
  %v2601 = vadd.f32 %v2207, %v2491
  %v2602 = vadd.f32 %v2208, %v2492
  %v2603 = vadd.f32 %v2209, %v2493
  %v2604 = vadd.f32 %v2210, %v2494
  %v2605 = vadd.f32 %v2211, %v2495
  %v2606 = vadd.f32 %v2212, %v2496
  %v2607 = vadd.f32 %v2213, %v2497
  %v2608 = vadd.f32 %v2214, %v2498
  %v2609 = vadd.f32 %v2215, %v2499
  %v2610 = vadd.f32 %v2216, %v2500
  %v2611 = vadd.f32 %v2217, %v2501
  %v2612 = vadd.f32 %v2218, %v2502
  %v2613 = vadd.f32 %v2219, %v2503
  %v2614 = vadd.f32 %v2220, %v2504
  %v2615 = vadd.f32 %v2221, %v2505
  %v2616 = vadd.f32 %v2222, %v2506
  %v2617 = vadd.f32 %v2223, %v2507
  %v2618 = vadd.f32 %v2224, %v2508
  %v2619 = vadd.f32 %v2225, %v2509
  %v2620 = vadd.f32 %v2226, %v2510
  %v2621 = vadd.f32 %v2227, %v2511
  %v2622 = vadd.f32 %v2228, %v2512
  %v2623 = vadd.f32 %v2229, %v2513
  %v2624 = vadd.f32 %v2230, %v2514
  %v2625 = vadd.f32 %v2231, %v2515
  %v2626 = vadd.f32 %v2232, %v2516
  %v2627 = vadd.f32 %v2233, %v2517
  %v2628 = vadd.f32 %v2234, %v2518
  %v2629 = vadd.f32 %v2235, %v2519
  %v2630 = vadd.f32 %v2236, %v2520
  %v2631 = vadd.f32 %v2237, %v2521
  %v2632 = vadd.f32 %v2238, %v2522
  %v2633 = vadd.f32 %v2239, %v2523
  %v2634 = vadd.f32 %v2240, %v2524
  %v2635 = vadd.f32 %v2241, %v2525
  %v2636 = vadd.f32 %v2242, %v2526
  %v2637 = vadd.f32 %v2243, %v2527
  %v2638 = vadd.f32 %v2244, %v2528
  %v2639 = vadd.f32 %v2245, %v2529
  %v2640 = vadd.f32 %v2246, %v2530
  %v2641 = vadd.f32 %v2247, %v2531
  %v2642 = vadd.f32 %v2248, %v2532
  %v2643 = vadd.f32 %v2249, %v2533
  %v2644 = vadd.f32 %v2250, %v2534
  %v2645 = vadd.f32 %v2251, %v2535
  %v2646 = vadd.f32 %v2252, %v2536
  %v2647 = vadd.f32 %v2253, %v2537
  %v2648 = vadd.f32 %v2254, %v2538
  %v2649 = vadd.f32 %v2255, %v2539
  %2650 = vset.pattern.permute.xlu0 7
  %2651 = vperm.xlu0 %2650, %v51
  %v2652 = vpop.permute.xlu0 %2651
  %v2654 = vmul.f32 %v2652, %v64
  %v2655 = vmul.f32 %v2652, %v65
  %v2656 = vmul.f32 %v2652, %v66
  %v2657 = vmul.f32 %v2652, %v67
  %v2658 = vmul.f32 %v2652, %v68
  %v2659 = vmul.f32 %v2652, %v69
  %v2660 = vmul.f32 %v2652, %v70
  %v2661 = vmul.f32 %v2652, %v71
  %v2662 = vmul.f32 %v2652, %v72
  %v2663 = vmul.f32 %v2652, %v73
  %v2664 = vmul.f32 %v2652, %v74
  %v2665 = vmul.f32 %v2652, %v75
  %v2666 = vmul.f32 %v2652, %v76
  %v2667 = vmul.f32 %v2652, %v77
  %v2668 = vmul.f32 %v2652, %v78
  %v2669 = vmul.f32 %v2652, %v79
  %v2670 = vmul.f32 %v2652, %v80
  %v2671 = vmul.f32 %v2652, %v81
  %v2672 = vmul.f32 %v2652, %v82
  %v2673 = vmul.f32 %v2652, %v83
  %v2674 = vmul.f32 %v2652, %v84
  %v2675 = vmul.f32 %v2652, %v85
  %v2676 = vmul.f32 %v2652, %v86
  %v2677 = vmul.f32 %v2652, %v87
  %v2678 = vmul.f32 %v2652, %v88
  %v2679 = vmul.f32 %v2652, %v89
  %v2680 = vmul.f32 %v2652, %v90
  %v2681 = vmul.f32 %v2652, %v91
  %v2682 = vmul.f32 %v2652, %v92
  %v2683 = vmul.f32 %v2652, %v93
  %v2684 = vmul.f32 %v2652, %v94
  %v2685 = vmul.f32 %v2652, %v95
  %v2686 = vmul.f32 %v2652, %v96
  %v2687 = vmul.f32 %v2652, %v97
  %v2688 = vmul.f32 %v2652, %v98
  %v2689 = vmul.f32 %v2652, %v99
  %v2690 = vmul.f32 %v2652, %v100
  %v2691 = vmul.f32 %v2652, %v101
  %v2692 = vmul.f32 %v2652, %v102
  %v2693 = vmul.f32 %v2652, %v103
  %v2694 = vmul.f32 %v2652, %v104
  %v2695 = vmul.f32 %v2652, %v105
  %v2696 = vmul.f32 %v2652, %v106
  %v2697 = vmul.f32 %v2652, %v107
  %v2698 = vmul.f32 %v2652, %v108
  %v2699 = vmul.f32 %v2652, %v109
  %v2700 = vmul.f32 %v2652, %v110
  %v2701 = vmul.f32 %v2652, %v111
  %v2702 = vmul.f32 %v2652, %v112
  %v2703 = vmul.f32 %v2652, %v113
  %v2704 = vmul.f32 %v2652, %v114
  %v2705 = vmul.f32 %v2652, %v115
  %v2706 = vmul.f32 %v2652, %v116
  %v2707 = vmul.f32 %v2652, %v117
  %v2708 = vmul.f32 %v2652, %v118
  %v2709 = vmul.f32 %v2652, %v288
  %2766 = vrot.lane.b32.xlu0 %v2654, 71
  %v2767 = vpop.permute.xlu0 %2766
  %2768 = vrot.lane.b32.xlu0 %v2655, 71
  %v2769 = vpop.permute.xlu0 %2768
  %2770 = vrot.lane.b32.xlu0 %v2656, 71
  %v2771 = vpop.permute.xlu0 %2770
  %2772 = vrot.lane.b32.xlu0 %v2657, 71
  %v2773 = vpop.permute.xlu0 %2772
  %2774 = vrot.lane.b32.xlu0 %v2658, 71
  %v2775 = vpop.permute.xlu0 %2774
  %2776 = vrot.lane.b32.xlu0 %v2659, 71
  %v2777 = vpop.permute.xlu0 %2776
  %2778 = vrot.lane.b32.xlu0 %v2660, 71
  %v2779 = vpop.permute.xlu0 %2778
  %2780 = vrot.lane.b32.xlu0 %v2661, 71
  %v2781 = vpop.permute.xlu0 %2780
  %2782 = vrot.lane.b32.xlu0 %v2662, 71
  %v2783 = vpop.permute.xlu0 %2782
  %2784 = vrot.lane.b32.xlu0 %v2663, 71
  %v2785 = vpop.permute.xlu0 %2784
  %2786 = vrot.lane.b32.xlu0 %v2664, 71
  %v2787 = vpop.permute.xlu0 %2786
  %2788 = vrot.lane.b32.xlu0 %v2665, 71
  %v2789 = vpop.permute.xlu0 %2788
  %2790 = vrot.lane.b32.xlu0 %v2666, 71
  %v2791 = vpop.permute.xlu0 %2790
  %2792 = vrot.lane.b32.xlu0 %v2667, 71
  %v2793 = vpop.permute.xlu0 %2792
  %2794 = vrot.lane.b32.xlu0 %v2668, 71
  %v2795 = vpop.permute.xlu0 %2794
  %2796 = vrot.lane.b32.xlu0 %v2669, 71
  %v2797 = vpop.permute.xlu0 %2796
  %2798 = vrot.lane.b32.xlu0 %v2670, 71
  %v2799 = vpop.permute.xlu0 %2798
  %2800 = vrot.lane.b32.xlu0 %v2671, 71
  %v2801 = vpop.permute.xlu0 %2800
  %2802 = vrot.lane.b32.xlu0 %v2672, 71
  %v2803 = vpop.permute.xlu0 %2802
  %2804 = vrot.lane.b32.xlu0 %v2673, 71
  %v2805 = vpop.permute.xlu0 %2804
  %2806 = vrot.lane.b32.xlu0 %v2674, 71
  %v2807 = vpop.permute.xlu0 %2806
  %2808 = vrot.lane.b32.xlu0 %v2675, 71
  %v2809 = vpop.permute.xlu0 %2808
  %2810 = vrot.lane.b32.xlu0 %v2676, 71
  %v2811 = vpop.permute.xlu0 %2810
  %2812 = vrot.lane.b32.xlu0 %v2677, 71
  %v2813 = vpop.permute.xlu0 %2812
  %2814 = vrot.lane.b32.xlu0 %v2678, 71
  %v2815 = vpop.permute.xlu0 %2814
  %2816 = vrot.lane.b32.xlu0 %v2679, 71
  %v2817 = vpop.permute.xlu0 %2816
  %2818 = vrot.lane.b32.xlu0 %v2680, 71
  %v2819 = vpop.permute.xlu0 %2818
  %2820 = vrot.lane.b32.xlu0 %v2681, 71
  %v2821 = vpop.permute.xlu0 %2820
  %2822 = vrot.lane.b32.xlu0 %v2682, 71
  %v2823 = vpop.permute.xlu0 %2822
  %2824 = vrot.lane.b32.xlu0 %v2683, 71
  %v2825 = vpop.permute.xlu0 %2824
  %2826 = vrot.lane.b32.xlu0 %v2684, 71
  %v2827 = vpop.permute.xlu0 %2826
  %2828 = vrot.lane.b32.xlu0 %v2685, 71
  %v2829 = vpop.permute.xlu0 %2828
  %2830 = vrot.lane.b32.xlu0 %v2686, 71
  %v2831 = vpop.permute.xlu0 %2830
  %2832 = vrot.lane.b32.xlu0 %v2687, 71
  %v2833 = vpop.permute.xlu0 %2832
  %2834 = vrot.lane.b32.xlu0 %v2688, 71
  %v2835 = vpop.permute.xlu0 %2834
  %2836 = vrot.lane.b32.xlu0 %v2689, 71
  %v2837 = vpop.permute.xlu0 %2836
  %2838 = vrot.lane.b32.xlu0 %v2690, 71
  %v2839 = vpop.permute.xlu0 %2838
  %2840 = vrot.lane.b32.xlu0 %v2691, 71
  %v2841 = vpop.permute.xlu0 %2840
  %2842 = vrot.lane.b32.xlu0 %v2692, 71
  %v2843 = vpop.permute.xlu0 %2842
  %2844 = vrot.lane.b32.xlu0 %v2693, 71
  %v2845 = vpop.permute.xlu0 %2844
  %2846 = vrot.lane.b32.xlu0 %v2694, 71
  %v2847 = vpop.permute.xlu0 %2846
  %2848 = vrot.lane.b32.xlu0 %v2695, 71
  %v2849 = vpop.permute.xlu0 %2848
  %2850 = vrot.lane.b32.xlu0 %v2696, 71
  %v2851 = vpop.permute.xlu0 %2850
  %2852 = vrot.lane.b32.xlu0 %v2697, 71
  %v2853 = vpop.permute.xlu0 %2852
  %2854 = vrot.lane.b32.xlu0 %v2698, 71
  %v2855 = vpop.permute.xlu0 %2854
  %2856 = vrot.lane.b32.xlu0 %v2699, 71
  %v2857 = vpop.permute.xlu0 %2856
  %2858 = vrot.lane.b32.xlu0 %v2700, 71
  %v2859 = vpop.permute.xlu0 %2858
  %2860 = vrot.lane.b32.xlu0 %v2701, 71
  %v2861 = vpop.permute.xlu0 %2860
  %2862 = vrot.lane.b32.xlu0 %v2702, 71
  %v2863 = vpop.permute.xlu0 %2862
  %2864 = vrot.lane.b32.xlu0 %v2703, 71
  %v2865 = vpop.permute.xlu0 %2864
  %2866 = vrot.lane.b32.xlu0 %v2704, 71
  %v2867 = vpop.permute.xlu0 %2866
  %2868 = vrot.lane.b32.xlu0 %v2705, 71
  %v2869 = vpop.permute.xlu0 %2868
  %2870 = vrot.lane.b32.xlu0 %v2706, 71
  %v2871 = vpop.permute.xlu0 %2870
  %2872 = vrot.lane.b32.xlu0 %v2707, 71
  %v2873 = vpop.permute.xlu0 %2872
  %2874 = vrot.lane.b32.xlu0 %v2708, 71
  %v2875 = vpop.permute.xlu0 %2874
  %2876 = vrot.lane.b32.xlu0 %v2709, 71
  %v2877 = vpop.permute.xlu0 %2876
  %vm2878 = vcmask 580608
  %v2879 = vsel %vm2878, %v2767, %v2769
  %v2880 = vsel %vm2878, %v2769, %v2771
  %v2881 = vsel %vm2878, %v2771, %v2773
  %v2882 = vsel %vm2878, %v2773, %v2775
  %v2883 = vsel %vm2878, %v2775, %v2777
  %v2884 = vsel %vm2878, %v2777, %v2779
  %v2885 = vsel %vm2878, %v2779, %v2781
  %v2886 = vsel %vm2878, %v2781, %v2783
  %v2887 = vsel %vm2878, %v2783, %v2785
  %v2888 = vsel %vm2878, %v2785, %v2787
  %v2889 = vsel %vm2878, %v2787, %v2789
  %v2890 = vsel %vm2878, %v2789, %v2791
  %v2891 = vsel %vm2878, %v2791, %v2793
  %v2892 = vsel %vm2878, %v2793, %v2795
  %v2893 = vsel %vm2878, %v2795, %v2797
  %v2894 = vsel %vm2878, %v2797, %v2799
  %v2895 = vsel %vm2878, %v2799, %v2801
  %v2896 = vsel %vm2878, %v2801, %v2803
  %v2897 = vsel %vm2878, %v2803, %v2805
  %v2898 = vsel %vm2878, %v2805, %v2807
  %v2899 = vsel %vm2878, %v2807, %v2809
  %v2900 = vsel %vm2878, %v2809, %v2811
  %v2901 = vsel %vm2878, %v2811, %v2813
  %v2902 = vsel %vm2878, %v2813, %v2815
  %v2903 = vsel %vm2878, %v2815, %v2817
  %v2904 = vsel %vm2878, %v2817, %v2819
  %v2905 = vsel %vm2878, %v2819, %v2821
  %v2906 = vsel %vm2878, %v2821, %v2823
  %v2907 = vsel %vm2878, %v2823, %v2825
  %v2908 = vsel %vm2878, %v2825, %v2827
  %v2909 = vsel %vm2878, %v2827, %v2829
  %v2910 = vsel %vm2878, %v2829, %v2831
  %v2911 = vsel %vm2878, %v2831, %v2833
  %v2912 = vsel %vm2878, %v2833, %v2835
  %v2913 = vsel %vm2878, %v2835, %v2837
  %v2914 = vsel %vm2878, %v2837, %v2839
  %v2915 = vsel %vm2878, %v2839, %v2841
  %v2916 = vsel %vm2878, %v2841, %v2843
  %v2917 = vsel %vm2878, %v2843, %v2845
  %v2918 = vsel %vm2878, %v2845, %v2847
  %v2919 = vsel %vm2878, %v2847, %v2849
  %v2920 = vsel %vm2878, %v2849, %v2851
  %v2921 = vsel %vm2878, %v2851, %v2853
  %v2922 = vsel %vm2878, %v2853, %v2855
  %v2923 = vsel %vm2878, %v2855, %v2857
  %v2924 = vsel %vm2878, %v2857, %v2859
  %v2925 = vsel %vm2878, %v2859, %v2861
  %v2926 = vsel %vm2878, %v2861, %v2863
  %v2927 = vsel %vm2878, %v2863, %v2865
  %v2928 = vsel %vm2878, %v2865, %v2867
  %v2929 = vsel %vm2878, %v2867, %v2869
  %v2930 = vsel %vm2878, %v2869, %v2871
  %v2931 = vsel %vm2878, %v2871, %v2873
  %v2932 = vsel %vm2878, %v2873, %v2875
  %v2933 = vsel %vm2878, %v2875, %v2877
  %v2989 = vadd.f32 %v2595, %v2879
  %v2990 = vadd.f32 %v2596, %v2880
  %v2991 = vadd.f32 %v2597, %v2881
  %v2992 = vadd.f32 %v2598, %v2882
  %v2993 = vadd.f32 %v2599, %v2883
  %v2994 = vadd.f32 %v2600, %v2884
  %v2995 = vadd.f32 %v2601, %v2885
  %v2996 = vadd.f32 %v2602, %v2886
  %v2997 = vadd.f32 %v2603, %v2887
  %v2998 = vadd.f32 %v2604, %v2888
  %v2999 = vadd.f32 %v2605, %v2889
  %v3000 = vadd.f32 %v2606, %v2890
  %v3001 = vadd.f32 %v2607, %v2891
  %v3002 = vadd.f32 %v2608, %v2892
  %v3003 = vadd.f32 %v2609, %v2893
  %v3004 = vadd.f32 %v2610, %v2894
  %v3005 = vadd.f32 %v2611, %v2895
  %v3006 = vadd.f32 %v2612, %v2896
  %v3007 = vadd.f32 %v2613, %v2897
  %v3008 = vadd.f32 %v2614, %v2898
  %v3009 = vadd.f32 %v2615, %v2899
  %v3010 = vadd.f32 %v2616, %v2900
  %v3011 = vadd.f32 %v2617, %v2901
  %v3012 = vadd.f32 %v2618, %v2902
  %v3013 = vadd.f32 %v2619, %v2903
  %v3014 = vadd.f32 %v2620, %v2904
  %v3015 = vadd.f32 %v2621, %v2905
  %v3016 = vadd.f32 %v2622, %v2906
  %v3017 = vadd.f32 %v2623, %v2907
  %v3018 = vadd.f32 %v2624, %v2908
  %v3019 = vadd.f32 %v2625, %v2909
  %v3020 = vadd.f32 %v2626, %v2910
  %v3021 = vadd.f32 %v2627, %v2911
  %v3022 = vadd.f32 %v2628, %v2912
  %v3023 = vadd.f32 %v2629, %v2913
  %v3024 = vadd.f32 %v2630, %v2914
  %v3025 = vadd.f32 %v2631, %v2915
  %v3026 = vadd.f32 %v2632, %v2916
  %v3027 = vadd.f32 %v2633, %v2917
  %v3028 = vadd.f32 %v2634, %v2918
  %v3029 = vadd.f32 %v2635, %v2919
  %v3030 = vadd.f32 %v2636, %v2920
  %v3031 = vadd.f32 %v2637, %v2921
  %v3032 = vadd.f32 %v2638, %v2922
  %v3033 = vadd.f32 %v2639, %v2923
  %v3034 = vadd.f32 %v2640, %v2924
  %v3035 = vadd.f32 %v2641, %v2925
  %v3036 = vadd.f32 %v2642, %v2926
  %v3037 = vadd.f32 %v2643, %v2927
  %v3038 = vadd.f32 %v2644, %v2928
  %v3039 = vadd.f32 %v2645, %v2929
  %v3040 = vadd.f32 %v2646, %v2930
  %v3041 = vadd.f32 %v2647, %v2931
  %v3042 = vadd.f32 %v2648, %v2932
  %v3043 = vadd.f32 %v2649, %v2933
  %3044 = vset.pattern.permute.xlu0 8
  %3045 = vperm.xlu0 %3044, %v51
  %v3046 = vpop.permute.xlu0 %3045
  %v3048 = vmul.f32 %v3046, %v64
  %v3049 = vmul.f32 %v3046, %v65
  %v3050 = vmul.f32 %v3046, %v66
  %v3051 = vmul.f32 %v3046, %v67
  %v3052 = vmul.f32 %v3046, %v68
  %v3053 = vmul.f32 %v3046, %v69
  %v3054 = vmul.f32 %v3046, %v70
  %v3055 = vmul.f32 %v3046, %v71
  %v3056 = vmul.f32 %v3046, %v72
  %v3057 = vmul.f32 %v3046, %v73
  %v3058 = vmul.f32 %v3046, %v74
  %v3059 = vmul.f32 %v3046, %v75
  %v3060 = vmul.f32 %v3046, %v76
  %v3061 = vmul.f32 %v3046, %v77
  %v3062 = vmul.f32 %v3046, %v78
  %v3063 = vmul.f32 %v3046, %v79
  %v3064 = vmul.f32 %v3046, %v80
  %v3065 = vmul.f32 %v3046, %v81
  %v3066 = vmul.f32 %v3046, %v82
  %v3067 = vmul.f32 %v3046, %v83
  %v3068 = vmul.f32 %v3046, %v84
  %v3069 = vmul.f32 %v3046, %v85
  %v3070 = vmul.f32 %v3046, %v86
  %v3071 = vmul.f32 %v3046, %v87
  %v3072 = vmul.f32 %v3046, %v88
  %v3073 = vmul.f32 %v3046, %v89
  %v3074 = vmul.f32 %v3046, %v90
  %v3075 = vmul.f32 %v3046, %v91
  %v3076 = vmul.f32 %v3046, %v92
  %v3077 = vmul.f32 %v3046, %v93
  %v3078 = vmul.f32 %v3046, %v94
  %v3079 = vmul.f32 %v3046, %v95
  %v3080 = vmul.f32 %v3046, %v96
  %v3081 = vmul.f32 %v3046, %v97
  %v3082 = vmul.f32 %v3046, %v98
  %v3083 = vmul.f32 %v3046, %v99
  %v3084 = vmul.f32 %v3046, %v100
  %v3085 = vmul.f32 %v3046, %v101
  %v3086 = vmul.f32 %v3046, %v102
  %v3087 = vmul.f32 %v3046, %v103
  %v3088 = vmul.f32 %v3046, %v104
  %v3089 = vmul.f32 %v3046, %v105
  %v3090 = vmul.f32 %v3046, %v106
  %v3091 = vmul.f32 %v3046, %v107
  %v3092 = vmul.f32 %v3046, %v108
  %v3093 = vmul.f32 %v3046, %v109
  %v3094 = vmul.f32 %v3046, %v110
  %v3095 = vmul.f32 %v3046, %v111
  %v3096 = vmul.f32 %v3046, %v112
  %v3097 = vmul.f32 %v3046, %v113
  %v3098 = vmul.f32 %v3046, %v114
  %v3099 = vmul.f32 %v3046, %v115
  %v3100 = vmul.f32 %v3046, %v116
  %v3101 = vmul.f32 %v3046, %v117
  %v3102 = vmul.f32 %v3046, %v118
  %v3103 = vmul.f32 %v3046, %v288
  %3160 = vrot.lane.b32.xlu0 %v3048, 70
  %v3161 = vpop.permute.xlu0 %3160
  %3162 = vrot.lane.b32.xlu0 %v3049, 70
  %v3163 = vpop.permute.xlu0 %3162
  %3164 = vrot.lane.b32.xlu0 %v3050, 70
  %v3165 = vpop.permute.xlu0 %3164
  %3166 = vrot.lane.b32.xlu0 %v3051, 70
  %v3167 = vpop.permute.xlu0 %3166
  %3168 = vrot.lane.b32.xlu0 %v3052, 70
  %v3169 = vpop.permute.xlu0 %3168
  %3170 = vrot.lane.b32.xlu0 %v3053, 70
  %v3171 = vpop.permute.xlu0 %3170
  %3172 = vrot.lane.b32.xlu0 %v3054, 70
  %v3173 = vpop.permute.xlu0 %3172
  %3174 = vrot.lane.b32.xlu0 %v3055, 70
  %v3175 = vpop.permute.xlu0 %3174
  %3176 = vrot.lane.b32.xlu0 %v3056, 70
  %v3177 = vpop.permute.xlu0 %3176
  %3178 = vrot.lane.b32.xlu0 %v3057, 70
  %v3179 = vpop.permute.xlu0 %3178
  %3180 = vrot.lane.b32.xlu0 %v3058, 70
  %v3181 = vpop.permute.xlu0 %3180
  %3182 = vrot.lane.b32.xlu0 %v3059, 70
  %v3183 = vpop.permute.xlu0 %3182
  %3184 = vrot.lane.b32.xlu0 %v3060, 70
  %v3185 = vpop.permute.xlu0 %3184
  %3186 = vrot.lane.b32.xlu0 %v3061, 70
  %v3187 = vpop.permute.xlu0 %3186
  %3188 = vrot.lane.b32.xlu0 %v3062, 70
  %v3189 = vpop.permute.xlu0 %3188
  %3190 = vrot.lane.b32.xlu0 %v3063, 70
  %v3191 = vpop.permute.xlu0 %3190
  %3192 = vrot.lane.b32.xlu0 %v3064, 70
  %v3193 = vpop.permute.xlu0 %3192
  %3194 = vrot.lane.b32.xlu0 %v3065, 70
  %v3195 = vpop.permute.xlu0 %3194
  %3196 = vrot.lane.b32.xlu0 %v3066, 70
  %v3197 = vpop.permute.xlu0 %3196
  %3198 = vrot.lane.b32.xlu0 %v3067, 70
  %v3199 = vpop.permute.xlu0 %3198
  %3200 = vrot.lane.b32.xlu0 %v3068, 70
  %v3201 = vpop.permute.xlu0 %3200
  %3202 = vrot.lane.b32.xlu0 %v3069, 70
  %v3203 = vpop.permute.xlu0 %3202
  %3204 = vrot.lane.b32.xlu0 %v3070, 70
  %v3205 = vpop.permute.xlu0 %3204
  %3206 = vrot.lane.b32.xlu0 %v3071, 70
  %v3207 = vpop.permute.xlu0 %3206
  %3208 = vrot.lane.b32.xlu0 %v3072, 70
  %v3209 = vpop.permute.xlu0 %3208
  %3210 = vrot.lane.b32.xlu0 %v3073, 70
  %v3211 = vpop.permute.xlu0 %3210
  %3212 = vrot.lane.b32.xlu0 %v3074, 70
  %v3213 = vpop.permute.xlu0 %3212
  %3214 = vrot.lane.b32.xlu0 %v3075, 70
  %v3215 = vpop.permute.xlu0 %3214
  %3216 = vrot.lane.b32.xlu0 %v3076, 70
  %v3217 = vpop.permute.xlu0 %3216
  %3218 = vrot.lane.b32.xlu0 %v3077, 70
  %v3219 = vpop.permute.xlu0 %3218
  %3220 = vrot.lane.b32.xlu0 %v3078, 70
  %v3221 = vpop.permute.xlu0 %3220
  %3222 = vrot.lane.b32.xlu0 %v3079, 70
  %v3223 = vpop.permute.xlu0 %3222
  %3224 = vrot.lane.b32.xlu0 %v3080, 70
  %v3225 = vpop.permute.xlu0 %3224
  %3226 = vrot.lane.b32.xlu0 %v3081, 70
  %v3227 = vpop.permute.xlu0 %3226
  %3228 = vrot.lane.b32.xlu0 %v3082, 70
  %v3229 = vpop.permute.xlu0 %3228
  %3230 = vrot.lane.b32.xlu0 %v3083, 70
  %v3231 = vpop.permute.xlu0 %3230
  %3232 = vrot.lane.b32.xlu0 %v3084, 70
  %v3233 = vpop.permute.xlu0 %3232
  %3234 = vrot.lane.b32.xlu0 %v3085, 70
  %v3235 = vpop.permute.xlu0 %3234
  %3236 = vrot.lane.b32.xlu0 %v3086, 70
  %v3237 = vpop.permute.xlu0 %3236
  %3238 = vrot.lane.b32.xlu0 %v3087, 70
  %v3239 = vpop.permute.xlu0 %3238
  %3240 = vrot.lane.b32.xlu0 %v3088, 70
  %v3241 = vpop.permute.xlu0 %3240
  %3242 = vrot.lane.b32.xlu0 %v3089, 70
  %v3243 = vpop.permute.xlu0 %3242
  %3244 = vrot.lane.b32.xlu0 %v3090, 70
  %v3245 = vpop.permute.xlu0 %3244
  %3246 = vrot.lane.b32.xlu0 %v3091, 70
  %v3247 = vpop.permute.xlu0 %3246
  %3248 = vrot.lane.b32.xlu0 %v3092, 70
  %v3249 = vpop.permute.xlu0 %3248
  %3250 = vrot.lane.b32.xlu0 %v3093, 70
  %v3251 = vpop.permute.xlu0 %3250
  %3252 = vrot.lane.b32.xlu0 %v3094, 70
  %v3253 = vpop.permute.xlu0 %3252
  %3254 = vrot.lane.b32.xlu0 %v3095, 70
  %v3255 = vpop.permute.xlu0 %3254
  %3256 = vrot.lane.b32.xlu0 %v3096, 70
  %v3257 = vpop.permute.xlu0 %3256
  %3258 = vrot.lane.b32.xlu0 %v3097, 70
  %v3259 = vpop.permute.xlu0 %3258
  %3260 = vrot.lane.b32.xlu0 %v3098, 70
  %v3261 = vpop.permute.xlu0 %3260
  %3262 = vrot.lane.b32.xlu0 %v3099, 70
  %v3263 = vpop.permute.xlu0 %3262
  %3264 = vrot.lane.b32.xlu0 %v3100, 70
  %v3265 = vpop.permute.xlu0 %3264
  %3266 = vrot.lane.b32.xlu0 %v3101, 70
  %v3267 = vpop.permute.xlu0 %3266
  %3268 = vrot.lane.b32.xlu0 %v3102, 70
  %v3269 = vpop.permute.xlu0 %3268
  %3270 = vrot.lane.b32.xlu0 %v3103, 70
  %v3271 = vpop.permute.xlu0 %3270
  %vm3272 = vcmask 572416
  %v3273 = vsel %vm3272, %v3161, %v3163
  %v3274 = vsel %vm3272, %v3163, %v3165
  %v3275 = vsel %vm3272, %v3165, %v3167
  %v3276 = vsel %vm3272, %v3167, %v3169
  %v3277 = vsel %vm3272, %v3169, %v3171
  %v3278 = vsel %vm3272, %v3171, %v3173
  %v3279 = vsel %vm3272, %v3173, %v3175
  %v3280 = vsel %vm3272, %v3175, %v3177
  %v3281 = vsel %vm3272, %v3177, %v3179
  %v3282 = vsel %vm3272, %v3179, %v3181
  %v3283 = vsel %vm3272, %v3181, %v3183
  %v3284 = vsel %vm3272, %v3183, %v3185
  %v3285 = vsel %vm3272, %v3185, %v3187
  %v3286 = vsel %vm3272, %v3187, %v3189
  %v3287 = vsel %vm3272, %v3189, %v3191
  %v3288 = vsel %vm3272, %v3191, %v3193
  %v3289 = vsel %vm3272, %v3193, %v3195
  %v3290 = vsel %vm3272, %v3195, %v3197
  %v3291 = vsel %vm3272, %v3197, %v3199
  %v3292 = vsel %vm3272, %v3199, %v3201
  %v3293 = vsel %vm3272, %v3201, %v3203
  %v3294 = vsel %vm3272, %v3203, %v3205
  %v3295 = vsel %vm3272, %v3205, %v3207
  %v3296 = vsel %vm3272, %v3207, %v3209
  %v3297 = vsel %vm3272, %v3209, %v3211
  %v3298 = vsel %vm3272, %v3211, %v3213
  %v3299 = vsel %vm3272, %v3213, %v3215
  %v3300 = vsel %vm3272, %v3215, %v3217
  %v3301 = vsel %vm3272, %v3217, %v3219
  %v3302 = vsel %vm3272, %v3219, %v3221
  %v3303 = vsel %vm3272, %v3221, %v3223
  %v3304 = vsel %vm3272, %v3223, %v3225
  %v3305 = vsel %vm3272, %v3225, %v3227
  %v3306 = vsel %vm3272, %v3227, %v3229
  %v3307 = vsel %vm3272, %v3229, %v3231
  %v3308 = vsel %vm3272, %v3231, %v3233
  %v3309 = vsel %vm3272, %v3233, %v3235
  %v3310 = vsel %vm3272, %v3235, %v3237
  %v3311 = vsel %vm3272, %v3237, %v3239
  %v3312 = vsel %vm3272, %v3239, %v3241
  %v3313 = vsel %vm3272, %v3241, %v3243
  %v3314 = vsel %vm3272, %v3243, %v3245
  %v3315 = vsel %vm3272, %v3245, %v3247
  %v3316 = vsel %vm3272, %v3247, %v3249
  %v3317 = vsel %vm3272, %v3249, %v3251
  %v3318 = vsel %vm3272, %v3251, %v3253
  %v3319 = vsel %vm3272, %v3253, %v3255
  %v3320 = vsel %vm3272, %v3255, %v3257
  %v3321 = vsel %vm3272, %v3257, %v3259
  %v3322 = vsel %vm3272, %v3259, %v3261
  %v3323 = vsel %vm3272, %v3261, %v3263
  %v3324 = vsel %vm3272, %v3263, %v3265
  %v3325 = vsel %vm3272, %v3265, %v3267
  %v3326 = vsel %vm3272, %v3267, %v3269
  %v3327 = vsel %vm3272, %v3269, %v3271
  %v3383 = vadd.f32 %v2989, %v3273
  %v3384 = vadd.f32 %v2990, %v3274
  %v3385 = vadd.f32 %v2991, %v3275
  %v3386 = vadd.f32 %v2992, %v3276
  %v3387 = vadd.f32 %v2993, %v3277
  %v3388 = vadd.f32 %v2994, %v3278
  %v3389 = vadd.f32 %v2995, %v3279
  %v3390 = vadd.f32 %v2996, %v3280
  %v3391 = vadd.f32 %v2997, %v3281
  %v3392 = vadd.f32 %v2998, %v3282
  %v3393 = vadd.f32 %v2999, %v3283
  %v3394 = vadd.f32 %v3000, %v3284
  %v3395 = vadd.f32 %v3001, %v3285
  %v3396 = vadd.f32 %v3002, %v3286
  %v3397 = vadd.f32 %v3003, %v3287
  %v3398 = vadd.f32 %v3004, %v3288
  %v3399 = vadd.f32 %v3005, %v3289
  %v3400 = vadd.f32 %v3006, %v3290
  %v3401 = vadd.f32 %v3007, %v3291
  %v3402 = vadd.f32 %v3008, %v3292
  %v3403 = vadd.f32 %v3009, %v3293
  %v3404 = vadd.f32 %v3010, %v3294
  %v3405 = vadd.f32 %v3011, %v3295
  %v3406 = vadd.f32 %v3012, %v3296
  %v3407 = vadd.f32 %v3013, %v3297
  %v3408 = vadd.f32 %v3014, %v3298
  %v3409 = vadd.f32 %v3015, %v3299
  %v3410 = vadd.f32 %v3016, %v3300
  %v3411 = vadd.f32 %v3017, %v3301
  %v3412 = vadd.f32 %v3018, %v3302
  %v3413 = vadd.f32 %v3019, %v3303
  %v3414 = vadd.f32 %v3020, %v3304
  %v3415 = vadd.f32 %v3021, %v3305
  %v3416 = vadd.f32 %v3022, %v3306
  %v3417 = vadd.f32 %v3023, %v3307
  %v3418 = vadd.f32 %v3024, %v3308
  %v3419 = vadd.f32 %v3025, %v3309
  %v3420 = vadd.f32 %v3026, %v3310
  %v3421 = vadd.f32 %v3027, %v3311
  %v3422 = vadd.f32 %v3028, %v3312
  %v3423 = vadd.f32 %v3029, %v3313
  %v3424 = vadd.f32 %v3030, %v3314
  %v3425 = vadd.f32 %v3031, %v3315
  %v3426 = vadd.f32 %v3032, %v3316
  %v3427 = vadd.f32 %v3033, %v3317
  %v3428 = vadd.f32 %v3034, %v3318
  %v3429 = vadd.f32 %v3035, %v3319
  %v3430 = vadd.f32 %v3036, %v3320
  %v3431 = vadd.f32 %v3037, %v3321
  %v3432 = vadd.f32 %v3038, %v3322
  %v3433 = vadd.f32 %v3039, %v3323
  %v3434 = vadd.f32 %v3040, %v3324
  %v3435 = vadd.f32 %v3041, %v3325
  %v3436 = vadd.f32 %v3042, %v3326
  %v3437 = vadd.f32 %v3043, %v3327
  %v3438 = vld [vmem:[%s2] sm:$0xff]
  %3440 = vset.pattern.permute.xlu0 0
  %3441 = vperm.xlu0 %3440, %v3438
  %v3442 = vpop.permute.xlu0 %3441
  %v3444 = vadd.f32 %v3383, %v3442
  %v3445 = vadd.f32 %v3384, %v3442
  %v3446 = vadd.f32 %v3385, %v3442
  %v3447 = vadd.f32 %v3386, %v3442
  %v3448 = vadd.f32 %v3387, %v3442
  %v3449 = vadd.f32 %v3388, %v3442
  %v3450 = vadd.f32 %v3389, %v3442
  %v3451 = vadd.f32 %v3390, %v3442
  %v3452 = vadd.f32 %v3391, %v3442
  %v3453 = vadd.f32 %v3392, %v3442
  %v3454 = vadd.f32 %v3393, %v3442
  %v3455 = vadd.f32 %v3394, %v3442
  %v3456 = vadd.f32 %v3395, %v3442
  %v3457 = vadd.f32 %v3396, %v3442
  %v3458 = vadd.f32 %v3397, %v3442
  %v3459 = vadd.f32 %v3398, %v3442
  %v3460 = vadd.f32 %v3399, %v3442
  %v3461 = vadd.f32 %v3400, %v3442
  %v3462 = vadd.f32 %v3401, %v3442
  %v3463 = vadd.f32 %v3402, %v3442
  %v3464 = vadd.f32 %v3403, %v3442
  %v3465 = vadd.f32 %v3404, %v3442
  %v3466 = vadd.f32 %v3405, %v3442
  %v3467 = vadd.f32 %v3406, %v3442
  %v3468 = vadd.f32 %v3407, %v3442
  %v3469 = vadd.f32 %v3408, %v3442
  %v3470 = vadd.f32 %v3409, %v3442
  %v3471 = vadd.f32 %v3410, %v3442
  %v3472 = vadd.f32 %v3411, %v3442
  %v3473 = vadd.f32 %v3412, %v3442
  %v3474 = vadd.f32 %v3413, %v3442
  %v3475 = vadd.f32 %v3414, %v3442
  %v3476 = vadd.f32 %v3415, %v3442
  %v3477 = vadd.f32 %v3416, %v3442
  %v3478 = vadd.f32 %v3417, %v3442
  %v3479 = vadd.f32 %v3418, %v3442
  %v3480 = vadd.f32 %v3419, %v3442
  %v3481 = vadd.f32 %v3420, %v3442
  %v3482 = vadd.f32 %v3421, %v3442
  %v3483 = vadd.f32 %v3422, %v3442
  %v3484 = vadd.f32 %v3423, %v3442
  %v3485 = vadd.f32 %v3424, %v3442
  %v3486 = vadd.f32 %v3425, %v3442
  %v3487 = vadd.f32 %v3426, %v3442
  %v3488 = vadd.f32 %v3427, %v3442
  %v3489 = vadd.f32 %v3428, %v3442
  %v3490 = vadd.f32 %v3429, %v3442
  %v3491 = vadd.f32 %v3430, %v3442
  %v3492 = vadd.f32 %v3431, %v3442
  %v3493 = vadd.f32 %v3432, %v3442
  %v3494 = vadd.f32 %v3433, %v3442
  %v3495 = vadd.f32 %v3434, %v3442
  %v3496 = vadd.f32 %v3435, %v3442
  %v3497 = vadd.f32 %v3436, %v3442
  %v3498 = vadd.f32 %v3437, %v3442
  %v3499 = vmax.f32 %v3444, 0.0
  %v3500 = vmax.f32 %v3445, 0.0
  %v3501 = vmax.f32 %v3446, 0.0
  %v3502 = vmax.f32 %v3447, 0.0
  %v3503 = vmax.f32 %v3448, 0.0
  %v3504 = vmax.f32 %v3449, 0.0
  %v3505 = vmax.f32 %v3450, 0.0
  %v3506 = vmax.f32 %v3451, 0.0
  %v3507 = vmax.f32 %v3452, 0.0
  %v3508 = vmax.f32 %v3453, 0.0
  %v3509 = vmax.f32 %v3454, 0.0
  %v3510 = vmax.f32 %v3455, 0.0
  %v3511 = vmax.f32 %v3456, 0.0
  %v3512 = vmax.f32 %v3457, 0.0
  %v3513 = vmax.f32 %v3458, 0.0
  %v3514 = vmax.f32 %v3459, 0.0
  %v3515 = vmax.f32 %v3460, 0.0
  %v3516 = vmax.f32 %v3461, 0.0
  %v3517 = vmax.f32 %v3462, 0.0
  %v3518 = vmax.f32 %v3463, 0.0
  %v3519 = vmax.f32 %v3464, 0.0
  %v3520 = vmax.f32 %v3465, 0.0
  %v3521 = vmax.f32 %v3466, 0.0
  %v3522 = vmax.f32 %v3467, 0.0
  %v3523 = vmax.f32 %v3468, 0.0
  %v3524 = vmax.f32 %v3469, 0.0
  %v3525 = vmax.f32 %v3470, 0.0
  %v3526 = vmax.f32 %v3471, 0.0
  %v3527 = vmax.f32 %v3472, 0.0
  %v3528 = vmax.f32 %v3473, 0.0
  %v3529 = vmax.f32 %v3474, 0.0
  %v3530 = vmax.f32 %v3475, 0.0
  %v3531 = vmax.f32 %v3476, 0.0
  %v3532 = vmax.f32 %v3477, 0.0
  %v3533 = vmax.f32 %v3478, 0.0
  %v3534 = vmax.f32 %v3479, 0.0
  %v3535 = vmax.f32 %v3480, 0.0
  %v3536 = vmax.f32 %v3481, 0.0
  %v3537 = vmax.f32 %v3482, 0.0
  %v3538 = vmax.f32 %v3483, 0.0
  %v3539 = vmax.f32 %v3484, 0.0
  %v3540 = vmax.f32 %v3485, 0.0
  %v3541 = vmax.f32 %v3486, 0.0
  %v3542 = vmax.f32 %v3487, 0.0
  %v3543 = vmax.f32 %v3488, 0.0
  %v3544 = vmax.f32 %v3489, 0.0
  %v3545 = vmax.f32 %v3490, 0.0
  %v3546 = vmax.f32 %v3491, 0.0
  %v3547 = vmax.f32 %v3492, 0.0
  %v3548 = vmax.f32 %v3493, 0.0
  %v3549 = vmax.f32 %v3494, 0.0
  %v3550 = vmax.f32 %v3495, 0.0
  %v3551 = vmax.f32 %v3496, 0.0
  %v3552 = vmax.f32 %v3497, 0.0
  %v3553 = vmax.f32 %v3498, 0.0
  %3609 = vrot.lane.b32.xlu0 %v3499, 127
  %v3610 = vpop.permute.xlu0 %3609
  %3611 = vrot.lane.b32.xlu0 %v3500, 127
  %v3612 = vpop.permute.xlu0 %3611
  %3613 = vrot.lane.b32.xlu0 %v3501, 127
  %v3614 = vpop.permute.xlu0 %3613
  %3615 = vrot.lane.b32.xlu0 %v3502, 127
  %v3616 = vpop.permute.xlu0 %3615
  %3617 = vrot.lane.b32.xlu0 %v3503, 127
  %v3618 = vpop.permute.xlu0 %3617
  %3619 = vrot.lane.b32.xlu0 %v3504, 127
  %v3620 = vpop.permute.xlu0 %3619
  %3621 = vrot.lane.b32.xlu0 %v3505, 127
  %v3622 = vpop.permute.xlu0 %3621
  %3623 = vrot.lane.b32.xlu0 %v3506, 127
  %v3624 = vpop.permute.xlu0 %3623
  %3625 = vrot.lane.b32.xlu0 %v3507, 127
  %v3626 = vpop.permute.xlu0 %3625
  %3627 = vrot.lane.b32.xlu0 %v3508, 127
  %v3628 = vpop.permute.xlu0 %3627
  %3629 = vrot.lane.b32.xlu0 %v3509, 127
  %v3630 = vpop.permute.xlu0 %3629
  %3631 = vrot.lane.b32.xlu0 %v3510, 127
  %v3632 = vpop.permute.xlu0 %3631
  %3633 = vrot.lane.b32.xlu0 %v3511, 127
  %v3634 = vpop.permute.xlu0 %3633
  %3635 = vrot.lane.b32.xlu0 %v3512, 127
  %v3636 = vpop.permute.xlu0 %3635
  %3637 = vrot.lane.b32.xlu0 %v3513, 127
  %v3638 = vpop.permute.xlu0 %3637
  %3639 = vrot.lane.b32.xlu0 %v3514, 127
  %v3640 = vpop.permute.xlu0 %3639
  %3641 = vrot.lane.b32.xlu0 %v3515, 127
  %v3642 = vpop.permute.xlu0 %3641
  %3643 = vrot.lane.b32.xlu0 %v3516, 127
  %v3644 = vpop.permute.xlu0 %3643
  %3645 = vrot.lane.b32.xlu0 %v3517, 127
  %v3646 = vpop.permute.xlu0 %3645
  %3647 = vrot.lane.b32.xlu0 %v3518, 127
  %v3648 = vpop.permute.xlu0 %3647
  %3649 = vrot.lane.b32.xlu0 %v3519, 127
  %v3650 = vpop.permute.xlu0 %3649
  %3651 = vrot.lane.b32.xlu0 %v3520, 127
  %v3652 = vpop.permute.xlu0 %3651
  %3653 = vrot.lane.b32.xlu0 %v3521, 127
  %v3654 = vpop.permute.xlu0 %3653
  %3655 = vrot.lane.b32.xlu0 %v3522, 127
  %v3656 = vpop.permute.xlu0 %3655
  %3657 = vrot.lane.b32.xlu0 %v3523, 127
  %v3658 = vpop.permute.xlu0 %3657
  %3659 = vrot.lane.b32.xlu0 %v3524, 127
  %v3660 = vpop.permute.xlu0 %3659
  %3661 = vrot.lane.b32.xlu0 %v3525, 127
  %v3662 = vpop.permute.xlu0 %3661
  %3663 = vrot.lane.b32.xlu0 %v3526, 127
  %v3664 = vpop.permute.xlu0 %3663
  %3665 = vrot.lane.b32.xlu0 %v3527, 127
  %v3666 = vpop.permute.xlu0 %3665
  %3667 = vrot.lane.b32.xlu0 %v3528, 127
  %v3668 = vpop.permute.xlu0 %3667
  %3669 = vrot.lane.b32.xlu0 %v3529, 127
  %v3670 = vpop.permute.xlu0 %3669
  %3671 = vrot.lane.b32.xlu0 %v3530, 127
  %v3672 = vpop.permute.xlu0 %3671
  %3673 = vrot.lane.b32.xlu0 %v3531, 127
  %v3674 = vpop.permute.xlu0 %3673
  %3675 = vrot.lane.b32.xlu0 %v3532, 127
  %v3676 = vpop.permute.xlu0 %3675
  %3677 = vrot.lane.b32.xlu0 %v3533, 127
  %v3678 = vpop.permute.xlu0 %3677
  %3679 = vrot.lane.b32.xlu0 %v3534, 127
  %v3680 = vpop.permute.xlu0 %3679
  %3681 = vrot.lane.b32.xlu0 %v3535, 127
  %v3682 = vpop.permute.xlu0 %3681
  %3683 = vrot.lane.b32.xlu0 %v3536, 127
  %v3684 = vpop.permute.xlu0 %3683
  %3685 = vrot.lane.b32.xlu0 %v3537, 127
  %v3686 = vpop.permute.xlu0 %3685
  %3687 = vrot.lane.b32.xlu0 %v3538, 127
  %v3688 = vpop.permute.xlu0 %3687
  %3689 = vrot.lane.b32.xlu0 %v3539, 127
  %v3690 = vpop.permute.xlu0 %3689
  %3691 = vrot.lane.b32.xlu0 %v3540, 127
  %v3692 = vpop.permute.xlu0 %3691
  %3693 = vrot.lane.b32.xlu0 %v3541, 127
  %v3694 = vpop.permute.xlu0 %3693
  %3695 = vrot.lane.b32.xlu0 %v3542, 127
  %v3696 = vpop.permute.xlu0 %3695
  %3697 = vrot.lane.b32.xlu0 %v3543, 127
  %v3698 = vpop.permute.xlu0 %3697
  %3699 = vrot.lane.b32.xlu0 %v3544, 127
  %v3700 = vpop.permute.xlu0 %3699
  %3701 = vrot.lane.b32.xlu0 %v3545, 127
  %v3702 = vpop.permute.xlu0 %3701
  %3703 = vrot.lane.b32.xlu0 %v3546, 127
  %v3704 = vpop.permute.xlu0 %3703
  %3705 = vrot.lane.b32.xlu0 %v3547, 127
  %v3706 = vpop.permute.xlu0 %3705
  %3707 = vrot.lane.b32.xlu0 %v3548, 127
  %v3708 = vpop.permute.xlu0 %3707
  %3709 = vrot.lane.b32.xlu0 %v3549, 127
  %v3710 = vpop.permute.xlu0 %3709
  %3711 = vrot.lane.b32.xlu0 %v3550, 127
  %v3712 = vpop.permute.xlu0 %3711
  %3713 = vrot.lane.b32.xlu0 %v3551, 127
  %v3714 = vpop.permute.xlu0 %3713
  %3715 = vrot.lane.b32.xlu0 %v3552, 127
  %v3716 = vpop.permute.xlu0 %3715
  %3717 = vrot.lane.b32.xlu0 %v3553, 127
  %v3718 = vpop.permute.xlu0 %3717
  %v3719 = vsel %vm514, %v3610, %v3612
  %v3720 = vsel %vm514, %v3612, %v3614
  %v3721 = vsel %vm514, %v3614, %v3616
  %v3722 = vsel %vm514, %v3616, %v3618
  %v3723 = vsel %vm514, %v3618, %v3620
  %v3724 = vsel %vm514, %v3620, %v3622
  %v3725 = vsel %vm514, %v3622, %v3624
  %v3726 = vsel %vm514, %v3624, %v3626
  %v3727 = vsel %vm514, %v3626, %v3628
  %v3728 = vsel %vm514, %v3628, %v3630
  %v3729 = vsel %vm514, %v3630, %v3632
  %v3730 = vsel %vm514, %v3632, %v3634
  %v3731 = vsel %vm514, %v3634, %v3636
  %v3732 = vsel %vm514, %v3636, %v3638
  %v3733 = vsel %vm514, %v3638, %v3640
  %v3734 = vsel %vm514, %v3640, %v3642
  %v3735 = vsel %vm514, %v3642, %v3644
  %v3736 = vsel %vm514, %v3644, %v3646
  %v3737 = vsel %vm514, %v3646, %v3648
  %v3738 = vsel %vm514, %v3648, %v3650
  %v3739 = vsel %vm514, %v3650, %v3652
  %v3740 = vsel %vm514, %v3652, %v3654
  %v3741 = vsel %vm514, %v3654, %v3656
  %v3742 = vsel %vm514, %v3656, %v3658
  %v3743 = vsel %vm514, %v3658, %v3660
  %v3744 = vsel %vm514, %v3660, %v3662
  %v3745 = vsel %vm514, %v3662, %v3664
  %v3746 = vsel %vm514, %v3664, %v3666
  %v3747 = vsel %vm514, %v3666, %v3668
  %v3748 = vsel %vm514, %v3668, %v3670
  %v3749 = vsel %vm514, %v3670, %v3672
  %v3750 = vsel %vm514, %v3672, %v3674
  %v3751 = vsel %vm514, %v3674, %v3676
  %v3752 = vsel %vm514, %v3676, %v3678
  %v3753 = vsel %vm514, %v3678, %v3680
  %v3754 = vsel %vm514, %v3680, %v3682
  %v3755 = vsel %vm514, %v3682, %v3684
  %v3756 = vsel %vm514, %v3684, %v3686
  %v3757 = vsel %vm514, %v3686, %v3688
  %v3758 = vsel %vm514, %v3688, %v3690
  %v3759 = vsel %vm514, %v3690, %v3692
  %v3760 = vsel %vm514, %v3692, %v3694
  %v3761 = vsel %vm514, %v3694, %v3696
  %v3762 = vsel %vm514, %v3696, %v3698
  %v3763 = vsel %vm514, %v3698, %v3700
  %v3764 = vsel %vm514, %v3700, %v3702
  %v3765 = vsel %vm514, %v3702, %v3704
  %v3766 = vsel %vm514, %v3704, %v3706
  %v3767 = vsel %vm514, %v3706, %v3708
  %v3768 = vsel %vm514, %v3708, %v3710
  %v3769 = vsel %vm514, %v3710, %v3712
  %v3770 = vsel %vm514, %v3712, %v3714
  %v3771 = vsel %vm514, %v3714, %v3716
  %v3772 = vsel %vm514, %v3716, %v3718
  %3828 = vrot.lane.b32.xlu0 %v3499, 126
  %v3829 = vpop.permute.xlu0 %3828
  %3830 = vrot.lane.b32.xlu0 %v3500, 126
  %v3831 = vpop.permute.xlu0 %3830
  %3832 = vrot.lane.b32.xlu0 %v3501, 126
  %v3833 = vpop.permute.xlu0 %3832
  %3834 = vrot.lane.b32.xlu0 %v3502, 126
  %v3835 = vpop.permute.xlu0 %3834
  %3836 = vrot.lane.b32.xlu0 %v3503, 126
  %v3837 = vpop.permute.xlu0 %3836
  %3838 = vrot.lane.b32.xlu0 %v3504, 126
  %v3839 = vpop.permute.xlu0 %3838
  %3840 = vrot.lane.b32.xlu0 %v3505, 126
  %v3841 = vpop.permute.xlu0 %3840
  %3842 = vrot.lane.b32.xlu0 %v3506, 126
  %v3843 = vpop.permute.xlu0 %3842
  %3844 = vrot.lane.b32.xlu0 %v3507, 126
  %v3845 = vpop.permute.xlu0 %3844
  %3846 = vrot.lane.b32.xlu0 %v3508, 126
  %v3847 = vpop.permute.xlu0 %3846
  %3848 = vrot.lane.b32.xlu0 %v3509, 126
  %v3849 = vpop.permute.xlu0 %3848
  %3850 = vrot.lane.b32.xlu0 %v3510, 126
  %v3851 = vpop.permute.xlu0 %3850
  %3852 = vrot.lane.b32.xlu0 %v3511, 126
  %v3853 = vpop.permute.xlu0 %3852
  %3854 = vrot.lane.b32.xlu0 %v3512, 126
  %v3855 = vpop.permute.xlu0 %3854
  %3856 = vrot.lane.b32.xlu0 %v3513, 126
  %v3857 = vpop.permute.xlu0 %3856
  %3858 = vrot.lane.b32.xlu0 %v3514, 126
  %v3859 = vpop.permute.xlu0 %3858
  %3860 = vrot.lane.b32.xlu0 %v3515, 126
  %v3861 = vpop.permute.xlu0 %3860
  %3862 = vrot.lane.b32.xlu0 %v3516, 126
  %v3863 = vpop.permute.xlu0 %3862
  %3864 = vrot.lane.b32.xlu0 %v3517, 126
  %v3865 = vpop.permute.xlu0 %3864
  %3866 = vrot.lane.b32.xlu0 %v3518, 126
  %v3867 = vpop.permute.xlu0 %3866
  %3868 = vrot.lane.b32.xlu0 %v3519, 126
  %v3869 = vpop.permute.xlu0 %3868
  %3870 = vrot.lane.b32.xlu0 %v3520, 126
  %v3871 = vpop.permute.xlu0 %3870
  %3872 = vrot.lane.b32.xlu0 %v3521, 126
  %v3873 = vpop.permute.xlu0 %3872
  %3874 = vrot.lane.b32.xlu0 %v3522, 126
  %v3875 = vpop.permute.xlu0 %3874
  %3876 = vrot.lane.b32.xlu0 %v3523, 126
  %v3877 = vpop.permute.xlu0 %3876
  %3878 = vrot.lane.b32.xlu0 %v3524, 126
  %v3879 = vpop.permute.xlu0 %3878
  %3880 = vrot.lane.b32.xlu0 %v3525, 126
  %v3881 = vpop.permute.xlu0 %3880
  %3882 = vrot.lane.b32.xlu0 %v3526, 126
  %v3883 = vpop.permute.xlu0 %3882
  %3884 = vrot.lane.b32.xlu0 %v3527, 126
  %v3885 = vpop.permute.xlu0 %3884
  %3886 = vrot.lane.b32.xlu0 %v3528, 126
  %v3887 = vpop.permute.xlu0 %3886
  %3888 = vrot.lane.b32.xlu0 %v3529, 126
  %v3889 = vpop.permute.xlu0 %3888
  %3890 = vrot.lane.b32.xlu0 %v3530, 126
  %v3891 = vpop.permute.xlu0 %3890
  %3892 = vrot.lane.b32.xlu0 %v3531, 126
  %v3893 = vpop.permute.xlu0 %3892
  %3894 = vrot.lane.b32.xlu0 %v3532, 126
  %v3895 = vpop.permute.xlu0 %3894
  %3896 = vrot.lane.b32.xlu0 %v3533, 126
  %v3897 = vpop.permute.xlu0 %3896
  %3898 = vrot.lane.b32.xlu0 %v3534, 126
  %v3899 = vpop.permute.xlu0 %3898
  %3900 = vrot.lane.b32.xlu0 %v3535, 126
  %v3901 = vpop.permute.xlu0 %3900
  %3902 = vrot.lane.b32.xlu0 %v3536, 126
  %v3903 = vpop.permute.xlu0 %3902
  %3904 = vrot.lane.b32.xlu0 %v3537, 126
  %v3905 = vpop.permute.xlu0 %3904
  %3906 = vrot.lane.b32.xlu0 %v3538, 126
  %v3907 = vpop.permute.xlu0 %3906
  %3908 = vrot.lane.b32.xlu0 %v3539, 126
  %v3909 = vpop.permute.xlu0 %3908
  %3910 = vrot.lane.b32.xlu0 %v3540, 126
  %v3911 = vpop.permute.xlu0 %3910
  %3912 = vrot.lane.b32.xlu0 %v3541, 126
  %v3913 = vpop.permute.xlu0 %3912
  %3914 = vrot.lane.b32.xlu0 %v3542, 126
  %v3915 = vpop.permute.xlu0 %3914
  %3916 = vrot.lane.b32.xlu0 %v3543, 126
  %v3917 = vpop.permute.xlu0 %3916
  %3918 = vrot.lane.b32.xlu0 %v3544, 126
  %v3919 = vpop.permute.xlu0 %3918
  %3920 = vrot.lane.b32.xlu0 %v3545, 126
  %v3921 = vpop.permute.xlu0 %3920
  %3922 = vrot.lane.b32.xlu0 %v3546, 126
  %v3923 = vpop.permute.xlu0 %3922
  %3924 = vrot.lane.b32.xlu0 %v3547, 126
  %v3925 = vpop.permute.xlu0 %3924
  %3926 = vrot.lane.b32.xlu0 %v3548, 126
  %v3927 = vpop.permute.xlu0 %3926
  %3928 = vrot.lane.b32.xlu0 %v3549, 126
  %v3929 = vpop.permute.xlu0 %3928
  %3930 = vrot.lane.b32.xlu0 %v3550, 126
  %v3931 = vpop.permute.xlu0 %3930
  %3932 = vrot.lane.b32.xlu0 %v3551, 126
  %v3933 = vpop.permute.xlu0 %3932
  %3934 = vrot.lane.b32.xlu0 %v3552, 126
  %v3935 = vpop.permute.xlu0 %3934
  %3936 = vrot.lane.b32.xlu0 %v3553, 126
  %v3937 = vpop.permute.xlu0 %3936
  %v3938 = vsel %vm908, %v3829, %v3831
  %v3939 = vsel %vm908, %v3831, %v3833
  %v3940 = vsel %vm908, %v3833, %v3835
  %v3941 = vsel %vm908, %v3835, %v3837
  %v3942 = vsel %vm908, %v3837, %v3839
  %v3943 = vsel %vm908, %v3839, %v3841
  %v3944 = vsel %vm908, %v3841, %v3843
  %v3945 = vsel %vm908, %v3843, %v3845
  %v3946 = vsel %vm908, %v3845, %v3847
  %v3947 = vsel %vm908, %v3847, %v3849
  %v3948 = vsel %vm908, %v3849, %v3851
  %v3949 = vsel %vm908, %v3851, %v3853
  %v3950 = vsel %vm908, %v3853, %v3855
  %v3951 = vsel %vm908, %v3855, %v3857
  %v3952 = vsel %vm908, %v3857, %v3859
  %v3953 = vsel %vm908, %v3859, %v3861
  %v3954 = vsel %vm908, %v3861, %v3863
  %v3955 = vsel %vm908, %v3863, %v3865
  %v3956 = vsel %vm908, %v3865, %v3867
  %v3957 = vsel %vm908, %v3867, %v3869
  %v3958 = vsel %vm908, %v3869, %v3871
  %v3959 = vsel %vm908, %v3871, %v3873
  %v3960 = vsel %vm908, %v3873, %v3875
  %v3961 = vsel %vm908, %v3875, %v3877
  %v3962 = vsel %vm908, %v3877, %v3879
  %v3963 = vsel %vm908, %v3879, %v3881
  %v3964 = vsel %vm908, %v3881, %v3883
  %v3965 = vsel %vm908, %v3883, %v3885
  %v3966 = vsel %vm908, %v3885, %v3887
  %v3967 = vsel %vm908, %v3887, %v3889
  %v3968 = vsel %vm908, %v3889, %v3891
  %v3969 = vsel %vm908, %v3891, %v3893
  %v3970 = vsel %vm908, %v3893, %v3895
  %v3971 = vsel %vm908, %v3895, %v3897
  %v3972 = vsel %vm908, %v3897, %v3899
  %v3973 = vsel %vm908, %v3899, %v3901
  %v3974 = vsel %vm908, %v3901, %v3903
  %v3975 = vsel %vm908, %v3903, %v3905
  %v3976 = vsel %vm908, %v3905, %v3907
  %v3977 = vsel %vm908, %v3907, %v3909
  %v3978 = vsel %vm908, %v3909, %v3911
  %v3979 = vsel %vm908, %v3911, %v3913
  %v3980 = vsel %vm908, %v3913, %v3915
  %v3981 = vsel %vm908, %v3915, %v3917
  %v3982 = vsel %vm908, %v3917, %v3919
  %v3983 = vsel %vm908, %v3919, %v3921
  %v3984 = vsel %vm908, %v3921, %v3923
  %v3985 = vsel %vm908, %v3923, %v3925
  %v3986 = vsel %vm908, %v3925, %v3927
  %v3987 = vsel %vm908, %v3927, %v3929
  %v3988 = vsel %vm908, %v3929, %v3931
  %v3989 = vsel %vm908, %v3931, %v3933
  %v3990 = vsel %vm908, %v3933, %v3935
  %v3991 = vsel %vm908, %v3935, %v3937
  %4047 = vrot.lane.b32.xlu0 %v3499, 100
  %v4048 = vpop.permute.xlu0 %4047
  %4049 = vrot.lane.b32.xlu0 %v3500, 100
  %v4050 = vpop.permute.xlu0 %4049
  %4051 = vrot.lane.b32.xlu0 %v3501, 100
  %v4052 = vpop.permute.xlu0 %4051
  %4053 = vrot.lane.b32.xlu0 %v3502, 100
  %v4054 = vpop.permute.xlu0 %4053
  %4055 = vrot.lane.b32.xlu0 %v3503, 100
  %v4056 = vpop.permute.xlu0 %4055
  %4057 = vrot.lane.b32.xlu0 %v3504, 100
  %v4058 = vpop.permute.xlu0 %4057
  %4059 = vrot.lane.b32.xlu0 %v3505, 100
  %v4060 = vpop.permute.xlu0 %4059
  %4061 = vrot.lane.b32.xlu0 %v3506, 100
  %v4062 = vpop.permute.xlu0 %4061
  %4063 = vrot.lane.b32.xlu0 %v3507, 100
  %v4064 = vpop.permute.xlu0 %4063
  %4065 = vrot.lane.b32.xlu0 %v3508, 100
  %v4066 = vpop.permute.xlu0 %4065
  %4067 = vrot.lane.b32.xlu0 %v3509, 100
  %v4068 = vpop.permute.xlu0 %4067
  %4069 = vrot.lane.b32.xlu0 %v3510, 100
  %v4070 = vpop.permute.xlu0 %4069
  %4071 = vrot.lane.b32.xlu0 %v3511, 100
  %v4072 = vpop.permute.xlu0 %4071
  %4073 = vrot.lane.b32.xlu0 %v3512, 100
  %v4074 = vpop.permute.xlu0 %4073
  %4075 = vrot.lane.b32.xlu0 %v3513, 100
  %v4076 = vpop.permute.xlu0 %4075
  %4077 = vrot.lane.b32.xlu0 %v3514, 100
  %v4078 = vpop.permute.xlu0 %4077
  %4079 = vrot.lane.b32.xlu0 %v3515, 100
  %v4080 = vpop.permute.xlu0 %4079
  %4081 = vrot.lane.b32.xlu0 %v3516, 100
  %v4082 = vpop.permute.xlu0 %4081
  %4083 = vrot.lane.b32.xlu0 %v3517, 100
  %v4084 = vpop.permute.xlu0 %4083
  %4085 = vrot.lane.b32.xlu0 %v3518, 100
  %v4086 = vpop.permute.xlu0 %4085
  %4087 = vrot.lane.b32.xlu0 %v3519, 100
  %v4088 = vpop.permute.xlu0 %4087
  %4089 = vrot.lane.b32.xlu0 %v3520, 100
  %v4090 = vpop.permute.xlu0 %4089
  %4091 = vrot.lane.b32.xlu0 %v3521, 100
  %v4092 = vpop.permute.xlu0 %4091
  %4093 = vrot.lane.b32.xlu0 %v3522, 100
  %v4094 = vpop.permute.xlu0 %4093
  %4095 = vrot.lane.b32.xlu0 %v3523, 100
  %v4096 = vpop.permute.xlu0 %4095
  %4097 = vrot.lane.b32.xlu0 %v3524, 100
  %v4098 = vpop.permute.xlu0 %4097
  %4099 = vrot.lane.b32.xlu0 %v3525, 100
  %v4100 = vpop.permute.xlu0 %4099
  %4101 = vrot.lane.b32.xlu0 %v3526, 100
  %v4102 = vpop.permute.xlu0 %4101
  %4103 = vrot.lane.b32.xlu0 %v3527, 100
  %v4104 = vpop.permute.xlu0 %4103
  %4105 = vrot.lane.b32.xlu0 %v3528, 100
  %v4106 = vpop.permute.xlu0 %4105
  %4107 = vrot.lane.b32.xlu0 %v3529, 100
  %v4108 = vpop.permute.xlu0 %4107
  %4109 = vrot.lane.b32.xlu0 %v3530, 100
  %v4110 = vpop.permute.xlu0 %4109
  %4111 = vrot.lane.b32.xlu0 %v3531, 100
  %v4112 = vpop.permute.xlu0 %4111
  %4113 = vrot.lane.b32.xlu0 %v3532, 100
  %v4114 = vpop.permute.xlu0 %4113
  %4115 = vrot.lane.b32.xlu0 %v3533, 100
  %v4116 = vpop.permute.xlu0 %4115
  %4117 = vrot.lane.b32.xlu0 %v3534, 100
  %v4118 = vpop.permute.xlu0 %4117
  %4119 = vrot.lane.b32.xlu0 %v3535, 100
  %v4120 = vpop.permute.xlu0 %4119
  %4121 = vrot.lane.b32.xlu0 %v3536, 100
  %v4122 = vpop.permute.xlu0 %4121
  %4123 = vrot.lane.b32.xlu0 %v3537, 100
  %v4124 = vpop.permute.xlu0 %4123
  %4125 = vrot.lane.b32.xlu0 %v3538, 100
  %v4126 = vpop.permute.xlu0 %4125
  %4127 = vrot.lane.b32.xlu0 %v3539, 100
  %v4128 = vpop.permute.xlu0 %4127
  %4129 = vrot.lane.b32.xlu0 %v3540, 100
  %v4130 = vpop.permute.xlu0 %4129
  %4131 = vrot.lane.b32.xlu0 %v3541, 100
  %v4132 = vpop.permute.xlu0 %4131
  %4133 = vrot.lane.b32.xlu0 %v3542, 100
  %v4134 = vpop.permute.xlu0 %4133
  %4135 = vrot.lane.b32.xlu0 %v3543, 100
  %v4136 = vpop.permute.xlu0 %4135
  %4137 = vrot.lane.b32.xlu0 %v3544, 100
  %v4138 = vpop.permute.xlu0 %4137
  %4139 = vrot.lane.b32.xlu0 %v3545, 100
  %v4140 = vpop.permute.xlu0 %4139
  %4141 = vrot.lane.b32.xlu0 %v3546, 100
  %v4142 = vpop.permute.xlu0 %4141
  %4143 = vrot.lane.b32.xlu0 %v3547, 100
  %v4144 = vpop.permute.xlu0 %4143
  %4145 = vrot.lane.b32.xlu0 %v3548, 100
  %v4146 = vpop.permute.xlu0 %4145
  %4147 = vrot.lane.b32.xlu0 %v3549, 100
  %v4148 = vpop.permute.xlu0 %4147
  %4149 = vrot.lane.b32.xlu0 %v3550, 100
  %v4150 = vpop.permute.xlu0 %4149
  %4151 = vrot.lane.b32.xlu0 %v3551, 100
  %v4152 = vpop.permute.xlu0 %4151
  %4153 = vrot.lane.b32.xlu0 %v3552, 100
  %v4154 = vpop.permute.xlu0 %4153
  %4155 = vrot.lane.b32.xlu0 %v3553, 100
  %v4156 = vpop.permute.xlu0 %4155
  %v4157 = vsel %vm1302, %v4048, %v4050
  %v4158 = vsel %vm1302, %v4050, %v4052
  %v4159 = vsel %vm1302, %v4052, %v4054
  %v4160 = vsel %vm1302, %v4054, %v4056
  %v4161 = vsel %vm1302, %v4056, %v4058
  %v4162 = vsel %vm1302, %v4058, %v4060
  %v4163 = vsel %vm1302, %v4060, %v4062
  %v4164 = vsel %vm1302, %v4062, %v4064
  %v4165 = vsel %vm1302, %v4064, %v4066
  %v4166 = vsel %vm1302, %v4066, %v4068
  %v4167 = vsel %vm1302, %v4068, %v4070
  %v4168 = vsel %vm1302, %v4070, %v4072
  %v4169 = vsel %vm1302, %v4072, %v4074
  %v4170 = vsel %vm1302, %v4074, %v4076
  %v4171 = vsel %vm1302, %v4076, %v4078
  %v4172 = vsel %vm1302, %v4078, %v4080
  %v4173 = vsel %vm1302, %v4080, %v4082
  %v4174 = vsel %vm1302, %v4082, %v4084
  %v4175 = vsel %vm1302, %v4084, %v4086
  %v4176 = vsel %vm1302, %v4086, %v4088
  %v4177 = vsel %vm1302, %v4088, %v4090
  %v4178 = vsel %vm1302, %v4090, %v4092
  %v4179 = vsel %vm1302, %v4092, %v4094
  %v4180 = vsel %vm1302, %v4094, %v4096
  %v4181 = vsel %vm1302, %v4096, %v4098
  %v4182 = vsel %vm1302, %v4098, %v4100
  %v4183 = vsel %vm1302, %v4100, %v4102
  %v4184 = vsel %vm1302, %v4102, %v4104
  %v4185 = vsel %vm1302, %v4104, %v4106
  %v4186 = vsel %vm1302, %v4106, %v4108
  %v4187 = vsel %vm1302, %v4108, %v4110
  %v4188 = vsel %vm1302, %v4110, %v4112
  %v4189 = vsel %vm1302, %v4112, %v4114
  %v4190 = vsel %vm1302, %v4114, %v4116
  %v4191 = vsel %vm1302, %v4116, %v4118
  %v4192 = vsel %vm1302, %v4118, %v4120
  %v4193 = vsel %vm1302, %v4120, %v4122
  %v4194 = vsel %vm1302, %v4122, %v4124
  %v4195 = vsel %vm1302, %v4124, %v4126
  %v4196 = vsel %vm1302, %v4126, %v4128
  %v4197 = vsel %vm1302, %v4128, %v4130
  %v4198 = vsel %vm1302, %v4130, %v4132
  %v4199 = vsel %vm1302, %v4132, %v4134
  %v4200 = vsel %vm1302, %v4134, %v4136
  %v4201 = vsel %vm1302, %v4136, %v4138
  %v4202 = vsel %vm1302, %v4138, %v4140
  %v4203 = vsel %vm1302, %v4140, %v4142
  %v4204 = vsel %vm1302, %v4142, %v4144
  %v4205 = vsel %vm1302, %v4144, %v4146
  %v4206 = vsel %vm1302, %v4146, %v4148
  %v4207 = vsel %vm1302, %v4148, %v4150
  %v4208 = vsel %vm1302, %v4150, %v4152
  %v4209 = vsel %vm1302, %v4152, %v4154
  %v4210 = vsel %vm1302, %v4154, %v4156
  %4266 = vrot.lane.b32.xlu0 %v3499, 99
  %v4267 = vpop.permute.xlu0 %4266
  %4268 = vrot.lane.b32.xlu0 %v3500, 99
  %v4269 = vpop.permute.xlu0 %4268
  %4270 = vrot.lane.b32.xlu0 %v3501, 99
  %v4271 = vpop.permute.xlu0 %4270
  %4272 = vrot.lane.b32.xlu0 %v3502, 99
  %v4273 = vpop.permute.xlu0 %4272
  %4274 = vrot.lane.b32.xlu0 %v3503, 99
  %v4275 = vpop.permute.xlu0 %4274
  %4276 = vrot.lane.b32.xlu0 %v3504, 99
  %v4277 = vpop.permute.xlu0 %4276
  %4278 = vrot.lane.b32.xlu0 %v3505, 99
  %v4279 = vpop.permute.xlu0 %4278
  %4280 = vrot.lane.b32.xlu0 %v3506, 99
  %v4281 = vpop.permute.xlu0 %4280
  %4282 = vrot.lane.b32.xlu0 %v3507, 99
  %v4283 = vpop.permute.xlu0 %4282
  %4284 = vrot.lane.b32.xlu0 %v3508, 99
  %v4285 = vpop.permute.xlu0 %4284
  %4286 = vrot.lane.b32.xlu0 %v3509, 99
  %v4287 = vpop.permute.xlu0 %4286
  %4288 = vrot.lane.b32.xlu0 %v3510, 99
  %v4289 = vpop.permute.xlu0 %4288
  %4290 = vrot.lane.b32.xlu0 %v3511, 99
  %v4291 = vpop.permute.xlu0 %4290
  %4292 = vrot.lane.b32.xlu0 %v3512, 99
  %v4293 = vpop.permute.xlu0 %4292
  %4294 = vrot.lane.b32.xlu0 %v3513, 99
  %v4295 = vpop.permute.xlu0 %4294
  %4296 = vrot.lane.b32.xlu0 %v3514, 99
  %v4297 = vpop.permute.xlu0 %4296
  %4298 = vrot.lane.b32.xlu0 %v3515, 99
  %v4299 = vpop.permute.xlu0 %4298
  %4300 = vrot.lane.b32.xlu0 %v3516, 99
  %v4301 = vpop.permute.xlu0 %4300
  %4302 = vrot.lane.b32.xlu0 %v3517, 99
  %v4303 = vpop.permute.xlu0 %4302
  %4304 = vrot.lane.b32.xlu0 %v3518, 99
  %v4305 = vpop.permute.xlu0 %4304
  %4306 = vrot.lane.b32.xlu0 %v3519, 99
  %v4307 = vpop.permute.xlu0 %4306
  %4308 = vrot.lane.b32.xlu0 %v3520, 99
  %v4309 = vpop.permute.xlu0 %4308
  %4310 = vrot.lane.b32.xlu0 %v3521, 99
  %v4311 = vpop.permute.xlu0 %4310
  %4312 = vrot.lane.b32.xlu0 %v3522, 99
  %v4313 = vpop.permute.xlu0 %4312
  %4314 = vrot.lane.b32.xlu0 %v3523, 99
  %v4315 = vpop.permute.xlu0 %4314
  %4316 = vrot.lane.b32.xlu0 %v3524, 99
  %v4317 = vpop.permute.xlu0 %4316
  %4318 = vrot.lane.b32.xlu0 %v3525, 99
  %v4319 = vpop.permute.xlu0 %4318
  %4320 = vrot.lane.b32.xlu0 %v3526, 99
  %v4321 = vpop.permute.xlu0 %4320
  %4322 = vrot.lane.b32.xlu0 %v3527, 99
  %v4323 = vpop.permute.xlu0 %4322
  %4324 = vrot.lane.b32.xlu0 %v3528, 99
  %v4325 = vpop.permute.xlu0 %4324
  %4326 = vrot.lane.b32.xlu0 %v3529, 99
  %v4327 = vpop.permute.xlu0 %4326
  %4328 = vrot.lane.b32.xlu0 %v3530, 99
  %v4329 = vpop.permute.xlu0 %4328
  %4330 = vrot.lane.b32.xlu0 %v3531, 99
  %v4331 = vpop.permute.xlu0 %4330
  %4332 = vrot.lane.b32.xlu0 %v3532, 99
  %v4333 = vpop.permute.xlu0 %4332
  %4334 = vrot.lane.b32.xlu0 %v3533, 99
  %v4335 = vpop.permute.xlu0 %4334
  %4336 = vrot.lane.b32.xlu0 %v3534, 99
  %v4337 = vpop.permute.xlu0 %4336
  %4338 = vrot.lane.b32.xlu0 %v3535, 99
  %v4339 = vpop.permute.xlu0 %4338
  %4340 = vrot.lane.b32.xlu0 %v3536, 99
  %v4341 = vpop.permute.xlu0 %4340
  %4342 = vrot.lane.b32.xlu0 %v3537, 99
  %v4343 = vpop.permute.xlu0 %4342
  %4344 = vrot.lane.b32.xlu0 %v3538, 99
  %v4345 = vpop.permute.xlu0 %4344
  %4346 = vrot.lane.b32.xlu0 %v3539, 99
  %v4347 = vpop.permute.xlu0 %4346
  %4348 = vrot.lane.b32.xlu0 %v3540, 99
  %v4349 = vpop.permute.xlu0 %4348
  %4350 = vrot.lane.b32.xlu0 %v3541, 99
  %v4351 = vpop.permute.xlu0 %4350
  %4352 = vrot.lane.b32.xlu0 %v3542, 99
  %v4353 = vpop.permute.xlu0 %4352
  %4354 = vrot.lane.b32.xlu0 %v3543, 99
  %v4355 = vpop.permute.xlu0 %4354
  %4356 = vrot.lane.b32.xlu0 %v3544, 99
  %v4357 = vpop.permute.xlu0 %4356
  %4358 = vrot.lane.b32.xlu0 %v3545, 99
  %v4359 = vpop.permute.xlu0 %4358
  %4360 = vrot.lane.b32.xlu0 %v3546, 99
  %v4361 = vpop.permute.xlu0 %4360
  %4362 = vrot.lane.b32.xlu0 %v3547, 99
  %v4363 = vpop.permute.xlu0 %4362
  %4364 = vrot.lane.b32.xlu0 %v3548, 99
  %v4365 = vpop.permute.xlu0 %4364
  %4366 = vrot.lane.b32.xlu0 %v3549, 99
  %v4367 = vpop.permute.xlu0 %4366
  %4368 = vrot.lane.b32.xlu0 %v3550, 99
  %v4369 = vpop.permute.xlu0 %4368
  %4370 = vrot.lane.b32.xlu0 %v3551, 99
  %v4371 = vpop.permute.xlu0 %4370
  %4372 = vrot.lane.b32.xlu0 %v3552, 99
  %v4373 = vpop.permute.xlu0 %4372
  %4374 = vrot.lane.b32.xlu0 %v3553, 99
  %v4375 = vpop.permute.xlu0 %4374
  %v4376 = vsel %vm1696, %v4267, %v4269
  %v4377 = vsel %vm1696, %v4269, %v4271
  %v4378 = vsel %vm1696, %v4271, %v4273
  %v4379 = vsel %vm1696, %v4273, %v4275
  %v4380 = vsel %vm1696, %v4275, %v4277
  %v4381 = vsel %vm1696, %v4277, %v4279
  %v4382 = vsel %vm1696, %v4279, %v4281
  %v4383 = vsel %vm1696, %v4281, %v4283
  %v4384 = vsel %vm1696, %v4283, %v4285
  %v4385 = vsel %vm1696, %v4285, %v4287
  %v4386 = vsel %vm1696, %v4287, %v4289
  %v4387 = vsel %vm1696, %v4289, %v4291
  %v4388 = vsel %vm1696, %v4291, %v4293
  %v4389 = vsel %vm1696, %v4293, %v4295
  %v4390 = vsel %vm1696, %v4295, %v4297
  %v4391 = vsel %vm1696, %v4297, %v4299
  %v4392 = vsel %vm1696, %v4299, %v4301
  %v4393 = vsel %vm1696, %v4301, %v4303
  %v4394 = vsel %vm1696, %v4303, %v4305
  %v4395 = vsel %vm1696, %v4305, %v4307
  %v4396 = vsel %vm1696, %v4307, %v4309
  %v4397 = vsel %vm1696, %v4309, %v4311
  %v4398 = vsel %vm1696, %v4311, %v4313
  %v4399 = vsel %vm1696, %v4313, %v4315
  %v4400 = vsel %vm1696, %v4315, %v4317
  %v4401 = vsel %vm1696, %v4317, %v4319
  %v4402 = vsel %vm1696, %v4319, %v4321
  %v4403 = vsel %vm1696, %v4321, %v4323
  %v4404 = vsel %vm1696, %v4323, %v4325
  %v4405 = vsel %vm1696, %v4325, %v4327
  %v4406 = vsel %vm1696, %v4327, %v4329
  %v4407 = vsel %vm1696, %v4329, %v4331
  %v4408 = vsel %vm1696, %v4331, %v4333
  %v4409 = vsel %vm1696, %v4333, %v4335
  %v4410 = vsel %vm1696, %v4335, %v4337
  %v4411 = vsel %vm1696, %v4337, %v4339
  %v4412 = vsel %vm1696, %v4339, %v4341
  %v4413 = vsel %vm1696, %v4341, %v4343
  %v4414 = vsel %vm1696, %v4343, %v4345
  %v4415 = vsel %vm1696, %v4345, %v4347
  %v4416 = vsel %vm1696, %v4347, %v4349
  %v4417 = vsel %vm1696, %v4349, %v4351
  %v4418 = vsel %vm1696, %v4351, %v4353
  %v4419 = vsel %vm1696, %v4353, %v4355
  %v4420 = vsel %vm1696, %v4355, %v4357
  %v4421 = vsel %vm1696, %v4357, %v4359
  %v4422 = vsel %vm1696, %v4359, %v4361
  %v4423 = vsel %vm1696, %v4361, %v4363
  %v4424 = vsel %vm1696, %v4363, %v4365
  %v4425 = vsel %vm1696, %v4365, %v4367
  %v4426 = vsel %vm1696, %v4367, %v4369
  %v4427 = vsel %vm1696, %v4369, %v4371
  %v4428 = vsel %vm1696, %v4371, %v4373
  %v4429 = vsel %vm1696, %v4373, %v4375
  %4485 = vrot.lane.b32.xlu0 %v3499, 98
  %v4486 = vpop.permute.xlu0 %4485
  %4487 = vrot.lane.b32.xlu0 %v3500, 98
  %v4488 = vpop.permute.xlu0 %4487
  %4489 = vrot.lane.b32.xlu0 %v3501, 98
  %v4490 = vpop.permute.xlu0 %4489
  %4491 = vrot.lane.b32.xlu0 %v3502, 98
  %v4492 = vpop.permute.xlu0 %4491
  %4493 = vrot.lane.b32.xlu0 %v3503, 98
  %v4494 = vpop.permute.xlu0 %4493
  %4495 = vrot.lane.b32.xlu0 %v3504, 98
  %v4496 = vpop.permute.xlu0 %4495
  %4497 = vrot.lane.b32.xlu0 %v3505, 98
  %v4498 = vpop.permute.xlu0 %4497
  %4499 = vrot.lane.b32.xlu0 %v3506, 98
  %v4500 = vpop.permute.xlu0 %4499
  %4501 = vrot.lane.b32.xlu0 %v3507, 98
  %v4502 = vpop.permute.xlu0 %4501
  %4503 = vrot.lane.b32.xlu0 %v3508, 98
  %v4504 = vpop.permute.xlu0 %4503
  %4505 = vrot.lane.b32.xlu0 %v3509, 98
  %v4506 = vpop.permute.xlu0 %4505
  %4507 = vrot.lane.b32.xlu0 %v3510, 98
  %v4508 = vpop.permute.xlu0 %4507
  %4509 = vrot.lane.b32.xlu0 %v3511, 98
  %v4510 = vpop.permute.xlu0 %4509
  %4511 = vrot.lane.b32.xlu0 %v3512, 98
  %v4512 = vpop.permute.xlu0 %4511
  %4513 = vrot.lane.b32.xlu0 %v3513, 98
  %v4514 = vpop.permute.xlu0 %4513
  %4515 = vrot.lane.b32.xlu0 %v3514, 98
  %v4516 = vpop.permute.xlu0 %4515
  %4517 = vrot.lane.b32.xlu0 %v3515, 98
  %v4518 = vpop.permute.xlu0 %4517
  %4519 = vrot.lane.b32.xlu0 %v3516, 98
  %v4520 = vpop.permute.xlu0 %4519
  %4521 = vrot.lane.b32.xlu0 %v3517, 98
  %v4522 = vpop.permute.xlu0 %4521
  %4523 = vrot.lane.b32.xlu0 %v3518, 98
  %v4524 = vpop.permute.xlu0 %4523
  %4525 = vrot.lane.b32.xlu0 %v3519, 98
  %v4526 = vpop.permute.xlu0 %4525
  %4527 = vrot.lane.b32.xlu0 %v3520, 98
  %v4528 = vpop.permute.xlu0 %4527
  %4529 = vrot.lane.b32.xlu0 %v3521, 98
  %v4530 = vpop.permute.xlu0 %4529
  %4531 = vrot.lane.b32.xlu0 %v3522, 98
  %v4532 = vpop.permute.xlu0 %4531
  %4533 = vrot.lane.b32.xlu0 %v3523, 98
  %v4534 = vpop.permute.xlu0 %4533
  %4535 = vrot.lane.b32.xlu0 %v3524, 98
  %v4536 = vpop.permute.xlu0 %4535
  %4537 = vrot.lane.b32.xlu0 %v3525, 98
  %v4538 = vpop.permute.xlu0 %4537
  %4539 = vrot.lane.b32.xlu0 %v3526, 98
  %v4540 = vpop.permute.xlu0 %4539
  %4541 = vrot.lane.b32.xlu0 %v3527, 98
  %v4542 = vpop.permute.xlu0 %4541
  %4543 = vrot.lane.b32.xlu0 %v3528, 98
  %v4544 = vpop.permute.xlu0 %4543
  %4545 = vrot.lane.b32.xlu0 %v3529, 98
  %v4546 = vpop.permute.xlu0 %4545
  %4547 = vrot.lane.b32.xlu0 %v3530, 98
  %v4548 = vpop.permute.xlu0 %4547
  %4549 = vrot.lane.b32.xlu0 %v3531, 98
  %v4550 = vpop.permute.xlu0 %4549
  %4551 = vrot.lane.b32.xlu0 %v3532, 98
  %v4552 = vpop.permute.xlu0 %4551
  %4553 = vrot.lane.b32.xlu0 %v3533, 98
  %v4554 = vpop.permute.xlu0 %4553
  %4555 = vrot.lane.b32.xlu0 %v3534, 98
  %v4556 = vpop.permute.xlu0 %4555
  %4557 = vrot.lane.b32.xlu0 %v3535, 98
  %v4558 = vpop.permute.xlu0 %4557
  %4559 = vrot.lane.b32.xlu0 %v3536, 98
  %v4560 = vpop.permute.xlu0 %4559
  %4561 = vrot.lane.b32.xlu0 %v3537, 98
  %v4562 = vpop.permute.xlu0 %4561
  %4563 = vrot.lane.b32.xlu0 %v3538, 98
  %v4564 = vpop.permute.xlu0 %4563
  %4565 = vrot.lane.b32.xlu0 %v3539, 98
  %v4566 = vpop.permute.xlu0 %4565
  %4567 = vrot.lane.b32.xlu0 %v3540, 98
  %v4568 = vpop.permute.xlu0 %4567
  %4569 = vrot.lane.b32.xlu0 %v3541, 98
  %v4570 = vpop.permute.xlu0 %4569
  %4571 = vrot.lane.b32.xlu0 %v3542, 98
  %v4572 = vpop.permute.xlu0 %4571
  %4573 = vrot.lane.b32.xlu0 %v3543, 98
  %v4574 = vpop.permute.xlu0 %4573
  %4575 = vrot.lane.b32.xlu0 %v3544, 98
  %v4576 = vpop.permute.xlu0 %4575
  %4577 = vrot.lane.b32.xlu0 %v3545, 98
  %v4578 = vpop.permute.xlu0 %4577
  %4579 = vrot.lane.b32.xlu0 %v3546, 98
  %v4580 = vpop.permute.xlu0 %4579
  %4581 = vrot.lane.b32.xlu0 %v3547, 98
  %v4582 = vpop.permute.xlu0 %4581
  %4583 = vrot.lane.b32.xlu0 %v3548, 98
  %v4584 = vpop.permute.xlu0 %4583
  %4585 = vrot.lane.b32.xlu0 %v3549, 98
  %v4586 = vpop.permute.xlu0 %4585
  %4587 = vrot.lane.b32.xlu0 %v3550, 98
  %v4588 = vpop.permute.xlu0 %4587
  %4589 = vrot.lane.b32.xlu0 %v3551, 98
  %v4590 = vpop.permute.xlu0 %4589
  %4591 = vrot.lane.b32.xlu0 %v3552, 98
  %v4592 = vpop.permute.xlu0 %4591
  %4593 = vrot.lane.b32.xlu0 %v3553, 98
  %v4594 = vpop.permute.xlu0 %4593
  %v4595 = vsel %vm2090, %v4486, %v4488
  %v4596 = vsel %vm2090, %v4488, %v4490
  %v4597 = vsel %vm2090, %v4490, %v4492
  %v4598 = vsel %vm2090, %v4492, %v4494
  %v4599 = vsel %vm2090, %v4494, %v4496
  %v4600 = vsel %vm2090, %v4496, %v4498
  %v4601 = vsel %vm2090, %v4498, %v4500
  %v4602 = vsel %vm2090, %v4500, %v4502
  %v4603 = vsel %vm2090, %v4502, %v4504
  %v4604 = vsel %vm2090, %v4504, %v4506
  %v4605 = vsel %vm2090, %v4506, %v4508
  %v4606 = vsel %vm2090, %v4508, %v4510
  %v4607 = vsel %vm2090, %v4510, %v4512
  %v4608 = vsel %vm2090, %v4512, %v4514
  %v4609 = vsel %vm2090, %v4514, %v4516
  %v4610 = vsel %vm2090, %v4516, %v4518
  %v4611 = vsel %vm2090, %v4518, %v4520
  %v4612 = vsel %vm2090, %v4520, %v4522
  %v4613 = vsel %vm2090, %v4522, %v4524
  %v4614 = vsel %vm2090, %v4524, %v4526
  %v4615 = vsel %vm2090, %v4526, %v4528
  %v4616 = vsel %vm2090, %v4528, %v4530
  %v4617 = vsel %vm2090, %v4530, %v4532
  %v4618 = vsel %vm2090, %v4532, %v4534
  %v4619 = vsel %vm2090, %v4534, %v4536
  %v4620 = vsel %vm2090, %v4536, %v4538
  %v4621 = vsel %vm2090, %v4538, %v4540
  %v4622 = vsel %vm2090, %v4540, %v4542
  %v4623 = vsel %vm2090, %v4542, %v4544
  %v4624 = vsel %vm2090, %v4544, %v4546
  %v4625 = vsel %vm2090, %v4546, %v4548
  %v4626 = vsel %vm2090, %v4548, %v4550
  %v4627 = vsel %vm2090, %v4550, %v4552
  %v4628 = vsel %vm2090, %v4552, %v4554
  %v4629 = vsel %vm2090, %v4554, %v4556
  %v4630 = vsel %vm2090, %v4556, %v4558
  %v4631 = vsel %vm2090, %v4558, %v4560
  %v4632 = vsel %vm2090, %v4560, %v4562
  %v4633 = vsel %vm2090, %v4562, %v4564
  %v4634 = vsel %vm2090, %v4564, %v4566
  %v4635 = vsel %vm2090, %v4566, %v4568
  %v4636 = vsel %vm2090, %v4568, %v4570
  %v4637 = vsel %vm2090, %v4570, %v4572
  %v4638 = vsel %vm2090, %v4572, %v4574
  %v4639 = vsel %vm2090, %v4574, %v4576
  %v4640 = vsel %vm2090, %v4576, %v4578
  %v4641 = vsel %vm2090, %v4578, %v4580
  %v4642 = vsel %vm2090, %v4580, %v4582
  %v4643 = vsel %vm2090, %v4582, %v4584
  %v4644 = vsel %vm2090, %v4584, %v4586
  %v4645 = vsel %vm2090, %v4586, %v4588
  %v4646 = vsel %vm2090, %v4588, %v4590
  %v4647 = vsel %vm2090, %v4590, %v4592
  %v4648 = vsel %vm2090, %v4592, %v4594
  %4704 = vrot.lane.b32.xlu0 %v3499, 72
  %v4705 = vpop.permute.xlu0 %4704
  %4706 = vrot.lane.b32.xlu0 %v3500, 72
  %v4707 = vpop.permute.xlu0 %4706
  %4708 = vrot.lane.b32.xlu0 %v3501, 72
  %v4709 = vpop.permute.xlu0 %4708
  %4710 = vrot.lane.b32.xlu0 %v3502, 72
  %v4711 = vpop.permute.xlu0 %4710
  %4712 = vrot.lane.b32.xlu0 %v3503, 72
  %v4713 = vpop.permute.xlu0 %4712
  %4714 = vrot.lane.b32.xlu0 %v3504, 72
  %v4715 = vpop.permute.xlu0 %4714
  %4716 = vrot.lane.b32.xlu0 %v3505, 72
  %v4717 = vpop.permute.xlu0 %4716
  %4718 = vrot.lane.b32.xlu0 %v3506, 72
  %v4719 = vpop.permute.xlu0 %4718
  %4720 = vrot.lane.b32.xlu0 %v3507, 72
  %v4721 = vpop.permute.xlu0 %4720
  %4722 = vrot.lane.b32.xlu0 %v3508, 72
  %v4723 = vpop.permute.xlu0 %4722
  %4724 = vrot.lane.b32.xlu0 %v3509, 72
  %v4725 = vpop.permute.xlu0 %4724
  %4726 = vrot.lane.b32.xlu0 %v3510, 72
  %v4727 = vpop.permute.xlu0 %4726
  %4728 = vrot.lane.b32.xlu0 %v3511, 72
  %v4729 = vpop.permute.xlu0 %4728
  %4730 = vrot.lane.b32.xlu0 %v3512, 72
  %v4731 = vpop.permute.xlu0 %4730
  %4732 = vrot.lane.b32.xlu0 %v3513, 72
  %v4733 = vpop.permute.xlu0 %4732
  %4734 = vrot.lane.b32.xlu0 %v3514, 72
  %v4735 = vpop.permute.xlu0 %4734
  %4736 = vrot.lane.b32.xlu0 %v3515, 72
  %v4737 = vpop.permute.xlu0 %4736
  %4738 = vrot.lane.b32.xlu0 %v3516, 72
  %v4739 = vpop.permute.xlu0 %4738
  %4740 = vrot.lane.b32.xlu0 %v3517, 72
  %v4741 = vpop.permute.xlu0 %4740
  %4742 = vrot.lane.b32.xlu0 %v3518, 72
  %v4743 = vpop.permute.xlu0 %4742
  %4744 = vrot.lane.b32.xlu0 %v3519, 72
  %v4745 = vpop.permute.xlu0 %4744
  %4746 = vrot.lane.b32.xlu0 %v3520, 72
  %v4747 = vpop.permute.xlu0 %4746
  %4748 = vrot.lane.b32.xlu0 %v3521, 72
  %v4749 = vpop.permute.xlu0 %4748
  %4750 = vrot.lane.b32.xlu0 %v3522, 72
  %v4751 = vpop.permute.xlu0 %4750
  %4752 = vrot.lane.b32.xlu0 %v3523, 72
  %v4753 = vpop.permute.xlu0 %4752
  %4754 = vrot.lane.b32.xlu0 %v3524, 72
  %v4755 = vpop.permute.xlu0 %4754
  %4756 = vrot.lane.b32.xlu0 %v3525, 72
  %v4757 = vpop.permute.xlu0 %4756
  %4758 = vrot.lane.b32.xlu0 %v3526, 72
  %v4759 = vpop.permute.xlu0 %4758
  %4760 = vrot.lane.b32.xlu0 %v3527, 72
  %v4761 = vpop.permute.xlu0 %4760
  %4762 = vrot.lane.b32.xlu0 %v3528, 72
  %v4763 = vpop.permute.xlu0 %4762
  %4764 = vrot.lane.b32.xlu0 %v3529, 72
  %v4765 = vpop.permute.xlu0 %4764
  %4766 = vrot.lane.b32.xlu0 %v3530, 72
  %v4767 = vpop.permute.xlu0 %4766
  %4768 = vrot.lane.b32.xlu0 %v3531, 72
  %v4769 = vpop.permute.xlu0 %4768
  %4770 = vrot.lane.b32.xlu0 %v3532, 72
  %v4771 = vpop.permute.xlu0 %4770
  %4772 = vrot.lane.b32.xlu0 %v3533, 72
  %v4773 = vpop.permute.xlu0 %4772
  %4774 = vrot.lane.b32.xlu0 %v3534, 72
  %v4775 = vpop.permute.xlu0 %4774
  %4776 = vrot.lane.b32.xlu0 %v3535, 72
  %v4777 = vpop.permute.xlu0 %4776
  %4778 = vrot.lane.b32.xlu0 %v3536, 72
  %v4779 = vpop.permute.xlu0 %4778
  %4780 = vrot.lane.b32.xlu0 %v3537, 72
  %v4781 = vpop.permute.xlu0 %4780
  %4782 = vrot.lane.b32.xlu0 %v3538, 72
  %v4783 = vpop.permute.xlu0 %4782
  %4784 = vrot.lane.b32.xlu0 %v3539, 72
  %v4785 = vpop.permute.xlu0 %4784
  %4786 = vrot.lane.b32.xlu0 %v3540, 72
  %v4787 = vpop.permute.xlu0 %4786
  %4788 = vrot.lane.b32.xlu0 %v3541, 72
  %v4789 = vpop.permute.xlu0 %4788
  %4790 = vrot.lane.b32.xlu0 %v3542, 72
  %v4791 = vpop.permute.xlu0 %4790
  %4792 = vrot.lane.b32.xlu0 %v3543, 72
  %v4793 = vpop.permute.xlu0 %4792
  %4794 = vrot.lane.b32.xlu0 %v3544, 72
  %v4795 = vpop.permute.xlu0 %4794
  %4796 = vrot.lane.b32.xlu0 %v3545, 72
  %v4797 = vpop.permute.xlu0 %4796
  %4798 = vrot.lane.b32.xlu0 %v3546, 72
  %v4799 = vpop.permute.xlu0 %4798
  %4800 = vrot.lane.b32.xlu0 %v3547, 72
  %v4801 = vpop.permute.xlu0 %4800
  %4802 = vrot.lane.b32.xlu0 %v3548, 72
  %v4803 = vpop.permute.xlu0 %4802
  %4804 = vrot.lane.b32.xlu0 %v3549, 72
  %v4805 = vpop.permute.xlu0 %4804
  %4806 = vrot.lane.b32.xlu0 %v3550, 72
  %v4807 = vpop.permute.xlu0 %4806
  %4808 = vrot.lane.b32.xlu0 %v3551, 72
  %v4809 = vpop.permute.xlu0 %4808
  %4810 = vrot.lane.b32.xlu0 %v3552, 72
  %v4811 = vpop.permute.xlu0 %4810
  %4812 = vrot.lane.b32.xlu0 %v3553, 72
  %v4813 = vpop.permute.xlu0 %4812
  %v4814 = vsel %vm2484, %v4705, %v4707
  %v4815 = vsel %vm2484, %v4707, %v4709
  %v4816 = vsel %vm2484, %v4709, %v4711
  %v4817 = vsel %vm2484, %v4711, %v4713
  %v4818 = vsel %vm2484, %v4713, %v4715
  %v4819 = vsel %vm2484, %v4715, %v4717
  %v4820 = vsel %vm2484, %v4717, %v4719
  %v4821 = vsel %vm2484, %v4719, %v4721
  %v4822 = vsel %vm2484, %v4721, %v4723
  %v4823 = vsel %vm2484, %v4723, %v4725
  %v4824 = vsel %vm2484, %v4725, %v4727
  %v4825 = vsel %vm2484, %v4727, %v4729
  %v4826 = vsel %vm2484, %v4729, %v4731
  %v4827 = vsel %vm2484, %v4731, %v4733
  %v4828 = vsel %vm2484, %v4733, %v4735
  %v4829 = vsel %vm2484, %v4735, %v4737
  %v4830 = vsel %vm2484, %v4737, %v4739
  %v4831 = vsel %vm2484, %v4739, %v4741
  %v4832 = vsel %vm2484, %v4741, %v4743
  %v4833 = vsel %vm2484, %v4743, %v4745
  %v4834 = vsel %vm2484, %v4745, %v4747
  %v4835 = vsel %vm2484, %v4747, %v4749
  %v4836 = vsel %vm2484, %v4749, %v4751
  %v4837 = vsel %vm2484, %v4751, %v4753
  %v4838 = vsel %vm2484, %v4753, %v4755
  %v4839 = vsel %vm2484, %v4755, %v4757
  %v4840 = vsel %vm2484, %v4757, %v4759
  %v4841 = vsel %vm2484, %v4759, %v4761
  %v4842 = vsel %vm2484, %v4761, %v4763
  %v4843 = vsel %vm2484, %v4763, %v4765
  %v4844 = vsel %vm2484, %v4765, %v4767
  %v4845 = vsel %vm2484, %v4767, %v4769
  %v4846 = vsel %vm2484, %v4769, %v4771
  %v4847 = vsel %vm2484, %v4771, %v4773
  %v4848 = vsel %vm2484, %v4773, %v4775
  %v4849 = vsel %vm2484, %v4775, %v4777
  %v4850 = vsel %vm2484, %v4777, %v4779
  %v4851 = vsel %vm2484, %v4779, %v4781
  %v4852 = vsel %vm2484, %v4781, %v4783
  %v4853 = vsel %vm2484, %v4783, %v4785
  %v4854 = vsel %vm2484, %v4785, %v4787
  %v4855 = vsel %vm2484, %v4787, %v4789
  %v4856 = vsel %vm2484, %v4789, %v4791
  %v4857 = vsel %vm2484, %v4791, %v4793
  %v4858 = vsel %vm2484, %v4793, %v4795
  %v4859 = vsel %vm2484, %v4795, %v4797
  %v4860 = vsel %vm2484, %v4797, %v4799
  %v4861 = vsel %vm2484, %v4799, %v4801
  %v4862 = vsel %vm2484, %v4801, %v4803
  %v4863 = vsel %vm2484, %v4803, %v4805
  %v4864 = vsel %vm2484, %v4805, %v4807
  %v4865 = vsel %vm2484, %v4807, %v4809
  %v4866 = vsel %vm2484, %v4809, %v4811
  %v4867 = vsel %vm2484, %v4811, %v4813
  %4923 = vrot.lane.b32.xlu0 %v3499, 71
  %v4924 = vpop.permute.xlu0 %4923
  %4925 = vrot.lane.b32.xlu0 %v3500, 71
  %v4926 = vpop.permute.xlu0 %4925
  %4927 = vrot.lane.b32.xlu0 %v3501, 71
  %v4928 = vpop.permute.xlu0 %4927
  %4929 = vrot.lane.b32.xlu0 %v3502, 71
  %v4930 = vpop.permute.xlu0 %4929
  %4931 = vrot.lane.b32.xlu0 %v3503, 71
  %v4932 = vpop.permute.xlu0 %4931
  %4933 = vrot.lane.b32.xlu0 %v3504, 71
  %v4934 = vpop.permute.xlu0 %4933
  %4935 = vrot.lane.b32.xlu0 %v3505, 71
  %v4936 = vpop.permute.xlu0 %4935
  %4937 = vrot.lane.b32.xlu0 %v3506, 71
  %v4938 = vpop.permute.xlu0 %4937
  %4939 = vrot.lane.b32.xlu0 %v3507, 71
  %v4940 = vpop.permute.xlu0 %4939
  %4941 = vrot.lane.b32.xlu0 %v3508, 71
  %v4942 = vpop.permute.xlu0 %4941
  %4943 = vrot.lane.b32.xlu0 %v3509, 71
  %v4944 = vpop.permute.xlu0 %4943
  %4945 = vrot.lane.b32.xlu0 %v3510, 71
  %v4946 = vpop.permute.xlu0 %4945
  %4947 = vrot.lane.b32.xlu0 %v3511, 71
  %v4948 = vpop.permute.xlu0 %4947
  %4949 = vrot.lane.b32.xlu0 %v3512, 71
  %v4950 = vpop.permute.xlu0 %4949
  %4951 = vrot.lane.b32.xlu0 %v3513, 71
  %v4952 = vpop.permute.xlu0 %4951
  %4953 = vrot.lane.b32.xlu0 %v3514, 71
  %v4954 = vpop.permute.xlu0 %4953
  %4955 = vrot.lane.b32.xlu0 %v3515, 71
  %v4956 = vpop.permute.xlu0 %4955
  %4957 = vrot.lane.b32.xlu0 %v3516, 71
  %v4958 = vpop.permute.xlu0 %4957
  %4959 = vrot.lane.b32.xlu0 %v3517, 71
  %v4960 = vpop.permute.xlu0 %4959
  %4961 = vrot.lane.b32.xlu0 %v3518, 71
  %v4962 = vpop.permute.xlu0 %4961
  %4963 = vrot.lane.b32.xlu0 %v3519, 71
  %v4964 = vpop.permute.xlu0 %4963
  %4965 = vrot.lane.b32.xlu0 %v3520, 71
  %v4966 = vpop.permute.xlu0 %4965
  %4967 = vrot.lane.b32.xlu0 %v3521, 71
  %v4968 = vpop.permute.xlu0 %4967
  %4969 = vrot.lane.b32.xlu0 %v3522, 71
  %v4970 = vpop.permute.xlu0 %4969
  %4971 = vrot.lane.b32.xlu0 %v3523, 71
  %v4972 = vpop.permute.xlu0 %4971
  %4973 = vrot.lane.b32.xlu0 %v3524, 71
  %v4974 = vpop.permute.xlu0 %4973
  %4975 = vrot.lane.b32.xlu0 %v3525, 71
  %v4976 = vpop.permute.xlu0 %4975
  %4977 = vrot.lane.b32.xlu0 %v3526, 71
  %v4978 = vpop.permute.xlu0 %4977
  %4979 = vrot.lane.b32.xlu0 %v3527, 71
  %v4980 = vpop.permute.xlu0 %4979
  %4981 = vrot.lane.b32.xlu0 %v3528, 71
  %v4982 = vpop.permute.xlu0 %4981
  %4983 = vrot.lane.b32.xlu0 %v3529, 71
  %v4984 = vpop.permute.xlu0 %4983
  %4985 = vrot.lane.b32.xlu0 %v3530, 71
  %v4986 = vpop.permute.xlu0 %4985
  %4987 = vrot.lane.b32.xlu0 %v3531, 71
  %v4988 = vpop.permute.xlu0 %4987
  %4989 = vrot.lane.b32.xlu0 %v3532, 71
  %v4990 = vpop.permute.xlu0 %4989
  %4991 = vrot.lane.b32.xlu0 %v3533, 71
  %v4992 = vpop.permute.xlu0 %4991
  %4993 = vrot.lane.b32.xlu0 %v3534, 71
  %v4994 = vpop.permute.xlu0 %4993
  %4995 = vrot.lane.b32.xlu0 %v3535, 71
  %v4996 = vpop.permute.xlu0 %4995
  %4997 = vrot.lane.b32.xlu0 %v3536, 71
  %v4998 = vpop.permute.xlu0 %4997
  %4999 = vrot.lane.b32.xlu0 %v3537, 71
  %v5000 = vpop.permute.xlu0 %4999
  %5001 = vrot.lane.b32.xlu0 %v3538, 71
  %v5002 = vpop.permute.xlu0 %5001
  %5003 = vrot.lane.b32.xlu0 %v3539, 71
  %v5004 = vpop.permute.xlu0 %5003
  %5005 = vrot.lane.b32.xlu0 %v3540, 71
  %v5006 = vpop.permute.xlu0 %5005
  %5007 = vrot.lane.b32.xlu0 %v3541, 71
  %v5008 = vpop.permute.xlu0 %5007
  %5009 = vrot.lane.b32.xlu0 %v3542, 71
  %v5010 = vpop.permute.xlu0 %5009
  %5011 = vrot.lane.b32.xlu0 %v3543, 71
  %v5012 = vpop.permute.xlu0 %5011
  %5013 = vrot.lane.b32.xlu0 %v3544, 71
  %v5014 = vpop.permute.xlu0 %5013
  %5015 = vrot.lane.b32.xlu0 %v3545, 71
  %v5016 = vpop.permute.xlu0 %5015
  %5017 = vrot.lane.b32.xlu0 %v3546, 71
  %v5018 = vpop.permute.xlu0 %5017
  %5019 = vrot.lane.b32.xlu0 %v3547, 71
  %v5020 = vpop.permute.xlu0 %5019
  %5021 = vrot.lane.b32.xlu0 %v3548, 71
  %v5022 = vpop.permute.xlu0 %5021
  %5023 = vrot.lane.b32.xlu0 %v3549, 71
  %v5024 = vpop.permute.xlu0 %5023
  %5025 = vrot.lane.b32.xlu0 %v3550, 71
  %v5026 = vpop.permute.xlu0 %5025
  %5027 = vrot.lane.b32.xlu0 %v3551, 71
  %v5028 = vpop.permute.xlu0 %5027
  %5029 = vrot.lane.b32.xlu0 %v3552, 71
  %v5030 = vpop.permute.xlu0 %5029
  %5031 = vrot.lane.b32.xlu0 %v3553, 71
  %v5032 = vpop.permute.xlu0 %5031
  %v5033 = vsel %vm2878, %v4924, %v4926
  %v5034 = vsel %vm2878, %v4926, %v4928
  %v5035 = vsel %vm2878, %v4928, %v4930
  %v5036 = vsel %vm2878, %v4930, %v4932
  %v5037 = vsel %vm2878, %v4932, %v4934
  %v5038 = vsel %vm2878, %v4934, %v4936
  %v5039 = vsel %vm2878, %v4936, %v4938
  %v5040 = vsel %vm2878, %v4938, %v4940
  %v5041 = vsel %vm2878, %v4940, %v4942
  %v5042 = vsel %vm2878, %v4942, %v4944
  %v5043 = vsel %vm2878, %v4944, %v4946
  %v5044 = vsel %vm2878, %v4946, %v4948
  %v5045 = vsel %vm2878, %v4948, %v4950
  %v5046 = vsel %vm2878, %v4950, %v4952
  %v5047 = vsel %vm2878, %v4952, %v4954
  %v5048 = vsel %vm2878, %v4954, %v4956
  %v5049 = vsel %vm2878, %v4956, %v4958
  %v5050 = vsel %vm2878, %v4958, %v4960
  %v5051 = vsel %vm2878, %v4960, %v4962
  %v5052 = vsel %vm2878, %v4962, %v4964
  %v5053 = vsel %vm2878, %v4964, %v4966
  %v5054 = vsel %vm2878, %v4966, %v4968
  %v5055 = vsel %vm2878, %v4968, %v4970
  %v5056 = vsel %vm2878, %v4970, %v4972
  %v5057 = vsel %vm2878, %v4972, %v4974
  %v5058 = vsel %vm2878, %v4974, %v4976
  %v5059 = vsel %vm2878, %v4976, %v4978
  %v5060 = vsel %vm2878, %v4978, %v4980
  %v5061 = vsel %vm2878, %v4980, %v4982
  %v5062 = vsel %vm2878, %v4982, %v4984
  %v5063 = vsel %vm2878, %v4984, %v4986
  %v5064 = vsel %vm2878, %v4986, %v4988
  %v5065 = vsel %vm2878, %v4988, %v4990
  %v5066 = vsel %vm2878, %v4990, %v4992
  %v5067 = vsel %vm2878, %v4992, %v4994
  %v5068 = vsel %vm2878, %v4994, %v4996
  %v5069 = vsel %vm2878, %v4996, %v4998
  %v5070 = vsel %vm2878, %v4998, %v5000
  %v5071 = vsel %vm2878, %v5000, %v5002
  %v5072 = vsel %vm2878, %v5002, %v5004
  %v5073 = vsel %vm2878, %v5004, %v5006
  %v5074 = vsel %vm2878, %v5006, %v5008
  %v5075 = vsel %vm2878, %v5008, %v5010
  %v5076 = vsel %vm2878, %v5010, %v5012
  %v5077 = vsel %vm2878, %v5012, %v5014
  %v5078 = vsel %vm2878, %v5014, %v5016
  %v5079 = vsel %vm2878, %v5016, %v5018
  %v5080 = vsel %vm2878, %v5018, %v5020
  %v5081 = vsel %vm2878, %v5020, %v5022
  %v5082 = vsel %vm2878, %v5022, %v5024
  %v5083 = vsel %vm2878, %v5024, %v5026
  %v5084 = vsel %vm2878, %v5026, %v5028
  %v5085 = vsel %vm2878, %v5028, %v5030
  %v5086 = vsel %vm2878, %v5030, %v5032
  %5142 = vrot.lane.b32.xlu0 %v3499, 70
  %v5143 = vpop.permute.xlu0 %5142
  %5144 = vrot.lane.b32.xlu0 %v3500, 70
  %v5145 = vpop.permute.xlu0 %5144
  %5146 = vrot.lane.b32.xlu0 %v3501, 70
  %v5147 = vpop.permute.xlu0 %5146
  %5148 = vrot.lane.b32.xlu0 %v3502, 70
  %v5149 = vpop.permute.xlu0 %5148
  %5150 = vrot.lane.b32.xlu0 %v3503, 70
  %v5151 = vpop.permute.xlu0 %5150
  %5152 = vrot.lane.b32.xlu0 %v3504, 70
  %v5153 = vpop.permute.xlu0 %5152
  %5154 = vrot.lane.b32.xlu0 %v3505, 70
  %v5155 = vpop.permute.xlu0 %5154
  %5156 = vrot.lane.b32.xlu0 %v3506, 70
  %v5157 = vpop.permute.xlu0 %5156
  %5158 = vrot.lane.b32.xlu0 %v3507, 70
  %v5159 = vpop.permute.xlu0 %5158
  %5160 = vrot.lane.b32.xlu0 %v3508, 70
  %v5161 = vpop.permute.xlu0 %5160
  %5162 = vrot.lane.b32.xlu0 %v3509, 70
  %v5163 = vpop.permute.xlu0 %5162
  %5164 = vrot.lane.b32.xlu0 %v3510, 70
  %v5165 = vpop.permute.xlu0 %5164
  %5166 = vrot.lane.b32.xlu0 %v3511, 70
  %v5167 = vpop.permute.xlu0 %5166
  %5168 = vrot.lane.b32.xlu0 %v3512, 70
  %v5169 = vpop.permute.xlu0 %5168
  %5170 = vrot.lane.b32.xlu0 %v3513, 70
  %v5171 = vpop.permute.xlu0 %5170
  %5172 = vrot.lane.b32.xlu0 %v3514, 70
  %v5173 = vpop.permute.xlu0 %5172
  %5174 = vrot.lane.b32.xlu0 %v3515, 70
  %v5175 = vpop.permute.xlu0 %5174
  %5176 = vrot.lane.b32.xlu0 %v3516, 70
  %v5177 = vpop.permute.xlu0 %5176
  %5178 = vrot.lane.b32.xlu0 %v3517, 70
  %v5179 = vpop.permute.xlu0 %5178
  %5180 = vrot.lane.b32.xlu0 %v3518, 70
  %v5181 = vpop.permute.xlu0 %5180
  %5182 = vrot.lane.b32.xlu0 %v3519, 70
  %v5183 = vpop.permute.xlu0 %5182
  %5184 = vrot.lane.b32.xlu0 %v3520, 70
  %v5185 = vpop.permute.xlu0 %5184
  %5186 = vrot.lane.b32.xlu0 %v3521, 70
  %v5187 = vpop.permute.xlu0 %5186
  %5188 = vrot.lane.b32.xlu0 %v3522, 70
  %v5189 = vpop.permute.xlu0 %5188
  %5190 = vrot.lane.b32.xlu0 %v3523, 70
  %v5191 = vpop.permute.xlu0 %5190
  %5192 = vrot.lane.b32.xlu0 %v3524, 70
  %v5193 = vpop.permute.xlu0 %5192
  %5194 = vrot.lane.b32.xlu0 %v3525, 70
  %v5195 = vpop.permute.xlu0 %5194
  %5196 = vrot.lane.b32.xlu0 %v3526, 70
  %v5197 = vpop.permute.xlu0 %5196
  %5198 = vrot.lane.b32.xlu0 %v3527, 70
  %v5199 = vpop.permute.xlu0 %5198
  %5200 = vrot.lane.b32.xlu0 %v3528, 70
  %v5201 = vpop.permute.xlu0 %5200
  %5202 = vrot.lane.b32.xlu0 %v3529, 70
  %v5203 = vpop.permute.xlu0 %5202
  %5204 = vrot.lane.b32.xlu0 %v3530, 70
  %v5205 = vpop.permute.xlu0 %5204
  %5206 = vrot.lane.b32.xlu0 %v3531, 70
  %v5207 = vpop.permute.xlu0 %5206
  %5208 = vrot.lane.b32.xlu0 %v3532, 70
  %v5209 = vpop.permute.xlu0 %5208
  %5210 = vrot.lane.b32.xlu0 %v3533, 70
  %v5211 = vpop.permute.xlu0 %5210
  %5212 = vrot.lane.b32.xlu0 %v3534, 70
  %v5213 = vpop.permute.xlu0 %5212
  %5214 = vrot.lane.b32.xlu0 %v3535, 70
  %v5215 = vpop.permute.xlu0 %5214
  %5216 = vrot.lane.b32.xlu0 %v3536, 70
  %v5217 = vpop.permute.xlu0 %5216
  %5218 = vrot.lane.b32.xlu0 %v3537, 70
  %v5219 = vpop.permute.xlu0 %5218
  %5220 = vrot.lane.b32.xlu0 %v3538, 70
  %v5221 = vpop.permute.xlu0 %5220
  %5222 = vrot.lane.b32.xlu0 %v3539, 70
  %v5223 = vpop.permute.xlu0 %5222
  %5224 = vrot.lane.b32.xlu0 %v3540, 70
  %v5225 = vpop.permute.xlu0 %5224
  %5226 = vrot.lane.b32.xlu0 %v3541, 70
  %v5227 = vpop.permute.xlu0 %5226
  %5228 = vrot.lane.b32.xlu0 %v3542, 70
  %v5229 = vpop.permute.xlu0 %5228
  %5230 = vrot.lane.b32.xlu0 %v3543, 70
  %v5231 = vpop.permute.xlu0 %5230
  %5232 = vrot.lane.b32.xlu0 %v3544, 70
  %v5233 = vpop.permute.xlu0 %5232
  %5234 = vrot.lane.b32.xlu0 %v3545, 70
  %v5235 = vpop.permute.xlu0 %5234
  %5236 = vrot.lane.b32.xlu0 %v3546, 70
  %v5237 = vpop.permute.xlu0 %5236
  %5238 = vrot.lane.b32.xlu0 %v3547, 70
  %v5239 = vpop.permute.xlu0 %5238
  %5240 = vrot.lane.b32.xlu0 %v3548, 70
  %v5241 = vpop.permute.xlu0 %5240
  %5242 = vrot.lane.b32.xlu0 %v3549, 70
  %v5243 = vpop.permute.xlu0 %5242
  %5244 = vrot.lane.b32.xlu0 %v3550, 70
  %v5245 = vpop.permute.xlu0 %5244
  %5246 = vrot.lane.b32.xlu0 %v3551, 70
  %v5247 = vpop.permute.xlu0 %5246
  %5248 = vrot.lane.b32.xlu0 %v3552, 70
  %v5249 = vpop.permute.xlu0 %5248
  %5250 = vrot.lane.b32.xlu0 %v3553, 70
  %v5251 = vpop.permute.xlu0 %5250
  %v5252 = vsel %vm3272, %v5143, %v5145
  %v5253 = vsel %vm3272, %v5145, %v5147
  %v5254 = vsel %vm3272, %v5147, %v5149
  %v5255 = vsel %vm3272, %v5149, %v5151
  %v5256 = vsel %vm3272, %v5151, %v5153
  %v5257 = vsel %vm3272, %v5153, %v5155
  %v5258 = vsel %vm3272, %v5155, %v5157
  %v5259 = vsel %vm3272, %v5157, %v5159
  %v5260 = vsel %vm3272, %v5159, %v5161
  %v5261 = vsel %vm3272, %v5161, %v5163
  %v5262 = vsel %vm3272, %v5163, %v5165
  %v5263 = vsel %vm3272, %v5165, %v5167
  %v5264 = vsel %vm3272, %v5167, %v5169
  %v5265 = vsel %vm3272, %v5169, %v5171
  %v5266 = vsel %vm3272, %v5171, %v5173
  %v5267 = vsel %vm3272, %v5173, %v5175
  %v5268 = vsel %vm3272, %v5175, %v5177
  %v5269 = vsel %vm3272, %v5177, %v5179
  %v5270 = vsel %vm3272, %v5179, %v5181
  %v5271 = vsel %vm3272, %v5181, %v5183
  %v5272 = vsel %vm3272, %v5183, %v5185
  %v5273 = vsel %vm3272, %v5185, %v5187
  %v5274 = vsel %vm3272, %v5187, %v5189
  %v5275 = vsel %vm3272, %v5189, %v5191
  %v5276 = vsel %vm3272, %v5191, %v5193
  %v5277 = vsel %vm3272, %v5193, %v5195
  %v5278 = vsel %vm3272, %v5195, %v5197
  %v5279 = vsel %vm3272, %v5197, %v5199
  %v5280 = vsel %vm3272, %v5199, %v5201
  %v5281 = vsel %vm3272, %v5201, %v5203
  %v5282 = vsel %vm3272, %v5203, %v5205
  %v5283 = vsel %vm3272, %v5205, %v5207
  %v5284 = vsel %vm3272, %v5207, %v5209
  %v5285 = vsel %vm3272, %v5209, %v5211
  %v5286 = vsel %vm3272, %v5211, %v5213
  %v5287 = vsel %vm3272, %v5213, %v5215
  %v5288 = vsel %vm3272, %v5215, %v5217
  %v5289 = vsel %vm3272, %v5217, %v5219
  %v5290 = vsel %vm3272, %v5219, %v5221
  %v5291 = vsel %vm3272, %v5221, %v5223
  %v5292 = vsel %vm3272, %v5223, %v5225
  %v5293 = vsel %vm3272, %v5225, %v5227
  %v5294 = vsel %vm3272, %v5227, %v5229
  %v5295 = vsel %vm3272, %v5229, %v5231
  %v5296 = vsel %vm3272, %v5231, %v5233
  %v5297 = vsel %vm3272, %v5233, %v5235
  %v5298 = vsel %vm3272, %v5235, %v5237
  %v5299 = vsel %vm3272, %v5237, %v5239
  %v5300 = vsel %vm3272, %v5239, %v5241
  %v5301 = vsel %vm3272, %v5241, %v5243
  %v5302 = vsel %vm3272, %v5243, %v5245
  %v5303 = vsel %vm3272, %v5245, %v5247
  %v5304 = vsel %vm3272, %v5247, %v5249
  %v5305 = vsel %vm3272, %v5249, %v5251
  %v5361 = vld [vmem:[%s3] sm:$0xff]
  %v5362 = vld [vmem:[%s3 + $0x8] sm:$0xff]
  %v5363 = vld [vmem:[%s4] sm:$0xff]
  %v5364 = vld [vmem:[%s4 + $0x8] sm:$0xff]
  %5366 = vset.pattern.permute.xlu0 0
  %5367 = vperm.xlu0 %5366, %v5363
  %v5368 = vpop.permute.xlu0 %5367
  %5371 = vset.pattern.permute.xlu0 0
  %5372 = vperm.xlu0 %5371, %v5364
  %v5373 = vpop.permute.xlu0 %5372
  %v5376 = vsel %vm2484, %v5361, 0
  %v5379 = vsel %vm2484, %v5362, 0
  %5381 = vmatpush.msra.mxu0 0.0
  %5382 = vmatpush.msra.mxu0 0.0
  %5383 = vmatpush.msra.mxu0 0.0
  %5384 = vmatpush.msra.mxu0 0.0
  %5385 = vmatpush.msra.mxu0 0.0
  %5386 = vmatpush.msra.mxu0 0.0
  %5387 = vmatpush.msra.mxu0 0.0
  %5388 = vmatpush.msra.mxu0 %v5252
  %5389 = vmatpush.msra.mxu0 %v5033
  %5390 = vmatpush.msra.mxu0 %v4814
  %5391 = vmatpush.msra.mxu0 %v4595
  %5392 = vmatpush.msra.mxu0 %v4376
  %5393 = vmatpush.msra.mxu0 %v4157
  %5394 = vmatpush.msra.mxu0 %v3938
  %5395 = vmatpush.msra.mxu0 %v3719
  %5396 = vmatpush.msra.mxu0 %v3499
  %5397 = vmatmul.f32.gmra.mxu0 %v5376
  %v5398 = vpop.f32.mrf.mxu0
  %v5399 = vadd.f32 %v5368, %v5398
  %5400 = vmatmul.f32.gmra.mxu0 %v5379
  %v5401 = vpop.f32.mrf.mxu0
  %v5402 = vadd.f32 %v5373, %v5401
  %5403 = vdwg.mxu0
  %5404 = vmatpush.msra.mxu0 0.0
  %5405 = vmatpush.msra.mxu0 0.0
  %5406 = vmatpush.msra.mxu0 0.0
  %5407 = vmatpush.msra.mxu0 0.0
  %5408 = vmatpush.msra.mxu0 0.0
  %5409 = vmatpush.msra.mxu0 0.0
  %5410 = vmatpush.msra.mxu0 0.0
  %5411 = vmatpush.msra.mxu0 %v5253
  %5412 = vmatpush.msra.mxu0 %v5034
  %5413 = vmatpush.msra.mxu0 %v4815
  %5414 = vmatpush.msra.mxu0 %v4596
  %5415 = vmatpush.msra.mxu0 %v4377
  %5416 = vmatpush.msra.mxu0 %v4158
  %5417 = vmatpush.msra.mxu0 %v3939
  %5418 = vmatpush.msra.mxu0 %v3720
  %5419 = vmatpush.msra.mxu0 %v3500
  %5420 = vmatmul.f32.gmra.mxu0 %v5376
  %v5421 = vpop.f32.mrf.mxu0
  %v5422 = vadd.f32 %v5368, %v5421
  %5423 = vmatmul.f32.gmra.mxu0 %v5379
  %v5424 = vpop.f32.mrf.mxu0
  %v5425 = vadd.f32 %v5373, %v5424
  %5426 = vdwg.mxu0
  %5427 = vmatpush.msra.mxu0 0.0
  %5428 = vmatpush.msra.mxu0 0.0
  %5429 = vmatpush.msra.mxu0 0.0
  %5430 = vmatpush.msra.mxu0 0.0
  %5431 = vmatpush.msra.mxu0 0.0
  %5432 = vmatpush.msra.mxu0 0.0
  %5433 = vmatpush.msra.mxu0 0.0
  %5434 = vmatpush.msra.mxu0 %v5254
  %5435 = vmatpush.msra.mxu0 %v5035
  %5436 = vmatpush.msra.mxu0 %v4816
  %5437 = vmatpush.msra.mxu0 %v4597
  %5438 = vmatpush.msra.mxu0 %v4378
  %5439 = vmatpush.msra.mxu0 %v4159
  %5440 = vmatpush.msra.mxu0 %v3940
  %5441 = vmatpush.msra.mxu0 %v3721
  %5442 = vmatpush.msra.mxu0 %v3501
  %5443 = vmatmul.f32.gmra.mxu0 %v5376
  %v5444 = vpop.f32.mrf.mxu0
  %v5445 = vadd.f32 %v5368, %v5444
  %5446 = vmatmul.f32.gmra.mxu0 %v5379
  %v5447 = vpop.f32.mrf.mxu0
  %v5448 = vadd.f32 %v5373, %v5447
  %5449 = vdwg.mxu0
  %5450 = vmatpush.msra.mxu0 0.0
  %5451 = vmatpush.msra.mxu0 0.0
  %5452 = vmatpush.msra.mxu0 0.0
  %5453 = vmatpush.msra.mxu0 0.0
  %5454 = vmatpush.msra.mxu0 0.0
  %5455 = vmatpush.msra.mxu0 0.0
  %5456 = vmatpush.msra.mxu0 0.0
  %5457 = vmatpush.msra.mxu0 %v5255
  %5458 = vmatpush.msra.mxu0 %v5036
  %5459 = vmatpush.msra.mxu0 %v4817
  %5460 = vmatpush.msra.mxu0 %v4598
  %5461 = vmatpush.msra.mxu0 %v4379
  %5462 = vmatpush.msra.mxu0 %v4160
  %5463 = vmatpush.msra.mxu0 %v3941
  %5464 = vmatpush.msra.mxu0 %v3722
  %5465 = vmatpush.msra.mxu0 %v3502
  %5466 = vmatmul.f32.gmra.mxu0 %v5376
  %v5467 = vpop.f32.mrf.mxu0
  %v5468 = vadd.f32 %v5368, %v5467
  %5469 = vmatmul.f32.gmra.mxu0 %v5379
  %v5470 = vpop.f32.mrf.mxu0
  %v5471 = vadd.f32 %v5373, %v5470
  %5472 = vdwg.mxu0
  %5473 = vmatpush.msra.mxu0 0.0
  %5474 = vmatpush.msra.mxu0 0.0
  %5475 = vmatpush.msra.mxu0 0.0
  %5476 = vmatpush.msra.mxu0 0.0
  %5477 = vmatpush.msra.mxu0 0.0
  %5478 = vmatpush.msra.mxu0 0.0
  %5479 = vmatpush.msra.mxu0 0.0
  %5480 = vmatpush.msra.mxu0 %v5256
  %5481 = vmatpush.msra.mxu0 %v5037
  %5482 = vmatpush.msra.mxu0 %v4818
  %5483 = vmatpush.msra.mxu0 %v4599
  %5484 = vmatpush.msra.mxu0 %v4380
  %5485 = vmatpush.msra.mxu0 %v4161
  %5486 = vmatpush.msra.mxu0 %v3942
  %5487 = vmatpush.msra.mxu0 %v3723
  %5488 = vmatpush.msra.mxu0 %v3503
  %5489 = vmatmul.f32.gmra.mxu0 %v5376
  %v5490 = vpop.f32.mrf.mxu0
  %v5491 = vadd.f32 %v5368, %v5490
  %5492 = vmatmul.f32.gmra.mxu0 %v5379
  %v5493 = vpop.f32.mrf.mxu0
  %v5494 = vadd.f32 %v5373, %v5493
  %5495 = vdwg.mxu0
  %5496 = vmatpush.msra.mxu0 0.0
  %5497 = vmatpush.msra.mxu0 0.0
  %5498 = vmatpush.msra.mxu0 0.0
  %5499 = vmatpush.msra.mxu0 0.0
  %5500 = vmatpush.msra.mxu0 0.0
  %5501 = vmatpush.msra.mxu0 0.0
  %5502 = vmatpush.msra.mxu0 0.0
  %5503 = vmatpush.msra.mxu0 %v5257
  %5504 = vmatpush.msra.mxu0 %v5038
  %5505 = vmatpush.msra.mxu0 %v4819
  %5506 = vmatpush.msra.mxu0 %v4600
  %5507 = vmatpush.msra.mxu0 %v4381
  %5508 = vmatpush.msra.mxu0 %v4162
  %5509 = vmatpush.msra.mxu0 %v3943
  %5510 = vmatpush.msra.mxu0 %v3724
  %5511 = vmatpush.msra.mxu0 %v3504
  %5512 = vmatmul.f32.gmra.mxu0 %v5376
  %v5513 = vpop.f32.mrf.mxu0
  %v5514 = vadd.f32 %v5368, %v5513
  %5515 = vmatmul.f32.gmra.mxu0 %v5379
  %v5516 = vpop.f32.mrf.mxu0
  %v5517 = vadd.f32 %v5373, %v5516
  %5518 = vdwg.mxu0
  %5519 = vmatpush.msra.mxu0 0.0
  %5520 = vmatpush.msra.mxu0 0.0
  %5521 = vmatpush.msra.mxu0 0.0
  %5522 = vmatpush.msra.mxu0 0.0
  %5523 = vmatpush.msra.mxu0 0.0
  %5524 = vmatpush.msra.mxu0 0.0
  %5525 = vmatpush.msra.mxu0 0.0
  %5526 = vmatpush.msra.mxu0 %v5258
  %5527 = vmatpush.msra.mxu0 %v5039
  %5528 = vmatpush.msra.mxu0 %v4820
  %5529 = vmatpush.msra.mxu0 %v4601
  %5530 = vmatpush.msra.mxu0 %v4382
  %5531 = vmatpush.msra.mxu0 %v4163
  %5532 = vmatpush.msra.mxu0 %v3944
  %5533 = vmatpush.msra.mxu0 %v3725
  %5534 = vmatpush.msra.mxu0 %v3505
  %5535 = vmatmul.f32.gmra.mxu0 %v5376
  %v5536 = vpop.f32.mrf.mxu0
  %v5537 = vadd.f32 %v5368, %v5536
  %5538 = vmatmul.f32.gmra.mxu0 %v5379
  %v5539 = vpop.f32.mrf.mxu0
  %v5540 = vadd.f32 %v5373, %v5539
  %5541 = vdwg.mxu0
  %5542 = vmatpush.msra.mxu0 0.0
  %5543 = vmatpush.msra.mxu0 0.0
  %5544 = vmatpush.msra.mxu0 0.0
  %5545 = vmatpush.msra.mxu0 0.0
  %5546 = vmatpush.msra.mxu0 0.0
  %5547 = vmatpush.msra.mxu0 0.0
  %5548 = vmatpush.msra.mxu0 0.0
  %5549 = vmatpush.msra.mxu0 %v5259
  %5550 = vmatpush.msra.mxu0 %v5040
  %5551 = vmatpush.msra.mxu0 %v4821
  %5552 = vmatpush.msra.mxu0 %v4602
  %5553 = vmatpush.msra.mxu0 %v4383
  %5554 = vmatpush.msra.mxu0 %v4164
  %5555 = vmatpush.msra.mxu0 %v3945
  %5556 = vmatpush.msra.mxu0 %v3726
  %5557 = vmatpush.msra.mxu0 %v3506
  %5558 = vmatmul.f32.gmra.mxu0 %v5376
  %v5559 = vpop.f32.mrf.mxu0
  %v5560 = vadd.f32 %v5368, %v5559
  %5561 = vmatmul.f32.gmra.mxu0 %v5379
  %v5562 = vpop.f32.mrf.mxu0
  %v5563 = vadd.f32 %v5373, %v5562
  %5564 = vdwg.mxu0
  %5565 = vmatpush.msra.mxu0 0.0
  %5566 = vmatpush.msra.mxu0 0.0
  %5567 = vmatpush.msra.mxu0 0.0
  %5568 = vmatpush.msra.mxu0 0.0
  %5569 = vmatpush.msra.mxu0 0.0
  %5570 = vmatpush.msra.mxu0 0.0
  %5571 = vmatpush.msra.mxu0 0.0
  %5572 = vmatpush.msra.mxu0 %v5260
  %5573 = vmatpush.msra.mxu0 %v5041
  %5574 = vmatpush.msra.mxu0 %v4822
  %5575 = vmatpush.msra.mxu0 %v4603
  %5576 = vmatpush.msra.mxu0 %v4384
  %5577 = vmatpush.msra.mxu0 %v4165
  %5578 = vmatpush.msra.mxu0 %v3946
  %5579 = vmatpush.msra.mxu0 %v3727
  %5580 = vmatpush.msra.mxu0 %v3507
  %5581 = vmatmul.f32.gmra.mxu0 %v5376
  %v5582 = vpop.f32.mrf.mxu0
  %v5583 = vadd.f32 %v5368, %v5582
  %5584 = vmatmul.f32.gmra.mxu0 %v5379
  %v5585 = vpop.f32.mrf.mxu0
  %v5586 = vadd.f32 %v5373, %v5585
  %5587 = vdwg.mxu0
  %5588 = vmatpush.msra.mxu0 0.0
  %5589 = vmatpush.msra.mxu0 0.0
  %5590 = vmatpush.msra.mxu0 0.0
  %5591 = vmatpush.msra.mxu0 0.0
  %5592 = vmatpush.msra.mxu0 0.0
  %5593 = vmatpush.msra.mxu0 0.0
  %5594 = vmatpush.msra.mxu0 0.0
  %5595 = vmatpush.msra.mxu0 %v5261
  %5596 = vmatpush.msra.mxu0 %v5042
  %5597 = vmatpush.msra.mxu0 %v4823
  %5598 = vmatpush.msra.mxu0 %v4604
  %5599 = vmatpush.msra.mxu0 %v4385
  %5600 = vmatpush.msra.mxu0 %v4166
  %5601 = vmatpush.msra.mxu0 %v3947
  %5602 = vmatpush.msra.mxu0 %v3728
  %5603 = vmatpush.msra.mxu0 %v3508
  %5604 = vmatmul.f32.gmra.mxu0 %v5376
  %v5605 = vpop.f32.mrf.mxu0
  %v5606 = vadd.f32 %v5368, %v5605
  %5607 = vmatmul.f32.gmra.mxu0 %v5379
  %v5608 = vpop.f32.mrf.mxu0
  %v5609 = vadd.f32 %v5373, %v5608
  %5610 = vdwg.mxu0
  %5611 = vmatpush.msra.mxu0 0.0
  %5612 = vmatpush.msra.mxu0 0.0
  %5613 = vmatpush.msra.mxu0 0.0
  %5614 = vmatpush.msra.mxu0 0.0
  %5615 = vmatpush.msra.mxu0 0.0
  %5616 = vmatpush.msra.mxu0 0.0
  %5617 = vmatpush.msra.mxu0 0.0
  %5618 = vmatpush.msra.mxu0 %v5262
  %5619 = vmatpush.msra.mxu0 %v5043
  %5620 = vmatpush.msra.mxu0 %v4824
  %5621 = vmatpush.msra.mxu0 %v4605
  %5622 = vmatpush.msra.mxu0 %v4386
  %5623 = vmatpush.msra.mxu0 %v4167
  %5624 = vmatpush.msra.mxu0 %v3948
  %5625 = vmatpush.msra.mxu0 %v3729
  %5626 = vmatpush.msra.mxu0 %v3509
  %5627 = vmatmul.f32.gmra.mxu0 %v5376
  %v5628 = vpop.f32.mrf.mxu0
  %v5629 = vadd.f32 %v5368, %v5628
  %5630 = vmatmul.f32.gmra.mxu0 %v5379
  %v5631 = vpop.f32.mrf.mxu0
  %v5632 = vadd.f32 %v5373, %v5631
  %5633 = vdwg.mxu0
  %5634 = vmatpush.msra.mxu0 0.0
  %5635 = vmatpush.msra.mxu0 0.0
  %5636 = vmatpush.msra.mxu0 0.0
  %5637 = vmatpush.msra.mxu0 0.0
  %5638 = vmatpush.msra.mxu0 0.0
  %5639 = vmatpush.msra.mxu0 0.0
  %5640 = vmatpush.msra.mxu0 0.0
  %5641 = vmatpush.msra.mxu0 %v5263
  %5642 = vmatpush.msra.mxu0 %v5044
  %5643 = vmatpush.msra.mxu0 %v4825
  %5644 = vmatpush.msra.mxu0 %v4606
  %5645 = vmatpush.msra.mxu0 %v4387
  %5646 = vmatpush.msra.mxu0 %v4168
  %5647 = vmatpush.msra.mxu0 %v3949
  %5648 = vmatpush.msra.mxu0 %v3730
  %5649 = vmatpush.msra.mxu0 %v3510
  %5650 = vmatmul.f32.gmra.mxu0 %v5376
  %v5651 = vpop.f32.mrf.mxu0
  %v5652 = vadd.f32 %v5368, %v5651
  %5653 = vmatmul.f32.gmra.mxu0 %v5379
  %v5654 = vpop.f32.mrf.mxu0
  %v5655 = vadd.f32 %v5373, %v5654
  %5656 = vdwg.mxu0
  %5657 = vmatpush.msra.mxu0 0.0
  %5658 = vmatpush.msra.mxu0 0.0
  %5659 = vmatpush.msra.mxu0 0.0
  %5660 = vmatpush.msra.mxu0 0.0
  %5661 = vmatpush.msra.mxu0 0.0
  %5662 = vmatpush.msra.mxu0 0.0
  %5663 = vmatpush.msra.mxu0 0.0
  %5664 = vmatpush.msra.mxu0 %v5264
  %5665 = vmatpush.msra.mxu0 %v5045
  %5666 = vmatpush.msra.mxu0 %v4826
  %5667 = vmatpush.msra.mxu0 %v4607
  %5668 = vmatpush.msra.mxu0 %v4388
  %5669 = vmatpush.msra.mxu0 %v4169
  %5670 = vmatpush.msra.mxu0 %v3950
  %5671 = vmatpush.msra.mxu0 %v3731
  %5672 = vmatpush.msra.mxu0 %v3511
  %5673 = vmatmul.f32.gmra.mxu0 %v5376
  %v5674 = vpop.f32.mrf.mxu0
  %v5675 = vadd.f32 %v5368, %v5674
  %5676 = vmatmul.f32.gmra.mxu0 %v5379
  %v5677 = vpop.f32.mrf.mxu0
  %v5678 = vadd.f32 %v5373, %v5677
  %5679 = vdwg.mxu0
  %5680 = vmatpush.msra.mxu0 0.0
  %5681 = vmatpush.msra.mxu0 0.0
  %5682 = vmatpush.msra.mxu0 0.0
  %5683 = vmatpush.msra.mxu0 0.0
  %5684 = vmatpush.msra.mxu0 0.0
  %5685 = vmatpush.msra.mxu0 0.0
  %5686 = vmatpush.msra.mxu0 0.0
  %5687 = vmatpush.msra.mxu0 %v5265
  %5688 = vmatpush.msra.mxu0 %v5046
  %5689 = vmatpush.msra.mxu0 %v4827
  %5690 = vmatpush.msra.mxu0 %v4608
  %5691 = vmatpush.msra.mxu0 %v4389
  %5692 = vmatpush.msra.mxu0 %v4170
  %5693 = vmatpush.msra.mxu0 %v3951
  %5694 = vmatpush.msra.mxu0 %v3732
  %5695 = vmatpush.msra.mxu0 %v3512
  %5696 = vmatmul.f32.gmra.mxu0 %v5376
  %v5697 = vpop.f32.mrf.mxu0
  %v5698 = vadd.f32 %v5368, %v5697
  %5699 = vmatmul.f32.gmra.mxu0 %v5379
  %v5700 = vpop.f32.mrf.mxu0
  %v5701 = vadd.f32 %v5373, %v5700
  %5702 = vdwg.mxu0
  %5703 = vmatpush.msra.mxu0 0.0
  %5704 = vmatpush.msra.mxu0 0.0
  %5705 = vmatpush.msra.mxu0 0.0
  %5706 = vmatpush.msra.mxu0 0.0
  %5707 = vmatpush.msra.mxu0 0.0
  %5708 = vmatpush.msra.mxu0 0.0
  %5709 = vmatpush.msra.mxu0 0.0
  %5710 = vmatpush.msra.mxu0 %v5266
  %5711 = vmatpush.msra.mxu0 %v5047
  %5712 = vmatpush.msra.mxu0 %v4828
  %5713 = vmatpush.msra.mxu0 %v4609
  %5714 = vmatpush.msra.mxu0 %v4390
  %5715 = vmatpush.msra.mxu0 %v4171
  %5716 = vmatpush.msra.mxu0 %v3952
  %5717 = vmatpush.msra.mxu0 %v3733
  %5718 = vmatpush.msra.mxu0 %v3513
  %5719 = vmatmul.f32.gmra.mxu0 %v5376
  %v5720 = vpop.f32.mrf.mxu0
  %v5721 = vadd.f32 %v5368, %v5720
  %5722 = vmatmul.f32.gmra.mxu0 %v5379
  %v5723 = vpop.f32.mrf.mxu0
  %v5724 = vadd.f32 %v5373, %v5723
  %5725 = vdwg.mxu0
  %5726 = vmatpush.msra.mxu0 0.0
  %5727 = vmatpush.msra.mxu0 0.0
  %5728 = vmatpush.msra.mxu0 0.0
  %5729 = vmatpush.msra.mxu0 0.0
  %5730 = vmatpush.msra.mxu0 0.0
  %5731 = vmatpush.msra.mxu0 0.0
  %5732 = vmatpush.msra.mxu0 0.0
  %5733 = vmatpush.msra.mxu0 %v5267
  %5734 = vmatpush.msra.mxu0 %v5048
  %5735 = vmatpush.msra.mxu0 %v4829
  %5736 = vmatpush.msra.mxu0 %v4610
  %5737 = vmatpush.msra.mxu0 %v4391
  %5738 = vmatpush.msra.mxu0 %v4172
  %5739 = vmatpush.msra.mxu0 %v3953
  %5740 = vmatpush.msra.mxu0 %v3734
  %5741 = vmatpush.msra.mxu0 %v3514
  %5742 = vmatmul.f32.gmra.mxu0 %v5376
  %v5743 = vpop.f32.mrf.mxu0
  %v5744 = vadd.f32 %v5368, %v5743
  %5745 = vmatmul.f32.gmra.mxu0 %v5379
  %v5746 = vpop.f32.mrf.mxu0
  %v5747 = vadd.f32 %v5373, %v5746
  %5748 = vdwg.mxu0
  %5749 = vmatpush.msra.mxu0 0.0
  %5750 = vmatpush.msra.mxu0 0.0
  %5751 = vmatpush.msra.mxu0 0.0
  %5752 = vmatpush.msra.mxu0 0.0
  %5753 = vmatpush.msra.mxu0 0.0
  %5754 = vmatpush.msra.mxu0 0.0
  %5755 = vmatpush.msra.mxu0 0.0
  %5756 = vmatpush.msra.mxu0 %v5268
  %5757 = vmatpush.msra.mxu0 %v5049
  %5758 = vmatpush.msra.mxu0 %v4830
  %5759 = vmatpush.msra.mxu0 %v4611
  %5760 = vmatpush.msra.mxu0 %v4392
  %5761 = vmatpush.msra.mxu0 %v4173
  %5762 = vmatpush.msra.mxu0 %v3954
  %5763 = vmatpush.msra.mxu0 %v3735
  %5764 = vmatpush.msra.mxu0 %v3515
  %5765 = vmatmul.f32.gmra.mxu0 %v5376
  %v5766 = vpop.f32.mrf.mxu0
  %v5767 = vadd.f32 %v5368, %v5766
  %5768 = vmatmul.f32.gmra.mxu0 %v5379
  %v5769 = vpop.f32.mrf.mxu0
  %v5770 = vadd.f32 %v5373, %v5769
  %5771 = vdwg.mxu0
  %5772 = vmatpush.msra.mxu0 0.0
  %5773 = vmatpush.msra.mxu0 0.0
  %5774 = vmatpush.msra.mxu0 0.0
  %5775 = vmatpush.msra.mxu0 0.0
  %5776 = vmatpush.msra.mxu0 0.0
  %5777 = vmatpush.msra.mxu0 0.0
  %5778 = vmatpush.msra.mxu0 0.0
  %5779 = vmatpush.msra.mxu0 %v5269
  %5780 = vmatpush.msra.mxu0 %v5050
  %5781 = vmatpush.msra.mxu0 %v4831
  %5782 = vmatpush.msra.mxu0 %v4612
  %5783 = vmatpush.msra.mxu0 %v4393
  %5784 = vmatpush.msra.mxu0 %v4174
  %5785 = vmatpush.msra.mxu0 %v3955
  %5786 = vmatpush.msra.mxu0 %v3736
  %5787 = vmatpush.msra.mxu0 %v3516
  %5788 = vmatmul.f32.gmra.mxu0 %v5376
  %v5789 = vpop.f32.mrf.mxu0
  %v5790 = vadd.f32 %v5368, %v5789
  %5791 = vmatmul.f32.gmra.mxu0 %v5379
  %v5792 = vpop.f32.mrf.mxu0
  %v5793 = vadd.f32 %v5373, %v5792
  %5794 = vdwg.mxu0
  %5795 = vmatpush.msra.mxu0 0.0
  %5796 = vmatpush.msra.mxu0 0.0
  %5797 = vmatpush.msra.mxu0 0.0
  %5798 = vmatpush.msra.mxu0 0.0
  %5799 = vmatpush.msra.mxu0 0.0
  %5800 = vmatpush.msra.mxu0 0.0
  %5801 = vmatpush.msra.mxu0 0.0
  %5802 = vmatpush.msra.mxu0 %v5270
  %5803 = vmatpush.msra.mxu0 %v5051
  %5804 = vmatpush.msra.mxu0 %v4832
  %5805 = vmatpush.msra.mxu0 %v4613
  %5806 = vmatpush.msra.mxu0 %v4394
  %5807 = vmatpush.msra.mxu0 %v4175
  %5808 = vmatpush.msra.mxu0 %v3956
  %5809 = vmatpush.msra.mxu0 %v3737
  %5810 = vmatpush.msra.mxu0 %v3517
  %5811 = vmatmul.f32.gmra.mxu0 %v5376
  %v5812 = vpop.f32.mrf.mxu0
  %v5813 = vadd.f32 %v5368, %v5812
  %5814 = vmatmul.f32.gmra.mxu0 %v5379
  %v5815 = vpop.f32.mrf.mxu0
  %v5816 = vadd.f32 %v5373, %v5815
  %5817 = vdwg.mxu0
  %5818 = vmatpush.msra.mxu0 0.0
  %5819 = vmatpush.msra.mxu0 0.0
  %5820 = vmatpush.msra.mxu0 0.0
  %5821 = vmatpush.msra.mxu0 0.0
  %5822 = vmatpush.msra.mxu0 0.0
  %5823 = vmatpush.msra.mxu0 0.0
  %5824 = vmatpush.msra.mxu0 0.0
  %5825 = vmatpush.msra.mxu0 %v5271
  %5826 = vmatpush.msra.mxu0 %v5052
  %5827 = vmatpush.msra.mxu0 %v4833
  %5828 = vmatpush.msra.mxu0 %v4614
  %5829 = vmatpush.msra.mxu0 %v4395
  %5830 = vmatpush.msra.mxu0 %v4176
  %5831 = vmatpush.msra.mxu0 %v3957
  %5832 = vmatpush.msra.mxu0 %v3738
  %5833 = vmatpush.msra.mxu0 %v3518
  %5834 = vmatmul.f32.gmra.mxu0 %v5376
  %v5835 = vpop.f32.mrf.mxu0
  %v5836 = vadd.f32 %v5368, %v5835
  %5837 = vmatmul.f32.gmra.mxu0 %v5379
  %v5838 = vpop.f32.mrf.mxu0
  %v5839 = vadd.f32 %v5373, %v5838
  %5840 = vdwg.mxu0
  %5841 = vmatpush.msra.mxu0 0.0
  %5842 = vmatpush.msra.mxu0 0.0
  %5843 = vmatpush.msra.mxu0 0.0
  %5844 = vmatpush.msra.mxu0 0.0
  %5845 = vmatpush.msra.mxu0 0.0
  %5846 = vmatpush.msra.mxu0 0.0
  %5847 = vmatpush.msra.mxu0 0.0
  %5848 = vmatpush.msra.mxu0 %v5272
  %5849 = vmatpush.msra.mxu0 %v5053
  %5850 = vmatpush.msra.mxu0 %v4834
  %5851 = vmatpush.msra.mxu0 %v4615
  %5852 = vmatpush.msra.mxu0 %v4396
  %5853 = vmatpush.msra.mxu0 %v4177
  %5854 = vmatpush.msra.mxu0 %v3958
  %5855 = vmatpush.msra.mxu0 %v3739
  %5856 = vmatpush.msra.mxu0 %v3519
  %5857 = vmatmul.f32.gmra.mxu0 %v5376
  %v5858 = vpop.f32.mrf.mxu0
  %v5859 = vadd.f32 %v5368, %v5858
  %5860 = vmatmul.f32.gmra.mxu0 %v5379
  %v5861 = vpop.f32.mrf.mxu0
  %v5862 = vadd.f32 %v5373, %v5861
  %5863 = vdwg.mxu0
  %5864 = vmatpush.msra.mxu0 0.0
  %5865 = vmatpush.msra.mxu0 0.0
  %5866 = vmatpush.msra.mxu0 0.0
  %5867 = vmatpush.msra.mxu0 0.0
  %5868 = vmatpush.msra.mxu0 0.0
  %5869 = vmatpush.msra.mxu0 0.0
  %5870 = vmatpush.msra.mxu0 0.0
  %5871 = vmatpush.msra.mxu0 %v5273
  %5872 = vmatpush.msra.mxu0 %v5054
  %5873 = vmatpush.msra.mxu0 %v4835
  %5874 = vmatpush.msra.mxu0 %v4616
  %5875 = vmatpush.msra.mxu0 %v4397
  %5876 = vmatpush.msra.mxu0 %v4178
  %5877 = vmatpush.msra.mxu0 %v3959
  %5878 = vmatpush.msra.mxu0 %v3740
  %5879 = vmatpush.msra.mxu0 %v3520
  %5880 = vmatmul.f32.gmra.mxu0 %v5376
  %v5881 = vpop.f32.mrf.mxu0
  %v5882 = vadd.f32 %v5368, %v5881
  %5883 = vmatmul.f32.gmra.mxu0 %v5379
  %v5884 = vpop.f32.mrf.mxu0
  %v5885 = vadd.f32 %v5373, %v5884
  %5886 = vdwg.mxu0
  %5887 = vmatpush.msra.mxu0 0.0
  %5888 = vmatpush.msra.mxu0 0.0
  %5889 = vmatpush.msra.mxu0 0.0
  %5890 = vmatpush.msra.mxu0 0.0
  %5891 = vmatpush.msra.mxu0 0.0
  %5892 = vmatpush.msra.mxu0 0.0
  %5893 = vmatpush.msra.mxu0 0.0
  %5894 = vmatpush.msra.mxu0 %v5274
  %5895 = vmatpush.msra.mxu0 %v5055
  %5896 = vmatpush.msra.mxu0 %v4836
  %5897 = vmatpush.msra.mxu0 %v4617
  %5898 = vmatpush.msra.mxu0 %v4398
  %5899 = vmatpush.msra.mxu0 %v4179
  %5900 = vmatpush.msra.mxu0 %v3960
  %5901 = vmatpush.msra.mxu0 %v3741
  %5902 = vmatpush.msra.mxu0 %v3521
  %5903 = vmatmul.f32.gmra.mxu0 %v5376
  %v5904 = vpop.f32.mrf.mxu0
  %v5905 = vadd.f32 %v5368, %v5904
  %5906 = vmatmul.f32.gmra.mxu0 %v5379
  %v5907 = vpop.f32.mrf.mxu0
  %v5908 = vadd.f32 %v5373, %v5907
  %5909 = vdwg.mxu0
  %5910 = vmatpush.msra.mxu0 0.0
  %5911 = vmatpush.msra.mxu0 0.0
  %5912 = vmatpush.msra.mxu0 0.0
  %5913 = vmatpush.msra.mxu0 0.0
  %5914 = vmatpush.msra.mxu0 0.0
  %5915 = vmatpush.msra.mxu0 0.0
  %5916 = vmatpush.msra.mxu0 0.0
  %5917 = vmatpush.msra.mxu0 %v5275
  %5918 = vmatpush.msra.mxu0 %v5056
  %5919 = vmatpush.msra.mxu0 %v4837
  %5920 = vmatpush.msra.mxu0 %v4618
  %5921 = vmatpush.msra.mxu0 %v4399
  %5922 = vmatpush.msra.mxu0 %v4180
  %5923 = vmatpush.msra.mxu0 %v3961
  %5924 = vmatpush.msra.mxu0 %v3742
  %5925 = vmatpush.msra.mxu0 %v3522
  %5926 = vmatmul.f32.gmra.mxu0 %v5376
  %v5927 = vpop.f32.mrf.mxu0
  %v5928 = vadd.f32 %v5368, %v5927
  %5929 = vmatmul.f32.gmra.mxu0 %v5379
  %v5930 = vpop.f32.mrf.mxu0
  %v5931 = vadd.f32 %v5373, %v5930
  %5932 = vdwg.mxu0
  %5933 = vmatpush.msra.mxu0 0.0
  %5934 = vmatpush.msra.mxu0 0.0
  %5935 = vmatpush.msra.mxu0 0.0
  %5936 = vmatpush.msra.mxu0 0.0
  %5937 = vmatpush.msra.mxu0 0.0
  %5938 = vmatpush.msra.mxu0 0.0
  %5939 = vmatpush.msra.mxu0 0.0
  %5940 = vmatpush.msra.mxu0 %v5276
  %5941 = vmatpush.msra.mxu0 %v5057
  %5942 = vmatpush.msra.mxu0 %v4838
  %5943 = vmatpush.msra.mxu0 %v4619
  %5944 = vmatpush.msra.mxu0 %v4400
  %5945 = vmatpush.msra.mxu0 %v4181
  %5946 = vmatpush.msra.mxu0 %v3962
  %5947 = vmatpush.msra.mxu0 %v3743
  %5948 = vmatpush.msra.mxu0 %v3523
  %5949 = vmatmul.f32.gmra.mxu0 %v5376
  %v5950 = vpop.f32.mrf.mxu0
  %v5951 = vadd.f32 %v5368, %v5950
  %5952 = vmatmul.f32.gmra.mxu0 %v5379
  %v5953 = vpop.f32.mrf.mxu0
  %v5954 = vadd.f32 %v5373, %v5953
  %5955 = vdwg.mxu0
  %5956 = vmatpush.msra.mxu0 0.0
  %5957 = vmatpush.msra.mxu0 0.0
  %5958 = vmatpush.msra.mxu0 0.0
  %5959 = vmatpush.msra.mxu0 0.0
  %5960 = vmatpush.msra.mxu0 0.0
  %5961 = vmatpush.msra.mxu0 0.0
  %5962 = vmatpush.msra.mxu0 0.0
  %5963 = vmatpush.msra.mxu0 %v5277
  %5964 = vmatpush.msra.mxu0 %v5058
  %5965 = vmatpush.msra.mxu0 %v4839
  %5966 = vmatpush.msra.mxu0 %v4620
  %5967 = vmatpush.msra.mxu0 %v4401
  %5968 = vmatpush.msra.mxu0 %v4182
  %5969 = vmatpush.msra.mxu0 %v3963
  %5970 = vmatpush.msra.mxu0 %v3744
  %5971 = vmatpush.msra.mxu0 %v3524
  %5972 = vmatmul.f32.gmra.mxu0 %v5376
  %v5973 = vpop.f32.mrf.mxu0
  %v5974 = vadd.f32 %v5368, %v5973
  %5975 = vmatmul.f32.gmra.mxu0 %v5379
  %v5976 = vpop.f32.mrf.mxu0
  %v5977 = vadd.f32 %v5373, %v5976
  %5978 = vdwg.mxu0
  %5979 = vmatpush.msra.mxu0 0.0
  %5980 = vmatpush.msra.mxu0 0.0
  %5981 = vmatpush.msra.mxu0 0.0
  %5982 = vmatpush.msra.mxu0 0.0
  %5983 = vmatpush.msra.mxu0 0.0
  %5984 = vmatpush.msra.mxu0 0.0
  %5985 = vmatpush.msra.mxu0 0.0
  %5986 = vmatpush.msra.mxu0 %v5278
  %5987 = vmatpush.msra.mxu0 %v5059
  %5988 = vmatpush.msra.mxu0 %v4840
  %5989 = vmatpush.msra.mxu0 %v4621
  %5990 = vmatpush.msra.mxu0 %v4402
  %5991 = vmatpush.msra.mxu0 %v4183
  %5992 = vmatpush.msra.mxu0 %v3964
  %5993 = vmatpush.msra.mxu0 %v3745
  %5994 = vmatpush.msra.mxu0 %v3525
  %5995 = vmatmul.f32.gmra.mxu0 %v5376
  %v5996 = vpop.f32.mrf.mxu0
  %v5997 = vadd.f32 %v5368, %v5996
  %5998 = vmatmul.f32.gmra.mxu0 %v5379
  %v5999 = vpop.f32.mrf.mxu0
  %v6000 = vadd.f32 %v5373, %v5999
  %6001 = vdwg.mxu0
  %6002 = vmatpush.msra.mxu0 0.0
  %6003 = vmatpush.msra.mxu0 0.0
  %6004 = vmatpush.msra.mxu0 0.0
  %6005 = vmatpush.msra.mxu0 0.0
  %6006 = vmatpush.msra.mxu0 0.0
  %6007 = vmatpush.msra.mxu0 0.0
  %6008 = vmatpush.msra.mxu0 0.0
  %6009 = vmatpush.msra.mxu0 %v5279
  %6010 = vmatpush.msra.mxu0 %v5060
  %6011 = vmatpush.msra.mxu0 %v4841
  %6012 = vmatpush.msra.mxu0 %v4622
  %6013 = vmatpush.msra.mxu0 %v4403
  %6014 = vmatpush.msra.mxu0 %v4184
  %6015 = vmatpush.msra.mxu0 %v3965
  %6016 = vmatpush.msra.mxu0 %v3746
  %6017 = vmatpush.msra.mxu0 %v3526
  %6018 = vmatmul.f32.gmra.mxu0 %v5376
  %v6019 = vpop.f32.mrf.mxu0
  %v6020 = vadd.f32 %v5368, %v6019
  %6021 = vmatmul.f32.gmra.mxu0 %v5379
  %v6022 = vpop.f32.mrf.mxu0
  %v6023 = vadd.f32 %v5373, %v6022
  %6024 = vdwg.mxu0
  %6025 = vmatpush.msra.mxu0 0.0
  %6026 = vmatpush.msra.mxu0 0.0
  %6027 = vmatpush.msra.mxu0 0.0
  %6028 = vmatpush.msra.mxu0 0.0
  %6029 = vmatpush.msra.mxu0 0.0
  %6030 = vmatpush.msra.mxu0 0.0
  %6031 = vmatpush.msra.mxu0 0.0
  %6032 = vmatpush.msra.mxu0 %v5280
  %6033 = vmatpush.msra.mxu0 %v5061
  %6034 = vmatpush.msra.mxu0 %v4842
  %6035 = vmatpush.msra.mxu0 %v4623
  %6036 = vmatpush.msra.mxu0 %v4404
  %6037 = vmatpush.msra.mxu0 %v4185
  %6038 = vmatpush.msra.mxu0 %v3966
  %6039 = vmatpush.msra.mxu0 %v3747
  %6040 = vmatpush.msra.mxu0 %v3527
  %6041 = vmatmul.f32.gmra.mxu0 %v5376
  %v6042 = vpop.f32.mrf.mxu0
  %v6043 = vadd.f32 %v5368, %v6042
  %6044 = vmatmul.f32.gmra.mxu0 %v5379
  %v6045 = vpop.f32.mrf.mxu0
  %v6046 = vadd.f32 %v5373, %v6045
  %6047 = vdwg.mxu0
  %6048 = vmatpush.msra.mxu0 0.0
  %6049 = vmatpush.msra.mxu0 0.0
  %6050 = vmatpush.msra.mxu0 0.0
  %6051 = vmatpush.msra.mxu0 0.0
  %6052 = vmatpush.msra.mxu0 0.0
  %6053 = vmatpush.msra.mxu0 0.0
  %6054 = vmatpush.msra.mxu0 0.0
  %6055 = vmatpush.msra.mxu0 %v5281
  %6056 = vmatpush.msra.mxu0 %v5062
  %6057 = vmatpush.msra.mxu0 %v4843
  %6058 = vmatpush.msra.mxu0 %v4624
  %6059 = vmatpush.msra.mxu0 %v4405
  %6060 = vmatpush.msra.mxu0 %v4186
  %6061 = vmatpush.msra.mxu0 %v3967
  %6062 = vmatpush.msra.mxu0 %v3748
  %6063 = vmatpush.msra.mxu0 %v3528
  %6064 = vmatmul.f32.gmra.mxu0 %v5376
  %v6065 = vpop.f32.mrf.mxu0
  %v6066 = vadd.f32 %v5368, %v6065
  %6067 = vmatmul.f32.gmra.mxu0 %v5379
  %v6068 = vpop.f32.mrf.mxu0
  %v6069 = vadd.f32 %v5373, %v6068
  %6070 = vdwg.mxu0
  %6071 = vmatpush.msra.mxu0 0.0
  %6072 = vmatpush.msra.mxu0 0.0
  %6073 = vmatpush.msra.mxu0 0.0
  %6074 = vmatpush.msra.mxu0 0.0
  %6075 = vmatpush.msra.mxu0 0.0
  %6076 = vmatpush.msra.mxu0 0.0
  %6077 = vmatpush.msra.mxu0 0.0
  %6078 = vmatpush.msra.mxu0 %v5282
  %6079 = vmatpush.msra.mxu0 %v5063
  %6080 = vmatpush.msra.mxu0 %v4844
  %6081 = vmatpush.msra.mxu0 %v4625
  %6082 = vmatpush.msra.mxu0 %v4406
  %6083 = vmatpush.msra.mxu0 %v4187
  %6084 = vmatpush.msra.mxu0 %v3968
  %6085 = vmatpush.msra.mxu0 %v3749
  %6086 = vmatpush.msra.mxu0 %v3529
  %6087 = vmatmul.f32.gmra.mxu0 %v5376
  %v6088 = vpop.f32.mrf.mxu0
  %v6089 = vadd.f32 %v5368, %v6088
  %6090 = vmatmul.f32.gmra.mxu0 %v5379
  %v6091 = vpop.f32.mrf.mxu0
  %v6092 = vadd.f32 %v5373, %v6091
  %6093 = vdwg.mxu0
  %6094 = vmatpush.msra.mxu0 0.0
  %6095 = vmatpush.msra.mxu0 0.0
  %6096 = vmatpush.msra.mxu0 0.0
  %6097 = vmatpush.msra.mxu0 0.0
  %6098 = vmatpush.msra.mxu0 0.0
  %6099 = vmatpush.msra.mxu0 0.0
  %6100 = vmatpush.msra.mxu0 0.0
  %6101 = vmatpush.msra.mxu0 %v5283
  %6102 = vmatpush.msra.mxu0 %v5064
  %6103 = vmatpush.msra.mxu0 %v4845
  %6104 = vmatpush.msra.mxu0 %v4626
  %6105 = vmatpush.msra.mxu0 %v4407
  %6106 = vmatpush.msra.mxu0 %v4188
  %6107 = vmatpush.msra.mxu0 %v3969
  %6108 = vmatpush.msra.mxu0 %v3750
  %6109 = vmatpush.msra.mxu0 %v3530
  %6110 = vmatmul.f32.gmra.mxu0 %v5376
  %v6111 = vpop.f32.mrf.mxu0
  %v6112 = vadd.f32 %v5368, %v6111
  %6113 = vmatmul.f32.gmra.mxu0 %v5379
  %v6114 = vpop.f32.mrf.mxu0
  %v6115 = vadd.f32 %v5373, %v6114
  %6116 = vdwg.mxu0
  %6117 = vmatpush.msra.mxu0 0.0
  %6118 = vmatpush.msra.mxu0 0.0
  %6119 = vmatpush.msra.mxu0 0.0
  %6120 = vmatpush.msra.mxu0 0.0
  %6121 = vmatpush.msra.mxu0 0.0
  %6122 = vmatpush.msra.mxu0 0.0
  %6123 = vmatpush.msra.mxu0 0.0
  %6124 = vmatpush.msra.mxu0 %v5284
  %6125 = vmatpush.msra.mxu0 %v5065
  %6126 = vmatpush.msra.mxu0 %v4846
  %6127 = vmatpush.msra.mxu0 %v4627
  %6128 = vmatpush.msra.mxu0 %v4408
  %6129 = vmatpush.msra.mxu0 %v4189
  %6130 = vmatpush.msra.mxu0 %v3970
  %6131 = vmatpush.msra.mxu0 %v3751
  %6132 = vmatpush.msra.mxu0 %v3531
  %6133 = vmatmul.f32.gmra.mxu0 %v5376
  %v6134 = vpop.f32.mrf.mxu0
  %v6135 = vadd.f32 %v5368, %v6134
  %6136 = vmatmul.f32.gmra.mxu0 %v5379
  %v6137 = vpop.f32.mrf.mxu0
  %v6138 = vadd.f32 %v5373, %v6137
  %6139 = vdwg.mxu0
  %6140 = vmatpush.msra.mxu0 0.0
  %6141 = vmatpush.msra.mxu0 0.0
  %6142 = vmatpush.msra.mxu0 0.0
  %6143 = vmatpush.msra.mxu0 0.0
  %6144 = vmatpush.msra.mxu0 0.0
  %6145 = vmatpush.msra.mxu0 0.0
  %6146 = vmatpush.msra.mxu0 0.0
  %6147 = vmatpush.msra.mxu0 %v5285
  %6148 = vmatpush.msra.mxu0 %v5066
  %6149 = vmatpush.msra.mxu0 %v4847
  %6150 = vmatpush.msra.mxu0 %v4628
  %6151 = vmatpush.msra.mxu0 %v4409
  %6152 = vmatpush.msra.mxu0 %v4190
  %6153 = vmatpush.msra.mxu0 %v3971
  %6154 = vmatpush.msra.mxu0 %v3752
  %6155 = vmatpush.msra.mxu0 %v3532
  %6156 = vmatmul.f32.gmra.mxu0 %v5376
  %v6157 = vpop.f32.mrf.mxu0
  %v6158 = vadd.f32 %v5368, %v6157
  %6159 = vmatmul.f32.gmra.mxu0 %v5379
  %v6160 = vpop.f32.mrf.mxu0
  %v6161 = vadd.f32 %v5373, %v6160
  %6162 = vdwg.mxu0
  %6163 = vmatpush.msra.mxu0 0.0
  %6164 = vmatpush.msra.mxu0 0.0
  %6165 = vmatpush.msra.mxu0 0.0
  %6166 = vmatpush.msra.mxu0 0.0
  %6167 = vmatpush.msra.mxu0 0.0
  %6168 = vmatpush.msra.mxu0 0.0
  %6169 = vmatpush.msra.mxu0 0.0
  %6170 = vmatpush.msra.mxu0 %v5286
  %6171 = vmatpush.msra.mxu0 %v5067
  %6172 = vmatpush.msra.mxu0 %v4848
  %6173 = vmatpush.msra.mxu0 %v4629
  %6174 = vmatpush.msra.mxu0 %v4410
  %6175 = vmatpush.msra.mxu0 %v4191
  %6176 = vmatpush.msra.mxu0 %v3972
  %6177 = vmatpush.msra.mxu0 %v3753
  %6178 = vmatpush.msra.mxu0 %v3533
  %6179 = vmatmul.f32.gmra.mxu0 %v5376
  %v6180 = vpop.f32.mrf.mxu0
  %v6181 = vadd.f32 %v5368, %v6180
  %6182 = vmatmul.f32.gmra.mxu0 %v5379
  %v6183 = vpop.f32.mrf.mxu0
  %v6184 = vadd.f32 %v5373, %v6183
  %6185 = vdwg.mxu0
  %6186 = vmatpush.msra.mxu0 0.0
  %6187 = vmatpush.msra.mxu0 0.0
  %6188 = vmatpush.msra.mxu0 0.0
  %6189 = vmatpush.msra.mxu0 0.0
  %6190 = vmatpush.msra.mxu0 0.0
  %6191 = vmatpush.msra.mxu0 0.0
  %6192 = vmatpush.msra.mxu0 0.0
  %6193 = vmatpush.msra.mxu0 %v5287
  %6194 = vmatpush.msra.mxu0 %v5068
  %6195 = vmatpush.msra.mxu0 %v4849
  %6196 = vmatpush.msra.mxu0 %v4630
  %6197 = vmatpush.msra.mxu0 %v4411
  %6198 = vmatpush.msra.mxu0 %v4192
  %6199 = vmatpush.msra.mxu0 %v3973
  %6200 = vmatpush.msra.mxu0 %v3754
  %6201 = vmatpush.msra.mxu0 %v3534
  %6202 = vmatmul.f32.gmra.mxu0 %v5376
  %v6203 = vpop.f32.mrf.mxu0
  %v6204 = vadd.f32 %v5368, %v6203
  %6205 = vmatmul.f32.gmra.mxu0 %v5379
  %v6206 = vpop.f32.mrf.mxu0
  %v6207 = vadd.f32 %v5373, %v6206
  %6208 = vdwg.mxu0
  %6209 = vmatpush.msra.mxu0 0.0
  %6210 = vmatpush.msra.mxu0 0.0
  %6211 = vmatpush.msra.mxu0 0.0
  %6212 = vmatpush.msra.mxu0 0.0
  %6213 = vmatpush.msra.mxu0 0.0
  %6214 = vmatpush.msra.mxu0 0.0
  %6215 = vmatpush.msra.mxu0 0.0
  %6216 = vmatpush.msra.mxu0 %v5288
  %6217 = vmatpush.msra.mxu0 %v5069
  %6218 = vmatpush.msra.mxu0 %v4850
  %6219 = vmatpush.msra.mxu0 %v4631
  %6220 = vmatpush.msra.mxu0 %v4412
  %6221 = vmatpush.msra.mxu0 %v4193
  %6222 = vmatpush.msra.mxu0 %v3974
  %6223 = vmatpush.msra.mxu0 %v3755
  %6224 = vmatpush.msra.mxu0 %v3535
  %6225 = vmatmul.f32.gmra.mxu0 %v5376
  %v6226 = vpop.f32.mrf.mxu0
  %v6227 = vadd.f32 %v5368, %v6226
  %6228 = vmatmul.f32.gmra.mxu0 %v5379
  %v6229 = vpop.f32.mrf.mxu0
  %v6230 = vadd.f32 %v5373, %v6229
  %6231 = vdwg.mxu0
  %6232 = vmatpush.msra.mxu0 0.0
  %6233 = vmatpush.msra.mxu0 0.0
  %6234 = vmatpush.msra.mxu0 0.0
  %6235 = vmatpush.msra.mxu0 0.0
  %6236 = vmatpush.msra.mxu0 0.0
  %6237 = vmatpush.msra.mxu0 0.0
  %6238 = vmatpush.msra.mxu0 0.0
  %6239 = vmatpush.msra.mxu0 %v5289
  %6240 = vmatpush.msra.mxu0 %v5070
  %6241 = vmatpush.msra.mxu0 %v4851
  %6242 = vmatpush.msra.mxu0 %v4632
  %6243 = vmatpush.msra.mxu0 %v4413
  %6244 = vmatpush.msra.mxu0 %v4194
  %6245 = vmatpush.msra.mxu0 %v3975
  %6246 = vmatpush.msra.mxu0 %v3756
  %6247 = vmatpush.msra.mxu0 %v3536
  %6248 = vmatmul.f32.gmra.mxu0 %v5376
  %v6249 = vpop.f32.mrf.mxu0
  %v6250 = vadd.f32 %v5368, %v6249
  %6251 = vmatmul.f32.gmra.mxu0 %v5379
  %v6252 = vpop.f32.mrf.mxu0
  %v6253 = vadd.f32 %v5373, %v6252
  %6254 = vdwg.mxu0
  %6255 = vmatpush.msra.mxu0 0.0
  %6256 = vmatpush.msra.mxu0 0.0
  %6257 = vmatpush.msra.mxu0 0.0
  %6258 = vmatpush.msra.mxu0 0.0
  %6259 = vmatpush.msra.mxu0 0.0
  %6260 = vmatpush.msra.mxu0 0.0
  %6261 = vmatpush.msra.mxu0 0.0
  %6262 = vmatpush.msra.mxu0 %v5290
  %6263 = vmatpush.msra.mxu0 %v5071
  %6264 = vmatpush.msra.mxu0 %v4852
  %6265 = vmatpush.msra.mxu0 %v4633
  %6266 = vmatpush.msra.mxu0 %v4414
  %6267 = vmatpush.msra.mxu0 %v4195
  %6268 = vmatpush.msra.mxu0 %v3976
  %6269 = vmatpush.msra.mxu0 %v3757
  %6270 = vmatpush.msra.mxu0 %v3537
  %6271 = vmatmul.f32.gmra.mxu0 %v5376
  %v6272 = vpop.f32.mrf.mxu0
  %v6273 = vadd.f32 %v5368, %v6272
  %6274 = vmatmul.f32.gmra.mxu0 %v5379
  %v6275 = vpop.f32.mrf.mxu0
  %v6276 = vadd.f32 %v5373, %v6275
  %6277 = vdwg.mxu0
  %6278 = vmatpush.msra.mxu0 0.0
  %6279 = vmatpush.msra.mxu0 0.0
  %6280 = vmatpush.msra.mxu0 0.0
  %6281 = vmatpush.msra.mxu0 0.0
  %6282 = vmatpush.msra.mxu0 0.0
  %6283 = vmatpush.msra.mxu0 0.0
  %6284 = vmatpush.msra.mxu0 0.0
  %6285 = vmatpush.msra.mxu0 %v5291
  %6286 = vmatpush.msra.mxu0 %v5072
  %6287 = vmatpush.msra.mxu0 %v4853
  %6288 = vmatpush.msra.mxu0 %v4634
  %6289 = vmatpush.msra.mxu0 %v4415
  %6290 = vmatpush.msra.mxu0 %v4196
  %6291 = vmatpush.msra.mxu0 %v3977
  %6292 = vmatpush.msra.mxu0 %v3758
  %6293 = vmatpush.msra.mxu0 %v3538
  %6294 = vmatmul.f32.gmra.mxu0 %v5376
  %v6295 = vpop.f32.mrf.mxu0
  %v6296 = vadd.f32 %v5368, %v6295
  %6297 = vmatmul.f32.gmra.mxu0 %v5379
  %v6298 = vpop.f32.mrf.mxu0
  %v6299 = vadd.f32 %v5373, %v6298
  %6300 = vdwg.mxu0
  %6301 = vmatpush.msra.mxu0 0.0
  %6302 = vmatpush.msra.mxu0 0.0
  %6303 = vmatpush.msra.mxu0 0.0
  %6304 = vmatpush.msra.mxu0 0.0
  %6305 = vmatpush.msra.mxu0 0.0
  %6306 = vmatpush.msra.mxu0 0.0
  %6307 = vmatpush.msra.mxu0 0.0
  %6308 = vmatpush.msra.mxu0 %v5292
  %6309 = vmatpush.msra.mxu0 %v5073
  %6310 = vmatpush.msra.mxu0 %v4854
  %6311 = vmatpush.msra.mxu0 %v4635
  %6312 = vmatpush.msra.mxu0 %v4416
  %6313 = vmatpush.msra.mxu0 %v4197
  %6314 = vmatpush.msra.mxu0 %v3978
  %6315 = vmatpush.msra.mxu0 %v3759
  %6316 = vmatpush.msra.mxu0 %v3539
  %6317 = vmatmul.f32.gmra.mxu0 %v5376
  %v6318 = vpop.f32.mrf.mxu0
  %v6319 = vadd.f32 %v5368, %v6318
  %6320 = vmatmul.f32.gmra.mxu0 %v5379
  %v6321 = vpop.f32.mrf.mxu0
  %v6322 = vadd.f32 %v5373, %v6321
  %6323 = vdwg.mxu0
  %6324 = vmatpush.msra.mxu0 0.0
  %6325 = vmatpush.msra.mxu0 0.0
  %6326 = vmatpush.msra.mxu0 0.0
  %6327 = vmatpush.msra.mxu0 0.0
  %6328 = vmatpush.msra.mxu0 0.0
  %6329 = vmatpush.msra.mxu0 0.0
  %6330 = vmatpush.msra.mxu0 0.0
  %6331 = vmatpush.msra.mxu0 %v5293
  %6332 = vmatpush.msra.mxu0 %v5074
  %6333 = vmatpush.msra.mxu0 %v4855
  %6334 = vmatpush.msra.mxu0 %v4636
  %6335 = vmatpush.msra.mxu0 %v4417
  %6336 = vmatpush.msra.mxu0 %v4198
  %6337 = vmatpush.msra.mxu0 %v3979
  %6338 = vmatpush.msra.mxu0 %v3760
  %6339 = vmatpush.msra.mxu0 %v3540
  %6340 = vmatmul.f32.gmra.mxu0 %v5376
  %v6341 = vpop.f32.mrf.mxu0
  %v6342 = vadd.f32 %v5368, %v6341
  %6343 = vmatmul.f32.gmra.mxu0 %v5379
  %v6344 = vpop.f32.mrf.mxu0
  %v6345 = vadd.f32 %v5373, %v6344
  %6346 = vdwg.mxu0
  %6347 = vmatpush.msra.mxu0 0.0
  %6348 = vmatpush.msra.mxu0 0.0
  %6349 = vmatpush.msra.mxu0 0.0
  %6350 = vmatpush.msra.mxu0 0.0
  %6351 = vmatpush.msra.mxu0 0.0
  %6352 = vmatpush.msra.mxu0 0.0
  %6353 = vmatpush.msra.mxu0 0.0
  %6354 = vmatpush.msra.mxu0 %v5294
  %6355 = vmatpush.msra.mxu0 %v5075
  %6356 = vmatpush.msra.mxu0 %v4856
  %6357 = vmatpush.msra.mxu0 %v4637
  %6358 = vmatpush.msra.mxu0 %v4418
  %6359 = vmatpush.msra.mxu0 %v4199
  %6360 = vmatpush.msra.mxu0 %v3980
  %6361 = vmatpush.msra.mxu0 %v3761
  %6362 = vmatpush.msra.mxu0 %v3541
  %6363 = vmatmul.f32.gmra.mxu0 %v5376
  %v6364 = vpop.f32.mrf.mxu0
  %v6365 = vadd.f32 %v5368, %v6364
  %6366 = vmatmul.f32.gmra.mxu0 %v5379
  %v6367 = vpop.f32.mrf.mxu0
  %v6368 = vadd.f32 %v5373, %v6367
  %6369 = vdwg.mxu0
  %6370 = vmatpush.msra.mxu0 0.0
  %6371 = vmatpush.msra.mxu0 0.0
  %6372 = vmatpush.msra.mxu0 0.0
  %6373 = vmatpush.msra.mxu0 0.0
  %6374 = vmatpush.msra.mxu0 0.0
  %6375 = vmatpush.msra.mxu0 0.0
  %6376 = vmatpush.msra.mxu0 0.0
  %6377 = vmatpush.msra.mxu0 %v5295
  %6378 = vmatpush.msra.mxu0 %v5076
  %6379 = vmatpush.msra.mxu0 %v4857
  %6380 = vmatpush.msra.mxu0 %v4638
  %6381 = vmatpush.msra.mxu0 %v4419
  %6382 = vmatpush.msra.mxu0 %v4200
  %6383 = vmatpush.msra.mxu0 %v3981
  %6384 = vmatpush.msra.mxu0 %v3762
  %6385 = vmatpush.msra.mxu0 %v3542
  %6386 = vmatmul.f32.gmra.mxu0 %v5376
  %v6387 = vpop.f32.mrf.mxu0
  %v6388 = vadd.f32 %v5368, %v6387
  %6389 = vmatmul.f32.gmra.mxu0 %v5379
  %v6390 = vpop.f32.mrf.mxu0
  %v6391 = vadd.f32 %v5373, %v6390
  %6392 = vdwg.mxu0
  %6393 = vmatpush.msra.mxu0 0.0
  %6394 = vmatpush.msra.mxu0 0.0
  %6395 = vmatpush.msra.mxu0 0.0
  %6396 = vmatpush.msra.mxu0 0.0
  %6397 = vmatpush.msra.mxu0 0.0
  %6398 = vmatpush.msra.mxu0 0.0
  %6399 = vmatpush.msra.mxu0 0.0
  %6400 = vmatpush.msra.mxu0 %v5296
  %6401 = vmatpush.msra.mxu0 %v5077
  %6402 = vmatpush.msra.mxu0 %v4858
  %6403 = vmatpush.msra.mxu0 %v4639
  %6404 = vmatpush.msra.mxu0 %v4420
  %6405 = vmatpush.msra.mxu0 %v4201
  %6406 = vmatpush.msra.mxu0 %v3982
  %6407 = vmatpush.msra.mxu0 %v3763
  %6408 = vmatpush.msra.mxu0 %v3543
  %6409 = vmatmul.f32.gmra.mxu0 %v5376
  %v6410 = vpop.f32.mrf.mxu0
  %v6411 = vadd.f32 %v5368, %v6410
  %6412 = vmatmul.f32.gmra.mxu0 %v5379
  %v6413 = vpop.f32.mrf.mxu0
  %v6414 = vadd.f32 %v5373, %v6413
  %6415 = vdwg.mxu0
  %6416 = vmatpush.msra.mxu0 0.0
  %6417 = vmatpush.msra.mxu0 0.0
  %6418 = vmatpush.msra.mxu0 0.0
  %6419 = vmatpush.msra.mxu0 0.0
  %6420 = vmatpush.msra.mxu0 0.0
  %6421 = vmatpush.msra.mxu0 0.0
  %6422 = vmatpush.msra.mxu0 0.0
  %6423 = vmatpush.msra.mxu0 %v5297
  %6424 = vmatpush.msra.mxu0 %v5078
  %6425 = vmatpush.msra.mxu0 %v4859
  %6426 = vmatpush.msra.mxu0 %v4640
  %6427 = vmatpush.msra.mxu0 %v4421
  %6428 = vmatpush.msra.mxu0 %v4202
  %6429 = vmatpush.msra.mxu0 %v3983
  %6430 = vmatpush.msra.mxu0 %v3764
  %6431 = vmatpush.msra.mxu0 %v3544
  %6432 = vmatmul.f32.gmra.mxu0 %v5376
  %v6433 = vpop.f32.mrf.mxu0
  %v6434 = vadd.f32 %v5368, %v6433
  %6435 = vmatmul.f32.gmra.mxu0 %v5379
  %v6436 = vpop.f32.mrf.mxu0
  %v6437 = vadd.f32 %v5373, %v6436
  %6438 = vdwg.mxu0
  %6439 = vmatpush.msra.mxu0 0.0
  %6440 = vmatpush.msra.mxu0 0.0
  %6441 = vmatpush.msra.mxu0 0.0
  %6442 = vmatpush.msra.mxu0 0.0
  %6443 = vmatpush.msra.mxu0 0.0
  %6444 = vmatpush.msra.mxu0 0.0
  %6445 = vmatpush.msra.mxu0 0.0
  %6446 = vmatpush.msra.mxu0 %v5298
  %6447 = vmatpush.msra.mxu0 %v5079
  %6448 = vmatpush.msra.mxu0 %v4860
  %6449 = vmatpush.msra.mxu0 %v4641
  %6450 = vmatpush.msra.mxu0 %v4422
  %6451 = vmatpush.msra.mxu0 %v4203
  %6452 = vmatpush.msra.mxu0 %v3984
  %6453 = vmatpush.msra.mxu0 %v3765
  %6454 = vmatpush.msra.mxu0 %v3545
  %6455 = vmatmul.f32.gmra.mxu0 %v5376
  %v6456 = vpop.f32.mrf.mxu0
  %v6457 = vadd.f32 %v5368, %v6456
  %6458 = vmatmul.f32.gmra.mxu0 %v5379
  %v6459 = vpop.f32.mrf.mxu0
  %v6460 = vadd.f32 %v5373, %v6459
  %6461 = vdwg.mxu0
  %6462 = vmatpush.msra.mxu0 0.0
  %6463 = vmatpush.msra.mxu0 0.0
  %6464 = vmatpush.msra.mxu0 0.0
  %6465 = vmatpush.msra.mxu0 0.0
  %6466 = vmatpush.msra.mxu0 0.0
  %6467 = vmatpush.msra.mxu0 0.0
  %6468 = vmatpush.msra.mxu0 0.0
  %6469 = vmatpush.msra.mxu0 %v5299
  %6470 = vmatpush.msra.mxu0 %v5080
  %6471 = vmatpush.msra.mxu0 %v4861
  %6472 = vmatpush.msra.mxu0 %v4642
  %6473 = vmatpush.msra.mxu0 %v4423
  %6474 = vmatpush.msra.mxu0 %v4204
  %6475 = vmatpush.msra.mxu0 %v3985
  %6476 = vmatpush.msra.mxu0 %v3766
  %6477 = vmatpush.msra.mxu0 %v3546
  %6478 = vmatmul.f32.gmra.mxu0 %v5376
  %v6479 = vpop.f32.mrf.mxu0
  %v6480 = vadd.f32 %v5368, %v6479
  %6481 = vmatmul.f32.gmra.mxu0 %v5379
  %v6482 = vpop.f32.mrf.mxu0
  %v6483 = vadd.f32 %v5373, %v6482
  %6484 = vdwg.mxu0
  %6485 = vmatpush.msra.mxu0 0.0
  %6486 = vmatpush.msra.mxu0 0.0
  %6487 = vmatpush.msra.mxu0 0.0
  %6488 = vmatpush.msra.mxu0 0.0
  %6489 = vmatpush.msra.mxu0 0.0
  %6490 = vmatpush.msra.mxu0 0.0
  %6491 = vmatpush.msra.mxu0 0.0
  %6492 = vmatpush.msra.mxu0 %v5300
  %6493 = vmatpush.msra.mxu0 %v5081
  %6494 = vmatpush.msra.mxu0 %v4862
  %6495 = vmatpush.msra.mxu0 %v4643
  %6496 = vmatpush.msra.mxu0 %v4424
  %6497 = vmatpush.msra.mxu0 %v4205
  %6498 = vmatpush.msra.mxu0 %v3986
  %6499 = vmatpush.msra.mxu0 %v3767
  %6500 = vmatpush.msra.mxu0 %v3547
  %6501 = vmatmul.f32.gmra.mxu0 %v5376
  %v6502 = vpop.f32.mrf.mxu0
  %v6503 = vadd.f32 %v5368, %v6502
  %6504 = vmatmul.f32.gmra.mxu0 %v5379
  %v6505 = vpop.f32.mrf.mxu0
  %v6506 = vadd.f32 %v5373, %v6505
  %6507 = vdwg.mxu0
  %6508 = vmatpush.msra.mxu0 0.0
  %6509 = vmatpush.msra.mxu0 0.0
  %6510 = vmatpush.msra.mxu0 0.0
  %6511 = vmatpush.msra.mxu0 0.0
  %6512 = vmatpush.msra.mxu0 0.0
  %6513 = vmatpush.msra.mxu0 0.0
  %6514 = vmatpush.msra.mxu0 0.0
  %6515 = vmatpush.msra.mxu0 %v5301
  %6516 = vmatpush.msra.mxu0 %v5082
  %6517 = vmatpush.msra.mxu0 %v4863
  %6518 = vmatpush.msra.mxu0 %v4644
  %6519 = vmatpush.msra.mxu0 %v4425
  %6520 = vmatpush.msra.mxu0 %v4206
  %6521 = vmatpush.msra.mxu0 %v3987
  %6522 = vmatpush.msra.mxu0 %v3768
  %6523 = vmatpush.msra.mxu0 %v3548
  %6524 = vmatmul.f32.gmra.mxu0 %v5376
  %v6525 = vpop.f32.mrf.mxu0
  %v6526 = vadd.f32 %v5368, %v6525
  %6527 = vmatmul.f32.gmra.mxu0 %v5379
  %v6528 = vpop.f32.mrf.mxu0
  %v6529 = vadd.f32 %v5373, %v6528
  %6530 = vdwg.mxu0
  %6531 = vmatpush.msra.mxu0 0.0
  %6532 = vmatpush.msra.mxu0 0.0
  %6533 = vmatpush.msra.mxu0 0.0
  %6534 = vmatpush.msra.mxu0 0.0
  %6535 = vmatpush.msra.mxu0 0.0
  %6536 = vmatpush.msra.mxu0 0.0
  %6537 = vmatpush.msra.mxu0 0.0
  %6538 = vmatpush.msra.mxu0 %v5302
  %6539 = vmatpush.msra.mxu0 %v5083
  %6540 = vmatpush.msra.mxu0 %v4864
  %6541 = vmatpush.msra.mxu0 %v4645
  %6542 = vmatpush.msra.mxu0 %v4426
  %6543 = vmatpush.msra.mxu0 %v4207
  %6544 = vmatpush.msra.mxu0 %v3988
  %6545 = vmatpush.msra.mxu0 %v3769
  %6546 = vmatpush.msra.mxu0 %v3549
  %6547 = vmatmul.f32.gmra.mxu0 %v5376
  %v6548 = vpop.f32.mrf.mxu0
  %v6549 = vadd.f32 %v5368, %v6548
  %6550 = vmatmul.f32.gmra.mxu0 %v5379
  %v6551 = vpop.f32.mrf.mxu0
  %v6552 = vadd.f32 %v5373, %v6551
  %6553 = vdwg.mxu0
  %6554 = vmatpush.msra.mxu0 0.0
  %6555 = vmatpush.msra.mxu0 0.0
  %6556 = vmatpush.msra.mxu0 0.0
  %6557 = vmatpush.msra.mxu0 0.0
  %6558 = vmatpush.msra.mxu0 0.0
  %6559 = vmatpush.msra.mxu0 0.0
  %6560 = vmatpush.msra.mxu0 0.0
  %6561 = vmatpush.msra.mxu0 %v5303
  %6562 = vmatpush.msra.mxu0 %v5084
  %6563 = vmatpush.msra.mxu0 %v4865
  %6564 = vmatpush.msra.mxu0 %v4646
  %6565 = vmatpush.msra.mxu0 %v4427
  %6566 = vmatpush.msra.mxu0 %v4208
  %6567 = vmatpush.msra.mxu0 %v3989
  %6568 = vmatpush.msra.mxu0 %v3770
  %6569 = vmatpush.msra.mxu0 %v3550
  %6570 = vmatmul.f32.gmra.mxu0 %v5376
  %v6571 = vpop.f32.mrf.mxu0
  %v6572 = vadd.f32 %v5368, %v6571
  %6573 = vmatmul.f32.gmra.mxu0 %v5379
  %v6574 = vpop.f32.mrf.mxu0
  %v6575 = vadd.f32 %v5373, %v6574
  %6576 = vdwg.mxu0
  %6577 = vmatpush.msra.mxu0 0.0
  %6578 = vmatpush.msra.mxu0 0.0
  %6579 = vmatpush.msra.mxu0 0.0
  %6580 = vmatpush.msra.mxu0 0.0
  %6581 = vmatpush.msra.mxu0 0.0
  %6582 = vmatpush.msra.mxu0 0.0
  %6583 = vmatpush.msra.mxu0 0.0
  %6584 = vmatpush.msra.mxu0 %v5304
  %6585 = vmatpush.msra.mxu0 %v5085
  %6586 = vmatpush.msra.mxu0 %v4866
  %6587 = vmatpush.msra.mxu0 %v4647
  %6588 = vmatpush.msra.mxu0 %v4428
  %6589 = vmatpush.msra.mxu0 %v4209
  %6590 = vmatpush.msra.mxu0 %v3990
  %6591 = vmatpush.msra.mxu0 %v3771
  %6592 = vmatpush.msra.mxu0 %v3551
  %6593 = vmatmul.f32.gmra.mxu0 %v5376
  %v6594 = vpop.f32.mrf.mxu0
  %v6595 = vadd.f32 %v5368, %v6594
  %6596 = vmatmul.f32.gmra.mxu0 %v5379
  %v6597 = vpop.f32.mrf.mxu0
  %v6598 = vadd.f32 %v5373, %v6597
  %6599 = vdwg.mxu0
  %6600 = vmatpush.msra.mxu0 0.0
  %6601 = vmatpush.msra.mxu0 0.0
  %6602 = vmatpush.msra.mxu0 0.0
  %6603 = vmatpush.msra.mxu0 0.0
  %6604 = vmatpush.msra.mxu0 0.0
  %6605 = vmatpush.msra.mxu0 0.0
  %6606 = vmatpush.msra.mxu0 0.0
  %6607 = vmatpush.msra.mxu0 %v5305
  %6608 = vmatpush.msra.mxu0 %v5086
  %6609 = vmatpush.msra.mxu0 %v4867
  %6610 = vmatpush.msra.mxu0 %v4648
  %6611 = vmatpush.msra.mxu0 %v4429
  %6612 = vmatpush.msra.mxu0 %v4210
  %6613 = vmatpush.msra.mxu0 %v3991
  %6614 = vmatpush.msra.mxu0 %v3772
  %6615 = vmatpush.msra.mxu0 %v3552
  %6616 = vmatmul.f32.gmra.mxu0 %v5376
  %v6617 = vpop.f32.mrf.mxu0
  %v6618 = vadd.f32 %v5368, %v6617
  %6619 = vmatmul.f32.gmra.mxu0 %v5379
  %v6620 = vpop.f32.mrf.mxu0
  %v6621 = vadd.f32 %v5373, %v6620
  %6622 = vdwg.mxu0
  %6623 = vmatpush.msra.mxu0 0.0
  %6624 = vmatpush.msra.mxu0 0.0
  %6625 = vmatpush.msra.mxu0 0.0
  %6626 = vmatpush.msra.mxu0 0.0
  %6627 = vmatpush.msra.mxu0 0.0
  %6628 = vmatpush.msra.mxu0 0.0
  %6629 = vmatpush.msra.mxu0 0.0
  %6630 = vmatpush.msra.mxu0 %v5251
  %6631 = vmatpush.msra.mxu0 %v5032
  %6632 = vmatpush.msra.mxu0 %v4813
  %6633 = vmatpush.msra.mxu0 %v4594
  %6634 = vmatpush.msra.mxu0 %v4375
  %6635 = vmatpush.msra.mxu0 %v4156
  %6636 = vmatpush.msra.mxu0 %v3937
  %6637 = vmatpush.msra.mxu0 %v3718
  %6638 = vmatpush.msra.mxu0 %v3553
  %6639 = vmatmul.f32.gmra.mxu0 %v5376
  %v6640 = vpop.f32.mrf.mxu0
  %v6641 = vadd.f32 %v5368, %v6640
  %6642 = vmatmul.f32.gmra.mxu0 %v5379
  %v6643 = vpop.f32.mrf.mxu0
  %v6644 = vadd.f32 %v5373, %v6643
  %6645 = vdwg.mxu0
  %v6646 = vmax.f32 %v5399, 0.0
  %v6647 = vmax.f32 %v5422, 0.0
  %v6648 = vmax.f32 %v5445, 0.0
  %v6649 = vmax.f32 %v5468, 0.0
  %v6650 = vmax.f32 %v5491, 0.0
  %v6651 = vmax.f32 %v5514, 0.0
  %v6652 = vmax.f32 %v5537, 0.0
  %v6653 = vmax.f32 %v5560, 0.0
  %v6654 = vmax.f32 %v5583, 0.0
  %v6655 = vmax.f32 %v5606, 0.0
  %v6656 = vmax.f32 %v5629, 0.0
  %v6657 = vmax.f32 %v5652, 0.0
  %v6658 = vmax.f32 %v5675, 0.0
  %v6659 = vmax.f32 %v5698, 0.0
  %v6660 = vmax.f32 %v5721, 0.0
  %v6661 = vmax.f32 %v5744, 0.0
  %v6662 = vmax.f32 %v5767, 0.0
  %v6663 = vmax.f32 %v5790, 0.0
  %v6664 = vmax.f32 %v5813, 0.0
  %v6665 = vmax.f32 %v5836, 0.0
  %v6666 = vmax.f32 %v5859, 0.0
  %v6667 = vmax.f32 %v5882, 0.0
  %v6668 = vmax.f32 %v5905, 0.0
  %v6669 = vmax.f32 %v5928, 0.0
  %v6670 = vmax.f32 %v5951, 0.0
  %v6671 = vmax.f32 %v5974, 0.0
  %v6672 = vmax.f32 %v5997, 0.0
  %v6673 = vmax.f32 %v6020, 0.0
  %v6674 = vmax.f32 %v6043, 0.0
  %v6675 = vmax.f32 %v6066, 0.0
  %v6676 = vmax.f32 %v6089, 0.0
  %v6677 = vmax.f32 %v6112, 0.0
  %v6678 = vmax.f32 %v6135, 0.0
  %v6679 = vmax.f32 %v6158, 0.0
  %v6680 = vmax.f32 %v6181, 0.0
  %v6681 = vmax.f32 %v6204, 0.0
  %v6682 = vmax.f32 %v6227, 0.0
  %v6683 = vmax.f32 %v6250, 0.0
  %v6684 = vmax.f32 %v6273, 0.0
  %v6685 = vmax.f32 %v6296, 0.0
  %v6686 = vmax.f32 %v6319, 0.0
  %v6687 = vmax.f32 %v6342, 0.0
  %v6688 = vmax.f32 %v6365, 0.0
  %v6689 = vmax.f32 %v6388, 0.0
  %v6690 = vmax.f32 %v6411, 0.0
  %v6691 = vmax.f32 %v6434, 0.0
  %v6692 = vmax.f32 %v6457, 0.0
  %v6693 = vmax.f32 %v6480, 0.0
  %v6694 = vmax.f32 %v6503, 0.0
  %v6695 = vmax.f32 %v6526, 0.0
  %v6696 = vmax.f32 %v6549, 0.0
  %v6697 = vmax.f32 %v6572, 0.0
  %v6698 = vmax.f32 %v6595, 0.0
  %v6699 = vmax.f32 %v6618, 0.0
  %v6700 = vmax.f32 %v6641, 0.0
  %v6701 = vmax.f32 %v5402, 0.0
  %v6702 = vmax.f32 %v5425, 0.0
  %v6703 = vmax.f32 %v5448, 0.0
  %v6704 = vmax.f32 %v5471, 0.0
  %v6705 = vmax.f32 %v5494, 0.0
  %v6706 = vmax.f32 %v5517, 0.0
  %v6707 = vmax.f32 %v5540, 0.0
  %v6708 = vmax.f32 %v5563, 0.0
  %v6709 = vmax.f32 %v5586, 0.0
  %v6710 = vmax.f32 %v5609, 0.0
  %v6711 = vmax.f32 %v5632, 0.0
  %v6712 = vmax.f32 %v5655, 0.0
  %v6713 = vmax.f32 %v5678, 0.0
  %v6714 = vmax.f32 %v5701, 0.0
  %v6715 = vmax.f32 %v5724, 0.0
  %v6716 = vmax.f32 %v5747, 0.0
  %v6717 = vmax.f32 %v5770, 0.0
  %v6718 = vmax.f32 %v5793, 0.0
  %v6719 = vmax.f32 %v5816, 0.0
  %v6720 = vmax.f32 %v5839, 0.0
  %v6721 = vmax.f32 %v5862, 0.0
  %v6722 = vmax.f32 %v5885, 0.0
  %v6723 = vmax.f32 %v5908, 0.0
  %v6724 = vmax.f32 %v5931, 0.0
  %v6725 = vmax.f32 %v5954, 0.0
  %v6726 = vmax.f32 %v5977, 0.0
  %v6727 = vmax.f32 %v6000, 0.0
  %v6728 = vmax.f32 %v6023, 0.0
  %v6729 = vmax.f32 %v6046, 0.0
  %v6730 = vmax.f32 %v6069, 0.0
  %v6731 = vmax.f32 %v6092, 0.0
  %v6732 = vmax.f32 %v6115, 0.0
  %v6733 = vmax.f32 %v6138, 0.0
  %v6734 = vmax.f32 %v6161, 0.0
  %v6735 = vmax.f32 %v6184, 0.0
  %v6736 = vmax.f32 %v6207, 0.0
  %v6737 = vmax.f32 %v6230, 0.0
  %v6738 = vmax.f32 %v6253, 0.0
  %v6739 = vmax.f32 %v6276, 0.0
  %v6740 = vmax.f32 %v6299, 0.0
  %v6741 = vmax.f32 %v6322, 0.0
  %v6742 = vmax.f32 %v6345, 0.0
  %v6743 = vmax.f32 %v6368, 0.0
  %v6744 = vmax.f32 %v6391, 0.0
  %v6745 = vmax.f32 %v6414, 0.0
  %v6746 = vmax.f32 %v6437, 0.0
  %v6747 = vmax.f32 %v6460, 0.0
  %v6748 = vmax.f32 %v6483, 0.0
  %v6749 = vmax.f32 %v6506, 0.0
  %v6750 = vmax.f32 %v6529, 0.0
  %v6751 = vmax.f32 %v6552, 0.0
  %v6752 = vmax.f32 %v6575, 0.0
  %v6753 = vmax.f32 %v6598, 0.0
  %v6754 = vmax.f32 %v6621, 0.0
  %v6755 = vmax.f32 %v6644, 0.0
  %6866 = vrot.lane.b32.xlu0 %v6646, 127
  %v6867 = vpop.permute.xlu0 %6866
  %6868 = vrot.lane.b32.xlu0 %v6647, 127
  %v6869 = vpop.permute.xlu0 %6868
  %6870 = vrot.lane.b32.xlu0 %v6648, 127
  %v6871 = vpop.permute.xlu0 %6870
  %6872 = vrot.lane.b32.xlu0 %v6649, 127
  %v6873 = vpop.permute.xlu0 %6872
  %6874 = vrot.lane.b32.xlu0 %v6650, 127
  %v6875 = vpop.permute.xlu0 %6874
  %6876 = vrot.lane.b32.xlu0 %v6651, 127
  %v6877 = vpop.permute.xlu0 %6876
  %6878 = vrot.lane.b32.xlu0 %v6652, 127
  %v6879 = vpop.permute.xlu0 %6878
  %6880 = vrot.lane.b32.xlu0 %v6653, 127
  %v6881 = vpop.permute.xlu0 %6880
  %6882 = vrot.lane.b32.xlu0 %v6654, 127
  %v6883 = vpop.permute.xlu0 %6882
  %6884 = vrot.lane.b32.xlu0 %v6655, 127
  %v6885 = vpop.permute.xlu0 %6884
  %6886 = vrot.lane.b32.xlu0 %v6656, 127
  %v6887 = vpop.permute.xlu0 %6886
  %6888 = vrot.lane.b32.xlu0 %v6657, 127
  %v6889 = vpop.permute.xlu0 %6888
  %6890 = vrot.lane.b32.xlu0 %v6658, 127
  %v6891 = vpop.permute.xlu0 %6890
  %6892 = vrot.lane.b32.xlu0 %v6659, 127
  %v6893 = vpop.permute.xlu0 %6892
  %6894 = vrot.lane.b32.xlu0 %v6660, 127
  %v6895 = vpop.permute.xlu0 %6894
  %6896 = vrot.lane.b32.xlu0 %v6661, 127
  %v6897 = vpop.permute.xlu0 %6896
  %6898 = vrot.lane.b32.xlu0 %v6662, 127
  %v6899 = vpop.permute.xlu0 %6898
  %6900 = vrot.lane.b32.xlu0 %v6663, 127
  %v6901 = vpop.permute.xlu0 %6900
  %6902 = vrot.lane.b32.xlu0 %v6664, 127
  %v6903 = vpop.permute.xlu0 %6902
  %6904 = vrot.lane.b32.xlu0 %v6665, 127
  %v6905 = vpop.permute.xlu0 %6904
  %6906 = vrot.lane.b32.xlu0 %v6666, 127
  %v6907 = vpop.permute.xlu0 %6906
  %6908 = vrot.lane.b32.xlu0 %v6667, 127
  %v6909 = vpop.permute.xlu0 %6908
  %6910 = vrot.lane.b32.xlu0 %v6668, 127
  %v6911 = vpop.permute.xlu0 %6910
  %6912 = vrot.lane.b32.xlu0 %v6669, 127
  %v6913 = vpop.permute.xlu0 %6912
  %6914 = vrot.lane.b32.xlu0 %v6670, 127
  %v6915 = vpop.permute.xlu0 %6914
  %6916 = vrot.lane.b32.xlu0 %v6671, 127
  %v6917 = vpop.permute.xlu0 %6916
  %6918 = vrot.lane.b32.xlu0 %v6672, 127
  %v6919 = vpop.permute.xlu0 %6918
  %6920 = vrot.lane.b32.xlu0 %v6673, 127
  %v6921 = vpop.permute.xlu0 %6920
  %6922 = vrot.lane.b32.xlu0 %v6674, 127
  %v6923 = vpop.permute.xlu0 %6922
  %6924 = vrot.lane.b32.xlu0 %v6675, 127
  %v6925 = vpop.permute.xlu0 %6924
  %6926 = vrot.lane.b32.xlu0 %v6676, 127
  %v6927 = vpop.permute.xlu0 %6926
  %6928 = vrot.lane.b32.xlu0 %v6677, 127
  %v6929 = vpop.permute.xlu0 %6928
  %6930 = vrot.lane.b32.xlu0 %v6678, 127
  %v6931 = vpop.permute.xlu0 %6930
  %6932 = vrot.lane.b32.xlu0 %v6679, 127
  %v6933 = vpop.permute.xlu0 %6932
  %6934 = vrot.lane.b32.xlu0 %v6680, 127
  %v6935 = vpop.permute.xlu0 %6934
  %6936 = vrot.lane.b32.xlu0 %v6681, 127
  %v6937 = vpop.permute.xlu0 %6936
  %6938 = vrot.lane.b32.xlu0 %v6682, 127
  %v6939 = vpop.permute.xlu0 %6938
  %6940 = vrot.lane.b32.xlu0 %v6683, 127
  %v6941 = vpop.permute.xlu0 %6940
  %6942 = vrot.lane.b32.xlu0 %v6684, 127
  %v6943 = vpop.permute.xlu0 %6942
  %6944 = vrot.lane.b32.xlu0 %v6685, 127
  %v6945 = vpop.permute.xlu0 %6944
  %6946 = vrot.lane.b32.xlu0 %v6686, 127
  %v6947 = vpop.permute.xlu0 %6946
  %6948 = vrot.lane.b32.xlu0 %v6687, 127
  %v6949 = vpop.permute.xlu0 %6948
  %6950 = vrot.lane.b32.xlu0 %v6688, 127
  %v6951 = vpop.permute.xlu0 %6950
  %6952 = vrot.lane.b32.xlu0 %v6689, 127
  %v6953 = vpop.permute.xlu0 %6952
  %6954 = vrot.lane.b32.xlu0 %v6690, 127
  %v6955 = vpop.permute.xlu0 %6954
  %6956 = vrot.lane.b32.xlu0 %v6691, 127
  %v6957 = vpop.permute.xlu0 %6956
  %6958 = vrot.lane.b32.xlu0 %v6692, 127
  %v6959 = vpop.permute.xlu0 %6958
  %6960 = vrot.lane.b32.xlu0 %v6693, 127
  %v6961 = vpop.permute.xlu0 %6960
  %6962 = vrot.lane.b32.xlu0 %v6694, 127
  %v6963 = vpop.permute.xlu0 %6962
  %6964 = vrot.lane.b32.xlu0 %v6695, 127
  %v6965 = vpop.permute.xlu0 %6964
  %6966 = vrot.lane.b32.xlu0 %v6696, 127
  %v6967 = vpop.permute.xlu0 %6966
  %6968 = vrot.lane.b32.xlu0 %v6697, 127
  %v6969 = vpop.permute.xlu0 %6968
  %6970 = vrot.lane.b32.xlu0 %v6698, 127
  %v6971 = vpop.permute.xlu0 %6970
  %6972 = vrot.lane.b32.xlu0 %v6699, 127
  %v6973 = vpop.permute.xlu0 %6972
  %6974 = vrot.lane.b32.xlu0 %v6700, 127
  %v6975 = vpop.permute.xlu0 %6974
  %6976 = vrot.lane.b32.xlu0 %v6701, 127
  %v6977 = vpop.permute.xlu0 %6976
  %6978 = vrot.lane.b32.xlu0 %v6702, 127
  %v6979 = vpop.permute.xlu0 %6978
  %6980 = vrot.lane.b32.xlu0 %v6703, 127
  %v6981 = vpop.permute.xlu0 %6980
  %6982 = vrot.lane.b32.xlu0 %v6704, 127
  %v6983 = vpop.permute.xlu0 %6982
  %6984 = vrot.lane.b32.xlu0 %v6705, 127
  %v6985 = vpop.permute.xlu0 %6984
  %6986 = vrot.lane.b32.xlu0 %v6706, 127
  %v6987 = vpop.permute.xlu0 %6986
  %6988 = vrot.lane.b32.xlu0 %v6707, 127
  %v6989 = vpop.permute.xlu0 %6988
  %6990 = vrot.lane.b32.xlu0 %v6708, 127
  %v6991 = vpop.permute.xlu0 %6990
  %6992 = vrot.lane.b32.xlu0 %v6709, 127
  %v6993 = vpop.permute.xlu0 %6992
  %6994 = vrot.lane.b32.xlu0 %v6710, 127
  %v6995 = vpop.permute.xlu0 %6994
  %6996 = vrot.lane.b32.xlu0 %v6711, 127
  %v6997 = vpop.permute.xlu0 %6996
  %6998 = vrot.lane.b32.xlu0 %v6712, 127
  %v6999 = vpop.permute.xlu0 %6998
  %7000 = vrot.lane.b32.xlu0 %v6713, 127
  %v7001 = vpop.permute.xlu0 %7000
  %7002 = vrot.lane.b32.xlu0 %v6714, 127
  %v7003 = vpop.permute.xlu0 %7002
  %7004 = vrot.lane.b32.xlu0 %v6715, 127
  %v7005 = vpop.permute.xlu0 %7004
  %7006 = vrot.lane.b32.xlu0 %v6716, 127
  %v7007 = vpop.permute.xlu0 %7006
  %7008 = vrot.lane.b32.xlu0 %v6717, 127
  %v7009 = vpop.permute.xlu0 %7008
  %7010 = vrot.lane.b32.xlu0 %v6718, 127
  %v7011 = vpop.permute.xlu0 %7010
  %7012 = vrot.lane.b32.xlu0 %v6719, 127
  %v7013 = vpop.permute.xlu0 %7012
  %7014 = vrot.lane.b32.xlu0 %v6720, 127
  %v7015 = vpop.permute.xlu0 %7014
  %7016 = vrot.lane.b32.xlu0 %v6721, 127
  %v7017 = vpop.permute.xlu0 %7016
  %7018 = vrot.lane.b32.xlu0 %v6722, 127
  %v7019 = vpop.permute.xlu0 %7018
  %7020 = vrot.lane.b32.xlu0 %v6723, 127
  %v7021 = vpop.permute.xlu0 %7020
  %7022 = vrot.lane.b32.xlu0 %v6724, 127
  %v7023 = vpop.permute.xlu0 %7022
  %7024 = vrot.lane.b32.xlu0 %v6725, 127
  %v7025 = vpop.permute.xlu0 %7024
  %7026 = vrot.lane.b32.xlu0 %v6726, 127
  %v7027 = vpop.permute.xlu0 %7026
  %7028 = vrot.lane.b32.xlu0 %v6727, 127
  %v7029 = vpop.permute.xlu0 %7028
  %7030 = vrot.lane.b32.xlu0 %v6728, 127
  %v7031 = vpop.permute.xlu0 %7030
  %7032 = vrot.lane.b32.xlu0 %v6729, 127
  %v7033 = vpop.permute.xlu0 %7032
  %7034 = vrot.lane.b32.xlu0 %v6730, 127
  %v7035 = vpop.permute.xlu0 %7034
  %7036 = vrot.lane.b32.xlu0 %v6731, 127
  %v7037 = vpop.permute.xlu0 %7036
  %7038 = vrot.lane.b32.xlu0 %v6732, 127
  %v7039 = vpop.permute.xlu0 %7038
  %7040 = vrot.lane.b32.xlu0 %v6733, 127
  %v7041 = vpop.permute.xlu0 %7040
  %7042 = vrot.lane.b32.xlu0 %v6734, 127
  %v7043 = vpop.permute.xlu0 %7042
  %7044 = vrot.lane.b32.xlu0 %v6735, 127
  %v7045 = vpop.permute.xlu0 %7044
  %7046 = vrot.lane.b32.xlu0 %v6736, 127
  %v7047 = vpop.permute.xlu0 %7046
  %7048 = vrot.lane.b32.xlu0 %v6737, 127
  %v7049 = vpop.permute.xlu0 %7048
  %7050 = vrot.lane.b32.xlu0 %v6738, 127
  %v7051 = vpop.permute.xlu0 %7050
  %7052 = vrot.lane.b32.xlu0 %v6739, 127
  %v7053 = vpop.permute.xlu0 %7052
  %7054 = vrot.lane.b32.xlu0 %v6740, 127
  %v7055 = vpop.permute.xlu0 %7054
  %7056 = vrot.lane.b32.xlu0 %v6741, 127
  %v7057 = vpop.permute.xlu0 %7056
  %7058 = vrot.lane.b32.xlu0 %v6742, 127
  %v7059 = vpop.permute.xlu0 %7058
  %7060 = vrot.lane.b32.xlu0 %v6743, 127
  %v7061 = vpop.permute.xlu0 %7060
  %7062 = vrot.lane.b32.xlu0 %v6744, 127
  %v7063 = vpop.permute.xlu0 %7062
  %7064 = vrot.lane.b32.xlu0 %v6745, 127
  %v7065 = vpop.permute.xlu0 %7064
  %7066 = vrot.lane.b32.xlu0 %v6746, 127
  %v7067 = vpop.permute.xlu0 %7066
  %7068 = vrot.lane.b32.xlu0 %v6747, 127
  %v7069 = vpop.permute.xlu0 %7068
  %7070 = vrot.lane.b32.xlu0 %v6748, 127
  %v7071 = vpop.permute.xlu0 %7070
  %7072 = vrot.lane.b32.xlu0 %v6749, 127
  %v7073 = vpop.permute.xlu0 %7072
  %7074 = vrot.lane.b32.xlu0 %v6750, 127
  %v7075 = vpop.permute.xlu0 %7074
  %7076 = vrot.lane.b32.xlu0 %v6751, 127
  %v7077 = vpop.permute.xlu0 %7076
  %7078 = vrot.lane.b32.xlu0 %v6752, 127
  %v7079 = vpop.permute.xlu0 %7078
  %7080 = vrot.lane.b32.xlu0 %v6753, 127
  %v7081 = vpop.permute.xlu0 %7080
  %7082 = vrot.lane.b32.xlu0 %v6754, 127
  %v7083 = vpop.permute.xlu0 %7082
  %7084 = vrot.lane.b32.xlu0 %v6755, 127
  %v7085 = vpop.permute.xlu0 %7084
  %v7086 = vsel %vm514, %v6867, %v6869
  %v7087 = vsel %vm514, %v6869, %v6871
  %v7088 = vsel %vm514, %v6871, %v6873
  %v7089 = vsel %vm514, %v6873, %v6875
  %v7090 = vsel %vm514, %v6875, %v6877
  %v7091 = vsel %vm514, %v6877, %v6879
  %v7092 = vsel %vm514, %v6879, %v6881
  %v7093 = vsel %vm514, %v6881, %v6883
  %v7094 = vsel %vm514, %v6883, %v6885
  %v7095 = vsel %vm514, %v6885, %v6887
  %v7096 = vsel %vm514, %v6887, %v6889
  %v7097 = vsel %vm514, %v6889, %v6891
  %v7098 = vsel %vm514, %v6891, %v6893
  %v7099 = vsel %vm514, %v6893, %v6895
  %v7100 = vsel %vm514, %v6895, %v6897
  %v7101 = vsel %vm514, %v6897, %v6899
  %v7102 = vsel %vm514, %v6899, %v6901
  %v7103 = vsel %vm514, %v6901, %v6903
  %v7104 = vsel %vm514, %v6903, %v6905
  %v7105 = vsel %vm514, %v6905, %v6907
  %v7106 = vsel %vm514, %v6907, %v6909
  %v7107 = vsel %vm514, %v6909, %v6911
  %v7108 = vsel %vm514, %v6911, %v6913
  %v7109 = vsel %vm514, %v6913, %v6915
  %v7110 = vsel %vm514, %v6915, %v6917
  %v7111 = vsel %vm514, %v6917, %v6919
  %v7112 = vsel %vm514, %v6919, %v6921
  %v7113 = vsel %vm514, %v6921, %v6923
  %v7114 = vsel %vm514, %v6923, %v6925
  %v7115 = vsel %vm514, %v6925, %v6927
  %v7116 = vsel %vm514, %v6927, %v6929
  %v7117 = vsel %vm514, %v6929, %v6931
  %v7118 = vsel %vm514, %v6931, %v6933
  %v7119 = vsel %vm514, %v6933, %v6935
  %v7120 = vsel %vm514, %v6935, %v6937
  %v7121 = vsel %vm514, %v6937, %v6939
  %v7122 = vsel %vm514, %v6939, %v6941
  %v7123 = vsel %vm514, %v6941, %v6943
  %v7124 = vsel %vm514, %v6943, %v6945
  %v7125 = vsel %vm514, %v6945, %v6947
  %v7126 = vsel %vm514, %v6947, %v6949
  %v7127 = vsel %vm514, %v6949, %v6951
  %v7128 = vsel %vm514, %v6951, %v6953
  %v7129 = vsel %vm514, %v6953, %v6955
  %v7130 = vsel %vm514, %v6955, %v6957
  %v7131 = vsel %vm514, %v6957, %v6959
  %v7132 = vsel %vm514, %v6959, %v6961
  %v7133 = vsel %vm514, %v6961, %v6963
  %v7134 = vsel %vm514, %v6963, %v6965
  %v7135 = vsel %vm514, %v6965, %v6967
  %v7136 = vsel %vm514, %v6967, %v6969
  %v7137 = vsel %vm514, %v6969, %v6971
  %v7138 = vsel %vm514, %v6971, %v6973
  %v7139 = vsel %vm514, %v6973, %v6975
  %v7140 = vsel %vm514, %v6977, %v6979
  %v7141 = vsel %vm514, %v6979, %v6981
  %v7142 = vsel %vm514, %v6981, %v6983
  %v7143 = vsel %vm514, %v6983, %v6985
  %v7144 = vsel %vm514, %v6985, %v6987
  %v7145 = vsel %vm514, %v6987, %v6989
  %v7146 = vsel %vm514, %v6989, %v6991
  %v7147 = vsel %vm514, %v6991, %v6993
  %v7148 = vsel %vm514, %v6993, %v6995
  %v7149 = vsel %vm514, %v6995, %v6997
  %v7150 = vsel %vm514, %v6997, %v6999
  %v7151 = vsel %vm514, %v6999, %v7001
  %v7152 = vsel %vm514, %v7001, %v7003
  %v7153 = vsel %vm514, %v7003, %v7005
  %v7154 = vsel %vm514, %v7005, %v7007
  %v7155 = vsel %vm514, %v7007, %v7009
  %v7156 = vsel %vm514, %v7009, %v7011
  %v7157 = vsel %vm514, %v7011, %v7013
  %v7158 = vsel %vm514, %v7013, %v7015
  %v7159 = vsel %vm514, %v7015, %v7017
  %v7160 = vsel %vm514, %v7017, %v7019
  %v7161 = vsel %vm514, %v7019, %v7021
  %v7162 = vsel %vm514, %v7021, %v7023
  %v7163 = vsel %vm514, %v7023, %v7025
  %v7164 = vsel %vm514, %v7025, %v7027
  %v7165 = vsel %vm514, %v7027, %v7029
  %v7166 = vsel %vm514, %v7029, %v7031
  %v7167 = vsel %vm514, %v7031, %v7033
  %v7168 = vsel %vm514, %v7033, %v7035
  %v7169 = vsel %vm514, %v7035, %v7037
  %v7170 = vsel %vm514, %v7037, %v7039
  %v7171 = vsel %vm514, %v7039, %v7041
  %v7172 = vsel %vm514, %v7041, %v7043
  %v7173 = vsel %vm514, %v7043, %v7045
  %v7174 = vsel %vm514, %v7045, %v7047
  %v7175 = vsel %vm514, %v7047, %v7049
  %v7176 = vsel %vm514, %v7049, %v7051
  %v7177 = vsel %vm514, %v7051, %v7053
  %v7178 = vsel %vm514, %v7053, %v7055
  %v7179 = vsel %vm514, %v7055, %v7057
  %v7180 = vsel %vm514, %v7057, %v7059
  %v7181 = vsel %vm514, %v7059, %v7061
  %v7182 = vsel %vm514, %v7061, %v7063
  %v7183 = vsel %vm514, %v7063, %v7065
  %v7184 = vsel %vm514, %v7065, %v7067
  %v7185 = vsel %vm514, %v7067, %v7069
  %v7186 = vsel %vm514, %v7069, %v7071
  %v7187 = vsel %vm514, %v7071, %v7073
  %v7188 = vsel %vm514, %v7073, %v7075
  %v7189 = vsel %vm514, %v7075, %v7077
  %v7190 = vsel %vm514, %v7077, %v7079
  %v7191 = vsel %vm514, %v7079, %v7081
  %v7192 = vsel %vm514, %v7081, %v7083
  %v7193 = vsel %vm514, %v7083, %v7085
  %v7304 = vmax.f32 %v6646, %v7086
  %v7305 = vmax.f32 %v6647, %v7087
  %v7306 = vmax.f32 %v6648, %v7088
  %v7307 = vmax.f32 %v6649, %v7089
  %v7308 = vmax.f32 %v6650, %v7090
  %v7309 = vmax.f32 %v6651, %v7091
  %v7310 = vmax.f32 %v6652, %v7092
  %v7311 = vmax.f32 %v6653, %v7093
  %v7312 = vmax.f32 %v6654, %v7094
  %v7313 = vmax.f32 %v6655, %v7095
  %v7314 = vmax.f32 %v6656, %v7096
  %v7315 = vmax.f32 %v6657, %v7097
  %v7316 = vmax.f32 %v6658, %v7098
  %v7317 = vmax.f32 %v6659, %v7099
  %v7318 = vmax.f32 %v6660, %v7100
  %v7319 = vmax.f32 %v6661, %v7101
  %v7320 = vmax.f32 %v6662, %v7102
  %v7321 = vmax.f32 %v6663, %v7103
  %v7322 = vmax.f32 %v6664, %v7104
  %v7323 = vmax.f32 %v6665, %v7105
  %v7324 = vmax.f32 %v6666, %v7106
  %v7325 = vmax.f32 %v6667, %v7107
  %v7326 = vmax.f32 %v6668, %v7108
  %v7327 = vmax.f32 %v6669, %v7109
  %v7328 = vmax.f32 %v6670, %v7110
  %v7329 = vmax.f32 %v6671, %v7111
  %v7330 = vmax.f32 %v6672, %v7112
  %v7331 = vmax.f32 %v6673, %v7113
  %v7332 = vmax.f32 %v6674, %v7114
  %v7333 = vmax.f32 %v6675, %v7115
  %v7334 = vmax.f32 %v6676, %v7116
  %v7335 = vmax.f32 %v6677, %v7117
  %v7336 = vmax.f32 %v6678, %v7118
  %v7337 = vmax.f32 %v6679, %v7119
  %v7338 = vmax.f32 %v6680, %v7120
  %v7339 = vmax.f32 %v6681, %v7121
  %v7340 = vmax.f32 %v6682, %v7122
  %v7341 = vmax.f32 %v6683, %v7123
  %v7342 = vmax.f32 %v6684, %v7124
  %v7343 = vmax.f32 %v6685, %v7125
  %v7344 = vmax.f32 %v6686, %v7126
  %v7345 = vmax.f32 %v6687, %v7127
  %v7346 = vmax.f32 %v6688, %v7128
  %v7347 = vmax.f32 %v6689, %v7129
  %v7348 = vmax.f32 %v6690, %v7130
  %v7349 = vmax.f32 %v6691, %v7131
  %v7350 = vmax.f32 %v6692, %v7132
  %v7351 = vmax.f32 %v6693, %v7133
  %v7352 = vmax.f32 %v6694, %v7134
  %v7353 = vmax.f32 %v6695, %v7135
  %v7354 = vmax.f32 %v6696, %v7136
  %v7355 = vmax.f32 %v6697, %v7137
  %v7356 = vmax.f32 %v6698, %v7138
  %v7357 = vmax.f32 %v6699, %v7139
  %v7358 = vmax.f32 %v6700, %v6975
  %v7359 = vmax.f32 %v6701, %v7140
  %v7360 = vmax.f32 %v6702, %v7141
  %v7361 = vmax.f32 %v6703, %v7142
  %v7362 = vmax.f32 %v6704, %v7143
  %v7363 = vmax.f32 %v6705, %v7144
  %v7364 = vmax.f32 %v6706, %v7145
  %v7365 = vmax.f32 %v6707, %v7146
  %v7366 = vmax.f32 %v6708, %v7147
  %v7367 = vmax.f32 %v6709, %v7148
  %v7368 = vmax.f32 %v6710, %v7149
  %v7369 = vmax.f32 %v6711, %v7150
  %v7370 = vmax.f32 %v6712, %v7151
  %v7371 = vmax.f32 %v6713, %v7152
  %v7372 = vmax.f32 %v6714, %v7153
  %v7373 = vmax.f32 %v6715, %v7154
  %v7374 = vmax.f32 %v6716, %v7155
  %v7375 = vmax.f32 %v6717, %v7156
  %v7376 = vmax.f32 %v6718, %v7157
  %v7377 = vmax.f32 %v6719, %v7158
  %v7378 = vmax.f32 %v6720, %v7159
  %v7379 = vmax.f32 %v6721, %v7160
  %v7380 = vmax.f32 %v6722, %v7161
  %v7381 = vmax.f32 %v6723, %v7162
  %v7382 = vmax.f32 %v6724, %v7163
  %v7383 = vmax.f32 %v6725, %v7164
  %v7384 = vmax.f32 %v6726, %v7165
  %v7385 = vmax.f32 %v6727, %v7166
  %v7386 = vmax.f32 %v6728, %v7167
  %v7387 = vmax.f32 %v6729, %v7168
  %v7388 = vmax.f32 %v6730, %v7169
  %v7389 = vmax.f32 %v6731, %v7170
  %v7390 = vmax.f32 %v6732, %v7171
  %v7391 = vmax.f32 %v6733, %v7172
  %v7392 = vmax.f32 %v6734, %v7173
  %v7393 = vmax.f32 %v6735, %v7174
  %v7394 = vmax.f32 %v6736, %v7175
  %v7395 = vmax.f32 %v6737, %v7176
  %v7396 = vmax.f32 %v6738, %v7177
  %v7397 = vmax.f32 %v6739, %v7178
  %v7398 = vmax.f32 %v6740, %v7179
  %v7399 = vmax.f32 %v6741, %v7180
  %v7400 = vmax.f32 %v6742, %v7181
  %v7401 = vmax.f32 %v6743, %v7182
  %v7402 = vmax.f32 %v6744, %v7183
  %v7403 = vmax.f32 %v6745, %v7184
  %v7404 = vmax.f32 %v6746, %v7185
  %v7405 = vmax.f32 %v6747, %v7186
  %v7406 = vmax.f32 %v6748, %v7187
  %v7407 = vmax.f32 %v6749, %v7188
  %v7408 = vmax.f32 %v6750, %v7189
  %v7409 = vmax.f32 %v6751, %v7190
  %v7410 = vmax.f32 %v6752, %v7191
  %v7411 = vmax.f32 %v6753, %v7192
  %v7412 = vmax.f32 %v6754, %v7193
  %v7413 = vmax.f32 %v6755, %v7085
  %7524 = vrot.lane.b32.xlu0 %v7304, 100
  %v7525 = vpop.permute.xlu0 %7524
  %7526 = vrot.lane.b32.xlu0 %v7305, 100
  %v7527 = vpop.permute.xlu0 %7526
  %7528 = vrot.lane.b32.xlu0 %v7306, 100
  %v7529 = vpop.permute.xlu0 %7528
  %7530 = vrot.lane.b32.xlu0 %v7307, 100
  %v7531 = vpop.permute.xlu0 %7530
  %7532 = vrot.lane.b32.xlu0 %v7308, 100
  %v7533 = vpop.permute.xlu0 %7532
  %7534 = vrot.lane.b32.xlu0 %v7309, 100
  %v7535 = vpop.permute.xlu0 %7534
  %7536 = vrot.lane.b32.xlu0 %v7310, 100
  %v7537 = vpop.permute.xlu0 %7536
  %7538 = vrot.lane.b32.xlu0 %v7311, 100
  %v7539 = vpop.permute.xlu0 %7538
  %7540 = vrot.lane.b32.xlu0 %v7312, 100
  %v7541 = vpop.permute.xlu0 %7540
  %7542 = vrot.lane.b32.xlu0 %v7313, 100
  %v7543 = vpop.permute.xlu0 %7542
  %7544 = vrot.lane.b32.xlu0 %v7314, 100
  %v7545 = vpop.permute.xlu0 %7544
  %7546 = vrot.lane.b32.xlu0 %v7315, 100
  %v7547 = vpop.permute.xlu0 %7546
  %7548 = vrot.lane.b32.xlu0 %v7316, 100
  %v7549 = vpop.permute.xlu0 %7548
  %7550 = vrot.lane.b32.xlu0 %v7317, 100
  %v7551 = vpop.permute.xlu0 %7550
  %7552 = vrot.lane.b32.xlu0 %v7318, 100
  %v7553 = vpop.permute.xlu0 %7552
  %7554 = vrot.lane.b32.xlu0 %v7319, 100
  %v7555 = vpop.permute.xlu0 %7554
  %7556 = vrot.lane.b32.xlu0 %v7320, 100
  %v7557 = vpop.permute.xlu0 %7556
  %7558 = vrot.lane.b32.xlu0 %v7321, 100
  %v7559 = vpop.permute.xlu0 %7558
  %7560 = vrot.lane.b32.xlu0 %v7322, 100
  %v7561 = vpop.permute.xlu0 %7560
  %7562 = vrot.lane.b32.xlu0 %v7323, 100
  %v7563 = vpop.permute.xlu0 %7562
  %7564 = vrot.lane.b32.xlu0 %v7324, 100
  %v7565 = vpop.permute.xlu0 %7564
  %7566 = vrot.lane.b32.xlu0 %v7325, 100
  %v7567 = vpop.permute.xlu0 %7566
  %7568 = vrot.lane.b32.xlu0 %v7326, 100
  %v7569 = vpop.permute.xlu0 %7568
  %7570 = vrot.lane.b32.xlu0 %v7327, 100
  %v7571 = vpop.permute.xlu0 %7570
  %7572 = vrot.lane.b32.xlu0 %v7328, 100
  %v7573 = vpop.permute.xlu0 %7572
  %7574 = vrot.lane.b32.xlu0 %v7329, 100
  %v7575 = vpop.permute.xlu0 %7574
  %7576 = vrot.lane.b32.xlu0 %v7330, 100
  %v7577 = vpop.permute.xlu0 %7576
  %7578 = vrot.lane.b32.xlu0 %v7331, 100
  %v7579 = vpop.permute.xlu0 %7578
  %7580 = vrot.lane.b32.xlu0 %v7332, 100
  %v7581 = vpop.permute.xlu0 %7580
  %7582 = vrot.lane.b32.xlu0 %v7333, 100
  %v7583 = vpop.permute.xlu0 %7582
  %7584 = vrot.lane.b32.xlu0 %v7334, 100
  %v7585 = vpop.permute.xlu0 %7584
  %7586 = vrot.lane.b32.xlu0 %v7335, 100
  %v7587 = vpop.permute.xlu0 %7586
  %7588 = vrot.lane.b32.xlu0 %v7336, 100
  %v7589 = vpop.permute.xlu0 %7588
  %7590 = vrot.lane.b32.xlu0 %v7337, 100
  %v7591 = vpop.permute.xlu0 %7590
  %7592 = vrot.lane.b32.xlu0 %v7338, 100
  %v7593 = vpop.permute.xlu0 %7592
  %7594 = vrot.lane.b32.xlu0 %v7339, 100
  %v7595 = vpop.permute.xlu0 %7594
  %7596 = vrot.lane.b32.xlu0 %v7340, 100
  %v7597 = vpop.permute.xlu0 %7596
  %7598 = vrot.lane.b32.xlu0 %v7341, 100
  %v7599 = vpop.permute.xlu0 %7598
  %7600 = vrot.lane.b32.xlu0 %v7342, 100
  %v7601 = vpop.permute.xlu0 %7600
  %7602 = vrot.lane.b32.xlu0 %v7343, 100
  %v7603 = vpop.permute.xlu0 %7602
  %7604 = vrot.lane.b32.xlu0 %v7344, 100
  %v7605 = vpop.permute.xlu0 %7604
  %7606 = vrot.lane.b32.xlu0 %v7345, 100
  %v7607 = vpop.permute.xlu0 %7606
  %7608 = vrot.lane.b32.xlu0 %v7346, 100
  %v7609 = vpop.permute.xlu0 %7608
  %7610 = vrot.lane.b32.xlu0 %v7347, 100
  %v7611 = vpop.permute.xlu0 %7610
  %7612 = vrot.lane.b32.xlu0 %v7348, 100
  %v7613 = vpop.permute.xlu0 %7612
  %7614 = vrot.lane.b32.xlu0 %v7349, 100
  %v7615 = vpop.permute.xlu0 %7614
  %7616 = vrot.lane.b32.xlu0 %v7350, 100
  %v7617 = vpop.permute.xlu0 %7616
  %7618 = vrot.lane.b32.xlu0 %v7351, 100
  %v7619 = vpop.permute.xlu0 %7618
  %7620 = vrot.lane.b32.xlu0 %v7352, 100
  %v7621 = vpop.permute.xlu0 %7620
  %7622 = vrot.lane.b32.xlu0 %v7353, 100
  %v7623 = vpop.permute.xlu0 %7622
  %7624 = vrot.lane.b32.xlu0 %v7354, 100
  %v7625 = vpop.permute.xlu0 %7624
  %7626 = vrot.lane.b32.xlu0 %v7355, 100
  %v7627 = vpop.permute.xlu0 %7626
  %7628 = vrot.lane.b32.xlu0 %v7356, 100
  %v7629 = vpop.permute.xlu0 %7628
  %7630 = vrot.lane.b32.xlu0 %v7357, 100
  %v7631 = vpop.permute.xlu0 %7630
  %7632 = vrot.lane.b32.xlu0 %v7358, 100
  %v7633 = vpop.permute.xlu0 %7632
  %7634 = vrot.lane.b32.xlu0 %v7359, 100
  %v7635 = vpop.permute.xlu0 %7634
  %7636 = vrot.lane.b32.xlu0 %v7360, 100
  %v7637 = vpop.permute.xlu0 %7636
  %7638 = vrot.lane.b32.xlu0 %v7361, 100
  %v7639 = vpop.permute.xlu0 %7638
  %7640 = vrot.lane.b32.xlu0 %v7362, 100
  %v7641 = vpop.permute.xlu0 %7640
  %7642 = vrot.lane.b32.xlu0 %v7363, 100
  %v7643 = vpop.permute.xlu0 %7642
  %7644 = vrot.lane.b32.xlu0 %v7364, 100
  %v7645 = vpop.permute.xlu0 %7644
  %7646 = vrot.lane.b32.xlu0 %v7365, 100
  %v7647 = vpop.permute.xlu0 %7646
  %7648 = vrot.lane.b32.xlu0 %v7366, 100
  %v7649 = vpop.permute.xlu0 %7648
  %7650 = vrot.lane.b32.xlu0 %v7367, 100
  %v7651 = vpop.permute.xlu0 %7650
  %7652 = vrot.lane.b32.xlu0 %v7368, 100
  %v7653 = vpop.permute.xlu0 %7652
  %7654 = vrot.lane.b32.xlu0 %v7369, 100
  %v7655 = vpop.permute.xlu0 %7654
  %7656 = vrot.lane.b32.xlu0 %v7370, 100
  %v7657 = vpop.permute.xlu0 %7656
  %7658 = vrot.lane.b32.xlu0 %v7371, 100
  %v7659 = vpop.permute.xlu0 %7658
  %7660 = vrot.lane.b32.xlu0 %v7372, 100
  %v7661 = vpop.permute.xlu0 %7660
  %7662 = vrot.lane.b32.xlu0 %v7373, 100
  %v7663 = vpop.permute.xlu0 %7662
  %7664 = vrot.lane.b32.xlu0 %v7374, 100
  %v7665 = vpop.permute.xlu0 %7664
  %7666 = vrot.lane.b32.xlu0 %v7375, 100
  %v7667 = vpop.permute.xlu0 %7666
  %7668 = vrot.lane.b32.xlu0 %v7376, 100
  %v7669 = vpop.permute.xlu0 %7668
  %7670 = vrot.lane.b32.xlu0 %v7377, 100
  %v7671 = vpop.permute.xlu0 %7670
  %7672 = vrot.lane.b32.xlu0 %v7378, 100
  %v7673 = vpop.permute.xlu0 %7672
  %7674 = vrot.lane.b32.xlu0 %v7379, 100
  %v7675 = vpop.permute.xlu0 %7674
  %7676 = vrot.lane.b32.xlu0 %v7380, 100
  %v7677 = vpop.permute.xlu0 %7676
  %7678 = vrot.lane.b32.xlu0 %v7381, 100
  %v7679 = vpop.permute.xlu0 %7678
  %7680 = vrot.lane.b32.xlu0 %v7382, 100
  %v7681 = vpop.permute.xlu0 %7680
  %7682 = vrot.lane.b32.xlu0 %v7383, 100
  %v7683 = vpop.permute.xlu0 %7682
  %7684 = vrot.lane.b32.xlu0 %v7384, 100
  %v7685 = vpop.permute.xlu0 %7684
  %7686 = vrot.lane.b32.xlu0 %v7385, 100
  %v7687 = vpop.permute.xlu0 %7686
  %7688 = vrot.lane.b32.xlu0 %v7386, 100
  %v7689 = vpop.permute.xlu0 %7688
  %7690 = vrot.lane.b32.xlu0 %v7387, 100
  %v7691 = vpop.permute.xlu0 %7690
  %7692 = vrot.lane.b32.xlu0 %v7388, 100
  %v7693 = vpop.permute.xlu0 %7692
  %7694 = vrot.lane.b32.xlu0 %v7389, 100
  %v7695 = vpop.permute.xlu0 %7694
  %7696 = vrot.lane.b32.xlu0 %v7390, 100
  %v7697 = vpop.permute.xlu0 %7696
  %7698 = vrot.lane.b32.xlu0 %v7391, 100
  %v7699 = vpop.permute.xlu0 %7698
  %7700 = vrot.lane.b32.xlu0 %v7392, 100
  %v7701 = vpop.permute.xlu0 %7700
  %7702 = vrot.lane.b32.xlu0 %v7393, 100
  %v7703 = vpop.permute.xlu0 %7702
  %7704 = vrot.lane.b32.xlu0 %v7394, 100
  %v7705 = vpop.permute.xlu0 %7704
  %7706 = vrot.lane.b32.xlu0 %v7395, 100
  %v7707 = vpop.permute.xlu0 %7706
  %7708 = vrot.lane.b32.xlu0 %v7396, 100
  %v7709 = vpop.permute.xlu0 %7708
  %7710 = vrot.lane.b32.xlu0 %v7397, 100
  %v7711 = vpop.permute.xlu0 %7710
  %7712 = vrot.lane.b32.xlu0 %v7398, 100
  %v7713 = vpop.permute.xlu0 %7712
  %7714 = vrot.lane.b32.xlu0 %v7399, 100
  %v7715 = vpop.permute.xlu0 %7714
  %7716 = vrot.lane.b32.xlu0 %v7400, 100
  %v7717 = vpop.permute.xlu0 %7716
  %7718 = vrot.lane.b32.xlu0 %v7401, 100
  %v7719 = vpop.permute.xlu0 %7718
  %7720 = vrot.lane.b32.xlu0 %v7402, 100
  %v7721 = vpop.permute.xlu0 %7720
  %7722 = vrot.lane.b32.xlu0 %v7403, 100
  %v7723 = vpop.permute.xlu0 %7722
  %7724 = vrot.lane.b32.xlu0 %v7404, 100
  %v7725 = vpop.permute.xlu0 %7724
  %7726 = vrot.lane.b32.xlu0 %v7405, 100
  %v7727 = vpop.permute.xlu0 %7726
  %7728 = vrot.lane.b32.xlu0 %v7406, 100
  %v7729 = vpop.permute.xlu0 %7728
  %7730 = vrot.lane.b32.xlu0 %v7407, 100
  %v7731 = vpop.permute.xlu0 %7730
  %7732 = vrot.lane.b32.xlu0 %v7408, 100
  %v7733 = vpop.permute.xlu0 %7732
  %7734 = vrot.lane.b32.xlu0 %v7409, 100
  %v7735 = vpop.permute.xlu0 %7734
  %7736 = vrot.lane.b32.xlu0 %v7410, 100
  %v7737 = vpop.permute.xlu0 %7736
  %7738 = vrot.lane.b32.xlu0 %v7411, 100
  %v7739 = vpop.permute.xlu0 %7738
  %7740 = vrot.lane.b32.xlu0 %v7412, 100
  %v7741 = vpop.permute.xlu0 %7740
  %7742 = vrot.lane.b32.xlu0 %v7413, 100
  %v7743 = vpop.permute.xlu0 %7742
  %v7744 = vsel %vm1302, %v7525, %v7527
  %v7745 = vsel %vm1302, %v7527, %v7529
  %v7746 = vsel %vm1302, %v7529, %v7531
  %v7747 = vsel %vm1302, %v7531, %v7533
  %v7748 = vsel %vm1302, %v7533, %v7535
  %v7749 = vsel %vm1302, %v7535, %v7537
  %v7750 = vsel %vm1302, %v7539, %v7541
  %v7751 = vsel %vm1302, %v7541, %v7543
  %v7752 = vsel %vm1302, %v7543, %v7545
  %v7753 = vsel %vm1302, %v7545, %v7547
  %v7754 = vsel %vm1302, %v7547, %v7549
  %v7755 = vsel %vm1302, %v7549, %v7551
  %v7756 = vsel %vm1302, %v7553, %v7555
  %v7757 = vsel %vm1302, %v7555, %v7557
  %v7758 = vsel %vm1302, %v7557, %v7559
  %v7759 = vsel %vm1302, %v7559, %v7561
  %v7760 = vsel %vm1302, %v7561, %v7563
  %v7761 = vsel %vm1302, %v7563, %v7565
  %v7762 = vsel %vm1302, %v7567, %v7569
  %v7763 = vsel %vm1302, %v7569, %v7571
  %v7764 = vsel %vm1302, %v7571, %v7573
  %v7765 = vsel %vm1302, %v7573, %v7575
  %v7766 = vsel %vm1302, %v7575, %v7577
  %v7767 = vsel %vm1302, %v7577, %v7579
  %v7768 = vsel %vm1302, %v7581, %v7583
  %v7769 = vsel %vm1302, %v7583, %v7585
  %v7770 = vsel %vm1302, %v7585, %v7587
  %v7771 = vsel %vm1302, %v7587, %v7589
  %v7772 = vsel %vm1302, %v7589, %v7591
  %v7773 = vsel %vm1302, %v7591, %v7593
  %v7774 = vsel %vm1302, %v7595, %v7597
  %v7775 = vsel %vm1302, %v7597, %v7599
  %v7776 = vsel %vm1302, %v7599, %v7601
  %v7777 = vsel %vm1302, %v7601, %v7603
  %v7778 = vsel %vm1302, %v7603, %v7605
  %v7779 = vsel %vm1302, %v7605, %v7607
  %v7780 = vsel %vm1302, %v7609, %v7611
  %v7781 = vsel %vm1302, %v7611, %v7613
  %v7782 = vsel %vm1302, %v7613, %v7615
  %v7783 = vsel %vm1302, %v7615, %v7617
  %v7784 = vsel %vm1302, %v7617, %v7619
  %v7785 = vsel %vm1302, %v7619, %v7621
  %v7786 = vsel %vm1302, %v7623, %v7625
  %v7787 = vsel %vm1302, %v7625, %v7627
  %v7788 = vsel %vm1302, %v7627, %v7629
  %v7789 = vsel %vm1302, %v7629, %v7631
  %v7790 = vsel %vm1302, %v7631, %v7633
  %v7791 = vsel %vm1302, %v7635, %v7637
  %v7792 = vsel %vm1302, %v7637, %v7639
  %v7793 = vsel %vm1302, %v7639, %v7641
  %v7794 = vsel %vm1302, %v7641, %v7643
  %v7795 = vsel %vm1302, %v7643, %v7645
  %v7796 = vsel %vm1302, %v7645, %v7647
  %v7797 = vsel %vm1302, %v7649, %v7651
  %v7798 = vsel %vm1302, %v7651, %v7653
  %v7799 = vsel %vm1302, %v7653, %v7655
  %v7800 = vsel %vm1302, %v7655, %v7657
  %v7801 = vsel %vm1302, %v7657, %v7659
  %v7802 = vsel %vm1302, %v7659, %v7661
  %v7803 = vsel %vm1302, %v7663, %v7665
  %v7804 = vsel %vm1302, %v7665, %v7667
  %v7805 = vsel %vm1302, %v7667, %v7669
  %v7806 = vsel %vm1302, %v7669, %v7671
  %v7807 = vsel %vm1302, %v7671, %v7673
  %v7808 = vsel %vm1302, %v7673, %v7675
  %v7809 = vsel %vm1302, %v7677, %v7679
  %v7810 = vsel %vm1302, %v7679, %v7681
  %v7811 = vsel %vm1302, %v7681, %v7683
  %v7812 = vsel %vm1302, %v7683, %v7685
  %v7813 = vsel %vm1302, %v7685, %v7687
  %v7814 = vsel %vm1302, %v7687, %v7689
  %v7815 = vsel %vm1302, %v7691, %v7693
  %v7816 = vsel %vm1302, %v7693, %v7695
  %v7817 = vsel %vm1302, %v7695, %v7697
  %v7818 = vsel %vm1302, %v7697, %v7699
  %v7819 = vsel %vm1302, %v7699, %v7701
  %v7820 = vsel %vm1302, %v7701, %v7703
  %v7821 = vsel %vm1302, %v7705, %v7707
  %v7822 = vsel %vm1302, %v7707, %v7709
  %v7823 = vsel %vm1302, %v7709, %v7711
  %v7824 = vsel %vm1302, %v7711, %v7713
  %v7825 = vsel %vm1302, %v7713, %v7715
  %v7826 = vsel %vm1302, %v7715, %v7717
  %v7827 = vsel %vm1302, %v7719, %v7721
  %v7828 = vsel %vm1302, %v7721, %v7723
  %v7829 = vsel %vm1302, %v7723, %v7725
  %v7830 = vsel %vm1302, %v7725, %v7727
  %v7831 = vsel %vm1302, %v7727, %v7729
  %v7832 = vsel %vm1302, %v7729, %v7731
  %v7833 = vsel %vm1302, %v7733, %v7735
  %v7834 = vsel %vm1302, %v7735, %v7737
  %v7835 = vsel %vm1302, %v7737, %v7739
  %v7836 = vsel %vm1302, %v7739, %v7741
  %v7837 = vsel %vm1302, %v7741, %v7743
  %v7934 = vmax.f32 %v7304, %v7744
  %v7935 = vmax.f32 %v7305, %v7745
  %v7936 = vmax.f32 %v7306, %v7746
  %v7937 = vmax.f32 %v7307, %v7747
  %v7938 = vmax.f32 %v7308, %v7748
  %v7939 = vmax.f32 %v7309, %v7749
  %v7940 = vmax.f32 %v7311, %v7750
  %v7941 = vmax.f32 %v7312, %v7751
  %v7942 = vmax.f32 %v7313, %v7752
  %v7943 = vmax.f32 %v7314, %v7753
  %v7944 = vmax.f32 %v7315, %v7754
  %v7945 = vmax.f32 %v7316, %v7755
  %v7946 = vmax.f32 %v7318, %v7756
  %v7947 = vmax.f32 %v7319, %v7757
  %v7948 = vmax.f32 %v7320, %v7758
  %v7949 = vmax.f32 %v7321, %v7759
  %v7950 = vmax.f32 %v7322, %v7760
  %v7951 = vmax.f32 %v7323, %v7761
  %v7952 = vmax.f32 %v7325, %v7762
  %v7953 = vmax.f32 %v7326, %v7763
  %v7954 = vmax.f32 %v7327, %v7764
  %v7955 = vmax.f32 %v7328, %v7765
  %v7956 = vmax.f32 %v7329, %v7766
  %v7957 = vmax.f32 %v7330, %v7767
  %v7958 = vmax.f32 %v7332, %v7768
  %v7959 = vmax.f32 %v7333, %v7769
  %v7960 = vmax.f32 %v7334, %v7770
  %v7961 = vmax.f32 %v7335, %v7771
  %v7962 = vmax.f32 %v7336, %v7772
  %v7963 = vmax.f32 %v7337, %v7773
  %v7964 = vmax.f32 %v7339, %v7774
  %v7965 = vmax.f32 %v7340, %v7775
  %v7966 = vmax.f32 %v7341, %v7776
  %v7967 = vmax.f32 %v7342, %v7777
  %v7968 = vmax.f32 %v7343, %v7778
  %v7969 = vmax.f32 %v7344, %v7779
  %v7970 = vmax.f32 %v7346, %v7780
  %v7971 = vmax.f32 %v7347, %v7781
  %v7972 = vmax.f32 %v7348, %v7782
  %v7973 = vmax.f32 %v7349, %v7783
  %v7974 = vmax.f32 %v7350, %v7784
  %v7975 = vmax.f32 %v7351, %v7785
  %v7976 = vmax.f32 %v7353, %v7786
  %v7977 = vmax.f32 %v7354, %v7787
  %v7978 = vmax.f32 %v7355, %v7788
  %v7979 = vmax.f32 %v7356, %v7789
  %v7980 = vmax.f32 %v7357, %v7790
  %v7981 = vmax.f32 %v7358, %v7633
  %v7982 = vmax.f32 %v7359, %v7791
  %v7983 = vmax.f32 %v7360, %v7792
  %v7984 = vmax.f32 %v7361, %v7793
  %v7985 = vmax.f32 %v7362, %v7794
  %v7986 = vmax.f32 %v7363, %v7795
  %v7987 = vmax.f32 %v7364, %v7796
  %v7988 = vmax.f32 %v7366, %v7797
  %v7989 = vmax.f32 %v7367, %v7798
  %v7990 = vmax.f32 %v7368, %v7799
  %v7991 = vmax.f32 %v7369, %v7800
  %v7992 = vmax.f32 %v7370, %v7801
  %v7993 = vmax.f32 %v7371, %v7802
  %v7994 = vmax.f32 %v7373, %v7803
  %v7995 = vmax.f32 %v7374, %v7804
  %v7996 = vmax.f32 %v7375, %v7805
  %v7997 = vmax.f32 %v7376, %v7806
  %v7998 = vmax.f32 %v7377, %v7807
  %v7999 = vmax.f32 %v7378, %v7808
  %v8000 = vmax.f32 %v7380, %v7809
  %v8001 = vmax.f32 %v7381, %v7810
  %v8002 = vmax.f32 %v7382, %v7811
  %v8003 = vmax.f32 %v7383, %v7812
  %v8004 = vmax.f32 %v7384, %v7813
  %v8005 = vmax.f32 %v7385, %v7814
  %v8006 = vmax.f32 %v7387, %v7815
  %v8007 = vmax.f32 %v7388, %v7816
  %v8008 = vmax.f32 %v7389, %v7817
  %v8009 = vmax.f32 %v7390, %v7818
  %v8010 = vmax.f32 %v7391, %v7819
  %v8011 = vmax.f32 %v7392, %v7820
  %v8012 = vmax.f32 %v7394, %v7821
  %v8013 = vmax.f32 %v7395, %v7822
  %v8014 = vmax.f32 %v7396, %v7823
  %v8015 = vmax.f32 %v7397, %v7824
  %v8016 = vmax.f32 %v7398, %v7825
  %v8017 = vmax.f32 %v7399, %v7826
  %v8018 = vmax.f32 %v7401, %v7827
  %v8019 = vmax.f32 %v7402, %v7828
  %v8020 = vmax.f32 %v7403, %v7829
  %v8021 = vmax.f32 %v7404, %v7830
  %v8022 = vmax.f32 %v7405, %v7831
  %v8023 = vmax.f32 %v7406, %v7832
  %v8024 = vmax.f32 %v7408, %v7833
  %v8025 = vmax.f32 %v7409, %v7834
  %v8026 = vmax.f32 %v7410, %v7835
  %v8027 = vmax.f32 %v7411, %v7836
  %v8028 = vmax.f32 %v7412, %v7837
  %v8029 = vmax.f32 %v7413, %v7743
  %v8030 = vld [vmem:[%s5] sm:$0xff]
  %v8031 = vld [vmem:[%s5 + $0x8] sm:$0xff]
  %v8032 = vld [vmem:[%s5 + $0x10] sm:$0xff]
  %v8033 = vld [vmem:[%s5 + $0x18] sm:$0xff]
  %v8034 = vld [vmem:[%s5 + $0x20] sm:$0xff]
  %v8035 = vld [vmem:[%s5 + $0x28] sm:$0xff]
  %v8036 = vld [vmem:[%s5 + $0x30] sm:$0xff]
  %v8037 = vld [vmem:[%s5 + $0x38] sm:$0xff]
  %v8038 = vld [vmem:[%s5 + $0x40] sm:$0xff]
  %v8039 = vld [vmem:[%s5 + $0x48] sm:$0xff]
  %v8040 = vld [vmem:[%s5 + $0x50] sm:$0xff]
  %v8041 = vld [vmem:[%s5 + $0x58] sm:$0xff]
  %v8042 = vld [vmem:[%s5 + $0x60] sm:$0xff]
  %v8043 = vld [vmem:[%s5 + $0x68] sm:$0xff]
  %v8044 = vld [vmem:[%s5 + $0x70] sm:$0xff]
  %v8045 = vld [vmem:[%s5 + $0x78] sm:$0xff]
  %v8046 = vld [vmem:[%s5 + $0x80] sm:$0xff]
  %v8047 = vld [vmem:[%s5 + $0x88] sm:$0xff]
  %v8048 = vld [vmem:[%s5 + $0x90] sm:$0xff]
  %v8049 = vld [vmem:[%s5 + $0x98] sm:$0xff]
  %v8050 = vld [vmem:[%s5 + $0xa0] sm:$0xff]
  %v8051 = vld [vmem:[%s5 + $0xa8] sm:$0xff]
  %v8052 = vld [vmem:[%s5 + $0xb0] sm:$0xff]
  %v8053 = vld [vmem:[%s5 + $0xb8] sm:$0xff]
  %v8054 = vld [vmem:[%s5 + $0xc0] sm:$0xff]
  %v8055 = vld [vmem:[%s5 + $0xc8] sm:$0xff]
  %v8056 = vld [vmem:[%s5 + $0xd0] sm:$0xff]
  %v8057 = vld [vmem:[%s5 + $0xd8] sm:$0xff]
  %v8058 = vld [vmem:[%s5 + $0xe0] sm:$0xff]
  %v8059 = vld [vmem:[%s5 + $0xe8] sm:$0xff]
  %v8060 = vld [vmem:[%s5 + $0xf0] sm:$0xff]
  %v8061 = vld [vmem:[%s5 + $0xf8] sm:$0xff]
  %v8062 = vld [vmem:[%s5 + $0x100] sm:$0xff]
  %v8063 = vld [vmem:[%s5 + $0x108] sm:$0xff]
  %v8064 = vld [vmem:[%s5 + $0x110] sm:$0xff]
  %v8065 = vld [vmem:[%s5 + $0x118] sm:$0xff]
  %v8066 = vld [vmem:[%s5 + $0x120] sm:$0xff]
  %v8067 = vld [vmem:[%s5 + $0x128] sm:$0xff]
  %v8068 = vld [vmem:[%s5 + $0x130] sm:$0xff]
  %v8069 = vld [vmem:[%s5 + $0x138] sm:$0xff]
  %v8070 = vld [vmem:[%s5 + $0x140] sm:$0xff]
  %v8071 = vld [vmem:[%s5 + $0x148] sm:$0xff]
  %v8072 = vld [vmem:[%s5 + $0x150] sm:$0xff]
  %v8073 = vld [vmem:[%s5 + $0x158] sm:$0xff]
  %v8074 = vld [vmem:[%s5 + $0x160] sm:$0xff]
  %v8075 = vld [vmem:[%s5 + $0x168] sm:$0xff]
  %v8076 = vld [vmem:[%s5 + $0x170] sm:$0xff]
  %v8077 = vld [vmem:[%s5 + $0x178] sm:$0xff]
  %v8078 = vld [vmem:[%s5 + $0x180] sm:$0xff]
  %v8079 = vld [vmem:[%s5 + $0x188] sm:$0xff]
  %v8080 = vld [vmem:[%s5 + $0x190] sm:$0xff]
  %v8081 = vld [vmem:[%s5 + $0x198] sm:$0xff]
  %v8082 = vld [vmem:[%s5 + $0x1a0] sm:$0xff]
  %v8083 = vld [vmem:[%s5 + $0x1a8] sm:$0xff]
  %v8084 = vld [vmem:[%s5 + $0x1b0] sm:$0xff]
  %v8085 = vld [vmem:[%s5 + $0x1b8] sm:$0xff]
  %v8086 = vld [vmem:[%s5 + $0x1c0] sm:$0xff]
  %v8087 = vld [vmem:[%s5 + $0x1c8] sm:$0xff]
  %v8088 = vld [vmem:[%s5 + $0x1d0] sm:$0xff]
  %v8089 = vld [vmem:[%s5 + $0x1d8] sm:$0xff]
  %v8090 = vld [vmem:[%s5 + $0x1e0] sm:$0xff]
  %v8091 = vld [vmem:[%s5 + $0x1e8] sm:$0xff]
  %v8092 = vld [vmem:[%s5 + $0x1f0] sm:$0xff]
  %v8093 = vld [vmem:[%s5 + $0x1f8] sm:$0xff]
  %v8094 = vld [vmem:[%s5 + $0x200] sm:$0xff]
  %v8095 = vld [vmem:[%s5 + $0x208] sm:$0xff]
  %v8096 = vld [vmem:[%s5 + $0x210] sm:$0xff]
  %v8097 = vld [vmem:[%s5 + $0x218] sm:$0xff]
  %v8098 = vld [vmem:[%s5 + $0x220] sm:$0xff]
  %v8099 = vld [vmem:[%s5 + $0x228] sm:$0xff]
  %v8100 = vld [vmem:[%s5 + $0x230] sm:$0xff]
  %v8101 = vld [vmem:[%s5 + $0x238] sm:$0xff]
  %v8102 = vld [vmem:[%s5 + $0x240] sm:$0xff]
  %v8103 = vld [vmem:[%s5 + $0x248] sm:$0xff]
  %v8104 = vld [vmem:[%s5 + $0x250] sm:$0xff]
  %v8105 = vld [vmem:[%s5 + $0x258] sm:$0xff]
  %v8106 = vld [vmem:[%s5 + $0x260] sm:$0xff]
  %v8107 = vld [vmem:[%s5 + $0x268] sm:$0xff]
  %v8108 = vld [vmem:[%s5 + $0x270] sm:$0xff]
  %v8109 = vld [vmem:[%s5 + $0x278] sm:$0xff]
  %v8110 = vld [vmem:[%s5 + $0x280] sm:$0xff]
  %v8111 = vld [vmem:[%s5 + $0x288] sm:$0xff]
  %v8112 = vld [vmem:[%s5 + $0x290] sm:$0xff]
  %v8113 = vld [vmem:[%s5 + $0x298] sm:$0xff]
  %v8114 = vld [vmem:[%s5 + $0x2a0] sm:$0xff]
  %v8115 = vld [vmem:[%s5 + $0x2a8] sm:$0xff]
  %v8116 = vld [vmem:[%s5 + $0x2b0] sm:$0xff]
  %v8117 = vld [vmem:[%s5 + $0x2b8] sm:$0xff]
  %v8118 = vld [vmem:[%s5 + $0x2c0] sm:$0xff]
  %v8119 = vld [vmem:[%s5 + $0x2c8] sm:$0xff]
  %v8120 = vld [vmem:[%s5 + $0x2d0] sm:$0xff]
  %v8121 = vld [vmem:[%s5 + $0x2d8] sm:$0xff]
  %v8122 = vld [vmem:[%s5 + $0x2e0] sm:$0xff]
  %v8123 = vld [vmem:[%s5 + $0x2e8] sm:$0xff]
  %v8124 = vld [vmem:[%s5 + $0x2f0] sm:$0xff]
  %v8125 = vld [vmem:[%s5 + $0x2f8] sm:$0xff]
  %v8126 = vld [vmem:[%s5 + $0x300] sm:$0xff]
  %v8127 = vld [vmem:[%s5 + $0x308] sm:$0xff]
  %v8128 = vld [vmem:[%s5 + $0x310] sm:$0xff]
  %v8129 = vld [vmem:[%s5 + $0x318] sm:$0xff]
  %v8130 = vld [vmem:[%s5 + $0x320] sm:$0xff]
  %v8131 = vld [vmem:[%s5 + $0x328] sm:$0xff]
  %v8132 = vld [vmem:[%s5 + $0x330] sm:$0xff]
  %v8133 = vld [vmem:[%s5 + $0x338] sm:$0xff]
  %v8134 = vld [vmem:[%s5 + $0x340] sm:$0xff]
  %v8135 = vld [vmem:[%s5 + $0x348] sm:$0xff]
  %v8136 = vld [vmem:[%s5 + $0x350] sm:$0xff]
  %v8137 = vld [vmem:[%s5 + $0x358] sm:$0xff]
  %v8138 = vld [vmem:[%s5 + $0x360] sm:$0xff]
  %v8139 = vld [vmem:[%s5 + $0x368] sm:$0xff]
  %v8140 = vld [vmem:[%s5 + $0x370] sm:$0xff]
  %v8141 = vld [vmem:[%s5 + $0x378] sm:$0xff]
  %v8142 = vld [vmem:[%s5 + $0x380] sm:$0xff]
  %v8143 = vld [vmem:[%s5 + $0x388] sm:$0xff]
  %v8144 = vld [vmem:[%s5 + $0x390] sm:$0xff]
  %v8145 = vld [vmem:[%s5 + $0x398] sm:$0xff]
  %v8146 = vld [vmem:[%s5 + $0x3a0] sm:$0xff]
  %v8147 = vld [vmem:[%s5 + $0x3a8] sm:$0xff]
  %v8148 = vld [vmem:[%s5 + $0x3b0] sm:$0xff]
  %v8149 = vld [vmem:[%s5 + $0x3b8] sm:$0xff]
  %v8150 = vld [vmem:[%s5 + $0x3c0] sm:$0xff]
  %v8151 = vld [vmem:[%s5 + $0x3c8] sm:$0xff]
  %v8152 = vld [vmem:[%s5 + $0x3d0] sm:$0xff]
  %v8153 = vld [vmem:[%s5 + $0x3d8] sm:$0xff]
  %v8154 = vld [vmem:[%s5 + $0x3e0] sm:$0xff]
  %v8155 = vld [vmem:[%s5 + $0x3e8] sm:$0xff]
  %v8156 = vld [vmem:[%s5 + $0x3f0] sm:$0xff]
  %v8157 = vld [vmem:[%s5 + $0x3f8] sm:$0xff]
  %v8158 = vld [vmem:[%s5 + $0x400] sm:$0xff]
  %v8159 = vld [vmem:[%s5 + $0x408] sm:$0xff]
  %v8160 = vld [vmem:[%s5 + $0x410] sm:$0xff]
  %v8161 = vld [vmem:[%s5 + $0x418] sm:$0xff]
  %v8162 = vld [vmem:[%s5 + $0x420] sm:$0xff]
  %v8163 = vld [vmem:[%s5 + $0x428] sm:$0xff]
  %v8164 = vld [vmem:[%s5 + $0x430] sm:$0xff]
  %v8165 = vld [vmem:[%s5 + $0x438] sm:$0xff]
  %v8166 = vld [vmem:[%s5 + $0x440] sm:$0xff]
  %v8167 = vld [vmem:[%s5 + $0x448] sm:$0xff]
  %v8168 = vld [vmem:[%s5 + $0x450] sm:$0xff]
  %v8169 = vld [vmem:[%s5 + $0x458] sm:$0xff]
  %v8170 = vld [vmem:[%s5 + $0x460] sm:$0xff]
  %v8171 = vld [vmem:[%s5 + $0x468] sm:$0xff]
  %v8172 = vld [vmem:[%s5 + $0x470] sm:$0xff]
  %v8173 = vld [vmem:[%s5 + $0x478] sm:$0xff]
  %v8174 = vld [vmem:[%s5 + $0x480] sm:$0xff]
  %v8175 = vld [vmem:[%s5 + $0x488] sm:$0xff]
  %v8176 = vld [vmem:[%s5 + $0x490] sm:$0xff]
  %v8177 = vld [vmem:[%s5 + $0x498] sm:$0xff]
  %v8178 = vld [vmem:[%s5 + $0x4a0] sm:$0xff]
  %v8179 = vld [vmem:[%s5 + $0x4a8] sm:$0xff]
  %v8180 = vld [vmem:[%s5 + $0x4b0] sm:$0xff]
  %v8181 = vld [vmem:[%s5 + $0x4b8] sm:$0xff]
  %v8182 = vld [vmem:[%s5 + $0x4c0] sm:$0xff]
  %v8183 = vld [vmem:[%s5 + $0x4c8] sm:$0xff]
  %v8184 = vld [vmem:[%s5 + $0x4d0] sm:$0xff]
  %v8185 = vld [vmem:[%s5 + $0x4d8] sm:$0xff]
  %v8186 = vld [vmem:[%s5 + $0x4e0] sm:$0xff]
  %v8187 = vld [vmem:[%s5 + $0x4e8] sm:$0xff]
  %v8188 = vld [vmem:[%s5 + $0x4f0] sm:$0xff]
  %v8189 = vld [vmem:[%s5 + $0x4f8] sm:$0xff]
  %v8190 = vld [vmem:[%s5 + $0x500] sm:$0x7]
  %v8191 = vld [vmem:[%s5 + $0x508] sm:$0x7]
  %vm8192 = vcmask 23552
  %v8194 = vsel %vm8192, %v7939, 0
  %v8197 = vsel %vm8192, %v7987, 0
  %vm8199 = vcmask 1042432
  %v8201 = vsel %vm8199, %v8190, 0
  %v8204 = vsel %vm8199, %v8191, 0
  %8206 = vmatpush.msra.mxu0 %v8060
  %8207 = vmatpush.msra.mxu0 %v8058
  %8208 = vmatpush.msra.mxu0 %v8056
  %8209 = vmatpush.msra.mxu0 %v8054
  %8210 = vmatpush.msra.mxu0 %v8052
  %8211 = vmatpush.msra.mxu0 %v8050
  %8212 = vmatpush.msra.mxu0 %v8048
  %8213 = vmatpush.msra.mxu0 %v8046
  %8214 = vmatpush.msra.mxu0 %v8044
  %8215 = vmatpush.msra.mxu0 %v8042
  %8216 = vmatpush.msra.mxu0 %v8040
  %8217 = vmatpush.msra.mxu0 %v8038
  %8218 = vmatpush.msra.mxu0 %v8036
  %8219 = vmatpush.msra.mxu0 %v8034
  %8220 = vmatpush.msra.mxu0 %v8032
  %8221 = vmatpush.msra.mxu0 %v8030
  %8222 = vmatmul.f32.gmra.mxu0 %v7934
  %v8223 = vpop.f32.mrf.mxu0
  %v8224 = vadd.f32 0.0, %v8223
  %8225 = vmatmul.f32.gmra.mxu0 %v7982
  %v8226 = vpop.f32.mrf.mxu0
  %v8227 = vadd.f32 0.0, %v8226
  %8228 = vdwg.mxu0
  %8229 = vmatpush.msra.mxu0 %v8092
  %8230 = vmatpush.msra.mxu0 %v8090
  %8231 = vmatpush.msra.mxu0 %v8088
  %8232 = vmatpush.msra.mxu0 %v8086
  %8233 = vmatpush.msra.mxu0 %v8084
  %8234 = vmatpush.msra.mxu0 %v8082
  %8235 = vmatpush.msra.mxu0 %v8080
  %8236 = vmatpush.msra.mxu0 %v8078
  %8237 = vmatpush.msra.mxu0 %v8076
  %8238 = vmatpush.msra.mxu0 %v8074
  %8239 = vmatpush.msra.mxu0 %v8072
  %8240 = vmatpush.msra.mxu0 %v8070
  %8241 = vmatpush.msra.mxu0 %v8068
  %8242 = vmatpush.msra.mxu0 %v8066
  %8243 = vmatpush.msra.mxu0 %v8064
  %8244 = vmatpush.msra.mxu0 %v8062
  %8245 = vmatmul.f32.gmra.mxu0 %v7935
  %v8246 = vpop.f32.mrf.mxu0
  %v8247 = vadd.f32 %v8224, %v8246
  %8248 = vmatmul.f32.gmra.mxu0 %v7983
  %v8249 = vpop.f32.mrf.mxu0
  %v8250 = vadd.f32 %v8227, %v8249
  %8251 = vdwg.mxu0
  %8252 = vmatpush.msra.mxu0 %v8124
  %8253 = vmatpush.msra.mxu0 %v8122
  %8254 = vmatpush.msra.mxu0 %v8120
  %8255 = vmatpush.msra.mxu0 %v8118
  %8256 = vmatpush.msra.mxu0 %v8116
  %8257 = vmatpush.msra.mxu0 %v8114
  %8258 = vmatpush.msra.mxu0 %v8112
  %8259 = vmatpush.msra.mxu0 %v8110
  %8260 = vmatpush.msra.mxu0 %v8108
  %8261 = vmatpush.msra.mxu0 %v8106
  %8262 = vmatpush.msra.mxu0 %v8104
  %8263 = vmatpush.msra.mxu0 %v8102
  %8264 = vmatpush.msra.mxu0 %v8100
  %8265 = vmatpush.msra.mxu0 %v8098
  %8266 = vmatpush.msra.mxu0 %v8096
  %8267 = vmatpush.msra.mxu0 %v8094
  %8268 = vmatmul.f32.gmra.mxu0 %v7936
  %v8269 = vpop.f32.mrf.mxu0
  %v8270 = vadd.f32 %v8247, %v8269
  %8271 = vmatmul.f32.gmra.mxu0 %v7984
  %v8272 = vpop.f32.mrf.mxu0
  %v8273 = vadd.f32 %v8250, %v8272
  %8274 = vdwg.mxu0
  %8275 = vmatpush.msra.mxu0 %v8156
  %8276 = vmatpush.msra.mxu0 %v8154
  %8277 = vmatpush.msra.mxu0 %v8152
  %8278 = vmatpush.msra.mxu0 %v8150
  %8279 = vmatpush.msra.mxu0 %v8148
  %8280 = vmatpush.msra.mxu0 %v8146
  %8281 = vmatpush.msra.mxu0 %v8144
  %8282 = vmatpush.msra.mxu0 %v8142
  %8283 = vmatpush.msra.mxu0 %v8140
  %8284 = vmatpush.msra.mxu0 %v8138
  %8285 = vmatpush.msra.mxu0 %v8136
  %8286 = vmatpush.msra.mxu0 %v8134
  %8287 = vmatpush.msra.mxu0 %v8132
  %8288 = vmatpush.msra.mxu0 %v8130
  %8289 = vmatpush.msra.mxu0 %v8128
  %8290 = vmatpush.msra.mxu0 %v8126
  %8291 = vmatmul.f32.gmra.mxu0 %v7937
  %v8292 = vpop.f32.mrf.mxu0
  %v8293 = vadd.f32 %v8270, %v8292
  %8294 = vmatmul.f32.gmra.mxu0 %v7985
  %v8295 = vpop.f32.mrf.mxu0
  %v8296 = vadd.f32 %v8273, %v8295
  %8297 = vdwg.mxu0
  %8298 = vmatpush.msra.mxu0 %v8188
  %8299 = vmatpush.msra.mxu0 %v8186
  %8300 = vmatpush.msra.mxu0 %v8184
  %8301 = vmatpush.msra.mxu0 %v8182
  %8302 = vmatpush.msra.mxu0 %v8180
  %8303 = vmatpush.msra.mxu0 %v8178
  %8304 = vmatpush.msra.mxu0 %v8176
  %8305 = vmatpush.msra.mxu0 %v8174
  %8306 = vmatpush.msra.mxu0 %v8172
  %8307 = vmatpush.msra.mxu0 %v8170
  %8308 = vmatpush.msra.mxu0 %v8168
  %8309 = vmatpush.msra.mxu0 %v8166
  %8310 = vmatpush.msra.mxu0 %v8164
  %8311 = vmatpush.msra.mxu0 %v8162
  %8312 = vmatpush.msra.mxu0 %v8160
  %8313 = vmatpush.msra.mxu0 %v8158
  %8314 = vmatmul.f32.gmra.mxu0 %v7938
  %v8315 = vpop.f32.mrf.mxu0
  %v8316 = vadd.f32 %v8293, %v8315
  %8317 = vmatmul.f32.gmra.mxu0 %v7986
  %v8318 = vpop.f32.mrf.mxu0
  %v8319 = vadd.f32 %v8296, %v8318
  %8320 = vdwg.mxu0
  %8321 = vmatpush.msra.mxu0 0.0
  %8322 = vmatpush.msra.mxu0 0.0
  %8323 = vmatpush.msra.mxu0 0.0
  %8324 = vmatpush.msra.mxu0 0.0
  %8325 = vmatpush.msra.mxu0 0.0
  %8326 = vmatpush.msra.mxu0 0.0
  %8327 = vmatpush.msra.mxu0 0.0
  %8328 = vmatpush.msra.mxu0 0.0
  %8329 = vmatpush.msra.mxu0 0.0
  %8330 = vmatpush.msra.mxu0 0.0
  %8331 = vmatpush.msra.mxu0 0.0
  %8332 = vmatpush.msra.mxu0 0.0
  %8333 = vmatpush.msra.mxu0 0.0
  %8334 = vmatpush.msra.mxu0 0.0
  %8335 = vmatpush.msra.mxu0 0.0
  %8336 = vmatpush.msra.mxu0 %v8201
  %8337 = vmatmul.f32.gmra.mxu0 %v8194
  %v8338 = vpop.f32.mrf.mxu0
  %v8339 = vadd.f32 %v8316, %v8338
  %8340 = vmatmul.f32.gmra.mxu0 %v8197
  %v8341 = vpop.f32.mrf.mxu0
  %v8342 = vadd.f32 %v8319, %v8341
  %8343 = vdwg.mxu0
  %8344 = vmatpush.msra.mxu0 %v8061
  %8345 = vmatpush.msra.mxu0 %v8059
  %8346 = vmatpush.msra.mxu0 %v8057
  %8347 = vmatpush.msra.mxu0 %v8055
  %8348 = vmatpush.msra.mxu0 %v8053
  %8349 = vmatpush.msra.mxu0 %v8051
  %8350 = vmatpush.msra.mxu0 %v8049
  %8351 = vmatpush.msra.mxu0 %v8047
  %8352 = vmatpush.msra.mxu0 %v8045
  %8353 = vmatpush.msra.mxu0 %v8043
  %8354 = vmatpush.msra.mxu0 %v8041
  %8355 = vmatpush.msra.mxu0 %v8039
  %8356 = vmatpush.msra.mxu0 %v8037
  %8357 = vmatpush.msra.mxu0 %v8035
  %8358 = vmatpush.msra.mxu0 %v8033
  %8359 = vmatpush.msra.mxu0 %v8031
  %8360 = vmatmul.f32.gmra.mxu0 %v7934
  %v8361 = vpop.f32.mrf.mxu0
  %v8362 = vadd.f32 0.0, %v8361
  %8363 = vmatmul.f32.gmra.mxu0 %v7982
  %v8364 = vpop.f32.mrf.mxu0
  %v8365 = vadd.f32 0.0, %v8364
  %8366 = vdwg.mxu0
  %8367 = vmatpush.msra.mxu0 %v8093
  %8368 = vmatpush.msra.mxu0 %v8091
  %8369 = vmatpush.msra.mxu0 %v8089
  %8370 = vmatpush.msra.mxu0 %v8087
  %8371 = vmatpush.msra.mxu0 %v8085
  %8372 = vmatpush.msra.mxu0 %v8083
  %8373 = vmatpush.msra.mxu0 %v8081
  %8374 = vmatpush.msra.mxu0 %v8079
  %8375 = vmatpush.msra.mxu0 %v8077
  %8376 = vmatpush.msra.mxu0 %v8075
  %8377 = vmatpush.msra.mxu0 %v8073
  %8378 = vmatpush.msra.mxu0 %v8071
  %8379 = vmatpush.msra.mxu0 %v8069
  %8380 = vmatpush.msra.mxu0 %v8067
  %8381 = vmatpush.msra.mxu0 %v8065
  %8382 = vmatpush.msra.mxu0 %v8063
  %8383 = vmatmul.f32.gmra.mxu0 %v7935
  %v8384 = vpop.f32.mrf.mxu0
  %v8385 = vadd.f32 %v8362, %v8384
  %8386 = vmatmul.f32.gmra.mxu0 %v7983
  %v8387 = vpop.f32.mrf.mxu0
  %v8388 = vadd.f32 %v8365, %v8387
  %8389 = vdwg.mxu0
  %8390 = vmatpush.msra.mxu0 %v8125
  %8391 = vmatpush.msra.mxu0 %v8123
  %8392 = vmatpush.msra.mxu0 %v8121
  %8393 = vmatpush.msra.mxu0 %v8119
  %8394 = vmatpush.msra.mxu0 %v8117
  %8395 = vmatpush.msra.mxu0 %v8115
  %8396 = vmatpush.msra.mxu0 %v8113
  %8397 = vmatpush.msra.mxu0 %v8111
  %8398 = vmatpush.msra.mxu0 %v8109
  %8399 = vmatpush.msra.mxu0 %v8107
  %8400 = vmatpush.msra.mxu0 %v8105
  %8401 = vmatpush.msra.mxu0 %v8103
  %8402 = vmatpush.msra.mxu0 %v8101
  %8403 = vmatpush.msra.mxu0 %v8099
  %8404 = vmatpush.msra.mxu0 %v8097
  %8405 = vmatpush.msra.mxu0 %v8095
  %8406 = vmatmul.f32.gmra.mxu0 %v7936
  %v8407 = vpop.f32.mrf.mxu0
  %v8408 = vadd.f32 %v8385, %v8407
  %8409 = vmatmul.f32.gmra.mxu0 %v7984
  %v8410 = vpop.f32.mrf.mxu0
  %v8411 = vadd.f32 %v8388, %v8410
  %8412 = vdwg.mxu0
  %8413 = vmatpush.msra.mxu0 %v8157
  %8414 = vmatpush.msra.mxu0 %v8155
  %8415 = vmatpush.msra.mxu0 %v8153
  %8416 = vmatpush.msra.mxu0 %v8151
  %8417 = vmatpush.msra.mxu0 %v8149
  %8418 = vmatpush.msra.mxu0 %v8147
  %8419 = vmatpush.msra.mxu0 %v8145
  %8420 = vmatpush.msra.mxu0 %v8143
  %8421 = vmatpush.msra.mxu0 %v8141
  %8422 = vmatpush.msra.mxu0 %v8139
  %8423 = vmatpush.msra.mxu0 %v8137
  %8424 = vmatpush.msra.mxu0 %v8135
  %8425 = vmatpush.msra.mxu0 %v8133
  %8426 = vmatpush.msra.mxu0 %v8131
  %8427 = vmatpush.msra.mxu0 %v8129
  %8428 = vmatpush.msra.mxu0 %v8127
  %8429 = vmatmul.f32.gmra.mxu0 %v7937
  %v8430 = vpop.f32.mrf.mxu0
  %v8431 = vadd.f32 %v8408, %v8430
  %8432 = vmatmul.f32.gmra.mxu0 %v7985
  %v8433 = vpop.f32.mrf.mxu0
  %v8434 = vadd.f32 %v8411, %v8433
  %8435 = vdwg.mxu0
  %8436 = vmatpush.msra.mxu0 %v8189
  %8437 = vmatpush.msra.mxu0 %v8187
  %8438 = vmatpush.msra.mxu0 %v8185
  %8439 = vmatpush.msra.mxu0 %v8183
  %8440 = vmatpush.msra.mxu0 %v8181
  %8441 = vmatpush.msra.mxu0 %v8179
  %8442 = vmatpush.msra.mxu0 %v8177
  %8443 = vmatpush.msra.mxu0 %v8175
  %8444 = vmatpush.msra.mxu0 %v8173
  %8445 = vmatpush.msra.mxu0 %v8171
  %8446 = vmatpush.msra.mxu0 %v8169
  %8447 = vmatpush.msra.mxu0 %v8167
  %8448 = vmatpush.msra.mxu0 %v8165
  %8449 = vmatpush.msra.mxu0 %v8163
  %8450 = vmatpush.msra.mxu0 %v8161
  %8451 = vmatpush.msra.mxu0 %v8159
  %8452 = vmatmul.f32.gmra.mxu0 %v7938
  %v8453 = vpop.f32.mrf.mxu0
  %v8454 = vadd.f32 %v8431, %v8453
  %8455 = vmatmul.f32.gmra.mxu0 %v7986
  %v8456 = vpop.f32.mrf.mxu0
  %v8457 = vadd.f32 %v8434, %v8456
  %8458 = vdwg.mxu0
  %8459 = vmatpush.msra.mxu0 0.0
  %8460 = vmatpush.msra.mxu0 0.0
  %8461 = vmatpush.msra.mxu0 0.0
  %8462 = vmatpush.msra.mxu0 0.0
  %8463 = vmatpush.msra.mxu0 0.0
  %8464 = vmatpush.msra.mxu0 0.0
  %8465 = vmatpush.msra.mxu0 0.0
  %8466 = vmatpush.msra.mxu0 0.0
  %8467 = vmatpush.msra.mxu0 0.0
  %8468 = vmatpush.msra.mxu0 0.0
  %8469 = vmatpush.msra.mxu0 0.0
  %8470 = vmatpush.msra.mxu0 0.0
  %8471 = vmatpush.msra.mxu0 0.0
  %8472 = vmatpush.msra.mxu0 0.0
  %8473 = vmatpush.msra.mxu0 0.0
  %8474 = vmatpush.msra.mxu0 %v8204
  %8475 = vmatmul.f32.gmra.mxu0 %v8194
  %v8476 = vpop.f32.mrf.mxu0
  %v8477 = vadd.f32 %v8454, %v8476
  %8478 = vmatmul.f32.gmra.mxu0 %v8197
  %v8479 = vpop.f32.mrf.mxu0
  %v8480 = vadd.f32 %v8457, %v8479
  %8481 = vdwg.mxu0
  %v8483 = vsel %vm8192, %v7945, 0
  %v8486 = vsel %vm8192, %v7993, 0
  %8488 = vmatpush.msra.mxu0 %v8060
  %8489 = vmatpush.msra.mxu0 %v8058
  %8490 = vmatpush.msra.mxu0 %v8056
  %8491 = vmatpush.msra.mxu0 %v8054
  %8492 = vmatpush.msra.mxu0 %v8052
  %8493 = vmatpush.msra.mxu0 %v8050
  %8494 = vmatpush.msra.mxu0 %v8048
  %8495 = vmatpush.msra.mxu0 %v8046
  %8496 = vmatpush.msra.mxu0 %v8044
  %8497 = vmatpush.msra.mxu0 %v8042
  %8498 = vmatpush.msra.mxu0 %v8040
  %8499 = vmatpush.msra.mxu0 %v8038
  %8500 = vmatpush.msra.mxu0 %v8036
  %8501 = vmatpush.msra.mxu0 %v8034
  %8502 = vmatpush.msra.mxu0 %v8032
  %8503 = vmatpush.msra.mxu0 %v8030
  %8504 = vmatmul.f32.gmra.mxu0 %v7940
  %v8505 = vpop.f32.mrf.mxu0
  %v8506 = vadd.f32 0.0, %v8505
  %8507 = vmatmul.f32.gmra.mxu0 %v7988
  %v8508 = vpop.f32.mrf.mxu0
  %v8509 = vadd.f32 0.0, %v8508
  %8510 = vdwg.mxu0
  %8511 = vmatpush.msra.mxu0 %v8092
  %8512 = vmatpush.msra.mxu0 %v8090
  %8513 = vmatpush.msra.mxu0 %v8088
  %8514 = vmatpush.msra.mxu0 %v8086
  %8515 = vmatpush.msra.mxu0 %v8084
  %8516 = vmatpush.msra.mxu0 %v8082
  %8517 = vmatpush.msra.mxu0 %v8080
  %8518 = vmatpush.msra.mxu0 %v8078
  %8519 = vmatpush.msra.mxu0 %v8076
  %8520 = vmatpush.msra.mxu0 %v8074
  %8521 = vmatpush.msra.mxu0 %v8072
  %8522 = vmatpush.msra.mxu0 %v8070
  %8523 = vmatpush.msra.mxu0 %v8068
  %8524 = vmatpush.msra.mxu0 %v8066
  %8525 = vmatpush.msra.mxu0 %v8064
  %8526 = vmatpush.msra.mxu0 %v8062
  %8527 = vmatmul.f32.gmra.mxu0 %v7941
  %v8528 = vpop.f32.mrf.mxu0
  %v8529 = vadd.f32 %v8506, %v8528
  %8530 = vmatmul.f32.gmra.mxu0 %v7989
  %v8531 = vpop.f32.mrf.mxu0
  %v8532 = vadd.f32 %v8509, %v8531
  %8533 = vdwg.mxu0
  %8534 = vmatpush.msra.mxu0 %v8124
  %8535 = vmatpush.msra.mxu0 %v8122
  %8536 = vmatpush.msra.mxu0 %v8120
  %8537 = vmatpush.msra.mxu0 %v8118
  %8538 = vmatpush.msra.mxu0 %v8116
  %8539 = vmatpush.msra.mxu0 %v8114
  %8540 = vmatpush.msra.mxu0 %v8112
  %8541 = vmatpush.msra.mxu0 %v8110
  %8542 = vmatpush.msra.mxu0 %v8108
  %8543 = vmatpush.msra.mxu0 %v8106
  %8544 = vmatpush.msra.mxu0 %v8104
  %8545 = vmatpush.msra.mxu0 %v8102
  %8546 = vmatpush.msra.mxu0 %v8100
  %8547 = vmatpush.msra.mxu0 %v8098
  %8548 = vmatpush.msra.mxu0 %v8096
  %8549 = vmatpush.msra.mxu0 %v8094
  %8550 = vmatmul.f32.gmra.mxu0 %v7942
  %v8551 = vpop.f32.mrf.mxu0
  %v8552 = vadd.f32 %v8529, %v8551
  %8553 = vmatmul.f32.gmra.mxu0 %v7990
  %v8554 = vpop.f32.mrf.mxu0
  %v8555 = vadd.f32 %v8532, %v8554
  %8556 = vdwg.mxu0
  %8557 = vmatpush.msra.mxu0 %v8156
  %8558 = vmatpush.msra.mxu0 %v8154
  %8559 = vmatpush.msra.mxu0 %v8152
  %8560 = vmatpush.msra.mxu0 %v8150
  %8561 = vmatpush.msra.mxu0 %v8148
  %8562 = vmatpush.msra.mxu0 %v8146
  %8563 = vmatpush.msra.mxu0 %v8144
  %8564 = vmatpush.msra.mxu0 %v8142
  %8565 = vmatpush.msra.mxu0 %v8140
  %8566 = vmatpush.msra.mxu0 %v8138
  %8567 = vmatpush.msra.mxu0 %v8136
  %8568 = vmatpush.msra.mxu0 %v8134
  %8569 = vmatpush.msra.mxu0 %v8132
  %8570 = vmatpush.msra.mxu0 %v8130
  %8571 = vmatpush.msra.mxu0 %v8128
  %8572 = vmatpush.msra.mxu0 %v8126
  %8573 = vmatmul.f32.gmra.mxu0 %v7943
  %v8574 = vpop.f32.mrf.mxu0
  %v8575 = vadd.f32 %v8552, %v8574
  %8576 = vmatmul.f32.gmra.mxu0 %v7991
  %v8577 = vpop.f32.mrf.mxu0
  %v8578 = vadd.f32 %v8555, %v8577
  %8579 = vdwg.mxu0
  %8580 = vmatpush.msra.mxu0 %v8188
  %8581 = vmatpush.msra.mxu0 %v8186
  %8582 = vmatpush.msra.mxu0 %v8184
  %8583 = vmatpush.msra.mxu0 %v8182
  %8584 = vmatpush.msra.mxu0 %v8180
  %8585 = vmatpush.msra.mxu0 %v8178
  %8586 = vmatpush.msra.mxu0 %v8176
  %8587 = vmatpush.msra.mxu0 %v8174
  %8588 = vmatpush.msra.mxu0 %v8172
  %8589 = vmatpush.msra.mxu0 %v8170
  %8590 = vmatpush.msra.mxu0 %v8168
  %8591 = vmatpush.msra.mxu0 %v8166
  %8592 = vmatpush.msra.mxu0 %v8164
  %8593 = vmatpush.msra.mxu0 %v8162
  %8594 = vmatpush.msra.mxu0 %v8160
  %8595 = vmatpush.msra.mxu0 %v8158
  %8596 = vmatmul.f32.gmra.mxu0 %v7944
  %v8597 = vpop.f32.mrf.mxu0
  %v8598 = vadd.f32 %v8575, %v8597
  %8599 = vmatmul.f32.gmra.mxu0 %v7992
  %v8600 = vpop.f32.mrf.mxu0
  %v8601 = vadd.f32 %v8578, %v8600
  %8602 = vdwg.mxu0
  %8603 = vmatpush.msra.mxu0 0.0
  %8604 = vmatpush.msra.mxu0 0.0
  %8605 = vmatpush.msra.mxu0 0.0
  %8606 = vmatpush.msra.mxu0 0.0
  %8607 = vmatpush.msra.mxu0 0.0
  %8608 = vmatpush.msra.mxu0 0.0
  %8609 = vmatpush.msra.mxu0 0.0
  %8610 = vmatpush.msra.mxu0 0.0
  %8611 = vmatpush.msra.mxu0 0.0
  %8612 = vmatpush.msra.mxu0 0.0
  %8613 = vmatpush.msra.mxu0 0.0
  %8614 = vmatpush.msra.mxu0 0.0
  %8615 = vmatpush.msra.mxu0 0.0
  %8616 = vmatpush.msra.mxu0 0.0
  %8617 = vmatpush.msra.mxu0 0.0
  %8618 = vmatpush.msra.mxu0 %v8201
  %8619 = vmatmul.f32.gmra.mxu0 %v8483
  %v8620 = vpop.f32.mrf.mxu0
  %v8621 = vadd.f32 %v8598, %v8620
  %8622 = vmatmul.f32.gmra.mxu0 %v8486
  %v8623 = vpop.f32.mrf.mxu0
  %v8624 = vadd.f32 %v8601, %v8623
  %8625 = vdwg.mxu0
  %8626 = vmatpush.msra.mxu0 %v8061
  %8627 = vmatpush.msra.mxu0 %v8059
  %8628 = vmatpush.msra.mxu0 %v8057
  %8629 = vmatpush.msra.mxu0 %v8055
  %8630 = vmatpush.msra.mxu0 %v8053
  %8631 = vmatpush.msra.mxu0 %v8051
  %8632 = vmatpush.msra.mxu0 %v8049
  %8633 = vmatpush.msra.mxu0 %v8047
  %8634 = vmatpush.msra.mxu0 %v8045
  %8635 = vmatpush.msra.mxu0 %v8043
  %8636 = vmatpush.msra.mxu0 %v8041
  %8637 = vmatpush.msra.mxu0 %v8039
  %8638 = vmatpush.msra.mxu0 %v8037
  %8639 = vmatpush.msra.mxu0 %v8035
  %8640 = vmatpush.msra.mxu0 %v8033
  %8641 = vmatpush.msra.mxu0 %v8031
  %8642 = vmatmul.f32.gmra.mxu0 %v7940
  %v8643 = vpop.f32.mrf.mxu0
  %v8644 = vadd.f32 0.0, %v8643
  %8645 = vmatmul.f32.gmra.mxu0 %v7988
  %v8646 = vpop.f32.mrf.mxu0
  %v8647 = vadd.f32 0.0, %v8646
  %8648 = vdwg.mxu0
  %8649 = vmatpush.msra.mxu0 %v8093
  %8650 = vmatpush.msra.mxu0 %v8091
  %8651 = vmatpush.msra.mxu0 %v8089
  %8652 = vmatpush.msra.mxu0 %v8087
  %8653 = vmatpush.msra.mxu0 %v8085
  %8654 = vmatpush.msra.mxu0 %v8083
  %8655 = vmatpush.msra.mxu0 %v8081
  %8656 = vmatpush.msra.mxu0 %v8079
  %8657 = vmatpush.msra.mxu0 %v8077
  %8658 = vmatpush.msra.mxu0 %v8075
  %8659 = vmatpush.msra.mxu0 %v8073
  %8660 = vmatpush.msra.mxu0 %v8071
  %8661 = vmatpush.msra.mxu0 %v8069
  %8662 = vmatpush.msra.mxu0 %v8067
  %8663 = vmatpush.msra.mxu0 %v8065
  %8664 = vmatpush.msra.mxu0 %v8063
  %8665 = vmatmul.f32.gmra.mxu0 %v7941
  %v8666 = vpop.f32.mrf.mxu0
  %v8667 = vadd.f32 %v8644, %v8666
  %8668 = vmatmul.f32.gmra.mxu0 %v7989
  %v8669 = vpop.f32.mrf.mxu0
  %v8670 = vadd.f32 %v8647, %v8669
  %8671 = vdwg.mxu0
  %8672 = vmatpush.msra.mxu0 %v8125
  %8673 = vmatpush.msra.mxu0 %v8123
  %8674 = vmatpush.msra.mxu0 %v8121
  %8675 = vmatpush.msra.mxu0 %v8119
  %8676 = vmatpush.msra.mxu0 %v8117
  %8677 = vmatpush.msra.mxu0 %v8115
  %8678 = vmatpush.msra.mxu0 %v8113
  %8679 = vmatpush.msra.mxu0 %v8111
  %8680 = vmatpush.msra.mxu0 %v8109
  %8681 = vmatpush.msra.mxu0 %v8107
  %8682 = vmatpush.msra.mxu0 %v8105
  %8683 = vmatpush.msra.mxu0 %v8103
  %8684 = vmatpush.msra.mxu0 %v8101
  %8685 = vmatpush.msra.mxu0 %v8099
  %8686 = vmatpush.msra.mxu0 %v8097
  %8687 = vmatpush.msra.mxu0 %v8095
  %8688 = vmatmul.f32.gmra.mxu0 %v7942
  %v8689 = vpop.f32.mrf.mxu0
  %v8690 = vadd.f32 %v8667, %v8689
  %8691 = vmatmul.f32.gmra.mxu0 %v7990
  %v8692 = vpop.f32.mrf.mxu0
  %v8693 = vadd.f32 %v8670, %v8692
  %8694 = vdwg.mxu0
  %8695 = vmatpush.msra.mxu0 %v8157
  %8696 = vmatpush.msra.mxu0 %v8155
  %8697 = vmatpush.msra.mxu0 %v8153
  %8698 = vmatpush.msra.mxu0 %v8151
  %8699 = vmatpush.msra.mxu0 %v8149
  %8700 = vmatpush.msra.mxu0 %v8147
  %8701 = vmatpush.msra.mxu0 %v8145
  %8702 = vmatpush.msra.mxu0 %v8143
  %8703 = vmatpush.msra.mxu0 %v8141
  %8704 = vmatpush.msra.mxu0 %v8139
  %8705 = vmatpush.msra.mxu0 %v8137
  %8706 = vmatpush.msra.mxu0 %v8135
  %8707 = vmatpush.msra.mxu0 %v8133
  %8708 = vmatpush.msra.mxu0 %v8131
  %8709 = vmatpush.msra.mxu0 %v8129
  %8710 = vmatpush.msra.mxu0 %v8127
  %8711 = vmatmul.f32.gmra.mxu0 %v7943
  %v8712 = vpop.f32.mrf.mxu0
  %v8713 = vadd.f32 %v8690, %v8712
  %8714 = vmatmul.f32.gmra.mxu0 %v7991
  %v8715 = vpop.f32.mrf.mxu0
  %v8716 = vadd.f32 %v8693, %v8715
  %8717 = vdwg.mxu0
  %8718 = vmatpush.msra.mxu0 %v8189
  %8719 = vmatpush.msra.mxu0 %v8187
  %8720 = vmatpush.msra.mxu0 %v8185
  %8721 = vmatpush.msra.mxu0 %v8183
  %8722 = vmatpush.msra.mxu0 %v8181
  %8723 = vmatpush.msra.mxu0 %v8179
  %8724 = vmatpush.msra.mxu0 %v8177
  %8725 = vmatpush.msra.mxu0 %v8175
  %8726 = vmatpush.msra.mxu0 %v8173
  %8727 = vmatpush.msra.mxu0 %v8171
  %8728 = vmatpush.msra.mxu0 %v8169
  %8729 = vmatpush.msra.mxu0 %v8167
  %8730 = vmatpush.msra.mxu0 %v8165
  %8731 = vmatpush.msra.mxu0 %v8163
  %8732 = vmatpush.msra.mxu0 %v8161
  %8733 = vmatpush.msra.mxu0 %v8159
  %8734 = vmatmul.f32.gmra.mxu0 %v7944
  %v8735 = vpop.f32.mrf.mxu0
  %v8736 = vadd.f32 %v8713, %v8735
  %8737 = vmatmul.f32.gmra.mxu0 %v7992
  %v8738 = vpop.f32.mrf.mxu0
  %v8739 = vadd.f32 %v8716, %v8738
  %8740 = vdwg.mxu0
  %8741 = vmatpush.msra.mxu0 0.0
  %8742 = vmatpush.msra.mxu0 0.0
  %8743 = vmatpush.msra.mxu0 0.0
  %8744 = vmatpush.msra.mxu0 0.0
  %8745 = vmatpush.msra.mxu0 0.0
  %8746 = vmatpush.msra.mxu0 0.0
  %8747 = vmatpush.msra.mxu0 0.0
  %8748 = vmatpush.msra.mxu0 0.0
  %8749 = vmatpush.msra.mxu0 0.0
  %8750 = vmatpush.msra.mxu0 0.0
  %8751 = vmatpush.msra.mxu0 0.0
  %8752 = vmatpush.msra.mxu0 0.0
  %8753 = vmatpush.msra.mxu0 0.0
  %8754 = vmatpush.msra.mxu0 0.0
  %8755 = vmatpush.msra.mxu0 0.0
  %8756 = vmatpush.msra.mxu0 %v8204
  %8757 = vmatmul.f32.gmra.mxu0 %v8483
  %v8758 = vpop.f32.mrf.mxu0
  %v8759 = vadd.f32 %v8736, %v8758
  %8760 = vmatmul.f32.gmra.mxu0 %v8486
  %v8761 = vpop.f32.mrf.mxu0
  %v8762 = vadd.f32 %v8739, %v8761
  %8763 = vdwg.mxu0
  %v8765 = vsel %vm8192, %v7951, 0
  %v8768 = vsel %vm8192, %v7999, 0
  %8770 = vmatpush.msra.mxu0 %v8060
  %8771 = vmatpush.msra.mxu0 %v8058
  %8772 = vmatpush.msra.mxu0 %v8056
  %8773 = vmatpush.msra.mxu0 %v8054
  %8774 = vmatpush.msra.mxu0 %v8052
  %8775 = vmatpush.msra.mxu0 %v8050
  %8776 = vmatpush.msra.mxu0 %v8048
  %8777 = vmatpush.msra.mxu0 %v8046
  %8778 = vmatpush.msra.mxu0 %v8044
  %8779 = vmatpush.msra.mxu0 %v8042
  %8780 = vmatpush.msra.mxu0 %v8040
  %8781 = vmatpush.msra.mxu0 %v8038
  %8782 = vmatpush.msra.mxu0 %v8036
  %8783 = vmatpush.msra.mxu0 %v8034
  %8784 = vmatpush.msra.mxu0 %v8032
  %8785 = vmatpush.msra.mxu0 %v8030
  %8786 = vmatmul.f32.gmra.mxu0 %v7946
  %v8787 = vpop.f32.mrf.mxu0
  %v8788 = vadd.f32 0.0, %v8787
  %8789 = vmatmul.f32.gmra.mxu0 %v7994
  %v8790 = vpop.f32.mrf.mxu0
  %v8791 = vadd.f32 0.0, %v8790
  %8792 = vdwg.mxu0
  %8793 = vmatpush.msra.mxu0 %v8092
  %8794 = vmatpush.msra.mxu0 %v8090
  %8795 = vmatpush.msra.mxu0 %v8088
  %8796 = vmatpush.msra.mxu0 %v8086
  %8797 = vmatpush.msra.mxu0 %v8084
  %8798 = vmatpush.msra.mxu0 %v8082
  %8799 = vmatpush.msra.mxu0 %v8080
  %8800 = vmatpush.msra.mxu0 %v8078
  %8801 = vmatpush.msra.mxu0 %v8076
  %8802 = vmatpush.msra.mxu0 %v8074
  %8803 = vmatpush.msra.mxu0 %v8072
  %8804 = vmatpush.msra.mxu0 %v8070
  %8805 = vmatpush.msra.mxu0 %v8068
  %8806 = vmatpush.msra.mxu0 %v8066
  %8807 = vmatpush.msra.mxu0 %v8064
  %8808 = vmatpush.msra.mxu0 %v8062
  %8809 = vmatmul.f32.gmra.mxu0 %v7947
  %v8810 = vpop.f32.mrf.mxu0
  %v8811 = vadd.f32 %v8788, %v8810
  %8812 = vmatmul.f32.gmra.mxu0 %v7995
  %v8813 = vpop.f32.mrf.mxu0
  %v8814 = vadd.f32 %v8791, %v8813
  %8815 = vdwg.mxu0
  %8816 = vmatpush.msra.mxu0 %v8124
  %8817 = vmatpush.msra.mxu0 %v8122
  %8818 = vmatpush.msra.mxu0 %v8120
  %8819 = vmatpush.msra.mxu0 %v8118
  %8820 = vmatpush.msra.mxu0 %v8116
  %8821 = vmatpush.msra.mxu0 %v8114
  %8822 = vmatpush.msra.mxu0 %v8112
  %8823 = vmatpush.msra.mxu0 %v8110
  %8824 = vmatpush.msra.mxu0 %v8108
  %8825 = vmatpush.msra.mxu0 %v8106
  %8826 = vmatpush.msra.mxu0 %v8104
  %8827 = vmatpush.msra.mxu0 %v8102
  %8828 = vmatpush.msra.mxu0 %v8100
  %8829 = vmatpush.msra.mxu0 %v8098
  %8830 = vmatpush.msra.mxu0 %v8096
  %8831 = vmatpush.msra.mxu0 %v8094
  %8832 = vmatmul.f32.gmra.mxu0 %v7948
  %v8833 = vpop.f32.mrf.mxu0
  %v8834 = vadd.f32 %v8811, %v8833
  %8835 = vmatmul.f32.gmra.mxu0 %v7996
  %v8836 = vpop.f32.mrf.mxu0
  %v8837 = vadd.f32 %v8814, %v8836
  %8838 = vdwg.mxu0
  %8839 = vmatpush.msra.mxu0 %v8156
  %8840 = vmatpush.msra.mxu0 %v8154
  %8841 = vmatpush.msra.mxu0 %v8152
  %8842 = vmatpush.msra.mxu0 %v8150
  %8843 = vmatpush.msra.mxu0 %v8148
  %8844 = vmatpush.msra.mxu0 %v8146
  %8845 = vmatpush.msra.mxu0 %v8144
  %8846 = vmatpush.msra.mxu0 %v8142
  %8847 = vmatpush.msra.mxu0 %v8140
  %8848 = vmatpush.msra.mxu0 %v8138
  %8849 = vmatpush.msra.mxu0 %v8136
  %8850 = vmatpush.msra.mxu0 %v8134
  %8851 = vmatpush.msra.mxu0 %v8132
  %8852 = vmatpush.msra.mxu0 %v8130
  %8853 = vmatpush.msra.mxu0 %v8128
  %8854 = vmatpush.msra.mxu0 %v8126
  %8855 = vmatmul.f32.gmra.mxu0 %v7949
  %v8856 = vpop.f32.mrf.mxu0
  %v8857 = vadd.f32 %v8834, %v8856
  %8858 = vmatmul.f32.gmra.mxu0 %v7997
  %v8859 = vpop.f32.mrf.mxu0
  %v8860 = vadd.f32 %v8837, %v8859
  %8861 = vdwg.mxu0
  %8862 = vmatpush.msra.mxu0 %v8188
  %8863 = vmatpush.msra.mxu0 %v8186
  %8864 = vmatpush.msra.mxu0 %v8184
  %8865 = vmatpush.msra.mxu0 %v8182
  %8866 = vmatpush.msra.mxu0 %v8180
  %8867 = vmatpush.msra.mxu0 %v8178
  %8868 = vmatpush.msra.mxu0 %v8176
  %8869 = vmatpush.msra.mxu0 %v8174
  %8870 = vmatpush.msra.mxu0 %v8172
  %8871 = vmatpush.msra.mxu0 %v8170
  %8872 = vmatpush.msra.mxu0 %v8168
  %8873 = vmatpush.msra.mxu0 %v8166
  %8874 = vmatpush.msra.mxu0 %v8164
  %8875 = vmatpush.msra.mxu0 %v8162
  %8876 = vmatpush.msra.mxu0 %v8160
  %8877 = vmatpush.msra.mxu0 %v8158
  %8878 = vmatmul.f32.gmra.mxu0 %v7950
  %v8879 = vpop.f32.mrf.mxu0
  %v8880 = vadd.f32 %v8857, %v8879
  %8881 = vmatmul.f32.gmra.mxu0 %v7998
  %v8882 = vpop.f32.mrf.mxu0
  %v8883 = vadd.f32 %v8860, %v8882
  %8884 = vdwg.mxu0
  %8885 = vmatpush.msra.mxu0 0.0
  %8886 = vmatpush.msra.mxu0 0.0
  %8887 = vmatpush.msra.mxu0 0.0
  %8888 = vmatpush.msra.mxu0 0.0
  %8889 = vmatpush.msra.mxu0 0.0
  %8890 = vmatpush.msra.mxu0 0.0
  %8891 = vmatpush.msra.mxu0 0.0
  %8892 = vmatpush.msra.mxu0 0.0
  %8893 = vmatpush.msra.mxu0 0.0
  %8894 = vmatpush.msra.mxu0 0.0
  %8895 = vmatpush.msra.mxu0 0.0
  %8896 = vmatpush.msra.mxu0 0.0
  %8897 = vmatpush.msra.mxu0 0.0
  %8898 = vmatpush.msra.mxu0 0.0
  %8899 = vmatpush.msra.mxu0 0.0
  %8900 = vmatpush.msra.mxu0 %v8201
  %8901 = vmatmul.f32.gmra.mxu0 %v8765
  %v8902 = vpop.f32.mrf.mxu0
  %v8903 = vadd.f32 %v8880, %v8902
  %8904 = vmatmul.f32.gmra.mxu0 %v8768
  %v8905 = vpop.f32.mrf.mxu0
  %v8906 = vadd.f32 %v8883, %v8905
  %8907 = vdwg.mxu0
  %8908 = vmatpush.msra.mxu0 %v8061
  %8909 = vmatpush.msra.mxu0 %v8059
  %8910 = vmatpush.msra.mxu0 %v8057
  %8911 = vmatpush.msra.mxu0 %v8055
  %8912 = vmatpush.msra.mxu0 %v8053
  %8913 = vmatpush.msra.mxu0 %v8051
  %8914 = vmatpush.msra.mxu0 %v8049
  %8915 = vmatpush.msra.mxu0 %v8047
  %8916 = vmatpush.msra.mxu0 %v8045
  %8917 = vmatpush.msra.mxu0 %v8043
  %8918 = vmatpush.msra.mxu0 %v8041
  %8919 = vmatpush.msra.mxu0 %v8039
  %8920 = vmatpush.msra.mxu0 %v8037
  %8921 = vmatpush.msra.mxu0 %v8035
  %8922 = vmatpush.msra.mxu0 %v8033
  %8923 = vmatpush.msra.mxu0 %v8031
  %8924 = vmatmul.f32.gmra.mxu0 %v7946
  %v8925 = vpop.f32.mrf.mxu0
  %v8926 = vadd.f32 0.0, %v8925
  %8927 = vmatmul.f32.gmra.mxu0 %v7994
  %v8928 = vpop.f32.mrf.mxu0
  %v8929 = vadd.f32 0.0, %v8928
  %8930 = vdwg.mxu0
  %8931 = vmatpush.msra.mxu0 %v8093
  %8932 = vmatpush.msra.mxu0 %v8091
  %8933 = vmatpush.msra.mxu0 %v8089
  %8934 = vmatpush.msra.mxu0 %v8087
  %8935 = vmatpush.msra.mxu0 %v8085
  %8936 = vmatpush.msra.mxu0 %v8083
  %8937 = vmatpush.msra.mxu0 %v8081
  %8938 = vmatpush.msra.mxu0 %v8079
  %8939 = vmatpush.msra.mxu0 %v8077
  %8940 = vmatpush.msra.mxu0 %v8075
  %8941 = vmatpush.msra.mxu0 %v8073
  %8942 = vmatpush.msra.mxu0 %v8071
  %8943 = vmatpush.msra.mxu0 %v8069
  %8944 = vmatpush.msra.mxu0 %v8067
  %8945 = vmatpush.msra.mxu0 %v8065
  %8946 = vmatpush.msra.mxu0 %v8063
  %8947 = vmatmul.f32.gmra.mxu0 %v7947
  %v8948 = vpop.f32.mrf.mxu0
  %v8949 = vadd.f32 %v8926, %v8948
  %8950 = vmatmul.f32.gmra.mxu0 %v7995
  %v8951 = vpop.f32.mrf.mxu0
  %v8952 = vadd.f32 %v8929, %v8951
  %8953 = vdwg.mxu0
  %8954 = vmatpush.msra.mxu0 %v8125
  %8955 = vmatpush.msra.mxu0 %v8123
  %8956 = vmatpush.msra.mxu0 %v8121
  %8957 = vmatpush.msra.mxu0 %v8119
  %8958 = vmatpush.msra.mxu0 %v8117
  %8959 = vmatpush.msra.mxu0 %v8115
  %8960 = vmatpush.msra.mxu0 %v8113
  %8961 = vmatpush.msra.mxu0 %v8111
  %8962 = vmatpush.msra.mxu0 %v8109
  %8963 = vmatpush.msra.mxu0 %v8107
  %8964 = vmatpush.msra.mxu0 %v8105
  %8965 = vmatpush.msra.mxu0 %v8103
  %8966 = vmatpush.msra.mxu0 %v8101
  %8967 = vmatpush.msra.mxu0 %v8099
  %8968 = vmatpush.msra.mxu0 %v8097
  %8969 = vmatpush.msra.mxu0 %v8095
  %8970 = vmatmul.f32.gmra.mxu0 %v7948
  %v8971 = vpop.f32.mrf.mxu0
  %v8972 = vadd.f32 %v8949, %v8971
  %8973 = vmatmul.f32.gmra.mxu0 %v7996
  %v8974 = vpop.f32.mrf.mxu0
  %v8975 = vadd.f32 %v8952, %v8974
  %8976 = vdwg.mxu0
  %8977 = vmatpush.msra.mxu0 %v8157
  %8978 = vmatpush.msra.mxu0 %v8155
  %8979 = vmatpush.msra.mxu0 %v8153
  %8980 = vmatpush.msra.mxu0 %v8151
  %8981 = vmatpush.msra.mxu0 %v8149
  %8982 = vmatpush.msra.mxu0 %v8147
  %8983 = vmatpush.msra.mxu0 %v8145
  %8984 = vmatpush.msra.mxu0 %v8143
  %8985 = vmatpush.msra.mxu0 %v8141
  %8986 = vmatpush.msra.mxu0 %v8139
  %8987 = vmatpush.msra.mxu0 %v8137
  %8988 = vmatpush.msra.mxu0 %v8135
  %8989 = vmatpush.msra.mxu0 %v8133
  %8990 = vmatpush.msra.mxu0 %v8131
  %8991 = vmatpush.msra.mxu0 %v8129
  %8992 = vmatpush.msra.mxu0 %v8127
  %8993 = vmatmul.f32.gmra.mxu0 %v7949
  %v8994 = vpop.f32.mrf.mxu0
  %v8995 = vadd.f32 %v8972, %v8994
  %8996 = vmatmul.f32.gmra.mxu0 %v7997
  %v8997 = vpop.f32.mrf.mxu0
  %v8998 = vadd.f32 %v8975, %v8997
  %8999 = vdwg.mxu0
  %9000 = vmatpush.msra.mxu0 %v8189
  %9001 = vmatpush.msra.mxu0 %v8187
  %9002 = vmatpush.msra.mxu0 %v8185
  %9003 = vmatpush.msra.mxu0 %v8183
  %9004 = vmatpush.msra.mxu0 %v8181
  %9005 = vmatpush.msra.mxu0 %v8179
  %9006 = vmatpush.msra.mxu0 %v8177
  %9007 = vmatpush.msra.mxu0 %v8175
  %9008 = vmatpush.msra.mxu0 %v8173
  %9009 = vmatpush.msra.mxu0 %v8171
  %9010 = vmatpush.msra.mxu0 %v8169
  %9011 = vmatpush.msra.mxu0 %v8167
  %9012 = vmatpush.msra.mxu0 %v8165
  %9013 = vmatpush.msra.mxu0 %v8163
  %9014 = vmatpush.msra.mxu0 %v8161
  %9015 = vmatpush.msra.mxu0 %v8159
  %9016 = vmatmul.f32.gmra.mxu0 %v7950
  %v9017 = vpop.f32.mrf.mxu0
  %v9018 = vadd.f32 %v8995, %v9017
  %9019 = vmatmul.f32.gmra.mxu0 %v7998
  %v9020 = vpop.f32.mrf.mxu0
  %v9021 = vadd.f32 %v8998, %v9020
  %9022 = vdwg.mxu0
  %9023 = vmatpush.msra.mxu0 0.0
  %9024 = vmatpush.msra.mxu0 0.0
  %9025 = vmatpush.msra.mxu0 0.0
  %9026 = vmatpush.msra.mxu0 0.0
  %9027 = vmatpush.msra.mxu0 0.0
  %9028 = vmatpush.msra.mxu0 0.0
  %9029 = vmatpush.msra.mxu0 0.0
  %9030 = vmatpush.msra.mxu0 0.0
  %9031 = vmatpush.msra.mxu0 0.0
  %9032 = vmatpush.msra.mxu0 0.0
  %9033 = vmatpush.msra.mxu0 0.0
  %9034 = vmatpush.msra.mxu0 0.0
  %9035 = vmatpush.msra.mxu0 0.0
  %9036 = vmatpush.msra.mxu0 0.0
  %9037 = vmatpush.msra.mxu0 0.0
  %9038 = vmatpush.msra.mxu0 %v8204
  %9039 = vmatmul.f32.gmra.mxu0 %v8765
  %v9040 = vpop.f32.mrf.mxu0
  %v9041 = vadd.f32 %v9018, %v9040
  %9042 = vmatmul.f32.gmra.mxu0 %v8768
  %v9043 = vpop.f32.mrf.mxu0
  %v9044 = vadd.f32 %v9021, %v9043
  %9045 = vdwg.mxu0
  %v9047 = vsel %vm8192, %v7957, 0
  %v9050 = vsel %vm8192, %v8005, 0
  %9052 = vmatpush.msra.mxu0 %v8060
  %9053 = vmatpush.msra.mxu0 %v8058
  %9054 = vmatpush.msra.mxu0 %v8056
  %9055 = vmatpush.msra.mxu0 %v8054
  %9056 = vmatpush.msra.mxu0 %v8052
  %9057 = vmatpush.msra.mxu0 %v8050
  %9058 = vmatpush.msra.mxu0 %v8048
  %9059 = vmatpush.msra.mxu0 %v8046
  %9060 = vmatpush.msra.mxu0 %v8044
  %9061 = vmatpush.msra.mxu0 %v8042
  %9062 = vmatpush.msra.mxu0 %v8040
  %9063 = vmatpush.msra.mxu0 %v8038
  %9064 = vmatpush.msra.mxu0 %v8036
  %9065 = vmatpush.msra.mxu0 %v8034
  %9066 = vmatpush.msra.mxu0 %v8032
  %9067 = vmatpush.msra.mxu0 %v8030
  %9068 = vmatmul.f32.gmra.mxu0 %v7952
  %v9069 = vpop.f32.mrf.mxu0
  %v9070 = vadd.f32 0.0, %v9069
  %9071 = vmatmul.f32.gmra.mxu0 %v8000
  %v9072 = vpop.f32.mrf.mxu0
  %v9073 = vadd.f32 0.0, %v9072
  %9074 = vdwg.mxu0
  %9075 = vmatpush.msra.mxu0 %v8092
  %9076 = vmatpush.msra.mxu0 %v8090
  %9077 = vmatpush.msra.mxu0 %v8088
  %9078 = vmatpush.msra.mxu0 %v8086
  %9079 = vmatpush.msra.mxu0 %v8084
  %9080 = vmatpush.msra.mxu0 %v8082
  %9081 = vmatpush.msra.mxu0 %v8080
  %9082 = vmatpush.msra.mxu0 %v8078
  %9083 = vmatpush.msra.mxu0 %v8076
  %9084 = vmatpush.msra.mxu0 %v8074
  %9085 = vmatpush.msra.mxu0 %v8072
  %9086 = vmatpush.msra.mxu0 %v8070
  %9087 = vmatpush.msra.mxu0 %v8068
  %9088 = vmatpush.msra.mxu0 %v8066
  %9089 = vmatpush.msra.mxu0 %v8064
  %9090 = vmatpush.msra.mxu0 %v8062
  %9091 = vmatmul.f32.gmra.mxu0 %v7953
  %v9092 = vpop.f32.mrf.mxu0
  %v9093 = vadd.f32 %v9070, %v9092
  %9094 = vmatmul.f32.gmra.mxu0 %v8001
  %v9095 = vpop.f32.mrf.mxu0
  %v9096 = vadd.f32 %v9073, %v9095
  %9097 = vdwg.mxu0
  %9098 = vmatpush.msra.mxu0 %v8124
  %9099 = vmatpush.msra.mxu0 %v8122
  %9100 = vmatpush.msra.mxu0 %v8120
  %9101 = vmatpush.msra.mxu0 %v8118
  %9102 = vmatpush.msra.mxu0 %v8116
  %9103 = vmatpush.msra.mxu0 %v8114
  %9104 = vmatpush.msra.mxu0 %v8112
  %9105 = vmatpush.msra.mxu0 %v8110
  %9106 = vmatpush.msra.mxu0 %v8108
  %9107 = vmatpush.msra.mxu0 %v8106
  %9108 = vmatpush.msra.mxu0 %v8104
  %9109 = vmatpush.msra.mxu0 %v8102
  %9110 = vmatpush.msra.mxu0 %v8100
  %9111 = vmatpush.msra.mxu0 %v8098
  %9112 = vmatpush.msra.mxu0 %v8096
  %9113 = vmatpush.msra.mxu0 %v8094
  %9114 = vmatmul.f32.gmra.mxu0 %v7954
  %v9115 = vpop.f32.mrf.mxu0
  %v9116 = vadd.f32 %v9093, %v9115
  %9117 = vmatmul.f32.gmra.mxu0 %v8002
  %v9118 = vpop.f32.mrf.mxu0
  %v9119 = vadd.f32 %v9096, %v9118
  %9120 = vdwg.mxu0
  %9121 = vmatpush.msra.mxu0 %v8156
  %9122 = vmatpush.msra.mxu0 %v8154
  %9123 = vmatpush.msra.mxu0 %v8152
  %9124 = vmatpush.msra.mxu0 %v8150
  %9125 = vmatpush.msra.mxu0 %v8148
  %9126 = vmatpush.msra.mxu0 %v8146
  %9127 = vmatpush.msra.mxu0 %v8144
  %9128 = vmatpush.msra.mxu0 %v8142
  %9129 = vmatpush.msra.mxu0 %v8140
  %9130 = vmatpush.msra.mxu0 %v8138
  %9131 = vmatpush.msra.mxu0 %v8136
  %9132 = vmatpush.msra.mxu0 %v8134
  %9133 = vmatpush.msra.mxu0 %v8132
  %9134 = vmatpush.msra.mxu0 %v8130
  %9135 = vmatpush.msra.mxu0 %v8128
  %9136 = vmatpush.msra.mxu0 %v8126
  %9137 = vmatmul.f32.gmra.mxu0 %v7955
  %v9138 = vpop.f32.mrf.mxu0
  %v9139 = vadd.f32 %v9116, %v9138
  %9140 = vmatmul.f32.gmra.mxu0 %v8003
  %v9141 = vpop.f32.mrf.mxu0
  %v9142 = vadd.f32 %v9119, %v9141
  %9143 = vdwg.mxu0
  %9144 = vmatpush.msra.mxu0 %v8188
  %9145 = vmatpush.msra.mxu0 %v8186
  %9146 = vmatpush.msra.mxu0 %v8184
  %9147 = vmatpush.msra.mxu0 %v8182
  %9148 = vmatpush.msra.mxu0 %v8180
  %9149 = vmatpush.msra.mxu0 %v8178
  %9150 = vmatpush.msra.mxu0 %v8176
  %9151 = vmatpush.msra.mxu0 %v8174
  %9152 = vmatpush.msra.mxu0 %v8172
  %9153 = vmatpush.msra.mxu0 %v8170
  %9154 = vmatpush.msra.mxu0 %v8168
  %9155 = vmatpush.msra.mxu0 %v8166
  %9156 = vmatpush.msra.mxu0 %v8164
  %9157 = vmatpush.msra.mxu0 %v8162
  %9158 = vmatpush.msra.mxu0 %v8160
  %9159 = vmatpush.msra.mxu0 %v8158
  %9160 = vmatmul.f32.gmra.mxu0 %v7956
  %v9161 = vpop.f32.mrf.mxu0
  %v9162 = vadd.f32 %v9139, %v9161
  %9163 = vmatmul.f32.gmra.mxu0 %v8004
  %v9164 = vpop.f32.mrf.mxu0
  %v9165 = vadd.f32 %v9142, %v9164
  %9166 = vdwg.mxu0
  %9167 = vmatpush.msra.mxu0 0.0
  %9168 = vmatpush.msra.mxu0 0.0
  %9169 = vmatpush.msra.mxu0 0.0
  %9170 = vmatpush.msra.mxu0 0.0
  %9171 = vmatpush.msra.mxu0 0.0
  %9172 = vmatpush.msra.mxu0 0.0
  %9173 = vmatpush.msra.mxu0 0.0
  %9174 = vmatpush.msra.mxu0 0.0
  %9175 = vmatpush.msra.mxu0 0.0
  %9176 = vmatpush.msra.mxu0 0.0
  %9177 = vmatpush.msra.mxu0 0.0
  %9178 = vmatpush.msra.mxu0 0.0
  %9179 = vmatpush.msra.mxu0 0.0
  %9180 = vmatpush.msra.mxu0 0.0
  %9181 = vmatpush.msra.mxu0 0.0
  %9182 = vmatpush.msra.mxu0 %v8201
  %9183 = vmatmul.f32.gmra.mxu0 %v9047
  %v9184 = vpop.f32.mrf.mxu0
  %v9185 = vadd.f32 %v9162, %v9184
  %9186 = vmatmul.f32.gmra.mxu0 %v9050
  %v9187 = vpop.f32.mrf.mxu0
  %v9188 = vadd.f32 %v9165, %v9187
  %9189 = vdwg.mxu0
  %9190 = vmatpush.msra.mxu0 %v8061
  %9191 = vmatpush.msra.mxu0 %v8059
  %9192 = vmatpush.msra.mxu0 %v8057
  %9193 = vmatpush.msra.mxu0 %v8055
  %9194 = vmatpush.msra.mxu0 %v8053
  %9195 = vmatpush.msra.mxu0 %v8051
  %9196 = vmatpush.msra.mxu0 %v8049
  %9197 = vmatpush.msra.mxu0 %v8047
  %9198 = vmatpush.msra.mxu0 %v8045
  %9199 = vmatpush.msra.mxu0 %v8043
  %9200 = vmatpush.msra.mxu0 %v8041
  %9201 = vmatpush.msra.mxu0 %v8039
  %9202 = vmatpush.msra.mxu0 %v8037
  %9203 = vmatpush.msra.mxu0 %v8035
  %9204 = vmatpush.msra.mxu0 %v8033
  %9205 = vmatpush.msra.mxu0 %v8031
  %9206 = vmatmul.f32.gmra.mxu0 %v7952
  %v9207 = vpop.f32.mrf.mxu0
  %v9208 = vadd.f32 0.0, %v9207
  %9209 = vmatmul.f32.gmra.mxu0 %v8000
  %v9210 = vpop.f32.mrf.mxu0
  %v9211 = vadd.f32 0.0, %v9210
  %9212 = vdwg.mxu0
  %9213 = vmatpush.msra.mxu0 %v8093
  %9214 = vmatpush.msra.mxu0 %v8091
  %9215 = vmatpush.msra.mxu0 %v8089
  %9216 = vmatpush.msra.mxu0 %v8087
  %9217 = vmatpush.msra.mxu0 %v8085
  %9218 = vmatpush.msra.mxu0 %v8083
  %9219 = vmatpush.msra.mxu0 %v8081
  %9220 = vmatpush.msra.mxu0 %v8079
  %9221 = vmatpush.msra.mxu0 %v8077
  %9222 = vmatpush.msra.mxu0 %v8075
  %9223 = vmatpush.msra.mxu0 %v8073
  %9224 = vmatpush.msra.mxu0 %v8071
  %9225 = vmatpush.msra.mxu0 %v8069
  %9226 = vmatpush.msra.mxu0 %v8067
  %9227 = vmatpush.msra.mxu0 %v8065
  %9228 = vmatpush.msra.mxu0 %v8063
  %9229 = vmatmul.f32.gmra.mxu0 %v7953
  %v9230 = vpop.f32.mrf.mxu0
  %v9231 = vadd.f32 %v9208, %v9230
  %9232 = vmatmul.f32.gmra.mxu0 %v8001
  %v9233 = vpop.f32.mrf.mxu0
  %v9234 = vadd.f32 %v9211, %v9233
  %9235 = vdwg.mxu0
  %9236 = vmatpush.msra.mxu0 %v8125
  %9237 = vmatpush.msra.mxu0 %v8123
  %9238 = vmatpush.msra.mxu0 %v8121
  %9239 = vmatpush.msra.mxu0 %v8119
  %9240 = vmatpush.msra.mxu0 %v8117
  %9241 = vmatpush.msra.mxu0 %v8115
  %9242 = vmatpush.msra.mxu0 %v8113
  %9243 = vmatpush.msra.mxu0 %v8111
  %9244 = vmatpush.msra.mxu0 %v8109
  %9245 = vmatpush.msra.mxu0 %v8107
  %9246 = vmatpush.msra.mxu0 %v8105
  %9247 = vmatpush.msra.mxu0 %v8103
  %9248 = vmatpush.msra.mxu0 %v8101
  %9249 = vmatpush.msra.mxu0 %v8099
  %9250 = vmatpush.msra.mxu0 %v8097
  %9251 = vmatpush.msra.mxu0 %v8095
  %9252 = vmatmul.f32.gmra.mxu0 %v7954
  %v9253 = vpop.f32.mrf.mxu0
  %v9254 = vadd.f32 %v9231, %v9253
  %9255 = vmatmul.f32.gmra.mxu0 %v8002
  %v9256 = vpop.f32.mrf.mxu0
  %v9257 = vadd.f32 %v9234, %v9256
  %9258 = vdwg.mxu0
  %9259 = vmatpush.msra.mxu0 %v8157
  %9260 = vmatpush.msra.mxu0 %v8155
  %9261 = vmatpush.msra.mxu0 %v8153
  %9262 = vmatpush.msra.mxu0 %v8151
  %9263 = vmatpush.msra.mxu0 %v8149
  %9264 = vmatpush.msra.mxu0 %v8147
  %9265 = vmatpush.msra.mxu0 %v8145
  %9266 = vmatpush.msra.mxu0 %v8143
  %9267 = vmatpush.msra.mxu0 %v8141
  %9268 = vmatpush.msra.mxu0 %v8139
  %9269 = vmatpush.msra.mxu0 %v8137
  %9270 = vmatpush.msra.mxu0 %v8135
  %9271 = vmatpush.msra.mxu0 %v8133
  %9272 = vmatpush.msra.mxu0 %v8131
  %9273 = vmatpush.msra.mxu0 %v8129
  %9274 = vmatpush.msra.mxu0 %v8127
  %9275 = vmatmul.f32.gmra.mxu0 %v7955
  %v9276 = vpop.f32.mrf.mxu0
  %v9277 = vadd.f32 %v9254, %v9276
  %9278 = vmatmul.f32.gmra.mxu0 %v8003
  %v9279 = vpop.f32.mrf.mxu0
  %v9280 = vadd.f32 %v9257, %v9279
  %9281 = vdwg.mxu0
  %9282 = vmatpush.msra.mxu0 %v8189
  %9283 = vmatpush.msra.mxu0 %v8187
  %9284 = vmatpush.msra.mxu0 %v8185
  %9285 = vmatpush.msra.mxu0 %v8183
  %9286 = vmatpush.msra.mxu0 %v8181
  %9287 = vmatpush.msra.mxu0 %v8179
  %9288 = vmatpush.msra.mxu0 %v8177
  %9289 = vmatpush.msra.mxu0 %v8175
  %9290 = vmatpush.msra.mxu0 %v8173
  %9291 = vmatpush.msra.mxu0 %v8171
  %9292 = vmatpush.msra.mxu0 %v8169
  %9293 = vmatpush.msra.mxu0 %v8167
  %9294 = vmatpush.msra.mxu0 %v8165
  %9295 = vmatpush.msra.mxu0 %v8163
  %9296 = vmatpush.msra.mxu0 %v8161
  %9297 = vmatpush.msra.mxu0 %v8159
  %9298 = vmatmul.f32.gmra.mxu0 %v7956
  %v9299 = vpop.f32.mrf.mxu0
  %v9300 = vadd.f32 %v9277, %v9299
  %9301 = vmatmul.f32.gmra.mxu0 %v8004
  %v9302 = vpop.f32.mrf.mxu0
  %v9303 = vadd.f32 %v9280, %v9302
  %9304 = vdwg.mxu0
  %9305 = vmatpush.msra.mxu0 0.0
  %9306 = vmatpush.msra.mxu0 0.0
  %9307 = vmatpush.msra.mxu0 0.0
  %9308 = vmatpush.msra.mxu0 0.0
  %9309 = vmatpush.msra.mxu0 0.0
  %9310 = vmatpush.msra.mxu0 0.0
  %9311 = vmatpush.msra.mxu0 0.0
  %9312 = vmatpush.msra.mxu0 0.0
  %9313 = vmatpush.msra.mxu0 0.0
  %9314 = vmatpush.msra.mxu0 0.0
  %9315 = vmatpush.msra.mxu0 0.0
  %9316 = vmatpush.msra.mxu0 0.0
  %9317 = vmatpush.msra.mxu0 0.0
  %9318 = vmatpush.msra.mxu0 0.0
  %9319 = vmatpush.msra.mxu0 0.0
  %9320 = vmatpush.msra.mxu0 %v8204
  %9321 = vmatmul.f32.gmra.mxu0 %v9047
  %v9322 = vpop.f32.mrf.mxu0
  %v9323 = vadd.f32 %v9300, %v9322
  %9324 = vmatmul.f32.gmra.mxu0 %v9050
  %v9325 = vpop.f32.mrf.mxu0
  %v9326 = vadd.f32 %v9303, %v9325
  %9327 = vdwg.mxu0
  %v9329 = vsel %vm8192, %v7963, 0
  %v9332 = vsel %vm8192, %v8011, 0
  %9334 = vmatpush.msra.mxu0 %v8060
  %9335 = vmatpush.msra.mxu0 %v8058
  %9336 = vmatpush.msra.mxu0 %v8056
  %9337 = vmatpush.msra.mxu0 %v8054
  %9338 = vmatpush.msra.mxu0 %v8052
  %9339 = vmatpush.msra.mxu0 %v8050
  %9340 = vmatpush.msra.mxu0 %v8048
  %9341 = vmatpush.msra.mxu0 %v8046
  %9342 = vmatpush.msra.mxu0 %v8044
  %9343 = vmatpush.msra.mxu0 %v8042
  %9344 = vmatpush.msra.mxu0 %v8040
  %9345 = vmatpush.msra.mxu0 %v8038
  %9346 = vmatpush.msra.mxu0 %v8036
  %9347 = vmatpush.msra.mxu0 %v8034
  %9348 = vmatpush.msra.mxu0 %v8032
  %9349 = vmatpush.msra.mxu0 %v8030
  %9350 = vmatmul.f32.gmra.mxu0 %v7958
  %v9351 = vpop.f32.mrf.mxu0
  %v9352 = vadd.f32 0.0, %v9351
  %9353 = vmatmul.f32.gmra.mxu0 %v8006
  %v9354 = vpop.f32.mrf.mxu0
  %v9355 = vadd.f32 0.0, %v9354
  %9356 = vdwg.mxu0
  %9357 = vmatpush.msra.mxu0 %v8092
  %9358 = vmatpush.msra.mxu0 %v8090
  %9359 = vmatpush.msra.mxu0 %v8088
  %9360 = vmatpush.msra.mxu0 %v8086
  %9361 = vmatpush.msra.mxu0 %v8084
  %9362 = vmatpush.msra.mxu0 %v8082
  %9363 = vmatpush.msra.mxu0 %v8080
  %9364 = vmatpush.msra.mxu0 %v8078
  %9365 = vmatpush.msra.mxu0 %v8076
  %9366 = vmatpush.msra.mxu0 %v8074
  %9367 = vmatpush.msra.mxu0 %v8072
  %9368 = vmatpush.msra.mxu0 %v8070
  %9369 = vmatpush.msra.mxu0 %v8068
  %9370 = vmatpush.msra.mxu0 %v8066
  %9371 = vmatpush.msra.mxu0 %v8064
  %9372 = vmatpush.msra.mxu0 %v8062
  %9373 = vmatmul.f32.gmra.mxu0 %v7959
  %v9374 = vpop.f32.mrf.mxu0
  %v9375 = vadd.f32 %v9352, %v9374
  %9376 = vmatmul.f32.gmra.mxu0 %v8007
  %v9377 = vpop.f32.mrf.mxu0
  %v9378 = vadd.f32 %v9355, %v9377
  %9379 = vdwg.mxu0
  %9380 = vmatpush.msra.mxu0 %v8124
  %9381 = vmatpush.msra.mxu0 %v8122
  %9382 = vmatpush.msra.mxu0 %v8120
  %9383 = vmatpush.msra.mxu0 %v8118
  %9384 = vmatpush.msra.mxu0 %v8116
  %9385 = vmatpush.msra.mxu0 %v8114
  %9386 = vmatpush.msra.mxu0 %v8112
  %9387 = vmatpush.msra.mxu0 %v8110
  %9388 = vmatpush.msra.mxu0 %v8108
  %9389 = vmatpush.msra.mxu0 %v8106
  %9390 = vmatpush.msra.mxu0 %v8104
  %9391 = vmatpush.msra.mxu0 %v8102
  %9392 = vmatpush.msra.mxu0 %v8100
  %9393 = vmatpush.msra.mxu0 %v8098
  %9394 = vmatpush.msra.mxu0 %v8096
  %9395 = vmatpush.msra.mxu0 %v8094
  %9396 = vmatmul.f32.gmra.mxu0 %v7960
  %v9397 = vpop.f32.mrf.mxu0
  %v9398 = vadd.f32 %v9375, %v9397
  %9399 = vmatmul.f32.gmra.mxu0 %v8008
  %v9400 = vpop.f32.mrf.mxu0
  %v9401 = vadd.f32 %v9378, %v9400
  %9402 = vdwg.mxu0
  %9403 = vmatpush.msra.mxu0 %v8156
  %9404 = vmatpush.msra.mxu0 %v8154
  %9405 = vmatpush.msra.mxu0 %v8152
  %9406 = vmatpush.msra.mxu0 %v8150
  %9407 = vmatpush.msra.mxu0 %v8148
  %9408 = vmatpush.msra.mxu0 %v8146
  %9409 = vmatpush.msra.mxu0 %v8144
  %9410 = vmatpush.msra.mxu0 %v8142
  %9411 = vmatpush.msra.mxu0 %v8140
  %9412 = vmatpush.msra.mxu0 %v8138
  %9413 = vmatpush.msra.mxu0 %v8136
  %9414 = vmatpush.msra.mxu0 %v8134
  %9415 = vmatpush.msra.mxu0 %v8132
  %9416 = vmatpush.msra.mxu0 %v8130
  %9417 = vmatpush.msra.mxu0 %v8128
  %9418 = vmatpush.msra.mxu0 %v8126
  %9419 = vmatmul.f32.gmra.mxu0 %v7961
  %v9420 = vpop.f32.mrf.mxu0
  %v9421 = vadd.f32 %v9398, %v9420
  %9422 = vmatmul.f32.gmra.mxu0 %v8009
  %v9423 = vpop.f32.mrf.mxu0
  %v9424 = vadd.f32 %v9401, %v9423
  %9425 = vdwg.mxu0
  %9426 = vmatpush.msra.mxu0 %v8188
  %9427 = vmatpush.msra.mxu0 %v8186
  %9428 = vmatpush.msra.mxu0 %v8184
  %9429 = vmatpush.msra.mxu0 %v8182
  %9430 = vmatpush.msra.mxu0 %v8180
  %9431 = vmatpush.msra.mxu0 %v8178
  %9432 = vmatpush.msra.mxu0 %v8176
  %9433 = vmatpush.msra.mxu0 %v8174
  %9434 = vmatpush.msra.mxu0 %v8172
  %9435 = vmatpush.msra.mxu0 %v8170
  %9436 = vmatpush.msra.mxu0 %v8168
  %9437 = vmatpush.msra.mxu0 %v8166
  %9438 = vmatpush.msra.mxu0 %v8164
  %9439 = vmatpush.msra.mxu0 %v8162
  %9440 = vmatpush.msra.mxu0 %v8160
  %9441 = vmatpush.msra.mxu0 %v8158
  %9442 = vmatmul.f32.gmra.mxu0 %v7962
  %v9443 = vpop.f32.mrf.mxu0
  %v9444 = vadd.f32 %v9421, %v9443
  %9445 = vmatmul.f32.gmra.mxu0 %v8010
  %v9446 = vpop.f32.mrf.mxu0
  %v9447 = vadd.f32 %v9424, %v9446
  %9448 = vdwg.mxu0
  %9449 = vmatpush.msra.mxu0 0.0
  %9450 = vmatpush.msra.mxu0 0.0
  %9451 = vmatpush.msra.mxu0 0.0
  %9452 = vmatpush.msra.mxu0 0.0
  %9453 = vmatpush.msra.mxu0 0.0
  %9454 = vmatpush.msra.mxu0 0.0
  %9455 = vmatpush.msra.mxu0 0.0
  %9456 = vmatpush.msra.mxu0 0.0
  %9457 = vmatpush.msra.mxu0 0.0
  %9458 = vmatpush.msra.mxu0 0.0
  %9459 = vmatpush.msra.mxu0 0.0
  %9460 = vmatpush.msra.mxu0 0.0
  %9461 = vmatpush.msra.mxu0 0.0
  %9462 = vmatpush.msra.mxu0 0.0
  %9463 = vmatpush.msra.mxu0 0.0
  %9464 = vmatpush.msra.mxu0 %v8201
  %9465 = vmatmul.f32.gmra.mxu0 %v9329
  %v9466 = vpop.f32.mrf.mxu0
  %v9467 = vadd.f32 %v9444, %v9466
  %9468 = vmatmul.f32.gmra.mxu0 %v9332
  %v9469 = vpop.f32.mrf.mxu0
  %v9470 = vadd.f32 %v9447, %v9469
  %9471 = vdwg.mxu0
  %9472 = vmatpush.msra.mxu0 %v8061
  %9473 = vmatpush.msra.mxu0 %v8059
  %9474 = vmatpush.msra.mxu0 %v8057
  %9475 = vmatpush.msra.mxu0 %v8055
  %9476 = vmatpush.msra.mxu0 %v8053
  %9477 = vmatpush.msra.mxu0 %v8051
  %9478 = vmatpush.msra.mxu0 %v8049
  %9479 = vmatpush.msra.mxu0 %v8047
  %9480 = vmatpush.msra.mxu0 %v8045
  %9481 = vmatpush.msra.mxu0 %v8043
  %9482 = vmatpush.msra.mxu0 %v8041
  %9483 = vmatpush.msra.mxu0 %v8039
  %9484 = vmatpush.msra.mxu0 %v8037
  %9485 = vmatpush.msra.mxu0 %v8035
  %9486 = vmatpush.msra.mxu0 %v8033
  %9487 = vmatpush.msra.mxu0 %v8031
  %9488 = vmatmul.f32.gmra.mxu0 %v7958
  %v9489 = vpop.f32.mrf.mxu0
  %v9490 = vadd.f32 0.0, %v9489
  %9491 = vmatmul.f32.gmra.mxu0 %v8006
  %v9492 = vpop.f32.mrf.mxu0
  %v9493 = vadd.f32 0.0, %v9492
  %9494 = vdwg.mxu0
  %9495 = vmatpush.msra.mxu0 %v8093
  %9496 = vmatpush.msra.mxu0 %v8091
  %9497 = vmatpush.msra.mxu0 %v8089
  %9498 = vmatpush.msra.mxu0 %v8087
  %9499 = vmatpush.msra.mxu0 %v8085
  %9500 = vmatpush.msra.mxu0 %v8083
  %9501 = vmatpush.msra.mxu0 %v8081
  %9502 = vmatpush.msra.mxu0 %v8079
  %9503 = vmatpush.msra.mxu0 %v8077
  %9504 = vmatpush.msra.mxu0 %v8075
  %9505 = vmatpush.msra.mxu0 %v8073
  %9506 = vmatpush.msra.mxu0 %v8071
  %9507 = vmatpush.msra.mxu0 %v8069
  %9508 = vmatpush.msra.mxu0 %v8067
  %9509 = vmatpush.msra.mxu0 %v8065
  %9510 = vmatpush.msra.mxu0 %v8063
  %9511 = vmatmul.f32.gmra.mxu0 %v7959
  %v9512 = vpop.f32.mrf.mxu0
  %v9513 = vadd.f32 %v9490, %v9512
  %9514 = vmatmul.f32.gmra.mxu0 %v8007
  %v9515 = vpop.f32.mrf.mxu0
  %v9516 = vadd.f32 %v9493, %v9515
  %9517 = vdwg.mxu0
  %9518 = vmatpush.msra.mxu0 %v8125
  %9519 = vmatpush.msra.mxu0 %v8123
  %9520 = vmatpush.msra.mxu0 %v8121
  %9521 = vmatpush.msra.mxu0 %v8119
  %9522 = vmatpush.msra.mxu0 %v8117
  %9523 = vmatpush.msra.mxu0 %v8115
  %9524 = vmatpush.msra.mxu0 %v8113
  %9525 = vmatpush.msra.mxu0 %v8111
  %9526 = vmatpush.msra.mxu0 %v8109
  %9527 = vmatpush.msra.mxu0 %v8107
  %9528 = vmatpush.msra.mxu0 %v8105
  %9529 = vmatpush.msra.mxu0 %v8103
  %9530 = vmatpush.msra.mxu0 %v8101
  %9531 = vmatpush.msra.mxu0 %v8099
  %9532 = vmatpush.msra.mxu0 %v8097
  %9533 = vmatpush.msra.mxu0 %v8095
  %9534 = vmatmul.f32.gmra.mxu0 %v7960
  %v9535 = vpop.f32.mrf.mxu0
  %v9536 = vadd.f32 %v9513, %v9535
  %9537 = vmatmul.f32.gmra.mxu0 %v8008
  %v9538 = vpop.f32.mrf.mxu0
  %v9539 = vadd.f32 %v9516, %v9538
  %9540 = vdwg.mxu0
  %9541 = vmatpush.msra.mxu0 %v8157
  %9542 = vmatpush.msra.mxu0 %v8155
  %9543 = vmatpush.msra.mxu0 %v8153
  %9544 = vmatpush.msra.mxu0 %v8151
  %9545 = vmatpush.msra.mxu0 %v8149
  %9546 = vmatpush.msra.mxu0 %v8147
  %9547 = vmatpush.msra.mxu0 %v8145
  %9548 = vmatpush.msra.mxu0 %v8143
  %9549 = vmatpush.msra.mxu0 %v8141
  %9550 = vmatpush.msra.mxu0 %v8139
  %9551 = vmatpush.msra.mxu0 %v8137
  %9552 = vmatpush.msra.mxu0 %v8135
  %9553 = vmatpush.msra.mxu0 %v8133
  %9554 = vmatpush.msra.mxu0 %v8131
  %9555 = vmatpush.msra.mxu0 %v8129
  %9556 = vmatpush.msra.mxu0 %v8127
  %9557 = vmatmul.f32.gmra.mxu0 %v7961
  %v9558 = vpop.f32.mrf.mxu0
  %v9559 = vadd.f32 %v9536, %v9558
  %9560 = vmatmul.f32.gmra.mxu0 %v8009
  %v9561 = vpop.f32.mrf.mxu0
  %v9562 = vadd.f32 %v9539, %v9561
  %9563 = vdwg.mxu0
  %9564 = vmatpush.msra.mxu0 %v8189
  %9565 = vmatpush.msra.mxu0 %v8187
  %9566 = vmatpush.msra.mxu0 %v8185
  %9567 = vmatpush.msra.mxu0 %v8183
  %9568 = vmatpush.msra.mxu0 %v8181
  %9569 = vmatpush.msra.mxu0 %v8179
  %9570 = vmatpush.msra.mxu0 %v8177
  %9571 = vmatpush.msra.mxu0 %v8175
  %9572 = vmatpush.msra.mxu0 %v8173
  %9573 = vmatpush.msra.mxu0 %v8171
  %9574 = vmatpush.msra.mxu0 %v8169
  %9575 = vmatpush.msra.mxu0 %v8167
  %9576 = vmatpush.msra.mxu0 %v8165
  %9577 = vmatpush.msra.mxu0 %v8163
  %9578 = vmatpush.msra.mxu0 %v8161
  %9579 = vmatpush.msra.mxu0 %v8159
  %9580 = vmatmul.f32.gmra.mxu0 %v7962
  %v9581 = vpop.f32.mrf.mxu0
  %v9582 = vadd.f32 %v9559, %v9581
  %9583 = vmatmul.f32.gmra.mxu0 %v8010
  %v9584 = vpop.f32.mrf.mxu0
  %v9585 = vadd.f32 %v9562, %v9584
  %9586 = vdwg.mxu0
  %9587 = vmatpush.msra.mxu0 0.0
  %9588 = vmatpush.msra.mxu0 0.0
  %9589 = vmatpush.msra.mxu0 0.0
  %9590 = vmatpush.msra.mxu0 0.0
  %9591 = vmatpush.msra.mxu0 0.0
  %9592 = vmatpush.msra.mxu0 0.0
  %9593 = vmatpush.msra.mxu0 0.0
  %9594 = vmatpush.msra.mxu0 0.0
  %9595 = vmatpush.msra.mxu0 0.0
  %9596 = vmatpush.msra.mxu0 0.0
  %9597 = vmatpush.msra.mxu0 0.0
  %9598 = vmatpush.msra.mxu0 0.0
  %9599 = vmatpush.msra.mxu0 0.0
  %9600 = vmatpush.msra.mxu0 0.0
  %9601 = vmatpush.msra.mxu0 0.0
  %9602 = vmatpush.msra.mxu0 %v8204
  %9603 = vmatmul.f32.gmra.mxu0 %v9329
  %v9604 = vpop.f32.mrf.mxu0
  %v9605 = vadd.f32 %v9582, %v9604
  %9606 = vmatmul.f32.gmra.mxu0 %v9332
  %v9607 = vpop.f32.mrf.mxu0
  %v9608 = vadd.f32 %v9585, %v9607
  %9609 = vdwg.mxu0
  %v9611 = vsel %vm8192, %v7969, 0
  %v9614 = vsel %vm8192, %v8017, 0
  %9616 = vmatpush.msra.mxu0 %v8060
  %9617 = vmatpush.msra.mxu0 %v8058
  %9618 = vmatpush.msra.mxu0 %v8056
  %9619 = vmatpush.msra.mxu0 %v8054
  %9620 = vmatpush.msra.mxu0 %v8052
  %9621 = vmatpush.msra.mxu0 %v8050
  %9622 = vmatpush.msra.mxu0 %v8048
  %9623 = vmatpush.msra.mxu0 %v8046
  %9624 = vmatpush.msra.mxu0 %v8044
  %9625 = vmatpush.msra.mxu0 %v8042
  %9626 = vmatpush.msra.mxu0 %v8040
  %9627 = vmatpush.msra.mxu0 %v8038
  %9628 = vmatpush.msra.mxu0 %v8036
  %9629 = vmatpush.msra.mxu0 %v8034
  %9630 = vmatpush.msra.mxu0 %v8032
  %9631 = vmatpush.msra.mxu0 %v8030
  %9632 = vmatmul.f32.gmra.mxu0 %v7964
  %v9633 = vpop.f32.mrf.mxu0
  %v9634 = vadd.f32 0.0, %v9633
  %9635 = vmatmul.f32.gmra.mxu0 %v8012
  %v9636 = vpop.f32.mrf.mxu0
  %v9637 = vadd.f32 0.0, %v9636
  %9638 = vdwg.mxu0
  %9639 = vmatpush.msra.mxu0 %v8092
  %9640 = vmatpush.msra.mxu0 %v8090
  %9641 = vmatpush.msra.mxu0 %v8088
  %9642 = vmatpush.msra.mxu0 %v8086
  %9643 = vmatpush.msra.mxu0 %v8084
  %9644 = vmatpush.msra.mxu0 %v8082
  %9645 = vmatpush.msra.mxu0 %v8080
  %9646 = vmatpush.msra.mxu0 %v8078
  %9647 = vmatpush.msra.mxu0 %v8076
  %9648 = vmatpush.msra.mxu0 %v8074
  %9649 = vmatpush.msra.mxu0 %v8072
  %9650 = vmatpush.msra.mxu0 %v8070
  %9651 = vmatpush.msra.mxu0 %v8068
  %9652 = vmatpush.msra.mxu0 %v8066
  %9653 = vmatpush.msra.mxu0 %v8064
  %9654 = vmatpush.msra.mxu0 %v8062
  %9655 = vmatmul.f32.gmra.mxu0 %v7965
  %v9656 = vpop.f32.mrf.mxu0
  %v9657 = vadd.f32 %v9634, %v9656
  %9658 = vmatmul.f32.gmra.mxu0 %v8013
  %v9659 = vpop.f32.mrf.mxu0
  %v9660 = vadd.f32 %v9637, %v9659
  %9661 = vdwg.mxu0
  %9662 = vmatpush.msra.mxu0 %v8124
  %9663 = vmatpush.msra.mxu0 %v8122
  %9664 = vmatpush.msra.mxu0 %v8120
  %9665 = vmatpush.msra.mxu0 %v8118
  %9666 = vmatpush.msra.mxu0 %v8116
  %9667 = vmatpush.msra.mxu0 %v8114
  %9668 = vmatpush.msra.mxu0 %v8112
  %9669 = vmatpush.msra.mxu0 %v8110
  %9670 = vmatpush.msra.mxu0 %v8108
  %9671 = vmatpush.msra.mxu0 %v8106
  %9672 = vmatpush.msra.mxu0 %v8104
  %9673 = vmatpush.msra.mxu0 %v8102
  %9674 = vmatpush.msra.mxu0 %v8100
  %9675 = vmatpush.msra.mxu0 %v8098
  %9676 = vmatpush.msra.mxu0 %v8096
  %9677 = vmatpush.msra.mxu0 %v8094
  %9678 = vmatmul.f32.gmra.mxu0 %v7966
  %v9679 = vpop.f32.mrf.mxu0
  %v9680 = vadd.f32 %v9657, %v9679
  %9681 = vmatmul.f32.gmra.mxu0 %v8014
  %v9682 = vpop.f32.mrf.mxu0
  %v9683 = vadd.f32 %v9660, %v9682
  %9684 = vdwg.mxu0
  %9685 = vmatpush.msra.mxu0 %v8156
  %9686 = vmatpush.msra.mxu0 %v8154
  %9687 = vmatpush.msra.mxu0 %v8152
  %9688 = vmatpush.msra.mxu0 %v8150
  %9689 = vmatpush.msra.mxu0 %v8148
  %9690 = vmatpush.msra.mxu0 %v8146
  %9691 = vmatpush.msra.mxu0 %v8144
  %9692 = vmatpush.msra.mxu0 %v8142
  %9693 = vmatpush.msra.mxu0 %v8140
  %9694 = vmatpush.msra.mxu0 %v8138
  %9695 = vmatpush.msra.mxu0 %v8136
  %9696 = vmatpush.msra.mxu0 %v8134
  %9697 = vmatpush.msra.mxu0 %v8132
  %9698 = vmatpush.msra.mxu0 %v8130
  %9699 = vmatpush.msra.mxu0 %v8128
  %9700 = vmatpush.msra.mxu0 %v8126
  %9701 = vmatmul.f32.gmra.mxu0 %v7967
  %v9702 = vpop.f32.mrf.mxu0
  %v9703 = vadd.f32 %v9680, %v9702
  %9704 = vmatmul.f32.gmra.mxu0 %v8015
  %v9705 = vpop.f32.mrf.mxu0
  %v9706 = vadd.f32 %v9683, %v9705
  %9707 = vdwg.mxu0
  %9708 = vmatpush.msra.mxu0 %v8188
  %9709 = vmatpush.msra.mxu0 %v8186
  %9710 = vmatpush.msra.mxu0 %v8184
  %9711 = vmatpush.msra.mxu0 %v8182
  %9712 = vmatpush.msra.mxu0 %v8180
  %9713 = vmatpush.msra.mxu0 %v8178
  %9714 = vmatpush.msra.mxu0 %v8176
  %9715 = vmatpush.msra.mxu0 %v8174
  %9716 = vmatpush.msra.mxu0 %v8172
  %9717 = vmatpush.msra.mxu0 %v8170
  %9718 = vmatpush.msra.mxu0 %v8168
  %9719 = vmatpush.msra.mxu0 %v8166
  %9720 = vmatpush.msra.mxu0 %v8164
  %9721 = vmatpush.msra.mxu0 %v8162
  %9722 = vmatpush.msra.mxu0 %v8160
  %9723 = vmatpush.msra.mxu0 %v8158
  %9724 = vmatmul.f32.gmra.mxu0 %v7968
  %v9725 = vpop.f32.mrf.mxu0
  %v9726 = vadd.f32 %v9703, %v9725
  %9727 = vmatmul.f32.gmra.mxu0 %v8016
  %v9728 = vpop.f32.mrf.mxu0
  %v9729 = vadd.f32 %v9706, %v9728
  %9730 = vdwg.mxu0
  %9731 = vmatpush.msra.mxu0 0.0
  %9732 = vmatpush.msra.mxu0 0.0
  %9733 = vmatpush.msra.mxu0 0.0
  %9734 = vmatpush.msra.mxu0 0.0
  %9735 = vmatpush.msra.mxu0 0.0
  %9736 = vmatpush.msra.mxu0 0.0
  %9737 = vmatpush.msra.mxu0 0.0
  %9738 = vmatpush.msra.mxu0 0.0
  %9739 = vmatpush.msra.mxu0 0.0
  %9740 = vmatpush.msra.mxu0 0.0
  %9741 = vmatpush.msra.mxu0 0.0
  %9742 = vmatpush.msra.mxu0 0.0
  %9743 = vmatpush.msra.mxu0 0.0
  %9744 = vmatpush.msra.mxu0 0.0
  %9745 = vmatpush.msra.mxu0 0.0
  %9746 = vmatpush.msra.mxu0 %v8201
  %9747 = vmatmul.f32.gmra.mxu0 %v9611
  %v9748 = vpop.f32.mrf.mxu0
  %v9749 = vadd.f32 %v9726, %v9748
  %9750 = vmatmul.f32.gmra.mxu0 %v9614
  %v9751 = vpop.f32.mrf.mxu0
  %v9752 = vadd.f32 %v9729, %v9751
  %9753 = vdwg.mxu0
  %9754 = vmatpush.msra.mxu0 %v8061
  %9755 = vmatpush.msra.mxu0 %v8059
  %9756 = vmatpush.msra.mxu0 %v8057
  %9757 = vmatpush.msra.mxu0 %v8055
  %9758 = vmatpush.msra.mxu0 %v8053
  %9759 = vmatpush.msra.mxu0 %v8051
  %9760 = vmatpush.msra.mxu0 %v8049
  %9761 = vmatpush.msra.mxu0 %v8047
  %9762 = vmatpush.msra.mxu0 %v8045
  %9763 = vmatpush.msra.mxu0 %v8043
  %9764 = vmatpush.msra.mxu0 %v8041
  %9765 = vmatpush.msra.mxu0 %v8039
  %9766 = vmatpush.msra.mxu0 %v8037
  %9767 = vmatpush.msra.mxu0 %v8035
  %9768 = vmatpush.msra.mxu0 %v8033
  %9769 = vmatpush.msra.mxu0 %v8031
  %9770 = vmatmul.f32.gmra.mxu0 %v7964
  %v9771 = vpop.f32.mrf.mxu0
  %v9772 = vadd.f32 0.0, %v9771
  %9773 = vmatmul.f32.gmra.mxu0 %v8012
  %v9774 = vpop.f32.mrf.mxu0
  %v9775 = vadd.f32 0.0, %v9774
  %9776 = vdwg.mxu0
  %9777 = vmatpush.msra.mxu0 %v8093
  %9778 = vmatpush.msra.mxu0 %v8091
  %9779 = vmatpush.msra.mxu0 %v8089
  %9780 = vmatpush.msra.mxu0 %v8087
  %9781 = vmatpush.msra.mxu0 %v8085
  %9782 = vmatpush.msra.mxu0 %v8083
  %9783 = vmatpush.msra.mxu0 %v8081
  %9784 = vmatpush.msra.mxu0 %v8079
  %9785 = vmatpush.msra.mxu0 %v8077
  %9786 = vmatpush.msra.mxu0 %v8075
  %9787 = vmatpush.msra.mxu0 %v8073
  %9788 = vmatpush.msra.mxu0 %v8071
  %9789 = vmatpush.msra.mxu0 %v8069
  %9790 = vmatpush.msra.mxu0 %v8067
  %9791 = vmatpush.msra.mxu0 %v8065
  %9792 = vmatpush.msra.mxu0 %v8063
  %9793 = vmatmul.f32.gmra.mxu0 %v7965
  %v9794 = vpop.f32.mrf.mxu0
  %v9795 = vadd.f32 %v9772, %v9794
  %9796 = vmatmul.f32.gmra.mxu0 %v8013
  %v9797 = vpop.f32.mrf.mxu0
  %v9798 = vadd.f32 %v9775, %v9797
  %9799 = vdwg.mxu0
  %9800 = vmatpush.msra.mxu0 %v8125
  %9801 = vmatpush.msra.mxu0 %v8123
  %9802 = vmatpush.msra.mxu0 %v8121
  %9803 = vmatpush.msra.mxu0 %v8119
  %9804 = vmatpush.msra.mxu0 %v8117
  %9805 = vmatpush.msra.mxu0 %v8115
  %9806 = vmatpush.msra.mxu0 %v8113
  %9807 = vmatpush.msra.mxu0 %v8111
  %9808 = vmatpush.msra.mxu0 %v8109
  %9809 = vmatpush.msra.mxu0 %v8107
  %9810 = vmatpush.msra.mxu0 %v8105
  %9811 = vmatpush.msra.mxu0 %v8103
  %9812 = vmatpush.msra.mxu0 %v8101
  %9813 = vmatpush.msra.mxu0 %v8099
  %9814 = vmatpush.msra.mxu0 %v8097
  %9815 = vmatpush.msra.mxu0 %v8095
  %9816 = vmatmul.f32.gmra.mxu0 %v7966
  %v9817 = vpop.f32.mrf.mxu0
  %v9818 = vadd.f32 %v9795, %v9817
  %9819 = vmatmul.f32.gmra.mxu0 %v8014
  %v9820 = vpop.f32.mrf.mxu0
  %v9821 = vadd.f32 %v9798, %v9820
  %9822 = vdwg.mxu0
  %9823 = vmatpush.msra.mxu0 %v8157
  %9824 = vmatpush.msra.mxu0 %v8155
  %9825 = vmatpush.msra.mxu0 %v8153
  %9826 = vmatpush.msra.mxu0 %v8151
  %9827 = vmatpush.msra.mxu0 %v8149
  %9828 = vmatpush.msra.mxu0 %v8147
  %9829 = vmatpush.msra.mxu0 %v8145
  %9830 = vmatpush.msra.mxu0 %v8143
  %9831 = vmatpush.msra.mxu0 %v8141
  %9832 = vmatpush.msra.mxu0 %v8139
  %9833 = vmatpush.msra.mxu0 %v8137
  %9834 = vmatpush.msra.mxu0 %v8135
  %9835 = vmatpush.msra.mxu0 %v8133
  %9836 = vmatpush.msra.mxu0 %v8131
  %9837 = vmatpush.msra.mxu0 %v8129
  %9838 = vmatpush.msra.mxu0 %v8127
  %9839 = vmatmul.f32.gmra.mxu0 %v7967
  %v9840 = vpop.f32.mrf.mxu0
  %v9841 = vadd.f32 %v9818, %v9840
  %9842 = vmatmul.f32.gmra.mxu0 %v8015
  %v9843 = vpop.f32.mrf.mxu0
  %v9844 = vadd.f32 %v9821, %v9843
  %9845 = vdwg.mxu0
  %9846 = vmatpush.msra.mxu0 %v8189
  %9847 = vmatpush.msra.mxu0 %v8187
  %9848 = vmatpush.msra.mxu0 %v8185
  %9849 = vmatpush.msra.mxu0 %v8183
  %9850 = vmatpush.msra.mxu0 %v8181
  %9851 = vmatpush.msra.mxu0 %v8179
  %9852 = vmatpush.msra.mxu0 %v8177
  %9853 = vmatpush.msra.mxu0 %v8175
  %9854 = vmatpush.msra.mxu0 %v8173
  %9855 = vmatpush.msra.mxu0 %v8171
  %9856 = vmatpush.msra.mxu0 %v8169
  %9857 = vmatpush.msra.mxu0 %v8167
  %9858 = vmatpush.msra.mxu0 %v8165
  %9859 = vmatpush.msra.mxu0 %v8163
  %9860 = vmatpush.msra.mxu0 %v8161
  %9861 = vmatpush.msra.mxu0 %v8159
  %9862 = vmatmul.f32.gmra.mxu0 %v7968
  %v9863 = vpop.f32.mrf.mxu0
  %v9864 = vadd.f32 %v9841, %v9863
  %9865 = vmatmul.f32.gmra.mxu0 %v8016
  %v9866 = vpop.f32.mrf.mxu0
  %v9867 = vadd.f32 %v9844, %v9866
  %9868 = vdwg.mxu0
  %9869 = vmatpush.msra.mxu0 0.0
  %9870 = vmatpush.msra.mxu0 0.0
  %9871 = vmatpush.msra.mxu0 0.0
  %9872 = vmatpush.msra.mxu0 0.0
  %9873 = vmatpush.msra.mxu0 0.0
  %9874 = vmatpush.msra.mxu0 0.0
  %9875 = vmatpush.msra.mxu0 0.0
  %9876 = vmatpush.msra.mxu0 0.0
  %9877 = vmatpush.msra.mxu0 0.0
  %9878 = vmatpush.msra.mxu0 0.0
  %9879 = vmatpush.msra.mxu0 0.0
  %9880 = vmatpush.msra.mxu0 0.0
  %9881 = vmatpush.msra.mxu0 0.0
  %9882 = vmatpush.msra.mxu0 0.0
  %9883 = vmatpush.msra.mxu0 0.0
  %9884 = vmatpush.msra.mxu0 %v8204
  %9885 = vmatmul.f32.gmra.mxu0 %v9611
  %v9886 = vpop.f32.mrf.mxu0
  %v9887 = vadd.f32 %v9864, %v9886
  %9888 = vmatmul.f32.gmra.mxu0 %v9614
  %v9889 = vpop.f32.mrf.mxu0
  %v9890 = vadd.f32 %v9867, %v9889
  %9891 = vdwg.mxu0
  %v9893 = vsel %vm8192, %v7975, 0
  %v9896 = vsel %vm8192, %v8023, 0
  %9898 = vmatpush.msra.mxu0 %v8060
  %9899 = vmatpush.msra.mxu0 %v8058
  %9900 = vmatpush.msra.mxu0 %v8056
  %9901 = vmatpush.msra.mxu0 %v8054
  %9902 = vmatpush.msra.mxu0 %v8052
  %9903 = vmatpush.msra.mxu0 %v8050
  %9904 = vmatpush.msra.mxu0 %v8048
  %9905 = vmatpush.msra.mxu0 %v8046
  %9906 = vmatpush.msra.mxu0 %v8044
  %9907 = vmatpush.msra.mxu0 %v8042
  %9908 = vmatpush.msra.mxu0 %v8040
  %9909 = vmatpush.msra.mxu0 %v8038
  %9910 = vmatpush.msra.mxu0 %v8036
  %9911 = vmatpush.msra.mxu0 %v8034
  %9912 = vmatpush.msra.mxu0 %v8032
  %9913 = vmatpush.msra.mxu0 %v8030
  %9914 = vmatmul.f32.gmra.mxu0 %v7970
  %v9915 = vpop.f32.mrf.mxu0
  %v9916 = vadd.f32 0.0, %v9915
  %9917 = vmatmul.f32.gmra.mxu0 %v8018
  %v9918 = vpop.f32.mrf.mxu0
  %v9919 = vadd.f32 0.0, %v9918
  %9920 = vdwg.mxu0
  %9921 = vmatpush.msra.mxu0 %v8092
  %9922 = vmatpush.msra.mxu0 %v8090
  %9923 = vmatpush.msra.mxu0 %v8088
  %9924 = vmatpush.msra.mxu0 %v8086
  %9925 = vmatpush.msra.mxu0 %v8084
  %9926 = vmatpush.msra.mxu0 %v8082
  %9927 = vmatpush.msra.mxu0 %v8080
  %9928 = vmatpush.msra.mxu0 %v8078
  %9929 = vmatpush.msra.mxu0 %v8076
  %9930 = vmatpush.msra.mxu0 %v8074
  %9931 = vmatpush.msra.mxu0 %v8072
  %9932 = vmatpush.msra.mxu0 %v8070
  %9933 = vmatpush.msra.mxu0 %v8068
  %9934 = vmatpush.msra.mxu0 %v8066
  %9935 = vmatpush.msra.mxu0 %v8064
  %9936 = vmatpush.msra.mxu0 %v8062
  %9937 = vmatmul.f32.gmra.mxu0 %v7971
  %v9938 = vpop.f32.mrf.mxu0
  %v9939 = vadd.f32 %v9916, %v9938
  %9940 = vmatmul.f32.gmra.mxu0 %v8019
  %v9941 = vpop.f32.mrf.mxu0
  %v9942 = vadd.f32 %v9919, %v9941
  %9943 = vdwg.mxu0
  %9944 = vmatpush.msra.mxu0 %v8124
  %9945 = vmatpush.msra.mxu0 %v8122
  %9946 = vmatpush.msra.mxu0 %v8120
  %9947 = vmatpush.msra.mxu0 %v8118
  %9948 = vmatpush.msra.mxu0 %v8116
  %9949 = vmatpush.msra.mxu0 %v8114
  %9950 = vmatpush.msra.mxu0 %v8112
  %9951 = vmatpush.msra.mxu0 %v8110
  %9952 = vmatpush.msra.mxu0 %v8108
  %9953 = vmatpush.msra.mxu0 %v8106
  %9954 = vmatpush.msra.mxu0 %v8104
  %9955 = vmatpush.msra.mxu0 %v8102
  %9956 = vmatpush.msra.mxu0 %v8100
  %9957 = vmatpush.msra.mxu0 %v8098
  %9958 = vmatpush.msra.mxu0 %v8096
  %9959 = vmatpush.msra.mxu0 %v8094
  %9960 = vmatmul.f32.gmra.mxu0 %v7972
  %v9961 = vpop.f32.mrf.mxu0
  %v9962 = vadd.f32 %v9939, %v9961
  %9963 = vmatmul.f32.gmra.mxu0 %v8020
  %v9964 = vpop.f32.mrf.mxu0
  %v9965 = vadd.f32 %v9942, %v9964
  %9966 = vdwg.mxu0
  %9967 = vmatpush.msra.mxu0 %v8156
  %9968 = vmatpush.msra.mxu0 %v8154
  %9969 = vmatpush.msra.mxu0 %v8152
  %9970 = vmatpush.msra.mxu0 %v8150
  %9971 = vmatpush.msra.mxu0 %v8148
  %9972 = vmatpush.msra.mxu0 %v8146
  %9973 = vmatpush.msra.mxu0 %v8144
  %9974 = vmatpush.msra.mxu0 %v8142
  %9975 = vmatpush.msra.mxu0 %v8140
  %9976 = vmatpush.msra.mxu0 %v8138
  %9977 = vmatpush.msra.mxu0 %v8136
  %9978 = vmatpush.msra.mxu0 %v8134
  %9979 = vmatpush.msra.mxu0 %v8132
  %9980 = vmatpush.msra.mxu0 %v8130
  %9981 = vmatpush.msra.mxu0 %v8128
  %9982 = vmatpush.msra.mxu0 %v8126
  %9983 = vmatmul.f32.gmra.mxu0 %v7973
  %v9984 = vpop.f32.mrf.mxu0
  %v9985 = vadd.f32 %v9962, %v9984
  %9986 = vmatmul.f32.gmra.mxu0 %v8021
  %v9987 = vpop.f32.mrf.mxu0
  %v9988 = vadd.f32 %v9965, %v9987
  %9989 = vdwg.mxu0
  %9990 = vmatpush.msra.mxu0 %v8188
  %9991 = vmatpush.msra.mxu0 %v8186
  %9992 = vmatpush.msra.mxu0 %v8184
  %9993 = vmatpush.msra.mxu0 %v8182
  %9994 = vmatpush.msra.mxu0 %v8180
  %9995 = vmatpush.msra.mxu0 %v8178
  %9996 = vmatpush.msra.mxu0 %v8176
  %9997 = vmatpush.msra.mxu0 %v8174
  %9998 = vmatpush.msra.mxu0 %v8172
  %9999 = vmatpush.msra.mxu0 %v8170
  %10000 = vmatpush.msra.mxu0 %v8168
  %10001 = vmatpush.msra.mxu0 %v8166
  %10002 = vmatpush.msra.mxu0 %v8164
  %10003 = vmatpush.msra.mxu0 %v8162
  %10004 = vmatpush.msra.mxu0 %v8160
  %10005 = vmatpush.msra.mxu0 %v8158
  %10006 = vmatmul.f32.gmra.mxu0 %v7974
  %v10007 = vpop.f32.mrf.mxu0
  %v10008 = vadd.f32 %v9985, %v10007
  %10009 = vmatmul.f32.gmra.mxu0 %v8022
  %v10010 = vpop.f32.mrf.mxu0
  %v10011 = vadd.f32 %v9988, %v10010
  %10012 = vdwg.mxu0
  %10013 = vmatpush.msra.mxu0 0.0
  %10014 = vmatpush.msra.mxu0 0.0
  %10015 = vmatpush.msra.mxu0 0.0
  %10016 = vmatpush.msra.mxu0 0.0
  %10017 = vmatpush.msra.mxu0 0.0
  %10018 = vmatpush.msra.mxu0 0.0
  %10019 = vmatpush.msra.mxu0 0.0
  %10020 = vmatpush.msra.mxu0 0.0
  %10021 = vmatpush.msra.mxu0 0.0
  %10022 = vmatpush.msra.mxu0 0.0
  %10023 = vmatpush.msra.mxu0 0.0
  %10024 = vmatpush.msra.mxu0 0.0
  %10025 = vmatpush.msra.mxu0 0.0
  %10026 = vmatpush.msra.mxu0 0.0
  %10027 = vmatpush.msra.mxu0 0.0
  %10028 = vmatpush.msra.mxu0 %v8201
  %10029 = vmatmul.f32.gmra.mxu0 %v9893
  %v10030 = vpop.f32.mrf.mxu0
  %v10031 = vadd.f32 %v10008, %v10030
  %10032 = vmatmul.f32.gmra.mxu0 %v9896
  %v10033 = vpop.f32.mrf.mxu0
  %v10034 = vadd.f32 %v10011, %v10033
  %10035 = vdwg.mxu0
  %10036 = vmatpush.msra.mxu0 %v8061
  %10037 = vmatpush.msra.mxu0 %v8059
  %10038 = vmatpush.msra.mxu0 %v8057
  %10039 = vmatpush.msra.mxu0 %v8055
  %10040 = vmatpush.msra.mxu0 %v8053
  %10041 = vmatpush.msra.mxu0 %v8051
  %10042 = vmatpush.msra.mxu0 %v8049
  %10043 = vmatpush.msra.mxu0 %v8047
  %10044 = vmatpush.msra.mxu0 %v8045
  %10045 = vmatpush.msra.mxu0 %v8043
  %10046 = vmatpush.msra.mxu0 %v8041
  %10047 = vmatpush.msra.mxu0 %v8039
  %10048 = vmatpush.msra.mxu0 %v8037
  %10049 = vmatpush.msra.mxu0 %v8035
  %10050 = vmatpush.msra.mxu0 %v8033
  %10051 = vmatpush.msra.mxu0 %v8031
  %10052 = vmatmul.f32.gmra.mxu0 %v7970
  %v10053 = vpop.f32.mrf.mxu0
  %v10054 = vadd.f32 0.0, %v10053
  %10055 = vmatmul.f32.gmra.mxu0 %v8018
  %v10056 = vpop.f32.mrf.mxu0
  %v10057 = vadd.f32 0.0, %v10056
  %10058 = vdwg.mxu0
  %10059 = vmatpush.msra.mxu0 %v8093
  %10060 = vmatpush.msra.mxu0 %v8091
  %10061 = vmatpush.msra.mxu0 %v8089
  %10062 = vmatpush.msra.mxu0 %v8087
  %10063 = vmatpush.msra.mxu0 %v8085
  %10064 = vmatpush.msra.mxu0 %v8083
  %10065 = vmatpush.msra.mxu0 %v8081
  %10066 = vmatpush.msra.mxu0 %v8079
  %10067 = vmatpush.msra.mxu0 %v8077
  %10068 = vmatpush.msra.mxu0 %v8075
  %10069 = vmatpush.msra.mxu0 %v8073
  %10070 = vmatpush.msra.mxu0 %v8071
  %10071 = vmatpush.msra.mxu0 %v8069
  %10072 = vmatpush.msra.mxu0 %v8067
  %10073 = vmatpush.msra.mxu0 %v8065
  %10074 = vmatpush.msra.mxu0 %v8063
  %10075 = vmatmul.f32.gmra.mxu0 %v7971
  %v10076 = vpop.f32.mrf.mxu0
  %v10077 = vadd.f32 %v10054, %v10076
  %10078 = vmatmul.f32.gmra.mxu0 %v8019
  %v10079 = vpop.f32.mrf.mxu0
  %v10080 = vadd.f32 %v10057, %v10079
  %10081 = vdwg.mxu0
  %10082 = vmatpush.msra.mxu0 %v8125
  %10083 = vmatpush.msra.mxu0 %v8123
  %10084 = vmatpush.msra.mxu0 %v8121
  %10085 = vmatpush.msra.mxu0 %v8119
  %10086 = vmatpush.msra.mxu0 %v8117
  %10087 = vmatpush.msra.mxu0 %v8115
  %10088 = vmatpush.msra.mxu0 %v8113
  %10089 = vmatpush.msra.mxu0 %v8111
  %10090 = vmatpush.msra.mxu0 %v8109
  %10091 = vmatpush.msra.mxu0 %v8107
  %10092 = vmatpush.msra.mxu0 %v8105
  %10093 = vmatpush.msra.mxu0 %v8103
  %10094 = vmatpush.msra.mxu0 %v8101
  %10095 = vmatpush.msra.mxu0 %v8099
  %10096 = vmatpush.msra.mxu0 %v8097
  %10097 = vmatpush.msra.mxu0 %v8095
  %10098 = vmatmul.f32.gmra.mxu0 %v7972
  %v10099 = vpop.f32.mrf.mxu0
  %v10100 = vadd.f32 %v10077, %v10099
  %10101 = vmatmul.f32.gmra.mxu0 %v8020
  %v10102 = vpop.f32.mrf.mxu0
  %v10103 = vadd.f32 %v10080, %v10102
  %10104 = vdwg.mxu0
  %10105 = vmatpush.msra.mxu0 %v8157
  %10106 = vmatpush.msra.mxu0 %v8155
  %10107 = vmatpush.msra.mxu0 %v8153
  %10108 = vmatpush.msra.mxu0 %v8151
  %10109 = vmatpush.msra.mxu0 %v8149
  %10110 = vmatpush.msra.mxu0 %v8147
  %10111 = vmatpush.msra.mxu0 %v8145
  %10112 = vmatpush.msra.mxu0 %v8143
  %10113 = vmatpush.msra.mxu0 %v8141
  %10114 = vmatpush.msra.mxu0 %v8139
  %10115 = vmatpush.msra.mxu0 %v8137
  %10116 = vmatpush.msra.mxu0 %v8135
  %10117 = vmatpush.msra.mxu0 %v8133
  %10118 = vmatpush.msra.mxu0 %v8131
  %10119 = vmatpush.msra.mxu0 %v8129
  %10120 = vmatpush.msra.mxu0 %v8127
  %10121 = vmatmul.f32.gmra.mxu0 %v7973
  %v10122 = vpop.f32.mrf.mxu0
  %v10123 = vadd.f32 %v10100, %v10122
  %10124 = vmatmul.f32.gmra.mxu0 %v8021
  %v10125 = vpop.f32.mrf.mxu0
  %v10126 = vadd.f32 %v10103, %v10125
  %10127 = vdwg.mxu0
  %10128 = vmatpush.msra.mxu0 %v8189
  %10129 = vmatpush.msra.mxu0 %v8187
  %10130 = vmatpush.msra.mxu0 %v8185
  %10131 = vmatpush.msra.mxu0 %v8183
  %10132 = vmatpush.msra.mxu0 %v8181
  %10133 = vmatpush.msra.mxu0 %v8179
  %10134 = vmatpush.msra.mxu0 %v8177
  %10135 = vmatpush.msra.mxu0 %v8175
  %10136 = vmatpush.msra.mxu0 %v8173
  %10137 = vmatpush.msra.mxu0 %v8171
  %10138 = vmatpush.msra.mxu0 %v8169
  %10139 = vmatpush.msra.mxu0 %v8167
  %10140 = vmatpush.msra.mxu0 %v8165
  %10141 = vmatpush.msra.mxu0 %v8163
  %10142 = vmatpush.msra.mxu0 %v8161
  %10143 = vmatpush.msra.mxu0 %v8159
  %10144 = vmatmul.f32.gmra.mxu0 %v7974
  %v10145 = vpop.f32.mrf.mxu0
  %v10146 = vadd.f32 %v10123, %v10145
  %10147 = vmatmul.f32.gmra.mxu0 %v8022
  %v10148 = vpop.f32.mrf.mxu0
  %v10149 = vadd.f32 %v10126, %v10148
  %10150 = vdwg.mxu0
  %10151 = vmatpush.msra.mxu0 0.0
  %10152 = vmatpush.msra.mxu0 0.0
  %10153 = vmatpush.msra.mxu0 0.0
  %10154 = vmatpush.msra.mxu0 0.0
  %10155 = vmatpush.msra.mxu0 0.0
  %10156 = vmatpush.msra.mxu0 0.0
  %10157 = vmatpush.msra.mxu0 0.0
  %10158 = vmatpush.msra.mxu0 0.0
  %10159 = vmatpush.msra.mxu0 0.0
  %10160 = vmatpush.msra.mxu0 0.0
  %10161 = vmatpush.msra.mxu0 0.0
  %10162 = vmatpush.msra.mxu0 0.0
  %10163 = vmatpush.msra.mxu0 0.0
  %10164 = vmatpush.msra.mxu0 0.0
  %10165 = vmatpush.msra.mxu0 0.0
  %10166 = vmatpush.msra.mxu0 %v8204
  %10167 = vmatmul.f32.gmra.mxu0 %v9893
  %v10168 = vpop.f32.mrf.mxu0
  %v10169 = vadd.f32 %v10146, %v10168
  %10170 = vmatmul.f32.gmra.mxu0 %v9896
  %v10171 = vpop.f32.mrf.mxu0
  %v10172 = vadd.f32 %v10149, %v10171
  %10173 = vdwg.mxu0
  %v10175 = vsel %vm8192, %v7981, 0
  %v10178 = vsel %vm8192, %v8029, 0
  %10180 = vmatpush.msra.mxu0 %v8060
  %10181 = vmatpush.msra.mxu0 %v8058
  %10182 = vmatpush.msra.mxu0 %v8056
  %10183 = vmatpush.msra.mxu0 %v8054
  %10184 = vmatpush.msra.mxu0 %v8052
  %10185 = vmatpush.msra.mxu0 %v8050
  %10186 = vmatpush.msra.mxu0 %v8048
  %10187 = vmatpush.msra.mxu0 %v8046
  %10188 = vmatpush.msra.mxu0 %v8044
  %10189 = vmatpush.msra.mxu0 %v8042
  %10190 = vmatpush.msra.mxu0 %v8040
  %10191 = vmatpush.msra.mxu0 %v8038
  %10192 = vmatpush.msra.mxu0 %v8036
  %10193 = vmatpush.msra.mxu0 %v8034
  %10194 = vmatpush.msra.mxu0 %v8032
  %10195 = vmatpush.msra.mxu0 %v8030
  %10196 = vmatmul.f32.gmra.mxu0 %v7976
  %v10197 = vpop.f32.mrf.mxu0
  %v10198 = vadd.f32 0.0, %v10197
  %10199 = vmatmul.f32.gmra.mxu0 %v8024
  %v10200 = vpop.f32.mrf.mxu0
  %v10201 = vadd.f32 0.0, %v10200
  %10202 = vdwg.mxu0
  %10203 = vmatpush.msra.mxu0 %v8092
  %10204 = vmatpush.msra.mxu0 %v8090
  %10205 = vmatpush.msra.mxu0 %v8088
  %10206 = vmatpush.msra.mxu0 %v8086
  %10207 = vmatpush.msra.mxu0 %v8084
  %10208 = vmatpush.msra.mxu0 %v8082
  %10209 = vmatpush.msra.mxu0 %v8080
  %10210 = vmatpush.msra.mxu0 %v8078
  %10211 = vmatpush.msra.mxu0 %v8076
  %10212 = vmatpush.msra.mxu0 %v8074
  %10213 = vmatpush.msra.mxu0 %v8072
  %10214 = vmatpush.msra.mxu0 %v8070
  %10215 = vmatpush.msra.mxu0 %v8068
  %10216 = vmatpush.msra.mxu0 %v8066
  %10217 = vmatpush.msra.mxu0 %v8064
  %10218 = vmatpush.msra.mxu0 %v8062
  %10219 = vmatmul.f32.gmra.mxu0 %v7977
  %v10220 = vpop.f32.mrf.mxu0
  %v10221 = vadd.f32 %v10198, %v10220
  %10222 = vmatmul.f32.gmra.mxu0 %v8025
  %v10223 = vpop.f32.mrf.mxu0
  %v10224 = vadd.f32 %v10201, %v10223
  %10225 = vdwg.mxu0
  %10226 = vmatpush.msra.mxu0 %v8124
  %10227 = vmatpush.msra.mxu0 %v8122
  %10228 = vmatpush.msra.mxu0 %v8120
  %10229 = vmatpush.msra.mxu0 %v8118
  %10230 = vmatpush.msra.mxu0 %v8116
  %10231 = vmatpush.msra.mxu0 %v8114
  %10232 = vmatpush.msra.mxu0 %v8112
  %10233 = vmatpush.msra.mxu0 %v8110
  %10234 = vmatpush.msra.mxu0 %v8108
  %10235 = vmatpush.msra.mxu0 %v8106
  %10236 = vmatpush.msra.mxu0 %v8104
  %10237 = vmatpush.msra.mxu0 %v8102
  %10238 = vmatpush.msra.mxu0 %v8100
  %10239 = vmatpush.msra.mxu0 %v8098
  %10240 = vmatpush.msra.mxu0 %v8096
  %10241 = vmatpush.msra.mxu0 %v8094
  %10242 = vmatmul.f32.gmra.mxu0 %v7978
  %v10243 = vpop.f32.mrf.mxu0
  %v10244 = vadd.f32 %v10221, %v10243
  %10245 = vmatmul.f32.gmra.mxu0 %v8026
  %v10246 = vpop.f32.mrf.mxu0
  %v10247 = vadd.f32 %v10224, %v10246
  %10248 = vdwg.mxu0
  %10249 = vmatpush.msra.mxu0 %v8156
  %10250 = vmatpush.msra.mxu0 %v8154
  %10251 = vmatpush.msra.mxu0 %v8152
  %10252 = vmatpush.msra.mxu0 %v8150
  %10253 = vmatpush.msra.mxu0 %v8148
  %10254 = vmatpush.msra.mxu0 %v8146
  %10255 = vmatpush.msra.mxu0 %v8144
  %10256 = vmatpush.msra.mxu0 %v8142
  %10257 = vmatpush.msra.mxu0 %v8140
  %10258 = vmatpush.msra.mxu0 %v8138
  %10259 = vmatpush.msra.mxu0 %v8136
  %10260 = vmatpush.msra.mxu0 %v8134
  %10261 = vmatpush.msra.mxu0 %v8132
  %10262 = vmatpush.msra.mxu0 %v8130
  %10263 = vmatpush.msra.mxu0 %v8128
  %10264 = vmatpush.msra.mxu0 %v8126
  %10265 = vmatmul.f32.gmra.mxu0 %v7979
  %v10266 = vpop.f32.mrf.mxu0
  %v10267 = vadd.f32 %v10244, %v10266
  %10268 = vmatmul.f32.gmra.mxu0 %v8027
  %v10269 = vpop.f32.mrf.mxu0
  %v10270 = vadd.f32 %v10247, %v10269
  %10271 = vdwg.mxu0
  %10272 = vmatpush.msra.mxu0 %v8188
  %10273 = vmatpush.msra.mxu0 %v8186
  %10274 = vmatpush.msra.mxu0 %v8184
  %10275 = vmatpush.msra.mxu0 %v8182
  %10276 = vmatpush.msra.mxu0 %v8180
  %10277 = vmatpush.msra.mxu0 %v8178
  %10278 = vmatpush.msra.mxu0 %v8176
  %10279 = vmatpush.msra.mxu0 %v8174
  %10280 = vmatpush.msra.mxu0 %v8172
  %10281 = vmatpush.msra.mxu0 %v8170
  %10282 = vmatpush.msra.mxu0 %v8168
  %10283 = vmatpush.msra.mxu0 %v8166
  %10284 = vmatpush.msra.mxu0 %v8164
  %10285 = vmatpush.msra.mxu0 %v8162
  %10286 = vmatpush.msra.mxu0 %v8160
  %10287 = vmatpush.msra.mxu0 %v8158
  %10288 = vmatmul.f32.gmra.mxu0 %v7980
  %v10289 = vpop.f32.mrf.mxu0
  %v10290 = vadd.f32 %v10267, %v10289
  %10291 = vmatmul.f32.gmra.mxu0 %v8028
  %v10292 = vpop.f32.mrf.mxu0
  %v10293 = vadd.f32 %v10270, %v10292
  %10294 = vdwg.mxu0
  %10295 = vmatpush.msra.mxu0 0.0
  %10296 = vmatpush.msra.mxu0 0.0
  %10297 = vmatpush.msra.mxu0 0.0
  %10298 = vmatpush.msra.mxu0 0.0
  %10299 = vmatpush.msra.mxu0 0.0
  %10300 = vmatpush.msra.mxu0 0.0
  %10301 = vmatpush.msra.mxu0 0.0
  %10302 = vmatpush.msra.mxu0 0.0
  %10303 = vmatpush.msra.mxu0 0.0
  %10304 = vmatpush.msra.mxu0 0.0
  %10305 = vmatpush.msra.mxu0 0.0
  %10306 = vmatpush.msra.mxu0 0.0
  %10307 = vmatpush.msra.mxu0 0.0
  %10308 = vmatpush.msra.mxu0 0.0
  %10309 = vmatpush.msra.mxu0 0.0
  %10310 = vmatpush.msra.mxu0 %v8201
  %10311 = vmatmul.f32.gmra.mxu0 %v10175
  %v10312 = vpop.f32.mrf.mxu0
  %v10313 = vadd.f32 %v10290, %v10312
  %10314 = vmatmul.f32.gmra.mxu0 %v10178
  %v10315 = vpop.f32.mrf.mxu0
  %v10316 = vadd.f32 %v10293, %v10315
  %10317 = vdwg.mxu0
  %10318 = vmatpush.msra.mxu0 %v8061
  %10319 = vmatpush.msra.mxu0 %v8059
  %10320 = vmatpush.msra.mxu0 %v8057
  %10321 = vmatpush.msra.mxu0 %v8055
  %10322 = vmatpush.msra.mxu0 %v8053
  %10323 = vmatpush.msra.mxu0 %v8051
  %10324 = vmatpush.msra.mxu0 %v8049
  %10325 = vmatpush.msra.mxu0 %v8047
  %10326 = vmatpush.msra.mxu0 %v8045
  %10327 = vmatpush.msra.mxu0 %v8043
  %10328 = vmatpush.msra.mxu0 %v8041
  %10329 = vmatpush.msra.mxu0 %v8039
  %10330 = vmatpush.msra.mxu0 %v8037
  %10331 = vmatpush.msra.mxu0 %v8035
  %10332 = vmatpush.msra.mxu0 %v8033
  %10333 = vmatpush.msra.mxu0 %v8031
  %10334 = vmatmul.f32.gmra.mxu0 %v7976
  %v10335 = vpop.f32.mrf.mxu0
  %v10336 = vadd.f32 0.0, %v10335
  %10337 = vmatmul.f32.gmra.mxu0 %v8024
  %v10338 = vpop.f32.mrf.mxu0
  %v10339 = vadd.f32 0.0, %v10338
  %10340 = vdwg.mxu0
  %10341 = vmatpush.msra.mxu0 %v8093
  %10342 = vmatpush.msra.mxu0 %v8091
  %10343 = vmatpush.msra.mxu0 %v8089
  %10344 = vmatpush.msra.mxu0 %v8087
  %10345 = vmatpush.msra.mxu0 %v8085
  %10346 = vmatpush.msra.mxu0 %v8083
  %10347 = vmatpush.msra.mxu0 %v8081
  %10348 = vmatpush.msra.mxu0 %v8079
  %10349 = vmatpush.msra.mxu0 %v8077
  %10350 = vmatpush.msra.mxu0 %v8075
  %10351 = vmatpush.msra.mxu0 %v8073
  %10352 = vmatpush.msra.mxu0 %v8071
  %10353 = vmatpush.msra.mxu0 %v8069
  %10354 = vmatpush.msra.mxu0 %v8067
  %10355 = vmatpush.msra.mxu0 %v8065
  %10356 = vmatpush.msra.mxu0 %v8063
  %10357 = vmatmul.f32.gmra.mxu0 %v7977
  %v10358 = vpop.f32.mrf.mxu0
  %v10359 = vadd.f32 %v10336, %v10358
  %10360 = vmatmul.f32.gmra.mxu0 %v8025
  %v10361 = vpop.f32.mrf.mxu0
  %v10362 = vadd.f32 %v10339, %v10361
  %10363 = vdwg.mxu0
  %10364 = vmatpush.msra.mxu0 %v8125
  %10365 = vmatpush.msra.mxu0 %v8123
  %10366 = vmatpush.msra.mxu0 %v8121
  %10367 = vmatpush.msra.mxu0 %v8119
  %10368 = vmatpush.msra.mxu0 %v8117
  %10369 = vmatpush.msra.mxu0 %v8115
  %10370 = vmatpush.msra.mxu0 %v8113
  %10371 = vmatpush.msra.mxu0 %v8111
  %10372 = vmatpush.msra.mxu0 %v8109
  %10373 = vmatpush.msra.mxu0 %v8107
  %10374 = vmatpush.msra.mxu0 %v8105
  %10375 = vmatpush.msra.mxu0 %v8103
  %10376 = vmatpush.msra.mxu0 %v8101
  %10377 = vmatpush.msra.mxu0 %v8099
  %10378 = vmatpush.msra.mxu0 %v8097
  %10379 = vmatpush.msra.mxu0 %v8095
  %10380 = vmatmul.f32.gmra.mxu0 %v7978
  %v10381 = vpop.f32.mrf.mxu0
  %v10382 = vadd.f32 %v10359, %v10381
  %10383 = vmatmul.f32.gmra.mxu0 %v8026
  %v10384 = vpop.f32.mrf.mxu0
  %v10385 = vadd.f32 %v10362, %v10384
  %10386 = vdwg.mxu0
  %10387 = vmatpush.msra.mxu0 %v8157
  %10388 = vmatpush.msra.mxu0 %v8155
  %10389 = vmatpush.msra.mxu0 %v8153
  %10390 = vmatpush.msra.mxu0 %v8151
  %10391 = vmatpush.msra.mxu0 %v8149
  %10392 = vmatpush.msra.mxu0 %v8147
  %10393 = vmatpush.msra.mxu0 %v8145
  %10394 = vmatpush.msra.mxu0 %v8143
  %10395 = vmatpush.msra.mxu0 %v8141
  %10396 = vmatpush.msra.mxu0 %v8139
  %10397 = vmatpush.msra.mxu0 %v8137
  %10398 = vmatpush.msra.mxu0 %v8135
  %10399 = vmatpush.msra.mxu0 %v8133
  %10400 = vmatpush.msra.mxu0 %v8131
  %10401 = vmatpush.msra.mxu0 %v8129
  %10402 = vmatpush.msra.mxu0 %v8127
  %10403 = vmatmul.f32.gmra.mxu0 %v7979
  %v10404 = vpop.f32.mrf.mxu0
  %v10405 = vadd.f32 %v10382, %v10404
  %10406 = vmatmul.f32.gmra.mxu0 %v8027
  %v10407 = vpop.f32.mrf.mxu0
  %v10408 = vadd.f32 %v10385, %v10407
  %10409 = vdwg.mxu0
  %10410 = vmatpush.msra.mxu0 %v8189
  %10411 = vmatpush.msra.mxu0 %v8187
  %10412 = vmatpush.msra.mxu0 %v8185
  %10413 = vmatpush.msra.mxu0 %v8183
  %10414 = vmatpush.msra.mxu0 %v8181
  %10415 = vmatpush.msra.mxu0 %v8179
  %10416 = vmatpush.msra.mxu0 %v8177
  %10417 = vmatpush.msra.mxu0 %v8175
  %10418 = vmatpush.msra.mxu0 %v8173
  %10419 = vmatpush.msra.mxu0 %v8171
  %10420 = vmatpush.msra.mxu0 %v8169
  %10421 = vmatpush.msra.mxu0 %v8167
  %10422 = vmatpush.msra.mxu0 %v8165
  %10423 = vmatpush.msra.mxu0 %v8163
  %10424 = vmatpush.msra.mxu0 %v8161
  %10425 = vmatpush.msra.mxu0 %v8159
  %10426 = vmatmul.f32.gmra.mxu0 %v7980
  %v10427 = vpop.f32.mrf.mxu0
  %v10428 = vadd.f32 %v10405, %v10427
  %10429 = vmatmul.f32.gmra.mxu0 %v8028
  %v10430 = vpop.f32.mrf.mxu0
  %v10431 = vadd.f32 %v10408, %v10430
  %10432 = vdwg.mxu0
  %10433 = vmatpush.msra.mxu0 0.0
  %10434 = vmatpush.msra.mxu0 0.0
  %10435 = vmatpush.msra.mxu0 0.0
  %10436 = vmatpush.msra.mxu0 0.0
  %10437 = vmatpush.msra.mxu0 0.0
  %10438 = vmatpush.msra.mxu0 0.0
  %10439 = vmatpush.msra.mxu0 0.0
  %10440 = vmatpush.msra.mxu0 0.0
  %10441 = vmatpush.msra.mxu0 0.0
  %10442 = vmatpush.msra.mxu0 0.0
  %10443 = vmatpush.msra.mxu0 0.0
  %10444 = vmatpush.msra.mxu0 0.0
  %10445 = vmatpush.msra.mxu0 0.0
  %10446 = vmatpush.msra.mxu0 0.0
  %10447 = vmatpush.msra.mxu0 0.0
  %10448 = vmatpush.msra.mxu0 %v8204
  %10449 = vmatmul.f32.gmra.mxu0 %v10175
  %v10450 = vpop.f32.mrf.mxu0
  %v10451 = vadd.f32 %v10428, %v10450
  %10452 = vmatmul.f32.gmra.mxu0 %v10178
  %v10453 = vpop.f32.mrf.mxu0
  %v10454 = vadd.f32 %v10431, %v10453
  %10455 = vdwg.mxu0
  %v10456 = vld [vmem:[%s6] sm:$0xff]
  %v10457 = vld [vmem:[%s6 + $0x8] sm:$0xff]
  %v10458 = vld [vmem:[%s6 + $0x10] sm:$0xff]
  %v10459 = vld [vmem:[%s6 + $0x18] sm:$0xff]
  %v10460 = vld [vmem:[%s6 + $0x20] sm:$0xff]
  %v10461 = vld [vmem:[%s6 + $0x28] sm:$0xff]
  %v10462 = vld [vmem:[%s6 + $0x30] sm:$0xff]
  %v10463 = vld [vmem:[%s6 + $0x38] sm:$0xff]
  %v10464 = vld [vmem:[%s6 + $0x40] sm:$0xff]
  %v10465 = vld [vmem:[%s6 + $0x48] sm:$0xff]
  %v10466 = vld [vmem:[%s6 + $0x50] sm:$0xff]
  %v10467 = vld [vmem:[%s6 + $0x58] sm:$0xff]
  %v10468 = vld [vmem:[%s6 + $0x60] sm:$0xff]
  %v10469 = vld [vmem:[%s6 + $0x68] sm:$0xff]
  %v10470 = vld [vmem:[%s6 + $0x70] sm:$0xff]
  %v10471 = vld [vmem:[%s6 + $0x78] sm:$0xff]
  %10472 = vmatpush.msra.mxu0 %v10316
  %10473 = vmatpush.msra.mxu0 %v10313
  %10474 = vmatpush.msra.mxu0 %v10034
  %10475 = vmatpush.msra.mxu0 %v10031
  %10476 = vmatpush.msra.mxu0 %v9752
  %10477 = vmatpush.msra.mxu0 %v9749
  %10478 = vmatpush.msra.mxu0 %v9470
  %10479 = vmatpush.msra.mxu0 %v9467
  %10480 = vmatpush.msra.mxu0 %v9188
  %10481 = vmatpush.msra.mxu0 %v9185
  %10482 = vmatpush.msra.mxu0 %v8906
  %10483 = vmatpush.msra.mxu0 %v8903
  %10484 = vmatpush.msra.mxu0 %v8624
  %10485 = vmatpush.msra.mxu0 %v8621
  %10486 = vmatpush.msra.mxu0 %v8342
  %10487 = vmatpush.msra.mxu0 %v8339
  %10488 = vmatmul.f32.gmra.mxu0 %v10456
  %v10489 = vpop.f32.mrf.mxu0
  %v10490 = vadd.f32 0.0, %v10489
  %10491 = vmatmul.f32.gmra.mxu0 %v10457
  %v10492 = vpop.f32.mrf.mxu0
  %v10493 = vadd.f32 0.0, %v10492
  %10494 = vmatmul.f32.gmra.mxu0 %v10458
  %v10495 = vpop.f32.mrf.mxu0
  %v10496 = vadd.f32 0.0, %v10495
  %10497 = vmatmul.f32.gmra.mxu0 %v10459
  %v10498 = vpop.f32.mrf.mxu0
  %v10499 = vadd.f32 0.0, %v10498
  %10500 = vmatmul.f32.gmra.mxu0 %v10460
  %v10501 = vpop.f32.mrf.mxu0
  %v10502 = vadd.f32 0.0, %v10501
  %10503 = vmatmul.f32.gmra.mxu0 %v10461
  %v10504 = vpop.f32.mrf.mxu0
  %v10505 = vadd.f32 0.0, %v10504
  %10506 = vmatmul.f32.gmra.mxu0 %v10462
  %v10507 = vpop.f32.mrf.mxu0
  %v10508 = vadd.f32 0.0, %v10507
  %10509 = vmatmul.f32.gmra.mxu0 %v10463
  %v10510 = vpop.f32.mrf.mxu0
  %v10511 = vadd.f32 0.0, %v10510
  %10512 = vmatmul.f32.gmra.mxu0 %v10464
  %v10513 = vpop.f32.mrf.mxu0
  %v10514 = vadd.f32 0.0, %v10513
  %10515 = vmatmul.f32.gmra.mxu0 %v10465
  %v10516 = vpop.f32.mrf.mxu0
  %v10517 = vadd.f32 0.0, %v10516
  %10518 = vmatmul.f32.gmra.mxu0 %v10466
  %v10519 = vpop.f32.mrf.mxu0
  %v10520 = vadd.f32 0.0, %v10519
  %10521 = vmatmul.f32.gmra.mxu0 %v10467
  %v10522 = vpop.f32.mrf.mxu0
  %v10523 = vadd.f32 0.0, %v10522
  %10524 = vmatmul.f32.gmra.mxu0 %v10468
  %v10525 = vpop.f32.mrf.mxu0
  %v10526 = vadd.f32 0.0, %v10525
  %10527 = vmatmul.f32.gmra.mxu0 %v10469
  %v10528 = vpop.f32.mrf.mxu0
  %v10529 = vadd.f32 0.0, %v10528
  %10530 = vmatmul.f32.gmra.mxu0 %v10470
  %v10531 = vpop.f32.mrf.mxu0
  %v10532 = vadd.f32 0.0, %v10531
  %10533 = vmatmul.f32.gmra.mxu0 %v10471
  %v10534 = vpop.f32.mrf.mxu0
  %v10535 = vadd.f32 0.0, %v10534
  %10536 = vdwg.mxu0
  %10537 = vmatpush.msra.mxu0 %v10454
  %10538 = vmatpush.msra.mxu0 %v10451
  %10539 = vmatpush.msra.mxu0 %v10172
  %10540 = vmatpush.msra.mxu0 %v10169
  %10541 = vmatpush.msra.mxu0 %v9890
  %10542 = vmatpush.msra.mxu0 %v9887
  %10543 = vmatpush.msra.mxu0 %v9608
  %10544 = vmatpush.msra.mxu0 %v9605
  %10545 = vmatpush.msra.mxu0 %v9326
  %10546 = vmatpush.msra.mxu0 %v9323
  %10547 = vmatpush.msra.mxu0 %v9044
  %10548 = vmatpush.msra.mxu0 %v9041
  %10549 = vmatpush.msra.mxu0 %v8762
  %10550 = vmatpush.msra.mxu0 %v8759
  %10551 = vmatpush.msra.mxu0 %v8480
  %10552 = vmatpush.msra.mxu0 %v8477
  %10553 = vmatmul.f32.gmra.mxu0 %v10456
  %v10554 = vpop.f32.mrf.mxu0
  %v10555 = vadd.f32 0.0, %v10554
  %10556 = vmatmul.f32.gmra.mxu0 %v10457
  %v10557 = vpop.f32.mrf.mxu0
  %v10558 = vadd.f32 0.0, %v10557
  %10559 = vmatmul.f32.gmra.mxu0 %v10458
  %v10560 = vpop.f32.mrf.mxu0
  %v10561 = vadd.f32 0.0, %v10560
  %10562 = vmatmul.f32.gmra.mxu0 %v10459
  %v10563 = vpop.f32.mrf.mxu0
  %v10564 = vadd.f32 0.0, %v10563
  %10565 = vmatmul.f32.gmra.mxu0 %v10460
  %v10566 = vpop.f32.mrf.mxu0
  %v10567 = vadd.f32 0.0, %v10566
  %10568 = vmatmul.f32.gmra.mxu0 %v10461
  %v10569 = vpop.f32.mrf.mxu0
  %v10570 = vadd.f32 0.0, %v10569
  %10571 = vmatmul.f32.gmra.mxu0 %v10462
  %v10572 = vpop.f32.mrf.mxu0
  %v10573 = vadd.f32 0.0, %v10572
  %10574 = vmatmul.f32.gmra.mxu0 %v10463
  %v10575 = vpop.f32.mrf.mxu0
  %v10576 = vadd.f32 0.0, %v10575
  %10577 = vmatmul.f32.gmra.mxu0 %v10464
  %v10578 = vpop.f32.mrf.mxu0
  %v10579 = vadd.f32 0.0, %v10578
  %10580 = vmatmul.f32.gmra.mxu0 %v10465
  %v10581 = vpop.f32.mrf.mxu0
  %v10582 = vadd.f32 0.0, %v10581
  %10583 = vmatmul.f32.gmra.mxu0 %v10466
  %v10584 = vpop.f32.mrf.mxu0
  %v10585 = vadd.f32 0.0, %v10584
  %10586 = vmatmul.f32.gmra.mxu0 %v10467
  %v10587 = vpop.f32.mrf.mxu0
  %v10588 = vadd.f32 0.0, %v10587
  %10589 = vmatmul.f32.gmra.mxu0 %v10468
  %v10590 = vpop.f32.mrf.mxu0
  %v10591 = vadd.f32 0.0, %v10590
  %10592 = vmatmul.f32.gmra.mxu0 %v10469
  %v10593 = vpop.f32.mrf.mxu0
  %v10594 = vadd.f32 0.0, %v10593
  %10595 = vmatmul.f32.gmra.mxu0 %v10470
  %v10596 = vpop.f32.mrf.mxu0
  %v10597 = vadd.f32 0.0, %v10596
  %10598 = vmatmul.f32.gmra.mxu0 %v10471
  %v10599 = vpop.f32.mrf.mxu0
  %v10600 = vadd.f32 0.0, %v10599
  %10601 = vdwg.mxu0
  %v10602 = vld [vmem:[%s7] sm:$0xff]
  %v10603 = vld [vmem:[%s7 + $0x8] sm:$0xff]
  %v10604 = vld [vmem:[%s7 + $0x10] sm:$0xff]
  %v10605 = vld [vmem:[%s7 + $0x18] sm:$0xff]
  %v10606 = vld [vmem:[%s7 + $0x20] sm:$0xff]
  %v10607 = vld [vmem:[%s7 + $0x28] sm:$0xff]
  %v10608 = vld [vmem:[%s7 + $0x30] sm:$0xff]
  %v10609 = vld [vmem:[%s7 + $0x38] sm:$0xff]
  %v10610 = vld [vmem:[%s7 + $0x40] sm:$0xff]
  %v10611 = vld [vmem:[%s7 + $0x48] sm:$0xff]
  %v10612 = vld [vmem:[%s7 + $0x50] sm:$0xff]
  %v10613 = vld [vmem:[%s7 + $0x58] sm:$0xff]
  %v10614 = vld [vmem:[%s7 + $0x60] sm:$0xff]
  %v10615 = vld [vmem:[%s7 + $0x68] sm:$0xff]
  %v10616 = vld [vmem:[%s7 + $0x70] sm:$0xff]
  %v10617 = vld [vmem:[%s7 + $0x78] sm:$0xff]
  %v10618 = vld [vmem:[%s7 + $0x80] sm:$0xff]
  %v10619 = vld [vmem:[%s7 + $0x88] sm:$0xff]
  %s10620 = scalar_lea.vmem %s7, 144
  %v10621 = vld [vmem:[%s10620] sm:$0xff]
  %v10622 = vld [vmem:[%s10620 + $0x8] sm:$0xff]
  %v10623 = vld [vmem:[%s10620 + $0x10] sm:$0xff]
  %v10624 = vld [vmem:[%s10620 + $0x18] sm:$0xff]
  %v10625 = vld [vmem:[%s10620 + $0x20] sm:$0xff]
  %v10626 = vld [vmem:[%s10620 + $0x28] sm:$0xff]
  %v10627 = vld [vmem:[%s10620 + $0x30] sm:$0xff]
  %v10628 = vld [vmem:[%s10620 + $0x38] sm:$0xff]
  %v10629 = vld [vmem:[%s10620 + $0x40] sm:$0xff]
  %v10630 = vld [vmem:[%s10620 + $0x48] sm:$0xff]
  %v10631 = vld [vmem:[%s10620 + $0x50] sm:$0xff]
  %v10632 = vld [vmem:[%s10620 + $0x58] sm:$0xff]
  %v10633 = vld [vmem:[%s10620 + $0x60] sm:$0xff]
  %v10634 = vld [vmem:[%s10620 + $0x68] sm:$0xff]
  %v10635 = vld [vmem:[%s10620 + $0x70] sm:$0xff]
  %v10636 = vld [vmem:[%s10620 + $0x78] sm:$0xff]
  %v10637 = vld [vmem:[%s10620 + $0x80] sm:$0xff]
  %v10638 = vld [vmem:[%s10620 + $0x88] sm:$0xff]
  %vm10639 = vcmask 130048
  %v10641 = vsel %vm10639, %v10558, 0
  %10643 = vmatpush.msra.mxu0 %v10636
  %10644 = vmatpush.msra.mxu0 %v10635
  %10645 = vmatpush.msra.mxu0 %v10634
  %10646 = vmatpush.msra.mxu0 %v10633
  %10647 = vmatpush.msra.mxu0 %v10632
  %10648 = vmatpush.msra.mxu0 %v10631
  %10649 = vmatpush.msra.mxu0 %v10630
  %10650 = vmatpush.msra.mxu0 %v10629
  %10651 = vmatpush.msra.mxu0 %v10628
  %10652 = vmatpush.msra.mxu0 %v10627
  %10653 = vmatpush.msra.mxu0 %v10626
  %10654 = vmatpush.msra.mxu0 %v10625
  %10655 = vmatpush.msra.mxu0 %v10624
  %10656 = vmatpush.msra.mxu0 %v10623
  %10657 = vmatpush.msra.mxu0 %v10622
  %10658 = vmatpush.msra.mxu0 %v10621
  %10659 = vmatmul.f32.gmra.mxu0 %v10493
  %v10660 = vpop.f32.mrf.mxu0
  %v10661 = vadd.f32 0.0, %v10660
  %10662 = vdwg.mxu0
  %10663 = vmatpush.msra.mxu0 0.0
  %10664 = vmatpush.msra.mxu0 0.0
  %10665 = vmatpush.msra.mxu0 0.0
  %10666 = vmatpush.msra.mxu0 0.0
  %10667 = vmatpush.msra.mxu0 0.0
  %10668 = vmatpush.msra.mxu0 0.0
  %10669 = vmatpush.msra.mxu0 0.0
  %10670 = vmatpush.msra.mxu0 0.0
  %10671 = vmatpush.msra.mxu0 0.0
  %10672 = vmatpush.msra.mxu0 0.0
  %10673 = vmatpush.msra.mxu0 0.0
  %10674 = vmatpush.msra.mxu0 0.0
  %10675 = vmatpush.msra.mxu0 0.0
  %10676 = vmatpush.msra.mxu0 0.0
  %10677 = vmatpush.msra.mxu0 %v10638
  %10678 = vmatpush.msra.mxu0 %v10637
  %10679 = vmatmul.f32.gmra.mxu0 %v10641
  %v10680 = vpop.f32.mrf.mxu0
  %v10681 = vadd.f32 %v10661, %v10680
  %10682 = vdwg.mxu0
  %v10684 = vsel %vm10639, %v10555, 0
  %10686 = vmatpush.msra.mxu0 %v10617
  %10687 = vmatpush.msra.mxu0 %v10616
  %10688 = vmatpush.msra.mxu0 %v10615
  %10689 = vmatpush.msra.mxu0 %v10614
  %10690 = vmatpush.msra.mxu0 %v10613
  %10691 = vmatpush.msra.mxu0 %v10612
  %10692 = vmatpush.msra.mxu0 %v10611
  %10693 = vmatpush.msra.mxu0 %v10610
  %10694 = vmatpush.msra.mxu0 %v10609
  %10695 = vmatpush.msra.mxu0 %v10608
  %10696 = vmatpush.msra.mxu0 %v10607
  %10697 = vmatpush.msra.mxu0 %v10606
  %10698 = vmatpush.msra.mxu0 %v10605
  %10699 = vmatpush.msra.mxu0 %v10604
  %10700 = vmatpush.msra.mxu0 %v10603
  %10701 = vmatpush.msra.mxu0 %v10602
  %10702 = vmatmul.f32.gmra.mxu0 %v10490
  %v10703 = vpop.f32.mrf.mxu0
  %v10704 = vadd.f32 %v10681, %v10703
  %10705 = vdwg.mxu0
  %10706 = vmatpush.msra.mxu0 0.0
  %10707 = vmatpush.msra.mxu0 0.0
  %10708 = vmatpush.msra.mxu0 0.0
  %10709 = vmatpush.msra.mxu0 0.0
  %10710 = vmatpush.msra.mxu0 0.0
  %10711 = vmatpush.msra.mxu0 0.0
  %10712 = vmatpush.msra.mxu0 0.0
  %10713 = vmatpush.msra.mxu0 0.0
  %10714 = vmatpush.msra.mxu0 0.0
  %10715 = vmatpush.msra.mxu0 0.0
  %10716 = vmatpush.msra.mxu0 0.0
  %10717 = vmatpush.msra.mxu0 0.0
  %10718 = vmatpush.msra.mxu0 0.0
  %10719 = vmatpush.msra.mxu0 0.0
  %10720 = vmatpush.msra.mxu0 %v10619
  %10721 = vmatpush.msra.mxu0 %v10618
  %10722 = vmatmul.f32.gmra.mxu0 %v10684
  %v10723 = vpop.f32.mrf.mxu0
  %v10724 = vadd.f32 %v10704, %v10723
  %10725 = vdwg.mxu0
  %s10726 = scalar_lea.vmem %s7, 288
  %v10727 = vld [vmem:[%s10726] sm:$0xff]
  %v10728 = vld [vmem:[%s10726 + $0x8] sm:$0xff]
  %v10729 = vld [vmem:[%s10726 + $0x10] sm:$0xff]
  %v10730 = vld [vmem:[%s10726 + $0x18] sm:$0xff]
  %v10731 = vld [vmem:[%s10726 + $0x20] sm:$0xff]
  %v10732 = vld [vmem:[%s10726 + $0x28] sm:$0xff]
  %v10733 = vld [vmem:[%s10726 + $0x30] sm:$0xff]
  %v10734 = vld [vmem:[%s10726 + $0x38] sm:$0xff]
  %v10735 = vld [vmem:[%s10726 + $0x40] sm:$0xff]
  %v10736 = vld [vmem:[%s10726 + $0x48] sm:$0xff]
  %v10737 = vld [vmem:[%s10726 + $0x50] sm:$0xff]
  %v10738 = vld [vmem:[%s10726 + $0x58] sm:$0xff]
  %v10739 = vld [vmem:[%s10726 + $0x60] sm:$0xff]
  %v10740 = vld [vmem:[%s10726 + $0x68] sm:$0xff]
  %v10741 = vld [vmem:[%s10726 + $0x70] sm:$0xff]
  %v10742 = vld [vmem:[%s10726 + $0x78] sm:$0xff]
  %v10743 = vld [vmem:[%s10726 + $0x80] sm:$0xff]
  %v10744 = vld [vmem:[%s10726 + $0x88] sm:$0xff]
  %v10746 = vsel %vm10639, %v10561, 0
  %10748 = vmatpush.msra.mxu0 %v10742
  %10749 = vmatpush.msra.mxu0 %v10741
  %10750 = vmatpush.msra.mxu0 %v10740
  %10751 = vmatpush.msra.mxu0 %v10739
  %10752 = vmatpush.msra.mxu0 %v10738
  %10753 = vmatpush.msra.mxu0 %v10737
  %10754 = vmatpush.msra.mxu0 %v10736
  %10755 = vmatpush.msra.mxu0 %v10735
  %10756 = vmatpush.msra.mxu0 %v10734
  %10757 = vmatpush.msra.mxu0 %v10733
  %10758 = vmatpush.msra.mxu0 %v10732
  %10759 = vmatpush.msra.mxu0 %v10731
  %10760 = vmatpush.msra.mxu0 %v10730
  %10761 = vmatpush.msra.mxu0 %v10729
  %10762 = vmatpush.msra.mxu0 %v10728
  %10763 = vmatpush.msra.mxu0 %v10727
  %10764 = vmatmul.f32.gmra.mxu0 %v10496
  %v10765 = vpop.f32.mrf.mxu0
  %v10766 = vadd.f32 0.0, %v10765
  %10767 = vdwg.mxu0
  %10768 = vmatpush.msra.mxu0 0.0
  %10769 = vmatpush.msra.mxu0 0.0
  %10770 = vmatpush.msra.mxu0 0.0
  %10771 = vmatpush.msra.mxu0 0.0
  %10772 = vmatpush.msra.mxu0 0.0
  %10773 = vmatpush.msra.mxu0 0.0
  %10774 = vmatpush.msra.mxu0 0.0
  %10775 = vmatpush.msra.mxu0 0.0
  %10776 = vmatpush.msra.mxu0 0.0
  %10777 = vmatpush.msra.mxu0 0.0
  %10778 = vmatpush.msra.mxu0 0.0
  %10779 = vmatpush.msra.mxu0 0.0
  %10780 = vmatpush.msra.mxu0 0.0
  %10781 = vmatpush.msra.mxu0 0.0
  %10782 = vmatpush.msra.mxu0 %v10744
  %10783 = vmatpush.msra.mxu0 %v10743
  %10784 = vmatmul.f32.gmra.mxu0 %v10746
  %v10785 = vpop.f32.mrf.mxu0
  %v10786 = vadd.f32 %v10766, %v10785
  %10787 = vdwg.mxu0
  %v10788 = vadd.f32 %v10724, %v10786
  %s10789 = scalar_lea.vmem %s7, 432
  %v10790 = vld [vmem:[%s10789] sm:$0xff]
  %v10791 = vld [vmem:[%s10789 + $0x8] sm:$0xff]
  %v10792 = vld [vmem:[%s10789 + $0x10] sm:$0xff]
  %v10793 = vld [vmem:[%s10789 + $0x18] sm:$0xff]
  %v10794 = vld [vmem:[%s10789 + $0x20] sm:$0xff]
  %v10795 = vld [vmem:[%s10789 + $0x28] sm:$0xff]
  %v10796 = vld [vmem:[%s10789 + $0x30] sm:$0xff]
  %v10797 = vld [vmem:[%s10789 + $0x38] sm:$0xff]
  %v10798 = vld [vmem:[%s10789 + $0x40] sm:$0xff]
  %v10799 = vld [vmem:[%s10789 + $0x48] sm:$0xff]
  %v10800 = vld [vmem:[%s10789 + $0x50] sm:$0xff]
  %v10801 = vld [vmem:[%s10789 + $0x58] sm:$0xff]
  %v10802 = vld [vmem:[%s10789 + $0x60] sm:$0xff]
  %v10803 = vld [vmem:[%s10789 + $0x68] sm:$0xff]
  %v10804 = vld [vmem:[%s10789 + $0x70] sm:$0xff]
  %v10805 = vld [vmem:[%s10789 + $0x78] sm:$0xff]
  %v10806 = vld [vmem:[%s10789 + $0x80] sm:$0xff]
  %v10807 = vld [vmem:[%s10789 + $0x88] sm:$0xff]
  %v10809 = vsel %vm10639, %v10564, 0
  %10811 = vmatpush.msra.mxu0 %v10805
  %10812 = vmatpush.msra.mxu0 %v10804
  %10813 = vmatpush.msra.mxu0 %v10803
  %10814 = vmatpush.msra.mxu0 %v10802
  %10815 = vmatpush.msra.mxu0 %v10801
  %10816 = vmatpush.msra.mxu0 %v10800
  %10817 = vmatpush.msra.mxu0 %v10799
  %10818 = vmatpush.msra.mxu0 %v10798
  %10819 = vmatpush.msra.mxu0 %v10797
  %10820 = vmatpush.msra.mxu0 %v10796
  %10821 = vmatpush.msra.mxu0 %v10795
  %10822 = vmatpush.msra.mxu0 %v10794
  %10823 = vmatpush.msra.mxu0 %v10793
  %10824 = vmatpush.msra.mxu0 %v10792
  %10825 = vmatpush.msra.mxu0 %v10791
  %10826 = vmatpush.msra.mxu0 %v10790
  %10827 = vmatmul.f32.gmra.mxu0 %v10499
  %v10828 = vpop.f32.mrf.mxu0
  %v10829 = vadd.f32 0.0, %v10828
  %10830 = vdwg.mxu0
  %10831 = vmatpush.msra.mxu0 0.0
  %10832 = vmatpush.msra.mxu0 0.0
  %10833 = vmatpush.msra.mxu0 0.0
  %10834 = vmatpush.msra.mxu0 0.0
  %10835 = vmatpush.msra.mxu0 0.0
  %10836 = vmatpush.msra.mxu0 0.0
  %10837 = vmatpush.msra.mxu0 0.0
  %10838 = vmatpush.msra.mxu0 0.0
  %10839 = vmatpush.msra.mxu0 0.0
  %10840 = vmatpush.msra.mxu0 0.0
  %10841 = vmatpush.msra.mxu0 0.0
  %10842 = vmatpush.msra.mxu0 0.0
  %10843 = vmatpush.msra.mxu0 0.0
  %10844 = vmatpush.msra.mxu0 0.0
  %10845 = vmatpush.msra.mxu0 %v10807
  %10846 = vmatpush.msra.mxu0 %v10806
  %10847 = vmatmul.f32.gmra.mxu0 %v10809
  %v10848 = vpop.f32.mrf.mxu0
  %v10849 = vadd.f32 %v10829, %v10848
  %10850 = vdwg.mxu0
  %v10851 = vadd.f32 %v10788, %v10849
  %s10852 = scalar_lea.vmem %s7, 576
  %v10853 = vld [vmem:[%s10852] sm:$0xff]
  %v10854 = vld [vmem:[%s10852 + $0x8] sm:$0xff]
  %v10855 = vld [vmem:[%s10852 + $0x10] sm:$0xff]
  %v10856 = vld [vmem:[%s10852 + $0x18] sm:$0xff]
  %v10857 = vld [vmem:[%s10852 + $0x20] sm:$0xff]
  %v10858 = vld [vmem:[%s10852 + $0x28] sm:$0xff]
  %v10859 = vld [vmem:[%s10852 + $0x30] sm:$0xff]
  %v10860 = vld [vmem:[%s10852 + $0x38] sm:$0xff]
  %v10861 = vld [vmem:[%s10852 + $0x40] sm:$0xff]
  %v10862 = vld [vmem:[%s10852 + $0x48] sm:$0xff]
  %v10863 = vld [vmem:[%s10852 + $0x50] sm:$0xff]
  %v10864 = vld [vmem:[%s10852 + $0x58] sm:$0xff]
  %v10865 = vld [vmem:[%s10852 + $0x60] sm:$0xff]
  %v10866 = vld [vmem:[%s10852 + $0x68] sm:$0xff]
  %v10867 = vld [vmem:[%s10852 + $0x70] sm:$0xff]
  %v10868 = vld [vmem:[%s10852 + $0x78] sm:$0xff]
  %v10869 = vld [vmem:[%s10852 + $0x80] sm:$0xff]
  %v10870 = vld [vmem:[%s10852 + $0x88] sm:$0xff]
  %v10872 = vsel %vm10639, %v10567, 0
  %10874 = vmatpush.msra.mxu0 %v10868
  %10875 = vmatpush.msra.mxu0 %v10867
  %10876 = vmatpush.msra.mxu0 %v10866
  %10877 = vmatpush.msra.mxu0 %v10865
  %10878 = vmatpush.msra.mxu0 %v10864
  %10879 = vmatpush.msra.mxu0 %v10863
  %10880 = vmatpush.msra.mxu0 %v10862
  %10881 = vmatpush.msra.mxu0 %v10861
  %10882 = vmatpush.msra.mxu0 %v10860
  %10883 = vmatpush.msra.mxu0 %v10859
  %10884 = vmatpush.msra.mxu0 %v10858
  %10885 = vmatpush.msra.mxu0 %v10857
  %10886 = vmatpush.msra.mxu0 %v10856
  %10887 = vmatpush.msra.mxu0 %v10855
  %10888 = vmatpush.msra.mxu0 %v10854
  %10889 = vmatpush.msra.mxu0 %v10853
  %10890 = vmatmul.f32.gmra.mxu0 %v10502
  %v10891 = vpop.f32.mrf.mxu0
  %v10892 = vadd.f32 0.0, %v10891
  %10893 = vdwg.mxu0
  %10894 = vmatpush.msra.mxu0 0.0
  %10895 = vmatpush.msra.mxu0 0.0
  %10896 = vmatpush.msra.mxu0 0.0
  %10897 = vmatpush.msra.mxu0 0.0
  %10898 = vmatpush.msra.mxu0 0.0
  %10899 = vmatpush.msra.mxu0 0.0
  %10900 = vmatpush.msra.mxu0 0.0
  %10901 = vmatpush.msra.mxu0 0.0
  %10902 = vmatpush.msra.mxu0 0.0
  %10903 = vmatpush.msra.mxu0 0.0
  %10904 = vmatpush.msra.mxu0 0.0
  %10905 = vmatpush.msra.mxu0 0.0
  %10906 = vmatpush.msra.mxu0 0.0
  %10907 = vmatpush.msra.mxu0 0.0
  %10908 = vmatpush.msra.mxu0 %v10870
  %10909 = vmatpush.msra.mxu0 %v10869
  %10910 = vmatmul.f32.gmra.mxu0 %v10872
  %v10911 = vpop.f32.mrf.mxu0
  %v10912 = vadd.f32 %v10892, %v10911
  %10913 = vdwg.mxu0
  %v10914 = vadd.f32 %v10851, %v10912
  %s10915 = scalar_lea.vmem %s7, 720
  %v10916 = vld [vmem:[%s10915] sm:$0xff]
  %v10917 = vld [vmem:[%s10915 + $0x8] sm:$0xff]
  %v10918 = vld [vmem:[%s10915 + $0x10] sm:$0xff]
  %v10919 = vld [vmem:[%s10915 + $0x18] sm:$0xff]
  %v10920 = vld [vmem:[%s10915 + $0x20] sm:$0xff]
  %v10921 = vld [vmem:[%s10915 + $0x28] sm:$0xff]
  %v10922 = vld [vmem:[%s10915 + $0x30] sm:$0xff]
  %v10923 = vld [vmem:[%s10915 + $0x38] sm:$0xff]
  %v10924 = vld [vmem:[%s10915 + $0x40] sm:$0xff]
  %v10925 = vld [vmem:[%s10915 + $0x48] sm:$0xff]
  %v10926 = vld [vmem:[%s10915 + $0x50] sm:$0xff]
  %v10927 = vld [vmem:[%s10915 + $0x58] sm:$0xff]
  %v10928 = vld [vmem:[%s10915 + $0x60] sm:$0xff]
  %v10929 = vld [vmem:[%s10915 + $0x68] sm:$0xff]
  %v10930 = vld [vmem:[%s10915 + $0x70] sm:$0xff]
  %v10931 = vld [vmem:[%s10915 + $0x78] sm:$0xff]
  %v10932 = vld [vmem:[%s10915 + $0x80] sm:$0xff]
  %v10933 = vld [vmem:[%s10915 + $0x88] sm:$0xff]
  %v10935 = vsel %vm10639, %v10570, 0
  %10937 = vmatpush.msra.mxu0 %v10931
  %10938 = vmatpush.msra.mxu0 %v10930
  %10939 = vmatpush.msra.mxu0 %v10929
  %10940 = vmatpush.msra.mxu0 %v10928
  %10941 = vmatpush.msra.mxu0 %v10927
  %10942 = vmatpush.msra.mxu0 %v10926
  %10943 = vmatpush.msra.mxu0 %v10925
  %10944 = vmatpush.msra.mxu0 %v10924
  %10945 = vmatpush.msra.mxu0 %v10923
  %10946 = vmatpush.msra.mxu0 %v10922
  %10947 = vmatpush.msra.mxu0 %v10921
  %10948 = vmatpush.msra.mxu0 %v10920
  %10949 = vmatpush.msra.mxu0 %v10919
  %10950 = vmatpush.msra.mxu0 %v10918
  %10951 = vmatpush.msra.mxu0 %v10917
  %10952 = vmatpush.msra.mxu0 %v10916
  %10953 = vmatmul.f32.gmra.mxu0 %v10505
  %v10954 = vpop.f32.mrf.mxu0
  %v10955 = vadd.f32 0.0, %v10954
  %10956 = vdwg.mxu0
  %10957 = vmatpush.msra.mxu0 0.0
  %10958 = vmatpush.msra.mxu0 0.0
  %10959 = vmatpush.msra.mxu0 0.0
  %10960 = vmatpush.msra.mxu0 0.0
  %10961 = vmatpush.msra.mxu0 0.0
  %10962 = vmatpush.msra.mxu0 0.0
  %10963 = vmatpush.msra.mxu0 0.0
  %10964 = vmatpush.msra.mxu0 0.0
  %10965 = vmatpush.msra.mxu0 0.0
  %10966 = vmatpush.msra.mxu0 0.0
  %10967 = vmatpush.msra.mxu0 0.0
  %10968 = vmatpush.msra.mxu0 0.0
  %10969 = vmatpush.msra.mxu0 0.0
  %10970 = vmatpush.msra.mxu0 0.0
  %10971 = vmatpush.msra.mxu0 %v10933
  %10972 = vmatpush.msra.mxu0 %v10932
  %10973 = vmatmul.f32.gmra.mxu0 %v10935
  %v10974 = vpop.f32.mrf.mxu0
  %v10975 = vadd.f32 %v10955, %v10974
  %10976 = vdwg.mxu0
  %v10977 = vadd.f32 %v10914, %v10975
  %s10978 = scalar_lea.vmem %s7, 864
  %v10979 = vld [vmem:[%s10978] sm:$0xff]
  %v10980 = vld [vmem:[%s10978 + $0x8] sm:$0xff]
  %v10981 = vld [vmem:[%s10978 + $0x10] sm:$0xff]
  %v10982 = vld [vmem:[%s10978 + $0x18] sm:$0xff]
  %v10983 = vld [vmem:[%s10978 + $0x20] sm:$0xff]
  %v10984 = vld [vmem:[%s10978 + $0x28] sm:$0xff]
  %v10985 = vld [vmem:[%s10978 + $0x30] sm:$0xff]
  %v10986 = vld [vmem:[%s10978 + $0x38] sm:$0xff]
  %v10987 = vld [vmem:[%s10978 + $0x40] sm:$0xff]
  %v10988 = vld [vmem:[%s10978 + $0x48] sm:$0xff]
  %v10989 = vld [vmem:[%s10978 + $0x50] sm:$0xff]
  %v10990 = vld [vmem:[%s10978 + $0x58] sm:$0xff]
  %v10991 = vld [vmem:[%s10978 + $0x60] sm:$0xff]
  %v10992 = vld [vmem:[%s10978 + $0x68] sm:$0xff]
  %v10993 = vld [vmem:[%s10978 + $0x70] sm:$0xff]
  %v10994 = vld [vmem:[%s10978 + $0x78] sm:$0xff]
  %v10995 = vld [vmem:[%s10978 + $0x80] sm:$0xff]
  %v10996 = vld [vmem:[%s10978 + $0x88] sm:$0xff]
  %v10998 = vsel %vm10639, %v10573, 0
  %11000 = vmatpush.msra.mxu0 %v10994
  %11001 = vmatpush.msra.mxu0 %v10993
  %11002 = vmatpush.msra.mxu0 %v10992
  %11003 = vmatpush.msra.mxu0 %v10991
  %11004 = vmatpush.msra.mxu0 %v10990
  %11005 = vmatpush.msra.mxu0 %v10989
  %11006 = vmatpush.msra.mxu0 %v10988
  %11007 = vmatpush.msra.mxu0 %v10987
  %11008 = vmatpush.msra.mxu0 %v10986
  %11009 = vmatpush.msra.mxu0 %v10985
  %11010 = vmatpush.msra.mxu0 %v10984
  %11011 = vmatpush.msra.mxu0 %v10983
  %11012 = vmatpush.msra.mxu0 %v10982
  %11013 = vmatpush.msra.mxu0 %v10981
  %11014 = vmatpush.msra.mxu0 %v10980
  %11015 = vmatpush.msra.mxu0 %v10979
  %11016 = vmatmul.f32.gmra.mxu0 %v10508
  %v11017 = vpop.f32.mrf.mxu0
  %v11018 = vadd.f32 0.0, %v11017
  %11019 = vdwg.mxu0
  %11020 = vmatpush.msra.mxu0 0.0
  %11021 = vmatpush.msra.mxu0 0.0
  %11022 = vmatpush.msra.mxu0 0.0
  %11023 = vmatpush.msra.mxu0 0.0
  %11024 = vmatpush.msra.mxu0 0.0
  %11025 = vmatpush.msra.mxu0 0.0
  %11026 = vmatpush.msra.mxu0 0.0
  %11027 = vmatpush.msra.mxu0 0.0
  %11028 = vmatpush.msra.mxu0 0.0
  %11029 = vmatpush.msra.mxu0 0.0
  %11030 = vmatpush.msra.mxu0 0.0
  %11031 = vmatpush.msra.mxu0 0.0
  %11032 = vmatpush.msra.mxu0 0.0
  %11033 = vmatpush.msra.mxu0 0.0
  %11034 = vmatpush.msra.mxu0 %v10996
  %11035 = vmatpush.msra.mxu0 %v10995
  %11036 = vmatmul.f32.gmra.mxu0 %v10998
  %v11037 = vpop.f32.mrf.mxu0
  %v11038 = vadd.f32 %v11018, %v11037
  %11039 = vdwg.mxu0
  %v11040 = vadd.f32 %v10977, %v11038
  %s11041 = scalar_lea.vmem %s7, 1008
  %v11042 = vld [vmem:[%s11041] sm:$0xff]
  %v11043 = vld [vmem:[%s11041 + $0x8] sm:$0xff]
  %v11044 = vld [vmem:[%s11041 + $0x10] sm:$0xff]
  %v11045 = vld [vmem:[%s11041 + $0x18] sm:$0xff]
  %v11046 = vld [vmem:[%s11041 + $0x20] sm:$0xff]
  %v11047 = vld [vmem:[%s11041 + $0x28] sm:$0xff]
  %v11048 = vld [vmem:[%s11041 + $0x30] sm:$0xff]
  %v11049 = vld [vmem:[%s11041 + $0x38] sm:$0xff]
  %v11050 = vld [vmem:[%s11041 + $0x40] sm:$0xff]
  %v11051 = vld [vmem:[%s11041 + $0x48] sm:$0xff]
  %v11052 = vld [vmem:[%s11041 + $0x50] sm:$0xff]
  %v11053 = vld [vmem:[%s11041 + $0x58] sm:$0xff]
  %v11054 = vld [vmem:[%s11041 + $0x60] sm:$0xff]
  %v11055 = vld [vmem:[%s11041 + $0x68] sm:$0xff]
  %v11056 = vld [vmem:[%s11041 + $0x70] sm:$0xff]
  %v11057 = vld [vmem:[%s11041 + $0x78] sm:$0xff]
  %v11058 = vld [vmem:[%s11041 + $0x80] sm:$0xff]
  %v11059 = vld [vmem:[%s11041 + $0x88] sm:$0xff]
  %v11061 = vsel %vm10639, %v10576, 0
  %11063 = vmatpush.msra.mxu0 %v11057
  %11064 = vmatpush.msra.mxu0 %v11056
  %11065 = vmatpush.msra.mxu0 %v11055
  %11066 = vmatpush.msra.mxu0 %v11054
  %11067 = vmatpush.msra.mxu0 %v11053
  %11068 = vmatpush.msra.mxu0 %v11052
  %11069 = vmatpush.msra.mxu0 %v11051
  %11070 = vmatpush.msra.mxu0 %v11050
  %11071 = vmatpush.msra.mxu0 %v11049
  %11072 = vmatpush.msra.mxu0 %v11048
  %11073 = vmatpush.msra.mxu0 %v11047
  %11074 = vmatpush.msra.mxu0 %v11046
  %11075 = vmatpush.msra.mxu0 %v11045
  %11076 = vmatpush.msra.mxu0 %v11044
  %11077 = vmatpush.msra.mxu0 %v11043
  %11078 = vmatpush.msra.mxu0 %v11042
  %11079 = vmatmul.f32.gmra.mxu0 %v10511
  %v11080 = vpop.f32.mrf.mxu0
  %v11081 = vadd.f32 0.0, %v11080
  %11082 = vdwg.mxu0
  %11083 = vmatpush.msra.mxu0 0.0
  %11084 = vmatpush.msra.mxu0 0.0
  %11085 = vmatpush.msra.mxu0 0.0
  %11086 = vmatpush.msra.mxu0 0.0
  %11087 = vmatpush.msra.mxu0 0.0
  %11088 = vmatpush.msra.mxu0 0.0
  %11089 = vmatpush.msra.mxu0 0.0
  %11090 = vmatpush.msra.mxu0 0.0
  %11091 = vmatpush.msra.mxu0 0.0
  %11092 = vmatpush.msra.mxu0 0.0
  %11093 = vmatpush.msra.mxu0 0.0
  %11094 = vmatpush.msra.mxu0 0.0
  %11095 = vmatpush.msra.mxu0 0.0
  %11096 = vmatpush.msra.mxu0 0.0
  %11097 = vmatpush.msra.mxu0 %v11059
  %11098 = vmatpush.msra.mxu0 %v11058
  %11099 = vmatmul.f32.gmra.mxu0 %v11061
  %v11100 = vpop.f32.mrf.mxu0
  %v11101 = vadd.f32 %v11081, %v11100
  %11102 = vdwg.mxu0
  %v11103 = vadd.f32 %v11040, %v11101
  %s11104 = scalar_lea.vmem %s7, 1152
  %v11105 = vld [vmem:[%s11104] sm:$0xff]
  %v11106 = vld [vmem:[%s11104 + $0x8] sm:$0xff]
  %v11107 = vld [vmem:[%s11104 + $0x10] sm:$0xff]
  %v11108 = vld [vmem:[%s11104 + $0x18] sm:$0xff]
  %v11109 = vld [vmem:[%s11104 + $0x20] sm:$0xff]
  %v11110 = vld [vmem:[%s11104 + $0x28] sm:$0xff]
  %v11111 = vld [vmem:[%s11104 + $0x30] sm:$0xff]
  %v11112 = vld [vmem:[%s11104 + $0x38] sm:$0xff]
  %v11113 = vld [vmem:[%s11104 + $0x40] sm:$0xff]
  %v11114 = vld [vmem:[%s11104 + $0x48] sm:$0xff]
  %v11115 = vld [vmem:[%s11104 + $0x50] sm:$0xff]
  %v11116 = vld [vmem:[%s11104 + $0x58] sm:$0xff]
  %v11117 = vld [vmem:[%s11104 + $0x60] sm:$0xff]
  %v11118 = vld [vmem:[%s11104 + $0x68] sm:$0xff]
  %v11119 = vld [vmem:[%s11104 + $0x70] sm:$0xff]
  %v11120 = vld [vmem:[%s11104 + $0x78] sm:$0xff]
  %v11121 = vld [vmem:[%s11104 + $0x80] sm:$0xff]
  %v11122 = vld [vmem:[%s11104 + $0x88] sm:$0xff]
  %v11124 = vsel %vm10639, %v10579, 0
  %11126 = vmatpush.msra.mxu0 %v11120
  %11127 = vmatpush.msra.mxu0 %v11119
  %11128 = vmatpush.msra.mxu0 %v11118
  %11129 = vmatpush.msra.mxu0 %v11117
  %11130 = vmatpush.msra.mxu0 %v11116
  %11131 = vmatpush.msra.mxu0 %v11115
  %11132 = vmatpush.msra.mxu0 %v11114
  %11133 = vmatpush.msra.mxu0 %v11113
  %11134 = vmatpush.msra.mxu0 %v11112
  %11135 = vmatpush.msra.mxu0 %v11111
  %11136 = vmatpush.msra.mxu0 %v11110
  %11137 = vmatpush.msra.mxu0 %v11109
  %11138 = vmatpush.msra.mxu0 %v11108
  %11139 = vmatpush.msra.mxu0 %v11107
  %11140 = vmatpush.msra.mxu0 %v11106
  %11141 = vmatpush.msra.mxu0 %v11105
  %11142 = vmatmul.f32.gmra.mxu0 %v10514
  %v11143 = vpop.f32.mrf.mxu0
  %v11144 = vadd.f32 0.0, %v11143
  %11145 = vdwg.mxu0
  %11146 = vmatpush.msra.mxu0 0.0
  %11147 = vmatpush.msra.mxu0 0.0
  %11148 = vmatpush.msra.mxu0 0.0
  %11149 = vmatpush.msra.mxu0 0.0
  %11150 = vmatpush.msra.mxu0 0.0
  %11151 = vmatpush.msra.mxu0 0.0
  %11152 = vmatpush.msra.mxu0 0.0
  %11153 = vmatpush.msra.mxu0 0.0
  %11154 = vmatpush.msra.mxu0 0.0
  %11155 = vmatpush.msra.mxu0 0.0
  %11156 = vmatpush.msra.mxu0 0.0
  %11157 = vmatpush.msra.mxu0 0.0
  %11158 = vmatpush.msra.mxu0 0.0
  %11159 = vmatpush.msra.mxu0 0.0
  %11160 = vmatpush.msra.mxu0 %v11122
  %11161 = vmatpush.msra.mxu0 %v11121
  %11162 = vmatmul.f32.gmra.mxu0 %v11124
  %v11163 = vpop.f32.mrf.mxu0
  %v11164 = vadd.f32 %v11144, %v11163
  %11165 = vdwg.mxu0
  %v11166 = vadd.f32 %v11103, %v11164
  %s11167 = scalar_lea.vmem %s7, 1296
  %v11168 = vld [vmem:[%s11167] sm:$0xff]
  %v11169 = vld [vmem:[%s11167 + $0x8] sm:$0xff]
  %v11170 = vld [vmem:[%s11167 + $0x10] sm:$0xff]
  %v11171 = vld [vmem:[%s11167 + $0x18] sm:$0xff]
  %v11172 = vld [vmem:[%s11167 + $0x20] sm:$0xff]
  %v11173 = vld [vmem:[%s11167 + $0x28] sm:$0xff]
  %v11174 = vld [vmem:[%s11167 + $0x30] sm:$0xff]
  %v11175 = vld [vmem:[%s11167 + $0x38] sm:$0xff]
  %v11176 = vld [vmem:[%s11167 + $0x40] sm:$0xff]
  %v11177 = vld [vmem:[%s11167 + $0x48] sm:$0xff]
  %v11178 = vld [vmem:[%s11167 + $0x50] sm:$0xff]
  %v11179 = vld [vmem:[%s11167 + $0x58] sm:$0xff]
  %v11180 = vld [vmem:[%s11167 + $0x60] sm:$0xff]
  %v11181 = vld [vmem:[%s11167 + $0x68] sm:$0xff]
  %v11182 = vld [vmem:[%s11167 + $0x70] sm:$0xff]
  %v11183 = vld [vmem:[%s11167 + $0x78] sm:$0xff]
  %v11184 = vld [vmem:[%s11167 + $0x80] sm:$0xff]
  %v11185 = vld [vmem:[%s11167 + $0x88] sm:$0xff]
  %v11187 = vsel %vm10639, %v10582, 0
  %11189 = vmatpush.msra.mxu0 %v11183
  %11190 = vmatpush.msra.mxu0 %v11182
  %11191 = vmatpush.msra.mxu0 %v11181
  %11192 = vmatpush.msra.mxu0 %v11180
  %11193 = vmatpush.msra.mxu0 %v11179
  %11194 = vmatpush.msra.mxu0 %v11178
  %11195 = vmatpush.msra.mxu0 %v11177
  %11196 = vmatpush.msra.mxu0 %v11176
  %11197 = vmatpush.msra.mxu0 %v11175
  %11198 = vmatpush.msra.mxu0 %v11174
  %11199 = vmatpush.msra.mxu0 %v11173
  %11200 = vmatpush.msra.mxu0 %v11172
  %11201 = vmatpush.msra.mxu0 %v11171
  %11202 = vmatpush.msra.mxu0 %v11170
  %11203 = vmatpush.msra.mxu0 %v11169
  %11204 = vmatpush.msra.mxu0 %v11168
  %11205 = vmatmul.f32.gmra.mxu0 %v10517
  %v11206 = vpop.f32.mrf.mxu0
  %v11207 = vadd.f32 0.0, %v11206
  %11208 = vdwg.mxu0
  %11209 = vmatpush.msra.mxu0 0.0
  %11210 = vmatpush.msra.mxu0 0.0
  %11211 = vmatpush.msra.mxu0 0.0
  %11212 = vmatpush.msra.mxu0 0.0
  %11213 = vmatpush.msra.mxu0 0.0
  %11214 = vmatpush.msra.mxu0 0.0
  %11215 = vmatpush.msra.mxu0 0.0
  %11216 = vmatpush.msra.mxu0 0.0
  %11217 = vmatpush.msra.mxu0 0.0
  %11218 = vmatpush.msra.mxu0 0.0
  %11219 = vmatpush.msra.mxu0 0.0
  %11220 = vmatpush.msra.mxu0 0.0
  %11221 = vmatpush.msra.mxu0 0.0
  %11222 = vmatpush.msra.mxu0 0.0
  %11223 = vmatpush.msra.mxu0 %v11185
  %11224 = vmatpush.msra.mxu0 %v11184
  %11225 = vmatmul.f32.gmra.mxu0 %v11187
  %v11226 = vpop.f32.mrf.mxu0
  %v11227 = vadd.f32 %v11207, %v11226
  %11228 = vdwg.mxu0
  %v11229 = vadd.f32 %v11166, %v11227
  %s11230 = scalar_lea.vmem %s7, 1440
  %v11231 = vld [vmem:[%s11230] sm:$0xff]
  %v11232 = vld [vmem:[%s11230 + $0x8] sm:$0xff]
  %v11233 = vld [vmem:[%s11230 + $0x10] sm:$0xff]
  %v11234 = vld [vmem:[%s11230 + $0x18] sm:$0xff]
  %v11235 = vld [vmem:[%s11230 + $0x20] sm:$0xff]
  %v11236 = vld [vmem:[%s11230 + $0x28] sm:$0xff]
  %v11237 = vld [vmem:[%s11230 + $0x30] sm:$0xff]
  %v11238 = vld [vmem:[%s11230 + $0x38] sm:$0xff]
  %v11239 = vld [vmem:[%s11230 + $0x40] sm:$0xff]
  %v11240 = vld [vmem:[%s11230 + $0x48] sm:$0xff]
  %v11241 = vld [vmem:[%s11230 + $0x50] sm:$0xff]
  %v11242 = vld [vmem:[%s11230 + $0x58] sm:$0xff]
  %v11243 = vld [vmem:[%s11230 + $0x60] sm:$0xff]
  %v11244 = vld [vmem:[%s11230 + $0x68] sm:$0xff]
  %v11245 = vld [vmem:[%s11230 + $0x70] sm:$0xff]
  %v11246 = vld [vmem:[%s11230 + $0x78] sm:$0xff]
  %v11247 = vld [vmem:[%s11230 + $0x80] sm:$0xff]
  %v11248 = vld [vmem:[%s11230 + $0x88] sm:$0xff]
  %v11250 = vsel %vm10639, %v10585, 0
  %11252 = vmatpush.msra.mxu0 %v11246
  %11253 = vmatpush.msra.mxu0 %v11245
  %11254 = vmatpush.msra.mxu0 %v11244
  %11255 = vmatpush.msra.mxu0 %v11243
  %11256 = vmatpush.msra.mxu0 %v11242
  %11257 = vmatpush.msra.mxu0 %v11241
  %11258 = vmatpush.msra.mxu0 %v11240
  %11259 = vmatpush.msra.mxu0 %v11239
  %11260 = vmatpush.msra.mxu0 %v11238
  %11261 = vmatpush.msra.mxu0 %v11237
  %11262 = vmatpush.msra.mxu0 %v11236
  %11263 = vmatpush.msra.mxu0 %v11235
  %11264 = vmatpush.msra.mxu0 %v11234
  %11265 = vmatpush.msra.mxu0 %v11233
  %11266 = vmatpush.msra.mxu0 %v11232
  %11267 = vmatpush.msra.mxu0 %v11231
  %11268 = vmatmul.f32.gmra.mxu0 %v10520
  %v11269 = vpop.f32.mrf.mxu0
  %v11270 = vadd.f32 0.0, %v11269
  %11271 = vdwg.mxu0
  %11272 = vmatpush.msra.mxu0 0.0
  %11273 = vmatpush.msra.mxu0 0.0
  %11274 = vmatpush.msra.mxu0 0.0
  %11275 = vmatpush.msra.mxu0 0.0
  %11276 = vmatpush.msra.mxu0 0.0
  %11277 = vmatpush.msra.mxu0 0.0
  %11278 = vmatpush.msra.mxu0 0.0
  %11279 = vmatpush.msra.mxu0 0.0
  %11280 = vmatpush.msra.mxu0 0.0
  %11281 = vmatpush.msra.mxu0 0.0
  %11282 = vmatpush.msra.mxu0 0.0
  %11283 = vmatpush.msra.mxu0 0.0
  %11284 = vmatpush.msra.mxu0 0.0
  %11285 = vmatpush.msra.mxu0 0.0
  %11286 = vmatpush.msra.mxu0 %v11248
  %11287 = vmatpush.msra.mxu0 %v11247
  %11288 = vmatmul.f32.gmra.mxu0 %v11250
  %v11289 = vpop.f32.mrf.mxu0
  %v11290 = vadd.f32 %v11270, %v11289
  %11291 = vdwg.mxu0
  %v11292 = vadd.f32 %v11229, %v11290
  %s11293 = scalar_lea.vmem %s7, 1584
  %v11294 = vld [vmem:[%s11293] sm:$0xff]
  %v11295 = vld [vmem:[%s11293 + $0x8] sm:$0xff]
  %v11296 = vld [vmem:[%s11293 + $0x10] sm:$0xff]
  %v11297 = vld [vmem:[%s11293 + $0x18] sm:$0xff]
  %v11298 = vld [vmem:[%s11293 + $0x20] sm:$0xff]
  %v11299 = vld [vmem:[%s11293 + $0x28] sm:$0xff]
  %v11300 = vld [vmem:[%s11293 + $0x30] sm:$0xff]
  %v11301 = vld [vmem:[%s11293 + $0x38] sm:$0xff]
  %v11302 = vld [vmem:[%s11293 + $0x40] sm:$0xff]
  %v11303 = vld [vmem:[%s11293 + $0x48] sm:$0xff]
  %v11304 = vld [vmem:[%s11293 + $0x50] sm:$0xff]
  %v11305 = vld [vmem:[%s11293 + $0x58] sm:$0xff]
  %v11306 = vld [vmem:[%s11293 + $0x60] sm:$0xff]
  %v11307 = vld [vmem:[%s11293 + $0x68] sm:$0xff]
  %v11308 = vld [vmem:[%s11293 + $0x70] sm:$0xff]
  %v11309 = vld [vmem:[%s11293 + $0x78] sm:$0xff]
  %v11310 = vld [vmem:[%s11293 + $0x80] sm:$0xff]
  %v11311 = vld [vmem:[%s11293 + $0x88] sm:$0xff]
  %v11313 = vsel %vm10639, %v10588, 0
  %11315 = vmatpush.msra.mxu0 %v11309
  %11316 = vmatpush.msra.mxu0 %v11308
  %11317 = vmatpush.msra.mxu0 %v11307
  %11318 = vmatpush.msra.mxu0 %v11306
  %11319 = vmatpush.msra.mxu0 %v11305
  %11320 = vmatpush.msra.mxu0 %v11304
  %11321 = vmatpush.msra.mxu0 %v11303
  %11322 = vmatpush.msra.mxu0 %v11302
  %11323 = vmatpush.msra.mxu0 %v11301
  %11324 = vmatpush.msra.mxu0 %v11300
  %11325 = vmatpush.msra.mxu0 %v11299
  %11326 = vmatpush.msra.mxu0 %v11298
  %11327 = vmatpush.msra.mxu0 %v11297
  %11328 = vmatpush.msra.mxu0 %v11296
  %11329 = vmatpush.msra.mxu0 %v11295
  %11330 = vmatpush.msra.mxu0 %v11294
  %11331 = vmatmul.f32.gmra.mxu0 %v10523
  %v11332 = vpop.f32.mrf.mxu0
  %v11333 = vadd.f32 0.0, %v11332
  %11334 = vdwg.mxu0
  %11335 = vmatpush.msra.mxu0 0.0
  %11336 = vmatpush.msra.mxu0 0.0
  %11337 = vmatpush.msra.mxu0 0.0
  %11338 = vmatpush.msra.mxu0 0.0
  %11339 = vmatpush.msra.mxu0 0.0
  %11340 = vmatpush.msra.mxu0 0.0
  %11341 = vmatpush.msra.mxu0 0.0
  %11342 = vmatpush.msra.mxu0 0.0
  %11343 = vmatpush.msra.mxu0 0.0
  %11344 = vmatpush.msra.mxu0 0.0
  %11345 = vmatpush.msra.mxu0 0.0
  %11346 = vmatpush.msra.mxu0 0.0
  %11347 = vmatpush.msra.mxu0 0.0
  %11348 = vmatpush.msra.mxu0 0.0
  %11349 = vmatpush.msra.mxu0 %v11311
  %11350 = vmatpush.msra.mxu0 %v11310
  %11351 = vmatmul.f32.gmra.mxu0 %v11313
  %v11352 = vpop.f32.mrf.mxu0
  %v11353 = vadd.f32 %v11333, %v11352
  %11354 = vdwg.mxu0
  %v11355 = vadd.f32 %v11292, %v11353
  %s11356 = scalar_lea.vmem %s7, 1728
  %v11357 = vld [vmem:[%s11356] sm:$0xff]
  %v11358 = vld [vmem:[%s11356 + $0x8] sm:$0xff]
  %v11359 = vld [vmem:[%s11356 + $0x10] sm:$0xff]
  %v11360 = vld [vmem:[%s11356 + $0x18] sm:$0xff]
  %v11361 = vld [vmem:[%s11356 + $0x20] sm:$0xff]
  %v11362 = vld [vmem:[%s11356 + $0x28] sm:$0xff]
  %v11363 = vld [vmem:[%s11356 + $0x30] sm:$0xff]
  %v11364 = vld [vmem:[%s11356 + $0x38] sm:$0xff]
  %v11365 = vld [vmem:[%s11356 + $0x40] sm:$0xff]
  %v11366 = vld [vmem:[%s11356 + $0x48] sm:$0xff]
  %v11367 = vld [vmem:[%s11356 + $0x50] sm:$0xff]
  %v11368 = vld [vmem:[%s11356 + $0x58] sm:$0xff]
  %v11369 = vld [vmem:[%s11356 + $0x60] sm:$0xff]
  %v11370 = vld [vmem:[%s11356 + $0x68] sm:$0xff]
  %v11371 = vld [vmem:[%s11356 + $0x70] sm:$0xff]
  %v11372 = vld [vmem:[%s11356 + $0x78] sm:$0xff]
  %v11373 = vld [vmem:[%s11356 + $0x80] sm:$0xff]
  %v11374 = vld [vmem:[%s11356 + $0x88] sm:$0xff]
  %v11376 = vsel %vm10639, %v10591, 0
  %11378 = vmatpush.msra.mxu0 %v11372
  %11379 = vmatpush.msra.mxu0 %v11371
  %11380 = vmatpush.msra.mxu0 %v11370
  %11381 = vmatpush.msra.mxu0 %v11369
  %11382 = vmatpush.msra.mxu0 %v11368
  %11383 = vmatpush.msra.mxu0 %v11367
  %11384 = vmatpush.msra.mxu0 %v11366
  %11385 = vmatpush.msra.mxu0 %v11365
  %11386 = vmatpush.msra.mxu0 %v11364
  %11387 = vmatpush.msra.mxu0 %v11363
  %11388 = vmatpush.msra.mxu0 %v11362
  %11389 = vmatpush.msra.mxu0 %v11361
  %11390 = vmatpush.msra.mxu0 %v11360
  %11391 = vmatpush.msra.mxu0 %v11359
  %11392 = vmatpush.msra.mxu0 %v11358
  %11393 = vmatpush.msra.mxu0 %v11357
  %11394 = vmatmul.f32.gmra.mxu0 %v10526
  %v11395 = vpop.f32.mrf.mxu0
  %v11396 = vadd.f32 0.0, %v11395
  %11397 = vdwg.mxu0
  %11398 = vmatpush.msra.mxu0 0.0
  %11399 = vmatpush.msra.mxu0 0.0
  %11400 = vmatpush.msra.mxu0 0.0
  %11401 = vmatpush.msra.mxu0 0.0
  %11402 = vmatpush.msra.mxu0 0.0
  %11403 = vmatpush.msra.mxu0 0.0
  %11404 = vmatpush.msra.mxu0 0.0
  %11405 = vmatpush.msra.mxu0 0.0
  %11406 = vmatpush.msra.mxu0 0.0
  %11407 = vmatpush.msra.mxu0 0.0
  %11408 = vmatpush.msra.mxu0 0.0
  %11409 = vmatpush.msra.mxu0 0.0
  %11410 = vmatpush.msra.mxu0 0.0
  %11411 = vmatpush.msra.mxu0 0.0
  %11412 = vmatpush.msra.mxu0 %v11374
  %11413 = vmatpush.msra.mxu0 %v11373
  %11414 = vmatmul.f32.gmra.mxu0 %v11376
  %v11415 = vpop.f32.mrf.mxu0
  %v11416 = vadd.f32 %v11396, %v11415
  %11417 = vdwg.mxu0
  %v11418 = vadd.f32 %v11355, %v11416
  %s11419 = scalar_lea.vmem %s7, 1872
  %v11420 = vld [vmem:[%s11419] sm:$0xff]
  %v11421 = vld [vmem:[%s11419 + $0x8] sm:$0xff]
  %v11422 = vld [vmem:[%s11419 + $0x10] sm:$0xff]
  %v11423 = vld [vmem:[%s11419 + $0x18] sm:$0xff]
  %v11424 = vld [vmem:[%s11419 + $0x20] sm:$0xff]
  %v11425 = vld [vmem:[%s11419 + $0x28] sm:$0xff]
  %v11426 = vld [vmem:[%s11419 + $0x30] sm:$0xff]
  %v11427 = vld [vmem:[%s11419 + $0x38] sm:$0xff]
  %v11428 = vld [vmem:[%s11419 + $0x40] sm:$0xff]
  %v11429 = vld [vmem:[%s11419 + $0x48] sm:$0xff]
  %v11430 = vld [vmem:[%s11419 + $0x50] sm:$0xff]
  %v11431 = vld [vmem:[%s11419 + $0x58] sm:$0xff]
  %v11432 = vld [vmem:[%s11419 + $0x60] sm:$0xff]
  %v11433 = vld [vmem:[%s11419 + $0x68] sm:$0xff]
  %v11434 = vld [vmem:[%s11419 + $0x70] sm:$0xff]
  %v11435 = vld [vmem:[%s11419 + $0x78] sm:$0xff]
  %v11436 = vld [vmem:[%s11419 + $0x80] sm:$0xff]
  %v11437 = vld [vmem:[%s11419 + $0x88] sm:$0xff]
  %v11439 = vsel %vm10639, %v10594, 0
  %11441 = vmatpush.msra.mxu0 %v11435
  %11442 = vmatpush.msra.mxu0 %v11434
  %11443 = vmatpush.msra.mxu0 %v11433
  %11444 = vmatpush.msra.mxu0 %v11432
  %11445 = vmatpush.msra.mxu0 %v11431
  %11446 = vmatpush.msra.mxu0 %v11430
  %11447 = vmatpush.msra.mxu0 %v11429
  %11448 = vmatpush.msra.mxu0 %v11428
  %11449 = vmatpush.msra.mxu0 %v11427
  %11450 = vmatpush.msra.mxu0 %v11426
  %11451 = vmatpush.msra.mxu0 %v11425
  %11452 = vmatpush.msra.mxu0 %v11424
  %11453 = vmatpush.msra.mxu0 %v11423
  %11454 = vmatpush.msra.mxu0 %v11422
  %11455 = vmatpush.msra.mxu0 %v11421
  %11456 = vmatpush.msra.mxu0 %v11420
  %11457 = vmatmul.f32.gmra.mxu0 %v10529
  %v11458 = vpop.f32.mrf.mxu0
  %v11459 = vadd.f32 0.0, %v11458
  %11460 = vdwg.mxu0
  %11461 = vmatpush.msra.mxu0 0.0
  %11462 = vmatpush.msra.mxu0 0.0
  %11463 = vmatpush.msra.mxu0 0.0
  %11464 = vmatpush.msra.mxu0 0.0
  %11465 = vmatpush.msra.mxu0 0.0
  %11466 = vmatpush.msra.mxu0 0.0
  %11467 = vmatpush.msra.mxu0 0.0
  %11468 = vmatpush.msra.mxu0 0.0
  %11469 = vmatpush.msra.mxu0 0.0
  %11470 = vmatpush.msra.mxu0 0.0
  %11471 = vmatpush.msra.mxu0 0.0
  %11472 = vmatpush.msra.mxu0 0.0
  %11473 = vmatpush.msra.mxu0 0.0
  %11474 = vmatpush.msra.mxu0 0.0
  %11475 = vmatpush.msra.mxu0 %v11437
  %11476 = vmatpush.msra.mxu0 %v11436
  %11477 = vmatmul.f32.gmra.mxu0 %v11439
  %v11478 = vpop.f32.mrf.mxu0
  %v11479 = vadd.f32 %v11459, %v11478
  %11480 = vdwg.mxu0
  %v11481 = vadd.f32 %v11418, %v11479
  %s11482 = scalar_lea.vmem %s7, 2016
  %v11483 = vld [vmem:[%s11482] sm:$0xff]
  %v11484 = vld [vmem:[%s11482 + $0x8] sm:$0xff]
  %v11485 = vld [vmem:[%s11482 + $0x10] sm:$0xff]
  %v11486 = vld [vmem:[%s11482 + $0x18] sm:$0xff]
  %v11487 = vld [vmem:[%s11482 + $0x20] sm:$0xff]
  %v11488 = vld [vmem:[%s11482 + $0x28] sm:$0xff]
  %v11489 = vld [vmem:[%s11482 + $0x30] sm:$0xff]
  %v11490 = vld [vmem:[%s11482 + $0x38] sm:$0xff]
  %v11491 = vld [vmem:[%s11482 + $0x40] sm:$0xff]
  %v11492 = vld [vmem:[%s11482 + $0x48] sm:$0xff]
  %v11493 = vld [vmem:[%s11482 + $0x50] sm:$0xff]
  %v11494 = vld [vmem:[%s11482 + $0x58] sm:$0xff]
  %v11495 = vld [vmem:[%s11482 + $0x60] sm:$0xff]
  %v11496 = vld [vmem:[%s11482 + $0x68] sm:$0xff]
  %v11497 = vld [vmem:[%s11482 + $0x70] sm:$0xff]
  %v11498 = vld [vmem:[%s11482 + $0x78] sm:$0xff]
  %v11499 = vld [vmem:[%s11482 + $0x80] sm:$0xff]
  %v11500 = vld [vmem:[%s11482 + $0x88] sm:$0xff]
  %v11502 = vsel %vm10639, %v10597, 0
  %11504 = vmatpush.msra.mxu0 %v11498
  %11505 = vmatpush.msra.mxu0 %v11497
  %11506 = vmatpush.msra.mxu0 %v11496
  %11507 = vmatpush.msra.mxu0 %v11495
  %11508 = vmatpush.msra.mxu0 %v11494
  %11509 = vmatpush.msra.mxu0 %v11493
  %11510 = vmatpush.msra.mxu0 %v11492
  %11511 = vmatpush.msra.mxu0 %v11491
  %11512 = vmatpush.msra.mxu0 %v11490
  %11513 = vmatpush.msra.mxu0 %v11489
  %11514 = vmatpush.msra.mxu0 %v11488
  %11515 = vmatpush.msra.mxu0 %v11487
  %11516 = vmatpush.msra.mxu0 %v11486
  %11517 = vmatpush.msra.mxu0 %v11485
  %11518 = vmatpush.msra.mxu0 %v11484
  %11519 = vmatpush.msra.mxu0 %v11483
  %11520 = vmatmul.f32.gmra.mxu0 %v10532
  %v11521 = vpop.f32.mrf.mxu0
  %v11522 = vadd.f32 0.0, %v11521
  %11523 = vdwg.mxu0
  %11524 = vmatpush.msra.mxu0 0.0
  %11525 = vmatpush.msra.mxu0 0.0
  %11526 = vmatpush.msra.mxu0 0.0
  %11527 = vmatpush.msra.mxu0 0.0
  %11528 = vmatpush.msra.mxu0 0.0
  %11529 = vmatpush.msra.mxu0 0.0
  %11530 = vmatpush.msra.mxu0 0.0
  %11531 = vmatpush.msra.mxu0 0.0
  %11532 = vmatpush.msra.mxu0 0.0
  %11533 = vmatpush.msra.mxu0 0.0
  %11534 = vmatpush.msra.mxu0 0.0
  %11535 = vmatpush.msra.mxu0 0.0
  %11536 = vmatpush.msra.mxu0 0.0
  %11537 = vmatpush.msra.mxu0 0.0
  %11538 = vmatpush.msra.mxu0 %v11500
  %11539 = vmatpush.msra.mxu0 %v11499
  %11540 = vmatmul.f32.gmra.mxu0 %v11502
  %v11541 = vpop.f32.mrf.mxu0
  %v11542 = vadd.f32 %v11522, %v11541
  %11543 = vdwg.mxu0
  %v11544 = vadd.f32 %v11481, %v11542
  %s11545 = scalar_lea.vmem %s7, 2160
  %v11546 = vld [vmem:[%s11545] sm:$0xff]
  %v11547 = vld [vmem:[%s11545 + $0x8] sm:$0xff]
  %v11548 = vld [vmem:[%s11545 + $0x10] sm:$0xff]
  %v11549 = vld [vmem:[%s11545 + $0x18] sm:$0xff]
  %v11550 = vld [vmem:[%s11545 + $0x20] sm:$0xff]
  %v11551 = vld [vmem:[%s11545 + $0x28] sm:$0xff]
  %v11552 = vld [vmem:[%s11545 + $0x30] sm:$0xff]
  %v11553 = vld [vmem:[%s11545 + $0x38] sm:$0xff]
  %v11554 = vld [vmem:[%s11545 + $0x40] sm:$0xff]
  %v11555 = vld [vmem:[%s11545 + $0x48] sm:$0xff]
  %v11556 = vld [vmem:[%s11545 + $0x50] sm:$0xff]
  %v11557 = vld [vmem:[%s11545 + $0x58] sm:$0xff]
  %v11558 = vld [vmem:[%s11545 + $0x60] sm:$0xff]
  %v11559 = vld [vmem:[%s11545 + $0x68] sm:$0xff]
  %v11560 = vld [vmem:[%s11545 + $0x70] sm:$0xff]
  %v11561 = vld [vmem:[%s11545 + $0x78] sm:$0xff]
  %v11562 = vld [vmem:[%s11545 + $0x80] sm:$0xff]
  %v11563 = vld [vmem:[%s11545 + $0x88] sm:$0xff]
  %v11565 = vsel %vm10639, %v10600, 0
  %11567 = vmatpush.msra.mxu0 %v11561
  %11568 = vmatpush.msra.mxu0 %v11560
  %11569 = vmatpush.msra.mxu0 %v11559
  %11570 = vmatpush.msra.mxu0 %v11558
  %11571 = vmatpush.msra.mxu0 %v11557
  %11572 = vmatpush.msra.mxu0 %v11556
  %11573 = vmatpush.msra.mxu0 %v11555
  %11574 = vmatpush.msra.mxu0 %v11554
  %11575 = vmatpush.msra.mxu0 %v11553
  %11576 = vmatpush.msra.mxu0 %v11552
  %11577 = vmatpush.msra.mxu0 %v11551
  %11578 = vmatpush.msra.mxu0 %v11550
  %11579 = vmatpush.msra.mxu0 %v11549
  %11580 = vmatpush.msra.mxu0 %v11548
  %11581 = vmatpush.msra.mxu0 %v11547
  %11582 = vmatpush.msra.mxu0 %v11546
  %11583 = vmatmul.f32.gmra.mxu0 %v10535
  %v11584 = vpop.f32.mrf.mxu0
  %v11585 = vadd.f32 0.0, %v11584
  %11586 = vdwg.mxu0
  %11587 = vmatpush.msra.mxu0 0.0
  %11588 = vmatpush.msra.mxu0 0.0
  %11589 = vmatpush.msra.mxu0 0.0
  %11590 = vmatpush.msra.mxu0 0.0
  %11591 = vmatpush.msra.mxu0 0.0
  %11592 = vmatpush.msra.mxu0 0.0
  %11593 = vmatpush.msra.mxu0 0.0
  %11594 = vmatpush.msra.mxu0 0.0
  %11595 = vmatpush.msra.mxu0 0.0
  %11596 = vmatpush.msra.mxu0 0.0
  %11597 = vmatpush.msra.mxu0 0.0
  %11598 = vmatpush.msra.mxu0 0.0
  %11599 = vmatpush.msra.mxu0 0.0
  %11600 = vmatpush.msra.mxu0 0.0
  %11601 = vmatpush.msra.mxu0 %v11563
  %11602 = vmatpush.msra.mxu0 %v11562
  %11603 = vmatmul.f32.gmra.mxu0 %v11565
  %v11604 = vpop.f32.mrf.mxu0
  %v11605 = vadd.f32 %v11585, %v11604
  %11606 = vdwg.mxu0
  %v11607 = vadd.f32 %v11544, %v11605
  %v11608 = vld [vmem:[%s8] sm:$0x1]
  %v11610 = vperm.slane %v11608, 0
  %v11612 = vadd.f32 %v11607, %v11610
  %v11613 = vmax.f32 %v11612, 0.0
  %v11614 = vld [vmem:[%s9] sm:$0xff]
  %v11615 = vld [vmem:[%s9 + $0x8] sm:$0xff]
  %v11616 = vld [vmem:[%s9 + $0x10] sm:$0xff]
  %v11617 = vld [vmem:[%s9 + $0x18] sm:$0xff]
  %v11618 = vld [vmem:[%s9 + $0x20] sm:$0xff]
  %v11619 = vld [vmem:[%s9 + $0x28] sm:$0xff]
  %v11620 = vld [vmem:[%s9 + $0x30] sm:$0xff]
  %v11621 = vld [vmem:[%s9 + $0x38] sm:$0xff]
  %v11622 = vld [vmem:[%s9 + $0x40] sm:$0xff]
  %v11623 = vld [vmem:[%s9 + $0x48] sm:$0xff]
  %v11624 = vld [vmem:[%s9 + $0x50] sm:$0xff]
  %v11625 = vld [vmem:[%s9 + $0x58] sm:$0xff]
  %v11626 = vld [vmem:[%s9 + $0x60] sm:$0xff]
  %v11627 = vld [vmem:[%s9 + $0x68] sm:$0xff]
  %v11628 = vld [vmem:[%s9 + $0x70] sm:$0xff]
  %v11629 = vld [vmem:[%s9 + $0x78] sm:$0xff]
  %v11630 = vld [vmem:[%s10] sm:$0x1]
  %v11632 = vperm.slane %v11630, 0
  %11634 = vmatpush.msra.mxu0 %v11629
  %11635 = vmatpush.msra.mxu0 %v11628
  %11636 = vmatpush.msra.mxu0 %v11627
  %11637 = vmatpush.msra.mxu0 %v11626
  %11638 = vmatpush.msra.mxu0 %v11625
  %11639 = vmatpush.msra.mxu0 %v11624
  %11640 = vmatpush.msra.mxu0 %v11623
  %11641 = vmatpush.msra.mxu0 %v11622
  %11642 = vmatpush.msra.mxu0 %v11621
  %11643 = vmatpush.msra.mxu0 %v11620
  %11644 = vmatpush.msra.mxu0 %v11619
  %11645 = vmatpush.msra.mxu0 %v11618
  %11646 = vmatpush.msra.mxu0 %v11617
  %11647 = vmatpush.msra.mxu0 %v11616
  %11648 = vmatpush.msra.mxu0 %v11615
  %11649 = vmatpush.msra.mxu0 %v11614
  %11650 = vmatmul.f32.gmra.mxu0 %v11613
  %v11651 = vpop.f32.mrf.mxu0
  %v11652 = vadd.f32 %v11632, %v11651
  %11653 = vdwg.mxu0
  %v11654 = vmax.f32 %v11652, 0.0
  %v11655 = vld [vmem:[%s11] sm:$0xff]
  %v11656 = vld [vmem:[%s11 + $0x8] sm:$0xff]
  %v11657 = vld [vmem:[%s11 + $0x10] sm:$0xff]
  %v11658 = vld [vmem:[%s11 + $0x18] sm:$0xff]
  %v11659 = vld [vmem:[%s11 + $0x20] sm:$0xff]
  %v11660 = vld [vmem:[%s11 + $0x28] sm:$0xff]
  %v11661 = vld [vmem:[%s11 + $0x30] sm:$0xff]
  %v11662 = vld [vmem:[%s11 + $0x38] sm:$0xff]
  %v11663 = vld [vmem:[%s12] sm:$0x1]
  %v11665 = vperm.slane %v11663, 0
  %vm11667 = vcmask 523264
  %v11669 = vsel %vm11667, %v11654, 0
  %11671 = vmatpush.msra.mxu0 0.0
  %11672 = vmatpush.msra.mxu0 0.0
  %11673 = vmatpush.msra.mxu0 0.0
  %11674 = vmatpush.msra.mxu0 0.0
  %11675 = vmatpush.msra.mxu0 0.0
  %11676 = vmatpush.msra.mxu0 0.0
  %11677 = vmatpush.msra.mxu0 0.0
  %11678 = vmatpush.msra.mxu0 0.0
  %11679 = vmatpush.msra.mxu0 %v11662
  %11680 = vmatpush.msra.mxu0 %v11661
  %11681 = vmatpush.msra.mxu0 %v11660
  %11682 = vmatpush.msra.mxu0 %v11659
  %11683 = vmatpush.msra.mxu0 %v11658
  %11684 = vmatpush.msra.mxu0 %v11657
  %11685 = vmatpush.msra.mxu0 %v11656
  %11686 = vmatpush.msra.mxu0 %v11655
  %11687 = vmatmul.f32.gmra.mxu0 %v11669
  %v11688 = vpop.f32.mrf.mxu0
  %v11689 = vadd.f32 %v11665, %v11688
  %11690 = vdwg.mxu0
  %11691 = vst [vmem:[%s13] sm:$0xff] %v11689
  // Predicated region
  $region54: #{cnn_forward_prepared.1} parent=0 // pred_check
    _
  $region55: #{cnn_forward_prepared.1} parent=0 // pred_check_branch
    %11693 = sbr.rel (0) target = $region57
  $region56: #{cnn_forward_prepared.1} parent=0 // pred_region
    _
  $region57: #{cnn_forward_prepared.1} parent=0 // pred_fallthru
    _
  // Predicated region
  $region58: #{cnn_forward_prepared.1} parent=0 // pred_check
    _
  $region59: #{cnn_forward_prepared.1} parent=0 // pred_check_branch
    %11695 = sbr.rel (0) target = $region61
  $region60: #{cnn_forward_prepared.1} parent=0 // pred_region
    _
  $region61: #{cnn_forward_prepared.1} parent=0 // pred_fallthru
    _

</llo_original>
